<compile_context>
chip_gen: v7x
topology: tpu7x:2x2x1
jax: 0.10.0
libtpu: 0.0.40
codegen_flags: <defaults>
</compile_context>

<pallas_src>
import functools

import jax
import jax.numpy as jnp
from jax.experimental import pallas as pl
from jax.experimental.pallas import tpu as pltpu


def _round_up(n, m):
    return (n + m - 1) // m * m


def _sublane(dtype):
    # sublane granularity: 8 for 4-byte, 16 for 2-byte, 32 for 1-byte dtypes
    return 8 * (4 // jnp.dtype(dtype).itemsize)


def _vmem_capacity():
    try:
        cap = int(getattr(pltpu.get_tpu_info(), "vmem_capacity_bytes", 64 << 20))
    except Exception:
        cap = 64 << 20          # conservative fallback: correct on every generation
    if cap < (32 << 20):
        cap = 64 << 20
    return cap


def _plan_tiles(batch, act_size, d_hidden, dtype, acts_dtype, matmul_dtype,
                tile_b, tile_h):
    """Pick (tile_b, tile_h) and a VMEM limit from the actual chip's capacity."""
    it = jnp.dtype(dtype).itemsize
    it_a = jnp.dtype(acts_dtype).itemsize
    it_m = jnp.dtype(matmul_dtype).itemsize
    sub = max(_sublane(dtype), _sublane(acts_dtype))
    cap = _vmem_capacity()
    budget = int(cap * 0.75)      # ~96 MiB on 128-MiB parts, ~48 MiB on v7x

    def weight_bytes(th):
        # W_enc/W_dec tiles + bias tiles, counted double-buffered (they are streamed
        # when n_h > 1, and the default pipeline keeps 2 buffers even when resident).
        return 2 * (2 * act_size * th + th + act_size) * it

    if tile_h is None:
        dh_full = _round_up(d_hidden, 128)
        if weight_bytes(dh_full) <= budget // 2:
            tile_h = dh_full                 # weights fit: resident, single hidden tile
        else:                                # fallback: stream the hidden dimension
            tile_h = 128
            for cand in (4096, 2048, 1024, 512, 256):
                if weight_bytes(cand) <= budget // 2:
                    tile_h = cand
                    break
    tile_h = _round_up(int(tile_h), 128)
    dh_pad = _round_up(d_hidden, tile_h)

    def footprint(tb, th):
        stream = 2 * tb * (2 * act_size * it + th * it_a)           # x, x_rec, acts (2 bufs)
        scratch = tb * act_size * 4                                  # f32 decoder accumulator
        temps = tb * (2 * th + 3 * act_size) * 4                     # f32 temporaries
        temps += (tb * (act_size + th) + 2 * act_size * th) * it_m   # matmul-dtype casts
        small = 4 * (act_size + th) * 4                              # loss partials + biases
        return weight_bytes(th) + stream + scratch + temps + small

    if tile_b is None:
        tile_b = 2048
        while tile_b > sub and footprint(tile_b, tile_h) > budget:
            tile_b //= 2
    tile_b = max(sub, _round_up(int(tile_b), sub))
    tile_b = min(tile_b, _round_up(batch, sub))
    # avoid gratuitous padded-batch work when the tile barely overshoots the batch
    while tile_b > sub and _round_up(batch, tile_b) - batch >= tile_b // 2:
        tile_b = max(sub, _round_up(tile_b // 2, sub))
    b_pad = _round_up(batch, tile_b)

    vmem_limit = footprint(tile_b, tile_h) + (4 << 20)
    vmem_limit = int(min(max(vmem_limit, 16 << 20), int(cap * 0.8)))
    return tile_b, tile_h, b_pad, dh_pad, vmem_limit


def _store_col_sums(out_ref, t, i, n_valid_last, needs_mask):
    """Per-lane (column) sums of `t`; padded batch rows of the last tile excluded."""
    if not needs_mask:
        out_ref[...] = jnp.sum(t, axis=0, keepdims=True)
        return
    last = pl.num_programs(0) - 1

    @pl.when(i != last)
    def _full():
        out_ref[...] = jnp.sum(t, axis=0, keepdims=True)

    @pl.when(i == last)          # only the single ragged tile pays for the mask
    def _ragged():
        rows = jax.lax.broadcasted_iota(jnp.int32, t.shape, 0)
        out_ref[...] = jnp.sum(jnp.where(rows < n_valid_last, t, 0.0),
                               axis=0, keepdims=True)


def _ae_kernel(n_valid_last, needs_mask, matmul_dtype, precision,
               x_ref, w_enc_ref, w_dec_ref, b_enc_ref, b_dec_ref,
               xrec_ref, acts_ref, msep_ref, l1p_ref, acc_ref):
    i = pl.program_id(0)          # batch tile   ("parallel" -> megacore-shardable)
    h = pl.program_id(1)          # hidden tile  ("arbitrary" -> reduction axis)
    n_h = pl.num_programs(1)

    x = x_ref[...]                                     # (tile_b, A), module dtype
    b_dec = b_dec_ref[...]                             # (1, A)
    x_cent = (x - b_dec).astype(matmul_dtype)

    # encoder tile: relu(x_cent @ W_enc[:, h] + b_enc[h])   (MXU, f32 accumulation)
    pre = jnp.dot(x_cent, w_enc_ref[...].astype(matmul_dtype),
                  preferred_element_type=jnp.float32, precision=precision)
    acts_f32 = jnp.maximum(pre + b_enc_ref[...].astype(jnp.float32), 0.0)
    acts_out = acts_f32.astype(acts_ref.dtype)
    acts_ref[...] = acts_out                           # lane-dense (tile_b, tile_h)

    # L1 per-lane partial sums on the stored activations (ReLU output => |acts| == acts)
    _store_col_sums(l1p_ref, acts_out.astype(jnp.float32), i, n_valid_last, needs_mask)

    # decoder partial product, accumulated across hidden tiles in f32 scratch
    dec = jnp.dot(acts_out.astype(matmul_dtype), w_dec_ref[...].astype(matmul_dtype),
                  preferred_element_type=jnp.float32, precision=precision)

    @pl.when(h == 0)
    def _init():
        acc_ref[...] = jnp.broadcast_to(b_dec.astype(jnp.float32), acc_ref.shape)

    acc_ref[...] += dec

    @pl.when(h == n_h - 1)
    def _finalize():
        rec_out = acc_ref[...].astype(xrec_ref.dtype)
        xrec_ref[...] = rec_out
        diff = rec_out.astype(jnp.float32) - x.astype(jnp.float32)
        _store_col_sums(msep_ref, diff * diff, i, n_valid_last, needs_mask)


def autoencoder_forward(x, W_enc, W_dec, b_enc, b_dec, l1_coeff, *,
                        matmul_dtype=None, acts_dtype=None,
                        tile_b=None, tile_h=None):
    """Returns (loss, x_reconstruct, acts, mse, l1_loss) like the PyTorch module."""
    B, A = x.shape
    d_hidden = W_enc.shape[1]
    dtype = x.dtype
    matmul_dtype = jnp.dtype(dtype if matmul_dtype is None else matmul_dtype)
    acts_dtype = jnp.dtype(dtype if acts_dtype is None else acts_dtype)
    precision = (jax.lax.Precision.HIGHEST
                 if matmul_dtype == jnp.float32 else jax.lax.Precision.DEFAULT)

    tile_b, tile_h, b_pad, dh_pad, vmem_limit = _plan_tiles(
        B, A, d_hidden, dtype, acts_dtype, matmul_dtype, tile_b, tile_h)

    # zero-padded hidden units -> zero acts -> no effect on reconstruction or L1
    if dh_pad != d_hidden:
        W_enc = jnp.pad(W_enc, ((0, 0), (0, dh_pad - d_hidden)))
        W_dec = jnp.pad(W_dec, ((0, dh_pad - d_hidden), (0, 0)))
        b_enc = jnp.pad(b_enc, (0, dh_pad - d_hidden))
    if b_pad != B:
        x = jnp.pad(x, ((0, b_pad - B), (0, 0)))

    n_b, n_h = b_pad // tile_b, dh_pad // tile_h
    n_valid_last = B - (n_b - 1) * tile_b
    needs_mask = n_valid_last != tile_b

    b_enc2 = b_enc.reshape(1, dh_pad).astype(dtype)
    b_dec2 = b_dec.reshape(1, A).astype(dtype)

    kernel = functools.partial(_ae_kernel, n_valid_last, needs_mask,
                               matmul_dtype, precision)

    out_shapes = (
        jax.ShapeDtypeStruct((b_pad, A), dtype),            # x_reconstruct
        jax.ShapeDtypeStruct((b_pad, dh_pad), acts_dtype),  # acts
        jax.ShapeDtypeStruct((n_b, A), jnp.float32),        # per-tile mse lane partials
        jax.ShapeDtypeStruct((n_b, dh_pad), jnp.float32),   # per-tile l1 lane partials
    )
    grid_spec = pltpu.PrefetchScalarGridSpec(
        num_scalar_prefetch=0,
        grid=(n_b, n_h),
        in_specs=[
            pl.BlockSpec((tile_b, A), lambda i, h: (i, 0)),       # x (per batch tile)
            pl.BlockSpec((A, tile_h), lambda i, h: (0, h)),       # W_enc (streamed/resident)
            pl.BlockSpec((tile_h, A), lambda i, h: (h, 0)),       # W_dec
            pl.BlockSpec((1, tile_h), lambda i, h: (0, h)),       # b_enc
            pl.BlockSpec((1, A), lambda i, h: (0, 0)),            # b_dec
        ],
        out_specs=(
            pl.BlockSpec((tile_b, A), lambda i, h: (i, 0)),       # x_reconstruct
            pl.BlockSpec((tile_b, tile_h), lambda i, h: (i, h)),  # acts (lane-dense)
            pl.BlockSpec((1, A), lambda i, h: (i, 0)),            # mse partials
            pl.BlockSpec((1, tile_h), lambda i, h: (i, h)),       # l1 partials
        ),
        scratch_shapes=[pltpu.VMEM((tile_b, A), jnp.float32)],    # decoder accumulator
    )

    x_rec, acts, mse_part, l1_part = pl.pallas_call(
        kernel,
        out_shape=out_shapes,
        grid_spec=grid_spec,
        compiler_params=pltpu.CompilerParams(
            # batch axis independent -> "parallel" (megacore); hidden axis = reduction
            dimension_semantics=("parallel", "arbitrary"),
            vmem_limit_bytes=vmem_limit),
    )(x, W_enc, W_dec, b_enc2, b_dec2)

    # tiny final reductions over the per-tile partials are left to XLA
    mse = jnp.sum(mse_part) * jnp.float32(1.0 / (B * A))
    l1 = jnp.asarray(l1_coeff, jnp.float32) * jnp.sum(l1_part)
    loss = mse + l1
    return loss, x_rec[:B], acts[:B, :d_hidden], mse, l1


def init_params(key, act_size, d_hidden, dtype=jnp.float32):
    """Init mirroring the module's __init__ (kaiming_uniform + unit-norm decoder rows).
    # TODO(synk): exact torch RNG bit-reproduction (torch.manual_seed) not attempted."""
    k_enc, k_dec = jax.random.split(key)
    bound_enc = (6.0 / d_hidden) ** 0.5          # torch fan_in = size(1)
    bound_dec = (6.0 / act_size) ** 0.5
    W_enc = jax.random.uniform(k_enc, (act_size, d_hidden), dtype=jnp.float32,
                               minval=-bound_enc, maxval=bound_enc)
    W_dec = jax.random.uniform(k_dec, (d_hidden, act_size), dtype=jnp.float32,
                               minval=-bound_dec, maxval=bound_dec)
    W_dec = W_dec / jnp.linalg.norm(W_dec, axis=-1, keepdims=True)
    b_enc = jnp.zeros((d_hidden,), dtype=jnp.float32)
    b_dec = jnp.zeros((act_size,), dtype=jnp.float32)
    return (W_enc.astype(dtype), W_dec.astype(dtype),
            b_enc.astype(dtype), b_dec.astype(dtype))


def _reference(x, W_enc, W_dec, b_enc, b_dec, l1_coeff):
    hp = jax.lax.Precision.HIGHEST
    x_cent = x - b_dec
    acts = jnp.maximum(jnp.dot(x_cent, W_enc, precision=hp) + b_enc, 0.0)
    x_rec = jnp.dot(acts, W_dec, precision=hp) + b_dec
    diff = x_rec.astype(jnp.float32) - x.astype(jnp.float32)
    mse = jnp.mean(diff * diff)
    l1 = jnp.float32(l1_coeff) * jnp.sum(jnp.abs(acts.astype(jnp.float32)))
    return mse + l1, x_rec, acts, mse, l1


if __name__ == "__main__":
    # cfg mirrors the PyTorch module: latent_dim=1 -> d_hidden = 784, act_size = 128
    cfg = dict(latent_dim=1, act_size=128, l1_coeff=1e-3, enc_dtype="fp32", seed=0)
    act_size = cfg["act_size"]
    d_hidden = cfg["latent_dim"] * 784

    key = jax.random.PRNGKey(0)
    k_x1, k_x2, k_p, k_b1, k_b2 = jax.random.split(key, 5)
    W_enc, W_dec, b_enc, b_dec = init_params(k_p, act_size, d_hidden)
    # non-zero biases so centering / bias-add / ragged-tile masking are truly exercised
    b_enc = 0.01 * jax.random.normal(k_b1, (d_hidden,), jnp.float32)
    b_dec = 0.05 * jax.random.normal(k_b2, (act_size,), jnp.float32)

    def check(outs, refs, rtol, atol):
        names = ("loss", "x_reconstruct", "acts", "mse", "l1_loss")
        for name, o, r in zip(names, outs, refs):
            ok = jnp.allclose(o, r, rtol=rtol, atol=atol)
            assert bool(ok), (f"{name} mismatch, max abs err "
                              f"{float(jnp.max(jnp.abs(o - r))):.3e}")

    # 1) default plan: weights resident (single hidden tile), fp32 HIGHEST matmuls
    x1 = jax.random.normal(k_x1, (8, act_size), dtype=jnp.float32)
    outs1 = jax.block_until_ready(
        autoencoder_forward(x1, W_enc, W_dec, b_enc, b_dec, cfg["l1_coeff"]))
    refs1 = _reference(x1, W_enc, W_dec, b_enc, b_dec, cfg["l1_coeff"])
    assert outs1[1].shape == (8, act_size) and outs1[2].shape == (8, d_hidden)
    check(outs1, refs1, rtol=5e-3, atol=5e-3)

    # 2) hidden-dim streaming fallback + ragged batch tile (masked reduction path)
    x2 = jax.random.normal(k_x2, (13, act_size), dtype=jnp.float32)
    outs2 = jax.block_until_ready(
        autoencoder_forward(x2, W_enc, W_dec, b_enc, b_dec, cfg["l1_coeff"],
                            tile_b=8, tile_h=128))
    refs2 = _reference(x2, W_enc, W_dec, b_enc, b_dec, cfg["l1_coeff"])
    assert outs2[1].shape == (13, act_size) and outs2[2].shape == (13, d_hidden)
    check(outs2, refs2, rtol=5e-3, atol=5e-3)

    # 3) recommended fast path: bf16 MXU matmuls with f32 accumulation
    outs3 = jax.block_until_ready(
        autoencoder_forward(x1, W_enc, W_dec, b_enc, b_dec, cfg["l1_coeff"],
                            matmul_dtype=jnp.bfloat16))
    check(outs3, refs1, rtol=1e-1, atol=1e-1)

    # TODO(synk): save/load/get_version (torch file I/O) and the no_grad decoder
    # re-normalization helper are training/IO utilities, not part of forward.
    print("KERNEL_OK")
</pallas_src>

<mosaic_0001>
module attributes {stable_mosaic.version = 11 : i64} {
  func.func @_ae_kernel(%arg0: i32, %arg1: i32, %arg2: memref<8x128xf32, #tpu.memory_space<vmem>>, %arg3: memref<128x896xf32, #tpu.memory_space<vmem>>, %arg4: memref<896x128xf32, #tpu.memory_space<vmem>>, %arg5: memref<1x896xf32, #tpu.memory_space<vmem>>, %arg6: memref<1x128xf32, #tpu.memory_space<vmem>>, %arg7: memref<8x128xf32, #tpu.memory_space<vmem>>, %arg8: memref<8x896xf32, #tpu.memory_space<vmem>>, %arg9: memref<1x128xf32, #tpu.memory_space<vmem>>, %arg10: memref<1x896xf32, #tpu.memory_space<vmem>>, %arg11: memref<8x128xf32, #tpu.memory_space<vmem>>) attributes {dimension_semantics = [#tpu.dimension_semantics<parallel>, #tpu.dimension_semantics<arbitrary>], iteration_bounds = array<i64: 1, 1>, scalar_prefetch = 0 : i64, scratch_operands = 1 : i64, tpu.core_type = #tpu.core_type<tc>, window_params = [{transform_indices = @transform_0, window_bounds = array<i64: 8, 128>}, {transform_indices = @transform_1, window_bounds = array<i64: 128, 896>}, {transform_indices = @transform_2, window_bounds = array<i64: 896, 128>}, {transform_indices = @transform_3, window_bounds = array<i64: 1, 896>}, {pipeline_mode = #tpu.pipeline_mode<synchronous>, transform_indices = @transform_4, window_bounds = array<i64: 1, 128>}, {transform_indices = @transform_5, window_bounds = array<i64: 8, 128>}, {transform_indices = @transform_6, window_bounds = array<i64: 8, 896>}, {transform_indices = @transform_7, window_bounds = array<i64: 1, 128>}, {transform_indices = @transform_8, window_bounds = array<i64: 1, 896>}]} {
    %c0 = arith.constant 0 : index
    %c0_0 = arith.constant 0 : index
    %0 = vector.load %arg2[%c0, %c0_0] : memref<8x128xf32, #tpu.memory_space<vmem>>, vector<8x128xf32>
    %c0_1 = arith.constant 0 : index
    %c0_2 = arith.constant 0 : index
    %1 = vector.load %arg6[%c0_1, %c0_2] : memref<1x128xf32, #tpu.memory_space<vmem>>, vector<1x128xf32>
    %2 = vector.broadcast %1 : vector<1x128xf32> to vector<8x128xf32>
    %3 = arith.subf %0, %2 : vector<8x128xf32>
    %c0_3 = arith.constant 0 : index
    %c0_4 = arith.constant 0 : index
    %4 = vector.load %arg3[%c0_3, %c0_4] : memref<128x896xf32, #tpu.memory_space<vmem>>, vector<128x896xf32>
    %cst = arith.constant dense<0.000000e+00> : vector<8x896xf32>
    %5 = tpu.matmul %3, %4, %cst {dimension_numbers = #tpu.dot_dimension_numbers<[1], [0], [0], [1], [0, 0, 1, 1], [], []>, precision = #tpu.contract_precision<fp32>} : vector<8x128xf32>, vector<128x896xf32>, vector<8x896xf32> -> vector<8x896xf32>
    %c0_5 = arith.constant 0 : index
    %c0_6 = arith.constant 0 : index
    %6 = vector.load %arg5[%c0_5, %c0_6] : memref<1x896xf32, #tpu.memory_space<vmem>>, vector<1x896xf32>
    %7 = vector.broadcast %6 : vector<1x896xf32> to vector<8x896xf32>
    %8 = arith.addf %5, %7 : vector<8x896xf32>
    %cst_7 = arith.constant 0.000000e+00 : f32
    %9 = vector.broadcast %cst_7 : f32 to vector<8x896xf32>
    %10 = arith.maximumf %8, %9 : vector<8x896xf32>
    %c0_8 = arith.constant 0 : index
    %c0_9 = arith.constant 0 : index
    %11 = vector.load %arg8[%c0_8, %c0_9] : memref<8x896xf32, #tpu.memory_space<vmem>>, vector<8x896xf32>
    tpu.vector_store %arg8[%c0_8, %c0_9], %10 {strides = array<i32>} : memref<8x896xf32, #tpu.memory_space<vmem>>, vector<8x896xf32>,
    %cst_10 = arith.constant dense<0.000000e+00> : vector<896xf32>
    %12 = vector.multi_reduction <add>, %10, %cst_10 [0] : vector<8x896xf32> to vector<896xf32>
    %13 = vector.shape_cast %12 : vector<896xf32> to vector<1x896xf32>
    %c0_11 = arith.constant 0 : index
    %c0_12 = arith.constant 0 : index
    %14 = vector.load %arg10[%c0_11, %c0_12] : memref<1x896xf32, #tpu.memory_space<vmem>>, vector<1x896xf32>
    tpu.vector_store %arg10[%c0_11, %c0_12], %13 {strides = array<i32>} : memref<1x896xf32, #tpu.memory_space<vmem>>, vector<1x896xf32>,
    %c0_13 = arith.constant 0 : index
    %c0_14 = arith.constant 0 : index
    %15 = vector.load %arg4[%c0_13, %c0_14] : memref<896x128xf32, #tpu.memory_space<vmem>>, vector<896x128xf32>
    %cst_15 = arith.constant dense<0.000000e+00> : vector<8x128xf32>
    %16 = tpu.matmul %10, %15, %cst_15 {dimension_numbers = #tpu.dot_dimension_numbers<[1], [0], [0], [1], [0, 0, 1, 1], [], []>, precision = #tpu.contract_precision<fp32>} : vector<8x896xf32>, vector<896x128xf32>, vector<8x128xf32> -> vector<8x128xf32>
    %c0_i32 = arith.constant 0 : i32
    %17 = arith.cmpi eq, %arg1, %c0_i32 : i32
    %18 = arith.extui %17 : i1 to i32
    %c0_i32_16 = arith.constant 0 : i32
    %19 = arith.cmpi ne, %18, %c0_i32_16 : i32
    scf.if %19 {
      %26 = vector.shape_cast %1 : vector<1x128xf32> to vector<1x128xf32>
      %27 = vector.broadcast %26 : vector<1x128xf32> to vector<8x128xf32>
      %c0_23 = arith.constant 0 : index
      %c0_24 = arith.constant 0 : index
      %28 = vector.load %arg11[%c0_23, %c0_24] : memref<8x128xf32, #tpu.memory_space<vmem>>, vector<8x128xf32>
      tpu.vector_store %arg11[%c0_23, %c0_24], %27 {strides = array<i32>} : memref<8x128xf32, #tpu.memory_space<vmem>>, vector<8x128xf32>,
    } else {
    }
    %c0_17 = arith.constant 0 : index
    %c0_18 = arith.constant 0 : index
    %20 = vector.load %arg11[%c0_17, %c0_18] : memref<8x128xf32, #tpu.memory_space<vmem>>, vector<8x128xf32>
    %21 = arith.addf %20, %16 : vector<8x128xf32>
    %c0_19 = arith.constant 0 : index
    %c0_20 = arith.constant 0 : index
    %22 = vector.load %arg11[%c0_19, %c0_20] : memref<8x128xf32, #tpu.memory_space<vmem>>, vector<8x128xf32>
    tpu.vector_store %arg11[%c0_19, %c0_20], %21 {strides = array<i32>} : memref<8x128xf32, #tpu.memory_space<vmem>>, vector<8x128xf32>,
    %c0_i32_21 = arith.constant 0 : i32
    %23 = arith.cmpi eq, %arg1, %c0_i32_21 : i32
    %24 = arith.extui %23 : i1 to i32
    %c0_i32_22 = arith.constant 0 : i32
    %25 = arith.cmpi ne, %24, %c0_i32_22 : i32
    scf.if %25 {
      %c0_23 = arith.constant 0 : index
      %c0_24 = arith.constant 0 : index
      %26 = vector.load %arg11[%c0_23, %c0_24] : memref<8x128xf32, #tpu.memory_space<vmem>>, vector<8x128xf32>
      %c0_25 = arith.constant 0 : index
      %c0_26 = arith.constant 0 : index
      %27 = vector.load %arg7[%c0_25, %c0_26] : memref<8x128xf32, #tpu.memory_space<vmem>>, vector<8x128xf32>
      tpu.vector_store %arg7[%c0_25, %c0_26], %26 {strides = array<i32>} : memref<8x128xf32, #tpu.memory_space<vmem>>, vector<8x128xf32>,
      %28 = arith.subf %26, %0 : vector<8x128xf32>
      %29 = arith.mulf %28, %28 : vector<8x128xf32>
      %cst_27 = arith.constant dense<0.000000e+00> : vector<128xf32>
      %30 = vector.multi_reduction <add>, %29, %cst_27 [0] : vector<8x128xf32> to vector<128xf32>
      %31 = vector.shape_cast %30 : vector<128xf32> to vector<1x128xf32>
      %c0_28 = arith.constant 0 : index
      %c0_29 = arith.constant 0 : index
      %32 = vector.load %arg9[%c0_28, %c0_29] : memref<1x128xf32, #tpu.memory_space<vmem>>, vector<1x128xf32>
      tpu.vector_store %arg9[%c0_28, %c0_29], %31 {strides = array<i32>} : memref<1x128xf32, #tpu.memory_space<vmem>>, vector<1x128xf32>,
    } else {
    }
    return
  }
  func.func @transform_0(%arg0: i32, %arg1: i32) -> (i32, i32) {
    %c0_i32 = arith.constant 0 : i32
    %c0_i32_0 = arith.constant 0 : i32
    return %arg0, %c0_i32 : i32, i32
  }
  func.func @transform_1(%arg0: i32, %arg1: i32) -> (i32, i32) {
    %c0_i32 = arith.constant 0 : i32
    %c0_i32_0 = arith.constant 0 : i32
    return %c0_i32, %arg1 : i32, i32
  }
  func.func @transform_2(%arg0: i32, %arg1: i32) -> (i32, i32) {
    %c0_i32 = arith.constant 0 : i32
    %c0_i32_0 = arith.constant 0 : i32
    return %arg1, %c0_i32 : i32, i32
  }
  func.func @transform_3(%arg0: i32, %arg1: i32) -> (i32, i32) {
    %c0_i32 = arith.constant 0 : i32
    %c0_i32_0 = arith.constant 0 : i32
    return %c0_i32, %arg1 : i32, i32
  }
  func.func @transform_4(%arg0: i32, %arg1: i32) -> (i32, i32) {
    %c0_i32 = arith.constant 0 : i32
    %c0_i32_0 = arith.constant 0 : i32
    %c0_i32_1 = arith.constant 0 : i32
    return %c0_i32, %c0_i32_0 : i32, i32
  }
  func.func @transform_5(%arg0: i32, %arg1: i32) -> (i32, i32) {
    %c0_i32 = arith.constant 0 : i32
    %c0_i32_0 = arith.constant 0 : i32
    return %arg0, %c0_i32 : i32, i32
  }
  func.func @transform_6(%arg0: i32, %arg1: i32) -> (i32, i32) {
    %c0_i32 = arith.constant 0 : i32
    return %arg0, %arg1 : i32, i32
  }
  func.func @transform_7(%arg0: i32, %arg1: i32) -> (i32, i32) {
    %c0_i32 = arith.constant 0 : i32
    %c0_i32_0 = arith.constant 0 : i32
    return %arg0, %c0_i32 : i32, i32
  }
  func.func @transform_8(%arg0: i32, %arg1: i32) -> (i32, i32) {
    %c0_i32 = arith.constant 0 : i32
    return %arg0, %arg1 : i32, i32
  }
}

</mosaic_0001>

<llo_original>
// kernel: tpu_custom_call.1
$region0: #{tpu_custom_call.1}
  #allocation0 [shape = 'u32[]', space=smem, size = 0x4, offset = 0x4, fixed_abs, tag = 'smem constant byte address 0x4 - core index']
  #allocation1 [shape = 'u32[144,128]{1,0:T(1,128)}', space=vmem, size = 0x12000, scoped, tag = 'internal scratch']
  #allocation2 [shape = 'f32[8,128]{1,0:T(8,128)}', space=vmem, size = 0x1000, scoped, tag = 'scratch operand']
  %s0 = inlined_call_operand.hbm [shape: f32[8,128], index: 0, kind: input, shape index: {}]
  %s1 = inlined_call_operand.hbm [shape: f32[128,896], index: 1, kind: input, shape index: {}]
  %s2 = inlined_call_operand.hbm [shape: f32[896,128], index: 2, kind: input, shape index: {}]
  %s3 = inlined_call_operand.vmem [shape: f32[1,896], index: 3, kind: input, shape index: {}]
  %s4 = inlined_call_operand.vmem [shape: f32[1,128], index: 4, kind: input, shape index: {}]
  %s5 = inlined_call_operand.hbm [shape: f32[8,128], index: 5, kind: output, shape index: {0}]
  %s6 = inlined_call_operand.hbm [shape: f32[8,896], index: 6, kind: output, shape index: {1}]
  %s7 = inlined_call_operand.hbm [shape: f32[1,128], index: 7, kind: output, shape index: {2}]
  %s8 = inlined_call_operand.hbm [shape: f32[1,896], index: 8, kind: output, shape index: {3}]
  %9 = xla_tuple %s5, %s6, %s7, %s8
  %s10 = sld [smem:[#allocation0]]
  $region74: #{tpu_custom_call.1} parent=0
    _
  %s12 = ssub.s32 1, %s10
  %s13 = scalar_select 0, %s12, %s10
  $region1: #{tpu_custom_call.1} parent=0
    #allocation3 [shape = 'u8[4096]{0}', space=vmem, size = 0x1000, scoped, tag = 'input window, operand 0, single buffered']
    #allocation4 [shape = 's32[1]{0}', space=sflag, size = 0x4, scoped, tag = 'scoped memory for tpu_custom_call.1']
    #allocation5 [shape = 's32[1]{0}', space=sflag, size = 0x4, scoped, tag = 'scoped memory for tpu_custom_call.1']
    #allocation6 [shape = 'u8[458752]{0}', space=vmem, size = 0x70000, scoped, tag = 'input window, operand 1, single buffered']
    #allocation7 [shape = 's32[1]{0}', space=sflag, size = 0x4, scoped, tag = 'scoped memory for tpu_custom_call.1']
    #allocation8 [shape = 'u8[458752]{0}', space=vmem, size = 0x70000, scoped, tag = 'input window, operand 2, single buffered']
    #allocation9 [shape = 'u8[4096]{0}', space=vmem, size = 0x1000, scoped, tag = 'output window, operand 0, single buffered']
    #allocation10 [shape = 'u8[28672]{0}', space=vmem, size = 0x7000, scoped, tag = 'output window, operand 1, single buffered']
    #allocation11 [shape = 's32[1]{0}', space=sflag, size = 0x4, scoped, tag = 'scoped memory for tpu_custom_call.1']
    #allocation12 [shape = 'u8[512]{0}', space=vmem, size = 0x400, scoped, tag = 'output window, operand 2, single buffered']
    #allocation13 [shape = 'u8[3584]{0}', space=vmem, size = 0x1000, scoped, tag = 'output window, operand 3, single buffered']
    #allocation14 [shape = 's32[1]{0}', space=sflag, size = 0x4, scoped, tag = 'scoped memory for tpu_custom_call.1']
    %14 = vsyncpa [#allocation4], 0
    %15 = vsyncpa [#allocation7], 0
    %16 = vsyncpa [#allocation5], 0
    %17 = vsyncpa [#allocation11], 0
    %18 = vsyncpa [#allocation14], 0
    // Predicated region
    $region2: #{tpu_custom_call.1} parent=1 // pred_check
      _
    $region3: #{tpu_custom_call.1} parent=1 // pred_check_branch
      %20 = sbr.rel (0) target = $region5
    $region4: #{tpu_custom_call.1} parent=1 // pred_region
      %s22 = ssub.s32 128, 128
      %23 = vsyncadd [#allocation4], %s22
      %s25 = sshll.u32 [#allocation3], 4
      %s26 = int_to_ptr.vmem [resolvable:$true] %s25
      %28 = dma.hbm_to_vmem [thread:$0]  %s0, 128, %s26, [#allocation4]
    $region5: #{tpu_custom_call.1} parent=1 // pred_fallthru
      _
    // Predicated region
    $region6: #{tpu_custom_call.1} parent=1 // pred_check
      _
    $region7: #{tpu_custom_call.1} parent=1 // pred_check_branch
      %30 = sbr.rel (0) target = $region9
    $region8: #{tpu_custom_call.1} parent=1 // pred_region
      %s32 = ssub.s32 14336, 14336
      %33 = vsyncadd [#allocation7], %s32
      %s34 = sshll.u32 [#allocation6], 4
      %s35 = int_to_ptr.vmem [resolvable:$true] %s34
      %40 = dma.hbm_to_vmem [thread:$0]  %s1, 14336, %s35, [#allocation7], 896, 896, 56
    $region9: #{tpu_custom_call.1} parent=1 // pred_fallthru
      _
    // Predicated region
    $region10: #{tpu_custom_call.1} parent=1 // pred_check
      _
    $region11: #{tpu_custom_call.1} parent=1 // pred_check_branch
      %42 = sbr.rel (0) target = $region13
    $region12: #{tpu_custom_call.1} parent=1 // pred_region
      %s44 = ssub.s32 14336, 14336
      %45 = vsyncadd [#allocation7], %s44
      %s46 = sshll.u32 [#allocation8], 4
      %s47 = int_to_ptr.vmem [resolvable:$true] %s46
      %52 = dma.hbm_to_vmem [thread:$0]  %s2, 14336, %s47, [#allocation7], 128, 128, 8
    $region13: #{tpu_custom_call.1} parent=1 // pred_fallthru
      _
    // Predicated region
    $region14: #{tpu_custom_call.1} parent=1 // pred_check
      _
    $region15: #{tpu_custom_call.1} parent=1 // pred_check_branch
      %54 = sbr.rel (0) target = $region17
    $region16: #{tpu_custom_call.1} parent=1 // pred_region
      _
    $region17: #{tpu_custom_call.1} parent=1 // pred_fallthru
      _
    // Predicated region
    $region18: #{tpu_custom_call.1} parent=1 // pred_check
      _
    $region19: #{tpu_custom_call.1} parent=1 // pred_check_branch
      %56 = sbr.rel (0) target = $region21
    $region20: #{tpu_custom_call.1} parent=1 // pred_region
      _
    $region21: #{tpu_custom_call.1} parent=1 // pred_fallthru
      _
    // Predicated region
    $region22: #{tpu_custom_call.1} parent=1 // pred_check
      _
    $region23: #{tpu_custom_call.1} parent=1 // pred_check_branch
      %58 = sbr.rel (0) target = $region25
    $region24: #{tpu_custom_call.1} parent=1 // pred_region
      %59 = dma.done [#allocation4], 128
    $region25: #{tpu_custom_call.1} parent=1 // pred_fallthru
      _
    // Predicated region
    $region26: #{tpu_custom_call.1} parent=1 // pred_check
      _
    $region27: #{tpu_custom_call.1} parent=1 // pred_check_branch
      %61 = sbr.rel (0) target = $region29
    $region28: #{tpu_custom_call.1} parent=1 // pred_region
      %62 = dma.done [#allocation7], 14336
    $region29: #{tpu_custom_call.1} parent=1 // pred_fallthru
      _
    // Predicated region
    $region30: #{tpu_custom_call.1} parent=1 // pred_check
      _
    $region31: #{tpu_custom_call.1} parent=1 // pred_check_branch
      %64 = sbr.rel (0) target = $region33
    $region32: #{tpu_custom_call.1} parent=1 // pred_region
      %65 = dma.done [#allocation7], 14336
    $region33: #{tpu_custom_call.1} parent=1 // pred_fallthru
      _
    %v66 = vld [vmem:[#allocation3] sm:$0xff]
    %v67 = vld [vmem:[%s4] sm:$0x1]
    %v69 = vlaneseq
    %v70 = vshrl.u32 %v69, 7
    %v71 = vsub.s32 0, %v70
    %v72 = vrot.slane %v67, %v71
    %v74 = vsub.f32 %v66, %v72
    %v75 = vld [vmem:[#allocation6] sm:$0xff]
    %v76 = vld [vmem:[#allocation6 + $0x8] sm:$0xff]
    %v77 = vld [vmem:[#allocation6 + $0x10] sm:$0xff]
    %v78 = vld [vmem:[#allocation6 + $0x18] sm:$0xff]
    %v79 = vld [vmem:[#allocation6 + $0x20] sm:$0xff]
    %v80 = vld [vmem:[#allocation6 + $0x28] sm:$0xff]
    %v81 = vld [vmem:[#allocation6 + $0x30] sm:$0xff]
    %v82 = vld [vmem:[#allocation6 + $0x38] sm:$0xff]
    %v83 = vld [vmem:[#allocation6 + $0x40] sm:$0xff]
    %v84 = vld [vmem:[#allocation6 + $0x48] sm:$0xff]
    %v85 = vld [vmem:[#allocation6 + $0x50] sm:$0xff]
    %v86 = vld [vmem:[#allocation6 + $0x58] sm:$0xff]
    %v87 = vld [vmem:[#allocation6 + $0x60] sm:$0xff]
    %v88 = vld [vmem:[#allocation6 + $0x68] sm:$0xff]
    %v89 = vld [vmem:[#allocation6 + $0x70] sm:$0xff]
    %v90 = vld [vmem:[#allocation6 + $0x78] sm:$0xff]
    %v91 = vld [vmem:[#allocation6 + $0x80] sm:$0xff]
    %v92 = vld [vmem:[#allocation6 + $0x88] sm:$0xff]
    %v93 = vld [vmem:[#allocation6 + $0x90] sm:$0xff]
    %v94 = vld [vmem:[#allocation6 + $0x98] sm:$0xff]
    %v95 = vld [vmem:[#allocation6 + $0xa0] sm:$0xff]
    %v96 = vld [vmem:[#allocation6 + $0xa8] sm:$0xff]
    %v97 = vld [vmem:[#allocation6 + $0xb0] sm:$0xff]
    %v98 = vld [vmem:[#allocation6 + $0xb8] sm:$0xff]
    %v99 = vld [vmem:[#allocation6 + $0xc0] sm:$0xff]
    %v100 = vld [vmem:[#allocation6 + $0xc8] sm:$0xff]
    %v101 = vld [vmem:[#allocation6 + $0xd0] sm:$0xff]
    %v102 = vld [vmem:[#allocation6 + $0xd8] sm:$0xff]
    %v103 = vld [vmem:[#allocation6 + $0xe0] sm:$0xff]
    %v104 = vld [vmem:[#allocation6 + $0xe8] sm:$0xff]
    %v105 = vld [vmem:[#allocation6 + $0xf0] sm:$0xff]
    %v106 = vld [vmem:[#allocation6 + $0xf8] sm:$0xff]
    %v107 = vld [vmem:[#allocation6 + $0x100] sm:$0xff]
    %v108 = vld [vmem:[#allocation6 + $0x108] sm:$0xff]
    %v109 = vld [vmem:[#allocation6 + $0x110] sm:$0xff]
    %v110 = vld [vmem:[#allocation6 + $0x118] sm:$0xff]
    %v111 = vld [vmem:[#allocation6 + $0x120] sm:$0xff]
    %v112 = vld [vmem:[#allocation6 + $0x128] sm:$0xff]
    %v113 = vld [vmem:[#allocation6 + $0x130] sm:$0xff]
    %v114 = vld [vmem:[#allocation6 + $0x138] sm:$0xff]
    %v115 = vld [vmem:[#allocation6 + $0x140] sm:$0xff]
    %v116 = vld [vmem:[#allocation6 + $0x148] sm:$0xff]
    %v117 = vld [vmem:[#allocation6 + $0x150] sm:$0xff]
    %v118 = vld [vmem:[#allocation6 + $0x158] sm:$0xff]
    %v119 = vld [vmem:[#allocation6 + $0x160] sm:$0xff]
    %v120 = vld [vmem:[#allocation6 + $0x168] sm:$0xff]
    %v121 = vld [vmem:[#allocation6 + $0x170] sm:$0xff]
    %v122 = vld [vmem:[#allocation6 + $0x178] sm:$0xff]
    %v123 = vld [vmem:[#allocation6 + $0x180] sm:$0xff]
    %v124 = vld [vmem:[#allocation6 + $0x188] sm:$0xff]
    %v125 = vld [vmem:[#allocation6 + $0x190] sm:$0xff]
    %v126 = vld [vmem:[#allocation6 + $0x198] sm:$0xff]
    %v127 = vld [vmem:[#allocation6 + $0x1a0] sm:$0xff]
    %v128 = vld [vmem:[#allocation6 + $0x1a8] sm:$0xff]
    %v129 = vld [vmem:[#allocation6 + $0x1b0] sm:$0xff]
    %v130 = vld [vmem:[#allocation6 + $0x1b8] sm:$0xff]
    %v131 = vld [vmem:[#allocation6 + $0x1c0] sm:$0xff]
    %v132 = vld [vmem:[#allocation6 + $0x1c8] sm:$0xff]
    %v133 = vld [vmem:[#allocation6 + $0x1d0] sm:$0xff]
    %v134 = vld [vmem:[#allocation6 + $0x1d8] sm:$0xff]
    %v135 = vld [vmem:[#allocation6 + $0x1e0] sm:$0xff]
    %v136 = vld [vmem:[#allocation6 + $0x1e8] sm:$0xff]
    %v137 = vld [vmem:[#allocation6 + $0x1f0] sm:$0xff]
    %v138 = vld [vmem:[#allocation6 + $0x1f8] sm:$0xff]
    %v139 = vld [vmem:[#allocation6 + $0x200] sm:$0xff]
    %v140 = vld [vmem:[#allocation6 + $0x208] sm:$0xff]
    %v141 = vld [vmem:[#allocation6 + $0x210] sm:$0xff]
    %v142 = vld [vmem:[#allocation6 + $0x218] sm:$0xff]
    %v143 = vld [vmem:[#allocation6 + $0x220] sm:$0xff]
    %v144 = vld [vmem:[#allocation6 + $0x228] sm:$0xff]
    %v145 = vld [vmem:[#allocation6 + $0x230] sm:$0xff]
    %v146 = vld [vmem:[#allocation6 + $0x238] sm:$0xff]
    %v147 = vld [vmem:[#allocation6 + $0x240] sm:$0xff]
    %v148 = vld [vmem:[#allocation6 + $0x248] sm:$0xff]
    %v149 = vld [vmem:[#allocation6 + $0x250] sm:$0xff]
    %v150 = vld [vmem:[#allocation6 + $0x258] sm:$0xff]
    %v151 = vld [vmem:[#allocation6 + $0x260] sm:$0xff]
    %v152 = vld [vmem:[#allocation6 + $0x268] sm:$0xff]
    %v153 = vld [vmem:[#allocation6 + $0x270] sm:$0xff]
    %v154 = vld [vmem:[#allocation6 + $0x278] sm:$0xff]
    %v155 = vld [vmem:[#allocation6 + $0x280] sm:$0xff]
    %v156 = vld [vmem:[#allocation6 + $0x288] sm:$0xff]
    %v157 = vld [vmem:[#allocation6 + $0x290] sm:$0xff]
    %v158 = vld [vmem:[#allocation6 + $0x298] sm:$0xff]
    %v159 = vld [vmem:[#allocation6 + $0x2a0] sm:$0xff]
    %v160 = vld [vmem:[#allocation6 + $0x2a8] sm:$0xff]
    %v161 = vld [vmem:[#allocation6 + $0x2b0] sm:$0xff]
    %v162 = vld [vmem:[#allocation6 + $0x2b8] sm:$0xff]
    %v163 = vld [vmem:[#allocation6 + $0x2c0] sm:$0xff]
    %v164 = vld [vmem:[#allocation6 + $0x2c8] sm:$0xff]
    %v165 = vld [vmem:[#allocation6 + $0x2d0] sm:$0xff]
    %v166 = vld [vmem:[#allocation6 + $0x2d8] sm:$0xff]
    %v167 = vld [vmem:[#allocation6 + $0x2e0] sm:$0xff]
    %v168 = vld [vmem:[#allocation6 + $0x2e8] sm:$0xff]
    %v169 = vld [vmem:[#allocation6 + $0x2f0] sm:$0xff]
    %v170 = vld [vmem:[#allocation6 + $0x2f8] sm:$0xff]
    %v171 = vld [vmem:[#allocation6 + $0x300] sm:$0xff]
    %v172 = vld [vmem:[#allocation6 + $0x308] sm:$0xff]
    %v173 = vld [vmem:[#allocation6 + $0x310] sm:$0xff]
    %v174 = vld [vmem:[#allocation6 + $0x318] sm:$0xff]
    %v175 = vld [vmem:[#allocation6 + $0x320] sm:$0xff]
    %v176 = vld [vmem:[#allocation6 + $0x328] sm:$0xff]
    %v177 = vld [vmem:[#allocation6 + $0x330] sm:$0xff]
    %v178 = vld [vmem:[#allocation6 + $0x338] sm:$0xff]
    %v179 = vld [vmem:[#allocation6 + $0x340] sm:$0xff]
    %v180 = vld [vmem:[#allocation6 + $0x348] sm:$0xff]
    %v181 = vld [vmem:[#allocation6 + $0x350] sm:$0xff]
    %v182 = vld [vmem:[#allocation6 + $0x358] sm:$0xff]
    %v183 = vld [vmem:[#allocation6 + $0x360] sm:$0xff]
    %v184 = vld [vmem:[#allocation6 + $0x368] sm:$0xff]
    %v185 = vld [vmem:[#allocation6 + $0x370] sm:$0xff]
    %v186 = vld [vmem:[#allocation6 + $0x378] sm:$0xff]
    %v187 = vld [vmem:[%s3] sm:$0xff]
    %v189 = vlaneseq
    %v190 = vshrl.u32 %v189, 7
    %v191 = vsub.s32 0, %v190
    %v192 = vrot.slane %v187, %v191
    %v193 = vlaneseq
    %v194 = vshrl.u32 %v193, 7
    %v195 = vsub.s32 1, %v194
    %v196 = vrot.slane %v187, %v195
    %v197 = vlaneseq
    %v198 = vshrl.u32 %v197, 7
    %v199 = vsub.s32 2, %v198
    %v200 = vrot.slane %v187, %v199
    %v201 = vlaneseq
    %v202 = vshrl.u32 %v201, 7
    %v203 = vsub.s32 3, %v202
    %v204 = vrot.slane %v187, %v203
    %v205 = vlaneseq
    %v206 = vshrl.u32 %v205, 7
    %v207 = vsub.s32 4, %v206
    %v208 = vrot.slane %v187, %v207
    %v209 = vlaneseq
    %v210 = vshrl.u32 %v209, 7
    %v211 = vsub.s32 5, %v210
    %v212 = vrot.slane %v187, %v211
    %v213 = vlaneseq
    %v214 = vshrl.u32 %v213, 7
    %v215 = vsub.s32 6, %v214
    %v216 = vrot.slane %v187, %v215
    %v224 = vand.u32 %v76, 4294901760
    %225 = vmatprep.subr.mxu0 %v224
    %v226 = vand.u32 %v75, 4294901760
    %227 = vmatpush1.msra.mxu0 %v226
    %v228 = vand.u32 %v83, 4294901760
    %229 = vmatprep.subr.mxu0 %v228
    %v230 = vand.u32 %v82, 4294901760
    %231 = vmatpush1.msra.mxu0 %v230
    %v232 = vand.u32 %v90, 4294901760
    %233 = vmatprep.subr.mxu0 %v232
    %v234 = vand.u32 %v89, 4294901760
    %235 = vmatpush1.msra.mxu0 %v234
    %v236 = vand.u32 %v97, 4294901760
    %237 = vmatprep.subr.mxu0 %v236
    %v238 = vand.u32 %v96, 4294901760
    %239 = vmatpush1.msra.mxu0 %v238
    %v240 = vand.u32 %v104, 4294901760
    %241 = vmatprep.subr.mxu0 %v240
    %v242 = vand.u32 %v103, 4294901760
    %243 = vmatpush1.msra.mxu0 %v242
    %v244 = vand.u32 %v111, 4294901760
    %245 = vmatprep.subr.mxu0 %v244
    %v246 = vand.u32 %v110, 4294901760
    %247 = vmatpush1.msra.mxu0 %v246
    %v248 = vand.u32 %v118, 4294901760
    %249 = vmatprep.subr.mxu0 %v248
    %v250 = vand.u32 %v117, 4294901760
    %251 = vmatpush1.msra.mxu0 %v250
    %v252 = vand.u32 %v125, 4294901760
    %253 = vmatprep.subr.mxu0 %v252
    %v254 = vand.u32 %v124, 4294901760
    %255 = vmatpush1.msra.mxu0 %v254
    %v256 = vand.u32 %v132, 4294901760
    %257 = vmatprep.subr.mxu0 %v256
    %v258 = vand.u32 %v131, 4294901760
    %259 = vmatpush1.msra.mxu0 %v258
    %v260 = vand.u32 %v139, 4294901760
    %261 = vmatprep.subr.mxu0 %v260
    %v262 = vand.u32 %v138, 4294901760
    %263 = vmatpush1.msra.mxu0 %v262
    %v264 = vand.u32 %v146, 4294901760
    %265 = vmatprep.subr.mxu0 %v264
    %v266 = vand.u32 %v145, 4294901760
    %267 = vmatpush1.msra.mxu0 %v266
    %v268 = vand.u32 %v153, 4294901760
    %269 = vmatprep.subr.mxu0 %v268
    %v270 = vand.u32 %v152, 4294901760
    %271 = vmatpush1.msra.mxu0 %v270
    %v272 = vand.u32 %v160, 4294901760
    %273 = vmatprep.subr.mxu0 %v272
    %v274 = vand.u32 %v159, 4294901760
    %275 = vmatpush1.msra.mxu0 %v274
    %v276 = vand.u32 %v167, 4294901760
    %277 = vmatprep.subr.mxu0 %v276
    %v278 = vand.u32 %v166, 4294901760
    %279 = vmatpush1.msra.mxu0 %v278
    %v280 = vand.u32 %v174, 4294901760
    %281 = vmatprep.subr.mxu0 %v280
    %v282 = vand.u32 %v173, 4294901760
    %283 = vmatpush1.msra.mxu0 %v282
    %v284 = vand.u32 %v181, 4294901760
    %285 = vmatprep.subr.mxu0 %v284
    %v286 = vand.u32 %v180, 4294901760
    %287 = vmatpush1.msra.mxu0 %v286
    %288 = vmatprep.subr.mxu0 0.0
    %289 = vmatpush1.msra.mxu0 0.0
    %290 = vmatprep.subr.mxu0 0.0
    %291 = vmatpush1.msra.mxu0 0.0
    %292 = vmatprep.subr.mxu0 0.0
    %293 = vmatpush1.msra.mxu0 0.0
    %294 = vmatprep.subr.mxu0 0.0
    %295 = vmatpush1.msra.mxu0 0.0
    %296 = vmatprep.subr.mxu0 0.0
    %297 = vmatpush1.msra.mxu0 0.0
    %298 = vmatprep.subr.mxu0 0.0
    %299 = vmatpush1.msra.mxu0 0.0
    %300 = vmatprep.subr.mxu0 0.0
    %301 = vmatpush1.msra.mxu0 0.0
    %302 = vmatprep.subr.mxu0 0.0
    %303 = vmatpush1.msra.mxu0 0.0
    %304 = vmatprep.subr.mxu0 0.0
    %305 = vmatpush1.msra.mxu0 0.0
    %306 = vmatprep.subr.mxu0 0.0
    %307 = vmatpush1.msra.mxu0 0.0
    %308 = vmatprep.subr.mxu0 0.0
    %309 = vmatpush1.msra.mxu0 0.0
    %310 = vmatprep.subr.mxu0 0.0
    %311 = vmatpush1.msra.mxu0 0.0
    %312 = vmatprep.subr.mxu0 0.0
    %313 = vmatpush1.msra.mxu0 0.0
    %314 = vmatprep.subr.mxu0 0.0
    %315 = vmatpush1.msra.mxu0 0.0
    %316 = vmatprep.subr.mxu0 0.0
    %317 = vmatpush1.msra.mxu0 0.0
    %318 = vmatprep.subr.mxu0 0.0
    %319 = vmatpush1.msra.mxu0 0.0
    %320 = vmatprep.mubr.f32.mxu0 0.0
    %v321 = vand.u32 %v74, 4294901760
    %v322 = vsub.f32 %v74, %v321
    %v323 = vand.u32 %v322, 4294901760
    %v324 = vsub.f32 %v322, %v323
    %v325 = vand.u32 %v324, 4294901760
    %326 = vmatmul.mubr.f32.gmra.mrb[0].mxu0 %v325
    %v327 = vpop.f32.mrb[0].mxu0
    %v328 = vadd.f32 %v192, %v327
    %v329 = vpop.f32.mrb[0].mxu0
    %v330 = vadd.f32 %v196, %v329
    %331 = vdwg.mxu0
    %v332 = vand.u32 %v76, 4294901760
    %v333 = vsub.f32 %v76, %v332
    %v334 = vand.u32 %v333, 4294901760
    %v335 = vsub.f32 %v333, %v334
    %v336 = vand.u32 %v335, 4294901760
    %337 = vmatprep.subr.mxu0 %v336
    %v338 = vand.u32 %v75, 4294901760
    %v339 = vsub.f32 %v75, %v338
    %v340 = vand.u32 %v339, 4294901760
    %v341 = vsub.f32 %v339, %v340
    %v342 = vand.u32 %v341, 4294901760
    %343 = vmatpush1.msra.mxu0 %v342
    %v344 = vand.u32 %v83, 4294901760
    %v345 = vsub.f32 %v83, %v344
    %v346 = vand.u32 %v345, 4294901760
    %v347 = vsub.f32 %v345, %v346
    %v348 = vand.u32 %v347, 4294901760
    %349 = vmatprep.subr.mxu0 %v348
    %v350 = vand.u32 %v82, 4294901760
    %v351 = vsub.f32 %v82, %v350
    %v352 = vand.u32 %v351, 4294901760
    %v353 = vsub.f32 %v351, %v352
    %v354 = vand.u32 %v353, 4294901760
    %355 = vmatpush1.msra.mxu0 %v354
    %v356 = vand.u32 %v90, 4294901760
    %v357 = vsub.f32 %v90, %v356
    %v358 = vand.u32 %v357, 4294901760
    %v359 = vsub.f32 %v357, %v358
    %v360 = vand.u32 %v359, 4294901760
    %361 = vmatprep.subr.mxu0 %v360
    %v362 = vand.u32 %v89, 4294901760
    %v363 = vsub.f32 %v89, %v362
    %v364 = vand.u32 %v363, 4294901760
    %v365 = vsub.f32 %v363, %v364
    %v366 = vand.u32 %v365, 4294901760
    %367 = vmatpush1.msra.mxu0 %v366
    %v368 = vand.u32 %v97, 4294901760
    %v369 = vsub.f32 %v97, %v368
    %v370 = vand.u32 %v369, 4294901760
    %v371 = vsub.f32 %v369, %v370
    %v372 = vand.u32 %v371, 4294901760
    %373 = vmatprep.subr.mxu0 %v372
    %v374 = vand.u32 %v96, 4294901760
    %v375 = vsub.f32 %v96, %v374
    %v376 = vand.u32 %v375, 4294901760
    %v377 = vsub.f32 %v375, %v376
    %v378 = vand.u32 %v377, 4294901760
    %379 = vmatpush1.msra.mxu0 %v378
    %v380 = vand.u32 %v104, 4294901760
    %v381 = vsub.f32 %v104, %v380
    %v382 = vand.u32 %v381, 4294901760
    %v383 = vsub.f32 %v381, %v382
    %v384 = vand.u32 %v383, 4294901760
    %385 = vmatprep.subr.mxu0 %v384
    %v386 = vand.u32 %v103, 4294901760
    %v387 = vsub.f32 %v103, %v386
    %v388 = vand.u32 %v387, 4294901760
    %v389 = vsub.f32 %v387, %v388
    %v390 = vand.u32 %v389, 4294901760
    %391 = vmatpush1.msra.mxu0 %v390
    %v392 = vand.u32 %v111, 4294901760
    %v393 = vsub.f32 %v111, %v392
    %v394 = vand.u32 %v393, 4294901760
    %v395 = vsub.f32 %v393, %v394
    %v396 = vand.u32 %v395, 4294901760
    %397 = vmatprep.subr.mxu0 %v396
    %v398 = vand.u32 %v110, 4294901760
    %v399 = vsub.f32 %v110, %v398
    %v400 = vand.u32 %v399, 4294901760
    %v401 = vsub.f32 %v399, %v400
    %v402 = vand.u32 %v401, 4294901760
    %403 = vmatpush1.msra.mxu0 %v402
    %v404 = vand.u32 %v118, 4294901760
    %v405 = vsub.f32 %v118, %v404
    %v406 = vand.u32 %v405, 4294901760
    %v407 = vsub.f32 %v405, %v406
    %v408 = vand.u32 %v407, 4294901760
    %409 = vmatprep.subr.mxu0 %v408
    %v410 = vand.u32 %v117, 4294901760
    %v411 = vsub.f32 %v117, %v410
    %v412 = vand.u32 %v411, 4294901760
    %v413 = vsub.f32 %v411, %v412
    %v414 = vand.u32 %v413, 4294901760
    %415 = vmatpush1.msra.mxu0 %v414
    %v416 = vand.u32 %v125, 4294901760
    %v417 = vsub.f32 %v125, %v416
    %v418 = vand.u32 %v417, 4294901760
    %v419 = vsub.f32 %v417, %v418
    %v420 = vand.u32 %v419, 4294901760
    %421 = vmatprep.subr.mxu0 %v420
    %v422 = vand.u32 %v124, 4294901760
    %v423 = vsub.f32 %v124, %v422
    %v424 = vand.u32 %v423, 4294901760
    %v425 = vsub.f32 %v423, %v424
    %v426 = vand.u32 %v425, 4294901760
    %427 = vmatpush1.msra.mxu0 %v426
    %v428 = vand.u32 %v132, 4294901760
    %v429 = vsub.f32 %v132, %v428
    %v430 = vand.u32 %v429, 4294901760
    %v431 = vsub.f32 %v429, %v430
    %v432 = vand.u32 %v431, 4294901760
    %433 = vmatprep.subr.mxu0 %v432
    %v434 = vand.u32 %v131, 4294901760
    %v435 = vsub.f32 %v131, %v434
    %v436 = vand.u32 %v435, 4294901760
    %v437 = vsub.f32 %v435, %v436
    %v438 = vand.u32 %v437, 4294901760
    %439 = vmatpush1.msra.mxu0 %v438
    %v440 = vand.u32 %v139, 4294901760
    %v441 = vsub.f32 %v139, %v440
    %v442 = vand.u32 %v441, 4294901760
    %v443 = vsub.f32 %v441, %v442
    %v444 = vand.u32 %v443, 4294901760
    %445 = vmatprep.subr.mxu0 %v444
    %v446 = vand.u32 %v138, 4294901760
    %v447 = vsub.f32 %v138, %v446
    %v448 = vand.u32 %v447, 4294901760
    %v449 = vsub.f32 %v447, %v448
    %v450 = vand.u32 %v449, 4294901760
    %451 = vmatpush1.msra.mxu0 %v450
    %v452 = vand.u32 %v146, 4294901760
    %v453 = vsub.f32 %v146, %v452
    %v454 = vand.u32 %v453, 4294901760
    %v455 = vsub.f32 %v453, %v454
    %v456 = vand.u32 %v455, 4294901760
    %457 = vmatprep.subr.mxu0 %v456
    %v458 = vand.u32 %v145, 4294901760
    %v459 = vsub.f32 %v145, %v458
    %v460 = vand.u32 %v459, 4294901760
    %v461 = vsub.f32 %v459, %v460
    %v462 = vand.u32 %v461, 4294901760
    %463 = vmatpush1.msra.mxu0 %v462
    %v464 = vand.u32 %v153, 4294901760
    %v465 = vsub.f32 %v153, %v464
    %v466 = vand.u32 %v465, 4294901760
    %v467 = vsub.f32 %v465, %v466
    %v468 = vand.u32 %v467, 4294901760
    %469 = vmatprep.subr.mxu0 %v468
    %v470 = vand.u32 %v152, 4294901760
    %v471 = vsub.f32 %v152, %v470
    %v472 = vand.u32 %v471, 4294901760
    %v473 = vsub.f32 %v471, %v472
    %v474 = vand.u32 %v473, 4294901760
    %475 = vmatpush1.msra.mxu0 %v474
    %v476 = vand.u32 %v160, 4294901760
    %v477 = vsub.f32 %v160, %v476
    %v478 = vand.u32 %v477, 4294901760
    %v479 = vsub.f32 %v477, %v478
    %v480 = vand.u32 %v479, 4294901760
    %481 = vmatprep.subr.mxu0 %v480
    %v482 = vand.u32 %v159, 4294901760
    %v483 = vsub.f32 %v159, %v482
    %v484 = vand.u32 %v483, 4294901760
    %v485 = vsub.f32 %v483, %v484
    %v486 = vand.u32 %v485, 4294901760
    %487 = vmatpush1.msra.mxu0 %v486
    %v488 = vand.u32 %v167, 4294901760
    %v489 = vsub.f32 %v167, %v488
    %v490 = vand.u32 %v489, 4294901760
    %v491 = vsub.f32 %v489, %v490
    %v492 = vand.u32 %v491, 4294901760
    %493 = vmatprep.subr.mxu0 %v492
    %v494 = vand.u32 %v166, 4294901760
    %v495 = vsub.f32 %v166, %v494
    %v496 = vand.u32 %v495, 4294901760
    %v497 = vsub.f32 %v495, %v496
    %v498 = vand.u32 %v497, 4294901760
    %499 = vmatpush1.msra.mxu0 %v498
    %v500 = vand.u32 %v174, 4294901760
    %v501 = vsub.f32 %v174, %v500
    %v502 = vand.u32 %v501, 4294901760
    %v503 = vsub.f32 %v501, %v502
    %v504 = vand.u32 %v503, 4294901760
    %505 = vmatprep.subr.mxu0 %v504
    %v506 = vand.u32 %v173, 4294901760
    %v507 = vsub.f32 %v173, %v506
    %v508 = vand.u32 %v507, 4294901760
    %v509 = vsub.f32 %v507, %v508
    %v510 = vand.u32 %v509, 4294901760
    %511 = vmatpush1.msra.mxu0 %v510
    %v512 = vand.u32 %v181, 4294901760
    %v513 = vsub.f32 %v181, %v512
    %v514 = vand.u32 %v513, 4294901760
    %v515 = vsub.f32 %v513, %v514
    %v516 = vand.u32 %v515, 4294901760
    %517 = vmatprep.subr.mxu0 %v516
    %v518 = vand.u32 %v180, 4294901760
    %v519 = vsub.f32 %v180, %v518
    %v520 = vand.u32 %v519, 4294901760
    %v521 = vsub.f32 %v519, %v520
    %v522 = vand.u32 %v521, 4294901760
    %523 = vmatpush1.msra.mxu0 %v522
    %524 = vmatprep.subr.mxu0 0.0
    %525 = vmatpush1.msra.mxu0 0.0
    %526 = vmatprep.subr.mxu0 0.0
    %527 = vmatpush1.msra.mxu0 0.0
    %528 = vmatprep.subr.mxu0 0.0
    %529 = vmatpush1.msra.mxu0 0.0
    %530 = vmatprep.subr.mxu0 0.0
    %531 = vmatpush1.msra.mxu0 0.0
    %532 = vmatprep.subr.mxu0 0.0
    %533 = vmatpush1.msra.mxu0 0.0
    %534 = vmatprep.subr.mxu0 0.0
    %535 = vmatpush1.msra.mxu0 0.0
    %536 = vmatprep.subr.mxu0 0.0
    %537 = vmatpush1.msra.mxu0 0.0
    %538 = vmatprep.subr.mxu0 0.0
    %539 = vmatpush1.msra.mxu0 0.0
    %540 = vmatprep.subr.mxu0 0.0
    %541 = vmatpush1.msra.mxu0 0.0
    %542 = vmatprep.subr.mxu0 0.0
    %543 = vmatpush1.msra.mxu0 0.0
    %544 = vmatprep.subr.mxu0 0.0
    %545 = vmatpush1.msra.mxu0 0.0
    %546 = vmatprep.subr.mxu0 0.0
    %547 = vmatpush1.msra.mxu0 0.0
    %548 = vmatprep.subr.mxu0 0.0
    %549 = vmatpush1.msra.mxu0 0.0
    %550 = vmatprep.subr.mxu0 0.0
    %551 = vmatpush1.msra.mxu0 0.0
    %552 = vmatprep.subr.mxu0 0.0
    %553 = vmatpush1.msra.mxu0 0.0
    %554 = vmatprep.subr.mxu0 0.0
    %555 = vmatpush1.msra.mxu0 0.0
    %556 = vmatprep.mubr.f32.mxu0 0.0
    %v557 = vand.u32 %v74, 4294901760
    %558 = vmatmul.mubr.f32.gmra.mrb[0].mxu0 %v557
    %v559 = vpop.f32.mrb[0].mxu0
    %v560 = vadd.f32 %v328, %v559
    %v561 = vpop.f32.mrb[0].mxu0
    %v562 = vadd.f32 %v330, %v561
    %563 = vdwg.mxu0
    %v564 = vand.u32 %v76, 4294901760
    %v565 = vsub.f32 %v76, %v564
    %566 = vmatprep.subr.mxu0 %v565
    %v567 = vand.u32 %v75, 4294901760
    %v568 = vsub.f32 %v75, %v567
    %569 = vmatpush1.msra.mxu0 %v568
    %v570 = vand.u32 %v83, 4294901760
    %v571 = vsub.f32 %v83, %v570
    %572 = vmatprep.subr.mxu0 %v571
    %v573 = vand.u32 %v82, 4294901760
    %v574 = vsub.f32 %v82, %v573
    %575 = vmatpush1.msra.mxu0 %v574
    %v576 = vand.u32 %v90, 4294901760
    %v577 = vsub.f32 %v90, %v576
    %578 = vmatprep.subr.mxu0 %v577
    %v579 = vand.u32 %v89, 4294901760
    %v580 = vsub.f32 %v89, %v579
    %581 = vmatpush1.msra.mxu0 %v580
    %v582 = vand.u32 %v97, 4294901760
    %v583 = vsub.f32 %v97, %v582
    %584 = vmatprep.subr.mxu0 %v583
    %v585 = vand.u32 %v96, 4294901760
    %v586 = vsub.f32 %v96, %v585
    %587 = vmatpush1.msra.mxu0 %v586
    %v588 = vand.u32 %v104, 4294901760
    %v589 = vsub.f32 %v104, %v588
    %590 = vmatprep.subr.mxu0 %v589
    %v591 = vand.u32 %v103, 4294901760
    %v592 = vsub.f32 %v103, %v591
    %593 = vmatpush1.msra.mxu0 %v592
    %v594 = vand.u32 %v111, 4294901760
    %v595 = vsub.f32 %v111, %v594
    %596 = vmatprep.subr.mxu0 %v595
    %v597 = vand.u32 %v110, 4294901760
    %v598 = vsub.f32 %v110, %v597
    %599 = vmatpush1.msra.mxu0 %v598
    %v600 = vand.u32 %v118, 4294901760
    %v601 = vsub.f32 %v118, %v600
    %602 = vmatprep.subr.mxu0 %v601
    %v603 = vand.u32 %v117, 4294901760
    %v604 = vsub.f32 %v117, %v603
    %605 = vmatpush1.msra.mxu0 %v604
    %v606 = vand.u32 %v125, 4294901760
    %v607 = vsub.f32 %v125, %v606
    %608 = vmatprep.subr.mxu0 %v607
    %v609 = vand.u32 %v124, 4294901760
    %v610 = vsub.f32 %v124, %v609
    %611 = vmatpush1.msra.mxu0 %v610
    %v612 = vand.u32 %v132, 4294901760
    %v613 = vsub.f32 %v132, %v612
    %614 = vmatprep.subr.mxu0 %v613
    %v615 = vand.u32 %v131, 4294901760
    %v616 = vsub.f32 %v131, %v615
    %617 = vmatpush1.msra.mxu0 %v616
    %v618 = vand.u32 %v139, 4294901760
    %v619 = vsub.f32 %v139, %v618
    %620 = vmatprep.subr.mxu0 %v619
    %v621 = vand.u32 %v138, 4294901760
    %v622 = vsub.f32 %v138, %v621
    %623 = vmatpush1.msra.mxu0 %v622
    %v624 = vand.u32 %v146, 4294901760
    %v625 = vsub.f32 %v146, %v624
    %626 = vmatprep.subr.mxu0 %v625
    %v627 = vand.u32 %v145, 4294901760
    %v628 = vsub.f32 %v145, %v627
    %629 = vmatpush1.msra.mxu0 %v628
    %v630 = vand.u32 %v153, 4294901760
    %v631 = vsub.f32 %v153, %v630
    %632 = vmatprep.subr.mxu0 %v631
    %v633 = vand.u32 %v152, 4294901760
    %v634 = vsub.f32 %v152, %v633
    %635 = vmatpush1.msra.mxu0 %v634
    %v636 = vand.u32 %v160, 4294901760
    %v637 = vsub.f32 %v160, %v636
    %638 = vmatprep.subr.mxu0 %v637
    %v639 = vand.u32 %v159, 4294901760
    %v640 = vsub.f32 %v159, %v639
    %641 = vmatpush1.msra.mxu0 %v640
    %v642 = vand.u32 %v167, 4294901760
    %v643 = vsub.f32 %v167, %v642
    %644 = vmatprep.subr.mxu0 %v643
    %v645 = vand.u32 %v166, 4294901760
    %v646 = vsub.f32 %v166, %v645
    %647 = vmatpush1.msra.mxu0 %v646
    %v648 = vand.u32 %v174, 4294901760
    %v649 = vsub.f32 %v174, %v648
    %650 = vmatprep.subr.mxu0 %v649
    %v651 = vand.u32 %v173, 4294901760
    %v652 = vsub.f32 %v173, %v651
    %653 = vmatpush1.msra.mxu0 %v652
    %v654 = vand.u32 %v181, 4294901760
    %v655 = vsub.f32 %v181, %v654
    %656 = vmatprep.subr.mxu0 %v655
    %v657 = vand.u32 %v180, 4294901760
    %v658 = vsub.f32 %v180, %v657
    %659 = vmatpush1.msra.mxu0 %v658
    %660 = vmatprep.subr.mxu0 0.0
    %661 = vmatpush1.msra.mxu0 0.0
    %662 = vmatprep.subr.mxu0 0.0
    %663 = vmatpush1.msra.mxu0 0.0
    %664 = vmatprep.subr.mxu0 0.0
    %665 = vmatpush1.msra.mxu0 0.0
    %666 = vmatprep.subr.mxu0 0.0
    %667 = vmatpush1.msra.mxu0 0.0
    %668 = vmatprep.subr.mxu0 0.0
    %669 = vmatpush1.msra.mxu0 0.0
    %670 = vmatprep.subr.mxu0 0.0
    %671 = vmatpush1.msra.mxu0 0.0
    %672 = vmatprep.subr.mxu0 0.0
    %673 = vmatpush1.msra.mxu0 0.0
    %674 = vmatprep.subr.mxu0 0.0
    %675 = vmatpush1.msra.mxu0 0.0
    %676 = vmatprep.subr.mxu0 0.0
    %677 = vmatpush1.msra.mxu0 0.0
    %678 = vmatprep.subr.mxu0 0.0
    %679 = vmatpush1.msra.mxu0 0.0
    %680 = vmatprep.subr.mxu0 0.0
    %681 = vmatpush1.msra.mxu0 0.0
    %682 = vmatprep.subr.mxu0 0.0
    %683 = vmatpush1.msra.mxu0 0.0
    %684 = vmatprep.subr.mxu0 0.0
    %685 = vmatpush1.msra.mxu0 0.0
    %686 = vmatprep.subr.mxu0 0.0
    %687 = vmatpush1.msra.mxu0 0.0
    %688 = vmatprep.subr.mxu0 0.0
    %689 = vmatpush1.msra.mxu0 0.0
    %690 = vmatprep.subr.mxu0 0.0
    %691 = vmatpush1.msra.mxu0 0.0
    %692 = vmatprep.mubr.f32.mxu0 0.0
    %v693 = vand.u32 %v74, 4294901760
    %v694 = vsub.f32 %v74, %v693
    %695 = vmatmul.mubr.f32.gmra.mrb[0].mxu0 %v694
    %v696 = vpop.f32.mrb[0].mxu0
    %v697 = vadd.f32 %v560, %v696
    %v698 = vpop.f32.mrb[0].mxu0
    %v699 = vadd.f32 %v562, %v698
    %700 = vdwg.mxu0
    %v701 = vand.u32 %v76, 4294901760
    %702 = vmatprep.subr.mxu0 %v701
    %v703 = vand.u32 %v75, 4294901760
    %704 = vmatpush1.msra.mxu0 %v703
    %v705 = vand.u32 %v83, 4294901760
    %706 = vmatprep.subr.mxu0 %v705
    %v707 = vand.u32 %v82, 4294901760
    %708 = vmatpush1.msra.mxu0 %v707
    %v709 = vand.u32 %v90, 4294901760
    %710 = vmatprep.subr.mxu0 %v709
    %v711 = vand.u32 %v89, 4294901760
    %712 = vmatpush1.msra.mxu0 %v711
    %v713 = vand.u32 %v97, 4294901760
    %714 = vmatprep.subr.mxu0 %v713
    %v715 = vand.u32 %v96, 4294901760
    %716 = vmatpush1.msra.mxu0 %v715
    %v717 = vand.u32 %v104, 4294901760
    %718 = vmatprep.subr.mxu0 %v717
    %v719 = vand.u32 %v103, 4294901760
    %720 = vmatpush1.msra.mxu0 %v719
    %v721 = vand.u32 %v111, 4294901760
    %722 = vmatprep.subr.mxu0 %v721
    %v723 = vand.u32 %v110, 4294901760
    %724 = vmatpush1.msra.mxu0 %v723
    %v725 = vand.u32 %v118, 4294901760
    %726 = vmatprep.subr.mxu0 %v725
    %v727 = vand.u32 %v117, 4294901760
    %728 = vmatpush1.msra.mxu0 %v727
    %v729 = vand.u32 %v125, 4294901760
    %730 = vmatprep.subr.mxu0 %v729
    %v731 = vand.u32 %v124, 4294901760
    %732 = vmatpush1.msra.mxu0 %v731
    %v733 = vand.u32 %v132, 4294901760
    %734 = vmatprep.subr.mxu0 %v733
    %v735 = vand.u32 %v131, 4294901760
    %736 = vmatpush1.msra.mxu0 %v735
    %v737 = vand.u32 %v139, 4294901760
    %738 = vmatprep.subr.mxu0 %v737
    %v739 = vand.u32 %v138, 4294901760
    %740 = vmatpush1.msra.mxu0 %v739
    %v741 = vand.u32 %v146, 4294901760
    %742 = vmatprep.subr.mxu0 %v741
    %v743 = vand.u32 %v145, 4294901760
    %744 = vmatpush1.msra.mxu0 %v743
    %v745 = vand.u32 %v153, 4294901760
    %746 = vmatprep.subr.mxu0 %v745
    %v747 = vand.u32 %v152, 4294901760
    %748 = vmatpush1.msra.mxu0 %v747
    %v749 = vand.u32 %v160, 4294901760
    %750 = vmatprep.subr.mxu0 %v749
    %v751 = vand.u32 %v159, 4294901760
    %752 = vmatpush1.msra.mxu0 %v751
    %v753 = vand.u32 %v167, 4294901760
    %754 = vmatprep.subr.mxu0 %v753
    %v755 = vand.u32 %v166, 4294901760
    %756 = vmatpush1.msra.mxu0 %v755
    %v757 = vand.u32 %v174, 4294901760
    %758 = vmatprep.subr.mxu0 %v757
    %v759 = vand.u32 %v173, 4294901760
    %760 = vmatpush1.msra.mxu0 %v759
    %v761 = vand.u32 %v181, 4294901760
    %762 = vmatprep.subr.mxu0 %v761
    %v763 = vand.u32 %v180, 4294901760
    %764 = vmatpush1.msra.mxu0 %v763
    %765 = vmatprep.subr.mxu0 0.0
    %766 = vmatpush1.msra.mxu0 0.0
    %767 = vmatprep.subr.mxu0 0.0
    %768 = vmatpush1.msra.mxu0 0.0
    %769 = vmatprep.subr.mxu0 0.0
    %770 = vmatpush1.msra.mxu0 0.0
    %771 = vmatprep.subr.mxu0 0.0
    %772 = vmatpush1.msra.mxu0 0.0
    %773 = vmatprep.subr.mxu0 0.0
    %774 = vmatpush1.msra.mxu0 0.0
    %775 = vmatprep.subr.mxu0 0.0
    %776 = vmatpush1.msra.mxu0 0.0
    %777 = vmatprep.subr.mxu0 0.0
    %778 = vmatpush1.msra.mxu0 0.0
    %779 = vmatprep.subr.mxu0 0.0
    %780 = vmatpush1.msra.mxu0 0.0
    %781 = vmatprep.subr.mxu0 0.0
    %782 = vmatpush1.msra.mxu0 0.0
    %783 = vmatprep.subr.mxu0 0.0
    %784 = vmatpush1.msra.mxu0 0.0
    %785 = vmatprep.subr.mxu0 0.0
    %786 = vmatpush1.msra.mxu0 0.0
    %787 = vmatprep.subr.mxu0 0.0
    %788 = vmatpush1.msra.mxu0 0.0
    %789 = vmatprep.subr.mxu0 0.0
    %790 = vmatpush1.msra.mxu0 0.0
    %791 = vmatprep.subr.mxu0 0.0
    %792 = vmatpush1.msra.mxu0 0.0
    %793 = vmatprep.subr.mxu0 0.0
    %794 = vmatpush1.msra.mxu0 0.0
    %795 = vmatprep.subr.mxu0 0.0
    %796 = vmatpush1.msra.mxu0 0.0
    %797 = vmatprep.mubr.f32.mxu0 0.0
    %v798 = vand.u32 %v74, 4294901760
    %v799 = vsub.f32 %v74, %v798
    %v800 = vand.u32 %v799, 4294901760
    %801 = vmatmul.mubr.f32.gmra.mrb[0].mxu0 %v800
    %v802 = vpop.f32.mrb[0].mxu0
    %v803 = vadd.f32 %v697, %v802
    %v804 = vpop.f32.mrb[0].mxu0
    %v805 = vadd.f32 %v699, %v804
    %806 = vdwg.mxu0
    %v807 = vand.u32 %v76, 4294901760
    %v808 = vsub.f32 %v76, %v807
    %v809 = vand.u32 %v808, 4294901760
    %810 = vmatprep.subr.mxu0 %v809
    %v811 = vand.u32 %v75, 4294901760
    %v812 = vsub.f32 %v75, %v811
    %v813 = vand.u32 %v812, 4294901760
    %814 = vmatpush1.msra.mxu0 %v813
    %v815 = vand.u32 %v83, 4294901760
    %v816 = vsub.f32 %v83, %v815
    %v817 = vand.u32 %v816, 4294901760
    %818 = vmatprep.subr.mxu0 %v817
    %v819 = vand.u32 %v82, 4294901760
    %v820 = vsub.f32 %v82, %v819
    %v821 = vand.u32 %v820, 4294901760
    %822 = vmatpush1.msra.mxu0 %v821
    %v823 = vand.u32 %v90, 4294901760
    %v824 = vsub.f32 %v90, %v823
    %v825 = vand.u32 %v824, 4294901760
    %826 = vmatprep.subr.mxu0 %v825
    %v827 = vand.u32 %v89, 4294901760
    %v828 = vsub.f32 %v89, %v827
    %v829 = vand.u32 %v828, 4294901760
    %830 = vmatpush1.msra.mxu0 %v829
    %v831 = vand.u32 %v97, 4294901760
    %v832 = vsub.f32 %v97, %v831
    %v833 = vand.u32 %v832, 4294901760
    %834 = vmatprep.subr.mxu0 %v833
    %v835 = vand.u32 %v96, 4294901760
    %v836 = vsub.f32 %v96, %v835
    %v837 = vand.u32 %v836, 4294901760
    %838 = vmatpush1.msra.mxu0 %v837
    %v839 = vand.u32 %v104, 4294901760
    %v840 = vsub.f32 %v104, %v839
    %v841 = vand.u32 %v840, 4294901760
    %842 = vmatprep.subr.mxu0 %v841
    %v843 = vand.u32 %v103, 4294901760
    %v844 = vsub.f32 %v103, %v843
    %v845 = vand.u32 %v844, 4294901760
    %846 = vmatpush1.msra.mxu0 %v845
    %v847 = vand.u32 %v111, 4294901760
    %v848 = vsub.f32 %v111, %v847
    %v849 = vand.u32 %v848, 4294901760
    %850 = vmatprep.subr.mxu0 %v849
    %v851 = vand.u32 %v110, 4294901760
    %v852 = vsub.f32 %v110, %v851
    %v853 = vand.u32 %v852, 4294901760
    %854 = vmatpush1.msra.mxu0 %v853
    %v855 = vand.u32 %v118, 4294901760
    %v856 = vsub.f32 %v118, %v855
    %v857 = vand.u32 %v856, 4294901760
    %858 = vmatprep.subr.mxu0 %v857
    %v859 = vand.u32 %v117, 4294901760
    %v860 = vsub.f32 %v117, %v859
    %v861 = vand.u32 %v860, 4294901760
    %862 = vmatpush1.msra.mxu0 %v861
    %v863 = vand.u32 %v125, 4294901760
    %v864 = vsub.f32 %v125, %v863
    %v865 = vand.u32 %v864, 4294901760
    %866 = vmatprep.subr.mxu0 %v865
    %v867 = vand.u32 %v124, 4294901760
    %v868 = vsub.f32 %v124, %v867
    %v869 = vand.u32 %v868, 4294901760
    %870 = vmatpush1.msra.mxu0 %v869
    %v871 = vand.u32 %v132, 4294901760
    %v872 = vsub.f32 %v132, %v871
    %v873 = vand.u32 %v872, 4294901760
    %874 = vmatprep.subr.mxu0 %v873
    %v875 = vand.u32 %v131, 4294901760
    %v876 = vsub.f32 %v131, %v875
    %v877 = vand.u32 %v876, 4294901760
    %878 = vmatpush1.msra.mxu0 %v877
    %v879 = vand.u32 %v139, 4294901760
    %v880 = vsub.f32 %v139, %v879
    %v881 = vand.u32 %v880, 4294901760
    %882 = vmatprep.subr.mxu0 %v881
    %v883 = vand.u32 %v138, 4294901760
    %v884 = vsub.f32 %v138, %v883
    %v885 = vand.u32 %v884, 4294901760
    %886 = vmatpush1.msra.mxu0 %v885
    %v887 = vand.u32 %v146, 4294901760
    %v888 = vsub.f32 %v146, %v887
    %v889 = vand.u32 %v888, 4294901760
    %890 = vmatprep.subr.mxu0 %v889
    %v891 = vand.u32 %v145, 4294901760
    %v892 = vsub.f32 %v145, %v891
    %v893 = vand.u32 %v892, 4294901760
    %894 = vmatpush1.msra.mxu0 %v893
    %v895 = vand.u32 %v153, 4294901760
    %v896 = vsub.f32 %v153, %v895
    %v897 = vand.u32 %v896, 4294901760
    %898 = vmatprep.subr.mxu0 %v897
    %v899 = vand.u32 %v152, 4294901760
    %v900 = vsub.f32 %v152, %v899
    %v901 = vand.u32 %v900, 4294901760
    %902 = vmatpush1.msra.mxu0 %v901
    %v903 = vand.u32 %v160, 4294901760
    %v904 = vsub.f32 %v160, %v903
    %v905 = vand.u32 %v904, 4294901760
    %906 = vmatprep.subr.mxu0 %v905
    %v907 = vand.u32 %v159, 4294901760
    %v908 = vsub.f32 %v159, %v907
    %v909 = vand.u32 %v908, 4294901760
    %910 = vmatpush1.msra.mxu0 %v909
    %v911 = vand.u32 %v167, 4294901760
    %v912 = vsub.f32 %v167, %v911
    %v913 = vand.u32 %v912, 4294901760
    %914 = vmatprep.subr.mxu0 %v913
    %v915 = vand.u32 %v166, 4294901760
    %v916 = vsub.f32 %v166, %v915
    %v917 = vand.u32 %v916, 4294901760
    %918 = vmatpush1.msra.mxu0 %v917
    %v919 = vand.u32 %v174, 4294901760
    %v920 = vsub.f32 %v174, %v919
    %v921 = vand.u32 %v920, 4294901760
    %922 = vmatprep.subr.mxu0 %v921
    %v923 = vand.u32 %v173, 4294901760
    %v924 = vsub.f32 %v173, %v923
    %v925 = vand.u32 %v924, 4294901760
    %926 = vmatpush1.msra.mxu0 %v925
    %v927 = vand.u32 %v181, 4294901760
    %v928 = vsub.f32 %v181, %v927
    %v929 = vand.u32 %v928, 4294901760
    %930 = vmatprep.subr.mxu0 %v929
    %v931 = vand.u32 %v180, 4294901760
    %v932 = vsub.f32 %v180, %v931
    %v933 = vand.u32 %v932, 4294901760
    %934 = vmatpush1.msra.mxu0 %v933
    %935 = vmatprep.subr.mxu0 0.0
    %936 = vmatpush1.msra.mxu0 0.0
    %937 = vmatprep.subr.mxu0 0.0
    %938 = vmatpush1.msra.mxu0 0.0
    %939 = vmatprep.subr.mxu0 0.0
    %940 = vmatpush1.msra.mxu0 0.0
    %941 = vmatprep.subr.mxu0 0.0
    %942 = vmatpush1.msra.mxu0 0.0
    %943 = vmatprep.subr.mxu0 0.0
    %944 = vmatpush1.msra.mxu0 0.0
    %945 = vmatprep.subr.mxu0 0.0
    %946 = vmatpush1.msra.mxu0 0.0
    %947 = vmatprep.subr.mxu0 0.0
    %948 = vmatpush1.msra.mxu0 0.0
    %949 = vmatprep.subr.mxu0 0.0
    %950 = vmatpush1.msra.mxu0 0.0
    %951 = vmatprep.subr.mxu0 0.0
    %952 = vmatpush1.msra.mxu0 0.0
    %953 = vmatprep.subr.mxu0 0.0
    %954 = vmatpush1.msra.mxu0 0.0
    %955 = vmatprep.subr.mxu0 0.0
    %956 = vmatpush1.msra.mxu0 0.0
    %957 = vmatprep.subr.mxu0 0.0
    %958 = vmatpush1.msra.mxu0 0.0
    %959 = vmatprep.subr.mxu0 0.0
    %960 = vmatpush1.msra.mxu0 0.0
    %961 = vmatprep.subr.mxu0 0.0
    %962 = vmatpush1.msra.mxu0 0.0
    %963 = vmatprep.subr.mxu0 0.0
    %964 = vmatpush1.msra.mxu0 0.0
    %965 = vmatprep.subr.mxu0 0.0
    %966 = vmatpush1.msra.mxu0 0.0
    %967 = vmatprep.mubr.f32.mxu0 0.0
    %v968 = vand.u32 %v74, 4294901760
    %969 = vmatmul.mubr.f32.gmra.mrb[0].mxu0 %v968
    %v970 = vpop.f32.mrb[0].mxu0
    %v971 = vadd.f32 %v803, %v970
    %v972 = vpop.f32.mrb[0].mxu0
    %v973 = vadd.f32 %v805, %v972
    %974 = vdwg.mxu0
    %v975 = vand.u32 %v76, 4294901760
    %976 = vmatprep.subr.mxu0 %v975
    %v977 = vand.u32 %v75, 4294901760
    %978 = vmatpush1.msra.mxu0 %v977
    %v979 = vand.u32 %v83, 4294901760
    %980 = vmatprep.subr.mxu0 %v979
    %v981 = vand.u32 %v82, 4294901760
    %982 = vmatpush1.msra.mxu0 %v981
    %v983 = vand.u32 %v90, 4294901760
    %984 = vmatprep.subr.mxu0 %v983
    %v985 = vand.u32 %v89, 4294901760
    %986 = vmatpush1.msra.mxu0 %v985
    %v987 = vand.u32 %v97, 4294901760
    %988 = vmatprep.subr.mxu0 %v987
    %v989 = vand.u32 %v96, 4294901760
    %990 = vmatpush1.msra.mxu0 %v989
    %v991 = vand.u32 %v104, 4294901760
    %992 = vmatprep.subr.mxu0 %v991
    %v993 = vand.u32 %v103, 4294901760
    %994 = vmatpush1.msra.mxu0 %v993
    %v995 = vand.u32 %v111, 4294901760
    %996 = vmatprep.subr.mxu0 %v995
    %v997 = vand.u32 %v110, 4294901760
    %998 = vmatpush1.msra.mxu0 %v997
    %v999 = vand.u32 %v118, 4294901760
    %1000 = vmatprep.subr.mxu0 %v999
    %v1001 = vand.u32 %v117, 4294901760
    %1002 = vmatpush1.msra.mxu0 %v1001
    %v1003 = vand.u32 %v125, 4294901760
    %1004 = vmatprep.subr.mxu0 %v1003
    %v1005 = vand.u32 %v124, 4294901760
    %1006 = vmatpush1.msra.mxu0 %v1005
    %v1007 = vand.u32 %v132, 4294901760
    %1008 = vmatprep.subr.mxu0 %v1007
    %v1009 = vand.u32 %v131, 4294901760
    %1010 = vmatpush1.msra.mxu0 %v1009
    %v1011 = vand.u32 %v139, 4294901760
    %1012 = vmatprep.subr.mxu0 %v1011
    %v1013 = vand.u32 %v138, 4294901760
    %1014 = vmatpush1.msra.mxu0 %v1013
    %v1015 = vand.u32 %v146, 4294901760
    %1016 = vmatprep.subr.mxu0 %v1015
    %v1017 = vand.u32 %v145, 4294901760
    %1018 = vmatpush1.msra.mxu0 %v1017
    %v1019 = vand.u32 %v153, 4294901760
    %1020 = vmatprep.subr.mxu0 %v1019
    %v1021 = vand.u32 %v152, 4294901760
    %1022 = vmatpush1.msra.mxu0 %v1021
    %v1023 = vand.u32 %v160, 4294901760
    %1024 = vmatprep.subr.mxu0 %v1023
    %v1025 = vand.u32 %v159, 4294901760
    %1026 = vmatpush1.msra.mxu0 %v1025
    %v1027 = vand.u32 %v167, 4294901760
    %1028 = vmatprep.subr.mxu0 %v1027
    %v1029 = vand.u32 %v166, 4294901760
    %1030 = vmatpush1.msra.mxu0 %v1029
    %v1031 = vand.u32 %v174, 4294901760
    %1032 = vmatprep.subr.mxu0 %v1031
    %v1033 = vand.u32 %v173, 4294901760
    %1034 = vmatpush1.msra.mxu0 %v1033
    %v1035 = vand.u32 %v181, 4294901760
    %1036 = vmatprep.subr.mxu0 %v1035
    %v1037 = vand.u32 %v180, 4294901760
    %1038 = vmatpush1.msra.mxu0 %v1037
    %1039 = vmatprep.subr.mxu0 0.0
    %1040 = vmatpush1.msra.mxu0 0.0
    %1041 = vmatprep.subr.mxu0 0.0
    %1042 = vmatpush1.msra.mxu0 0.0
    %1043 = vmatprep.subr.mxu0 0.0
    %1044 = vmatpush1.msra.mxu0 0.0
    %1045 = vmatprep.subr.mxu0 0.0
    %1046 = vmatpush1.msra.mxu0 0.0
    %1047 = vmatprep.subr.mxu0 0.0
    %1048 = vmatpush1.msra.mxu0 0.0
    %1049 = vmatprep.subr.mxu0 0.0
    %1050 = vmatpush1.msra.mxu0 0.0
    %1051 = vmatprep.subr.mxu0 0.0
    %1052 = vmatpush1.msra.mxu0 0.0
    %1053 = vmatprep.subr.mxu0 0.0
    %1054 = vmatpush1.msra.mxu0 0.0
    %1055 = vmatprep.subr.mxu0 0.0
    %1056 = vmatpush1.msra.mxu0 0.0
    %1057 = vmatprep.subr.mxu0 0.0
    %1058 = vmatpush1.msra.mxu0 0.0
    %1059 = vmatprep.subr.mxu0 0.0
    %1060 = vmatpush1.msra.mxu0 0.0
    %1061 = vmatprep.subr.mxu0 0.0
    %1062 = vmatpush1.msra.mxu0 0.0
    %1063 = vmatprep.subr.mxu0 0.0
    %1064 = vmatpush1.msra.mxu0 0.0
    %1065 = vmatprep.subr.mxu0 0.0
    %1066 = vmatpush1.msra.mxu0 0.0
    %1067 = vmatprep.subr.mxu0 0.0
    %1068 = vmatpush1.msra.mxu0 0.0
    %1069 = vmatprep.subr.mxu0 0.0
    %1070 = vmatpush1.msra.mxu0 0.0
    %1071 = vmatprep.mubr.f32.mxu0 0.0
    %v1072 = vand.u32 %v74, 4294901760
    %1073 = vmatmul.mubr.f32.gmra.mrb[0].mxu0 %v1072
    %v1074 = vpop.f32.mrb[0].mxu0
    %v1075 = vadd.f32 %v971, %v1074
    %v1076 = vpop.f32.mrb[0].mxu0
    %v1077 = vadd.f32 %v973, %v1076
    %1078 = vdwg.mxu0
    %v1079 = vand.u32 %v78, 4294901760
    %1080 = vmatprep.subr.mxu0 %v1079
    %v1081 = vand.u32 %v77, 4294901760
    %1082 = vmatpush1.msra.mxu0 %v1081
    %v1083 = vand.u32 %v85, 4294901760
    %1084 = vmatprep.subr.mxu0 %v1083
    %v1085 = vand.u32 %v84, 4294901760
    %1086 = vmatpush1.msra.mxu0 %v1085
    %v1087 = vand.u32 %v92, 4294901760
    %1088 = vmatprep.subr.mxu0 %v1087
    %v1089 = vand.u32 %v91, 4294901760
    %1090 = vmatpush1.msra.mxu0 %v1089
    %v1091 = vand.u32 %v99, 4294901760
    %1092 = vmatprep.subr.mxu0 %v1091
    %v1093 = vand.u32 %v98, 4294901760
    %1094 = vmatpush1.msra.mxu0 %v1093
    %v1095 = vand.u32 %v106, 4294901760
    %1096 = vmatprep.subr.mxu0 %v1095
    %v1097 = vand.u32 %v105, 4294901760
    %1098 = vmatpush1.msra.mxu0 %v1097
    %v1099 = vand.u32 %v113, 4294901760
    %1100 = vmatprep.subr.mxu0 %v1099
    %v1101 = vand.u32 %v112, 4294901760
    %1102 = vmatpush1.msra.mxu0 %v1101
    %v1103 = vand.u32 %v120, 4294901760
    %1104 = vmatprep.subr.mxu0 %v1103
    %v1105 = vand.u32 %v119, 4294901760
    %1106 = vmatpush1.msra.mxu0 %v1105
    %v1107 = vand.u32 %v127, 4294901760
    %1108 = vmatprep.subr.mxu0 %v1107
    %v1109 = vand.u32 %v126, 4294901760
    %1110 = vmatpush1.msra.mxu0 %v1109
    %v1111 = vand.u32 %v134, 4294901760
    %1112 = vmatprep.subr.mxu0 %v1111
    %v1113 = vand.u32 %v133, 4294901760
    %1114 = vmatpush1.msra.mxu0 %v1113
    %v1115 = vand.u32 %v141, 4294901760
    %1116 = vmatprep.subr.mxu0 %v1115
    %v1117 = vand.u32 %v140, 4294901760
    %1118 = vmatpush1.msra.mxu0 %v1117
    %v1119 = vand.u32 %v148, 4294901760
    %1120 = vmatprep.subr.mxu0 %v1119
    %v1121 = vand.u32 %v147, 4294901760
    %1122 = vmatpush1.msra.mxu0 %v1121
    %v1123 = vand.u32 %v155, 4294901760
    %1124 = vmatprep.subr.mxu0 %v1123
    %v1125 = vand.u32 %v154, 4294901760
    %1126 = vmatpush1.msra.mxu0 %v1125
    %v1127 = vand.u32 %v162, 4294901760
    %1128 = vmatprep.subr.mxu0 %v1127
    %v1129 = vand.u32 %v161, 4294901760
    %1130 = vmatpush1.msra.mxu0 %v1129
    %v1131 = vand.u32 %v169, 4294901760
    %1132 = vmatprep.subr.mxu0 %v1131
    %v1133 = vand.u32 %v168, 4294901760
    %1134 = vmatpush1.msra.mxu0 %v1133
    %v1135 = vand.u32 %v176, 4294901760
    %1136 = vmatprep.subr.mxu0 %v1135
    %v1137 = vand.u32 %v175, 4294901760
    %1138 = vmatpush1.msra.mxu0 %v1137
    %v1139 = vand.u32 %v183, 4294901760
    %1140 = vmatprep.subr.mxu0 %v1139
    %v1141 = vand.u32 %v182, 4294901760
    %1142 = vmatpush1.msra.mxu0 %v1141
    %1143 = vmatprep.subr.mxu0 0.0
    %1144 = vmatpush1.msra.mxu0 0.0
    %1145 = vmatprep.subr.mxu0 0.0
    %1146 = vmatpush1.msra.mxu0 0.0
    %1147 = vmatprep.subr.mxu0 0.0
    %1148 = vmatpush1.msra.mxu0 0.0
    %1149 = vmatprep.subr.mxu0 0.0
    %1150 = vmatpush1.msra.mxu0 0.0
    %1151 = vmatprep.subr.mxu0 0.0
    %1152 = vmatpush1.msra.mxu0 0.0
    %1153 = vmatprep.subr.mxu0 0.0
    %1154 = vmatpush1.msra.mxu0 0.0
    %1155 = vmatprep.subr.mxu0 0.0
    %1156 = vmatpush1.msra.mxu0 0.0
    %1157 = vmatprep.subr.mxu0 0.0
    %1158 = vmatpush1.msra.mxu0 0.0
    %1159 = vmatprep.subr.mxu0 0.0
    %1160 = vmatpush1.msra.mxu0 0.0
    %1161 = vmatprep.subr.mxu0 0.0
    %1162 = vmatpush1.msra.mxu0 0.0
    %1163 = vmatprep.subr.mxu0 0.0
    %1164 = vmatpush1.msra.mxu0 0.0
    %1165 = vmatprep.subr.mxu0 0.0
    %1166 = vmatpush1.msra.mxu0 0.0
    %1167 = vmatprep.subr.mxu0 0.0
    %1168 = vmatpush1.msra.mxu0 0.0
    %1169 = vmatprep.subr.mxu0 0.0
    %1170 = vmatpush1.msra.mxu0 0.0
    %1171 = vmatprep.subr.mxu0 0.0
    %1172 = vmatpush1.msra.mxu0 0.0
    %1173 = vmatprep.subr.mxu0 0.0
    %1174 = vmatpush1.msra.mxu0 0.0
    %1175 = vmatprep.mubr.f32.mxu0 0.0
    %v1176 = vand.u32 %v74, 4294901760
    %v1177 = vsub.f32 %v74, %v1176
    %v1178 = vand.u32 %v1177, 4294901760
    %v1179 = vsub.f32 %v1177, %v1178
    %v1180 = vand.u32 %v1179, 4294901760
    %1181 = vmatmul.mubr.f32.gmra.mrb[0].mxu0 %v1180
    %v1182 = vpop.f32.mrb[0].mxu0
    %v1183 = vadd.f32 %v200, %v1182
    %v1184 = vpop.f32.mrb[0].mxu0
    %v1185 = vadd.f32 %v204, %v1184
    %1186 = vdwg.mxu0
    %v1187 = vand.u32 %v78, 4294901760
    %v1188 = vsub.f32 %v78, %v1187
    %v1189 = vand.u32 %v1188, 4294901760
    %v1190 = vsub.f32 %v1188, %v1189
    %v1191 = vand.u32 %v1190, 4294901760
    %1192 = vmatprep.subr.mxu0 %v1191
    %v1193 = vand.u32 %v77, 4294901760
    %v1194 = vsub.f32 %v77, %v1193
    %v1195 = vand.u32 %v1194, 4294901760
    %v1196 = vsub.f32 %v1194, %v1195
    %v1197 = vand.u32 %v1196, 4294901760
    %1198 = vmatpush1.msra.mxu0 %v1197
    %v1199 = vand.u32 %v85, 4294901760
    %v1200 = vsub.f32 %v85, %v1199
    %v1201 = vand.u32 %v1200, 4294901760
    %v1202 = vsub.f32 %v1200, %v1201
    %v1203 = vand.u32 %v1202, 4294901760
    %1204 = vmatprep.subr.mxu0 %v1203
    %v1205 = vand.u32 %v84, 4294901760
    %v1206 = vsub.f32 %v84, %v1205
    %v1207 = vand.u32 %v1206, 4294901760
    %v1208 = vsub.f32 %v1206, %v1207
    %v1209 = vand.u32 %v1208, 4294901760
    %1210 = vmatpush1.msra.mxu0 %v1209
    %v1211 = vand.u32 %v92, 4294901760
    %v1212 = vsub.f32 %v92, %v1211
    %v1213 = vand.u32 %v1212, 4294901760
    %v1214 = vsub.f32 %v1212, %v1213
    %v1215 = vand.u32 %v1214, 4294901760
    %1216 = vmatprep.subr.mxu0 %v1215
    %v1217 = vand.u32 %v91, 4294901760
    %v1218 = vsub.f32 %v91, %v1217
    %v1219 = vand.u32 %v1218, 4294901760
    %v1220 = vsub.f32 %v1218, %v1219
    %v1221 = vand.u32 %v1220, 4294901760
    %1222 = vmatpush1.msra.mxu0 %v1221
    %v1223 = vand.u32 %v99, 4294901760
    %v1224 = vsub.f32 %v99, %v1223
    %v1225 = vand.u32 %v1224, 4294901760
    %v1226 = vsub.f32 %v1224, %v1225
    %v1227 = vand.u32 %v1226, 4294901760
    %1228 = vmatprep.subr.mxu0 %v1227
    %v1229 = vand.u32 %v98, 4294901760
    %v1230 = vsub.f32 %v98, %v1229
    %v1231 = vand.u32 %v1230, 4294901760
    %v1232 = vsub.f32 %v1230, %v1231
    %v1233 = vand.u32 %v1232, 4294901760
    %1234 = vmatpush1.msra.mxu0 %v1233
    %v1235 = vand.u32 %v106, 4294901760
    %v1236 = vsub.f32 %v106, %v1235
    %v1237 = vand.u32 %v1236, 4294901760
    %v1238 = vsub.f32 %v1236, %v1237
    %v1239 = vand.u32 %v1238, 4294901760
    %1240 = vmatprep.subr.mxu0 %v1239
    %v1241 = vand.u32 %v105, 4294901760
    %v1242 = vsub.f32 %v105, %v1241
    %v1243 = vand.u32 %v1242, 4294901760
    %v1244 = vsub.f32 %v1242, %v1243
    %v1245 = vand.u32 %v1244, 4294901760
    %1246 = vmatpush1.msra.mxu0 %v1245
    %v1247 = vand.u32 %v113, 4294901760
    %v1248 = vsub.f32 %v113, %v1247
    %v1249 = vand.u32 %v1248, 4294901760
    %v1250 = vsub.f32 %v1248, %v1249
    %v1251 = vand.u32 %v1250, 4294901760
    %1252 = vmatprep.subr.mxu0 %v1251
    %v1253 = vand.u32 %v112, 4294901760
    %v1254 = vsub.f32 %v112, %v1253
    %v1255 = vand.u32 %v1254, 4294901760
    %v1256 = vsub.f32 %v1254, %v1255
    %v1257 = vand.u32 %v1256, 4294901760
    %1258 = vmatpush1.msra.mxu0 %v1257
    %v1259 = vand.u32 %v120, 4294901760
    %v1260 = vsub.f32 %v120, %v1259
    %v1261 = vand.u32 %v1260, 4294901760
    %v1262 = vsub.f32 %v1260, %v1261
    %v1263 = vand.u32 %v1262, 4294901760
    %1264 = vmatprep.subr.mxu0 %v1263
    %v1265 = vand.u32 %v119, 4294901760
    %v1266 = vsub.f32 %v119, %v1265
    %v1267 = vand.u32 %v1266, 4294901760
    %v1268 = vsub.f32 %v1266, %v1267
    %v1269 = vand.u32 %v1268, 4294901760
    %1270 = vmatpush1.msra.mxu0 %v1269
    %v1271 = vand.u32 %v127, 4294901760
    %v1272 = vsub.f32 %v127, %v1271
    %v1273 = vand.u32 %v1272, 4294901760
    %v1274 = vsub.f32 %v1272, %v1273
    %v1275 = vand.u32 %v1274, 4294901760
    %1276 = vmatprep.subr.mxu0 %v1275
    %v1277 = vand.u32 %v126, 4294901760
    %v1278 = vsub.f32 %v126, %v1277
    %v1279 = vand.u32 %v1278, 4294901760
    %v1280 = vsub.f32 %v1278, %v1279
    %v1281 = vand.u32 %v1280, 4294901760
    %1282 = vmatpush1.msra.mxu0 %v1281
    %v1283 = vand.u32 %v134, 4294901760
    %v1284 = vsub.f32 %v134, %v1283
    %v1285 = vand.u32 %v1284, 4294901760
    %v1286 = vsub.f32 %v1284, %v1285
    %v1287 = vand.u32 %v1286, 4294901760
    %1288 = vmatprep.subr.mxu0 %v1287
    %v1289 = vand.u32 %v133, 4294901760
    %v1290 = vsub.f32 %v133, %v1289
    %v1291 = vand.u32 %v1290, 4294901760
    %v1292 = vsub.f32 %v1290, %v1291
    %v1293 = vand.u32 %v1292, 4294901760
    %1294 = vmatpush1.msra.mxu0 %v1293
    %v1295 = vand.u32 %v141, 4294901760
    %v1296 = vsub.f32 %v141, %v1295
    %v1297 = vand.u32 %v1296, 4294901760
    %v1298 = vsub.f32 %v1296, %v1297
    %v1299 = vand.u32 %v1298, 4294901760
    %1300 = vmatprep.subr.mxu0 %v1299
    %v1301 = vand.u32 %v140, 4294901760
    %v1302 = vsub.f32 %v140, %v1301
    %v1303 = vand.u32 %v1302, 4294901760
    %v1304 = vsub.f32 %v1302, %v1303
    %v1305 = vand.u32 %v1304, 4294901760
    %1306 = vmatpush1.msra.mxu0 %v1305
    %v1307 = vand.u32 %v148, 4294901760
    %v1308 = vsub.f32 %v148, %v1307
    %v1309 = vand.u32 %v1308, 4294901760
    %v1310 = vsub.f32 %v1308, %v1309
    %v1311 = vand.u32 %v1310, 4294901760
    %1312 = vmatprep.subr.mxu0 %v1311
    %v1313 = vand.u32 %v147, 4294901760
    %v1314 = vsub.f32 %v147, %v1313
    %v1315 = vand.u32 %v1314, 4294901760
    %v1316 = vsub.f32 %v1314, %v1315
    %v1317 = vand.u32 %v1316, 4294901760
    %1318 = vmatpush1.msra.mxu0 %v1317
    %v1319 = vand.u32 %v155, 4294901760
    %v1320 = vsub.f32 %v155, %v1319
    %v1321 = vand.u32 %v1320, 4294901760
    %v1322 = vsub.f32 %v1320, %v1321
    %v1323 = vand.u32 %v1322, 4294901760
    %1324 = vmatprep.subr.mxu0 %v1323
    %v1325 = vand.u32 %v154, 4294901760
    %v1326 = vsub.f32 %v154, %v1325
    %v1327 = vand.u32 %v1326, 4294901760
    %v1328 = vsub.f32 %v1326, %v1327
    %v1329 = vand.u32 %v1328, 4294901760
    %1330 = vmatpush1.msra.mxu0 %v1329
    %v1331 = vand.u32 %v162, 4294901760
    %v1332 = vsub.f32 %v162, %v1331
    %v1333 = vand.u32 %v1332, 4294901760
    %v1334 = vsub.f32 %v1332, %v1333
    %v1335 = vand.u32 %v1334, 4294901760
    %1336 = vmatprep.subr.mxu0 %v1335
    %v1337 = vand.u32 %v161, 4294901760
    %v1338 = vsub.f32 %v161, %v1337
    %v1339 = vand.u32 %v1338, 4294901760
    %v1340 = vsub.f32 %v1338, %v1339
    %v1341 = vand.u32 %v1340, 4294901760
    %1342 = vmatpush1.msra.mxu0 %v1341
    %v1343 = vand.u32 %v169, 4294901760
    %v1344 = vsub.f32 %v169, %v1343
    %v1345 = vand.u32 %v1344, 4294901760
    %v1346 = vsub.f32 %v1344, %v1345
    %v1347 = vand.u32 %v1346, 4294901760
    %1348 = vmatprep.subr.mxu0 %v1347
    %v1349 = vand.u32 %v168, 4294901760
    %v1350 = vsub.f32 %v168, %v1349
    %v1351 = vand.u32 %v1350, 4294901760
    %v1352 = vsub.f32 %v1350, %v1351
    %v1353 = vand.u32 %v1352, 4294901760
    %1354 = vmatpush1.msra.mxu0 %v1353
    %v1355 = vand.u32 %v176, 4294901760
    %v1356 = vsub.f32 %v176, %v1355
    %v1357 = vand.u32 %v1356, 4294901760
    %v1358 = vsub.f32 %v1356, %v1357
    %v1359 = vand.u32 %v1358, 4294901760
    %1360 = vmatprep.subr.mxu0 %v1359
    %v1361 = vand.u32 %v175, 4294901760
    %v1362 = vsub.f32 %v175, %v1361
    %v1363 = vand.u32 %v1362, 4294901760
    %v1364 = vsub.f32 %v1362, %v1363
    %v1365 = vand.u32 %v1364, 4294901760
    %1366 = vmatpush1.msra.mxu0 %v1365
    %v1367 = vand.u32 %v183, 4294901760
    %v1368 = vsub.f32 %v183, %v1367
    %v1369 = vand.u32 %v1368, 4294901760
    %v1370 = vsub.f32 %v1368, %v1369
    %v1371 = vand.u32 %v1370, 4294901760
    %1372 = vmatprep.subr.mxu0 %v1371
    %v1373 = vand.u32 %v182, 4294901760
    %v1374 = vsub.f32 %v182, %v1373
    %v1375 = vand.u32 %v1374, 4294901760
    %v1376 = vsub.f32 %v1374, %v1375
    %v1377 = vand.u32 %v1376, 4294901760
    %1378 = vmatpush1.msra.mxu0 %v1377
    %1379 = vmatprep.subr.mxu0 0.0
    %1380 = vmatpush1.msra.mxu0 0.0
    %1381 = vmatprep.subr.mxu0 0.0
    %1382 = vmatpush1.msra.mxu0 0.0
    %1383 = vmatprep.subr.mxu0 0.0
    %1384 = vmatpush1.msra.mxu0 0.0
    %1385 = vmatprep.subr.mxu0 0.0
    %1386 = vmatpush1.msra.mxu0 0.0
    %1387 = vmatprep.subr.mxu0 0.0
    %1388 = vmatpush1.msra.mxu0 0.0
    %1389 = vmatprep.subr.mxu0 0.0
    %1390 = vmatpush1.msra.mxu0 0.0
    %1391 = vmatprep.subr.mxu0 0.0
    %1392 = vmatpush1.msra.mxu0 0.0
    %1393 = vmatprep.subr.mxu0 0.0
    %1394 = vmatpush1.msra.mxu0 0.0
    %1395 = vmatprep.subr.mxu0 0.0
    %1396 = vmatpush1.msra.mxu0 0.0
    %1397 = vmatprep.subr.mxu0 0.0
    %1398 = vmatpush1.msra.mxu0 0.0
    %1399 = vmatprep.subr.mxu0 0.0
    %1400 = vmatpush1.msra.mxu0 0.0
    %1401 = vmatprep.subr.mxu0 0.0
    %1402 = vmatpush1.msra.mxu0 0.0
    %1403 = vmatprep.subr.mxu0 0.0
    %1404 = vmatpush1.msra.mxu0 0.0
    %1405 = vmatprep.subr.mxu0 0.0
    %1406 = vmatpush1.msra.mxu0 0.0
    %1407 = vmatprep.subr.mxu0 0.0
    %1408 = vmatpush1.msra.mxu0 0.0
    %1409 = vmatprep.subr.mxu0 0.0
    %1410 = vmatpush1.msra.mxu0 0.0
    %1411 = vmatprep.mubr.f32.mxu0 0.0
    %v1412 = vand.u32 %v74, 4294901760
    %1413 = vmatmul.mubr.f32.gmra.mrb[0].mxu0 %v1412
    %v1414 = vpop.f32.mrb[0].mxu0
    %v1415 = vadd.f32 %v1183, %v1414
    %v1416 = vpop.f32.mrb[0].mxu0
    %v1417 = vadd.f32 %v1185, %v1416
    %1418 = vdwg.mxu0
    %v1419 = vand.u32 %v78, 4294901760
    %v1420 = vsub.f32 %v78, %v1419
    %1421 = vmatprep.subr.mxu0 %v1420
    %v1422 = vand.u32 %v77, 4294901760
    %v1423 = vsub.f32 %v77, %v1422
    %1424 = vmatpush1.msra.mxu0 %v1423
    %v1425 = vand.u32 %v85, 4294901760
    %v1426 = vsub.f32 %v85, %v1425
    %1427 = vmatprep.subr.mxu0 %v1426
    %v1428 = vand.u32 %v84, 4294901760
    %v1429 = vsub.f32 %v84, %v1428
    %1430 = vmatpush1.msra.mxu0 %v1429
    %v1431 = vand.u32 %v92, 4294901760
    %v1432 = vsub.f32 %v92, %v1431
    %1433 = vmatprep.subr.mxu0 %v1432
    %v1434 = vand.u32 %v91, 4294901760
    %v1435 = vsub.f32 %v91, %v1434
    %1436 = vmatpush1.msra.mxu0 %v1435
    %v1437 = vand.u32 %v99, 4294901760
    %v1438 = vsub.f32 %v99, %v1437
    %1439 = vmatprep.subr.mxu0 %v1438
    %v1440 = vand.u32 %v98, 4294901760
    %v1441 = vsub.f32 %v98, %v1440
    %1442 = vmatpush1.msra.mxu0 %v1441
    %v1443 = vand.u32 %v106, 4294901760
    %v1444 = vsub.f32 %v106, %v1443
    %1445 = vmatprep.subr.mxu0 %v1444
    %v1446 = vand.u32 %v105, 4294901760
    %v1447 = vsub.f32 %v105, %v1446
    %1448 = vmatpush1.msra.mxu0 %v1447
    %v1449 = vand.u32 %v113, 4294901760
    %v1450 = vsub.f32 %v113, %v1449
    %1451 = vmatprep.subr.mxu0 %v1450
    %v1452 = vand.u32 %v112, 4294901760
    %v1453 = vsub.f32 %v112, %v1452
    %1454 = vmatpush1.msra.mxu0 %v1453
    %v1455 = vand.u32 %v120, 4294901760
    %v1456 = vsub.f32 %v120, %v1455
    %1457 = vmatprep.subr.mxu0 %v1456
    %v1458 = vand.u32 %v119, 4294901760
    %v1459 = vsub.f32 %v119, %v1458
    %1460 = vmatpush1.msra.mxu0 %v1459
    %v1461 = vand.u32 %v127, 4294901760
    %v1462 = vsub.f32 %v127, %v1461
    %1463 = vmatprep.subr.mxu0 %v1462
    %v1464 = vand.u32 %v126, 4294901760
    %v1465 = vsub.f32 %v126, %v1464
    %1466 = vmatpush1.msra.mxu0 %v1465
    %v1467 = vand.u32 %v134, 4294901760
    %v1468 = vsub.f32 %v134, %v1467
    %1469 = vmatprep.subr.mxu0 %v1468
    %v1470 = vand.u32 %v133, 4294901760
    %v1471 = vsub.f32 %v133, %v1470
    %1472 = vmatpush1.msra.mxu0 %v1471
    %v1473 = vand.u32 %v141, 4294901760
    %v1474 = vsub.f32 %v141, %v1473
    %1475 = vmatprep.subr.mxu0 %v1474
    %v1476 = vand.u32 %v140, 4294901760
    %v1477 = vsub.f32 %v140, %v1476
    %1478 = vmatpush1.msra.mxu0 %v1477
    %v1479 = vand.u32 %v148, 4294901760
    %v1480 = vsub.f32 %v148, %v1479
    %1481 = vmatprep.subr.mxu0 %v1480
    %v1482 = vand.u32 %v147, 4294901760
    %v1483 = vsub.f32 %v147, %v1482
    %1484 = vmatpush1.msra.mxu0 %v1483
    %v1485 = vand.u32 %v155, 4294901760
    %v1486 = vsub.f32 %v155, %v1485
    %1487 = vmatprep.subr.mxu0 %v1486
    %v1488 = vand.u32 %v154, 4294901760
    %v1489 = vsub.f32 %v154, %v1488
    %1490 = vmatpush1.msra.mxu0 %v1489
    %v1491 = vand.u32 %v162, 4294901760
    %v1492 = vsub.f32 %v162, %v1491
    %1493 = vmatprep.subr.mxu0 %v1492
    %v1494 = vand.u32 %v161, 4294901760
    %v1495 = vsub.f32 %v161, %v1494
    %1496 = vmatpush1.msra.mxu0 %v1495
    %v1497 = vand.u32 %v169, 4294901760
    %v1498 = vsub.f32 %v169, %v1497
    %1499 = vmatprep.subr.mxu0 %v1498
    %v1500 = vand.u32 %v168, 4294901760
    %v1501 = vsub.f32 %v168, %v1500
    %1502 = vmatpush1.msra.mxu0 %v1501
    %v1503 = vand.u32 %v176, 4294901760
    %v1504 = vsub.f32 %v176, %v1503
    %1505 = vmatprep.subr.mxu0 %v1504
    %v1506 = vand.u32 %v175, 4294901760
    %v1507 = vsub.f32 %v175, %v1506
    %1508 = vmatpush1.msra.mxu0 %v1507
    %v1509 = vand.u32 %v183, 4294901760
    %v1510 = vsub.f32 %v183, %v1509
    %1511 = vmatprep.subr.mxu0 %v1510
    %v1512 = vand.u32 %v182, 4294901760
    %v1513 = vsub.f32 %v182, %v1512
    %1514 = vmatpush1.msra.mxu0 %v1513
    %1515 = vmatprep.subr.mxu0 0.0
    %1516 = vmatpush1.msra.mxu0 0.0
    %1517 = vmatprep.subr.mxu0 0.0
    %1518 = vmatpush1.msra.mxu0 0.0
    %1519 = vmatprep.subr.mxu0 0.0
    %1520 = vmatpush1.msra.mxu0 0.0
    %1521 = vmatprep.subr.mxu0 0.0
    %1522 = vmatpush1.msra.mxu0 0.0
    %1523 = vmatprep.subr.mxu0 0.0
    %1524 = vmatpush1.msra.mxu0 0.0
    %1525 = vmatprep.subr.mxu0 0.0
    %1526 = vmatpush1.msra.mxu0 0.0
    %1527 = vmatprep.subr.mxu0 0.0
    %1528 = vmatpush1.msra.mxu0 0.0
    %1529 = vmatprep.subr.mxu0 0.0
    %1530 = vmatpush1.msra.mxu0 0.0
    %1531 = vmatprep.subr.mxu0 0.0
    %1532 = vmatpush1.msra.mxu0 0.0
    %1533 = vmatprep.subr.mxu0 0.0
    %1534 = vmatpush1.msra.mxu0 0.0
    %1535 = vmatprep.subr.mxu0 0.0
    %1536 = vmatpush1.msra.mxu0 0.0
    %1537 = vmatprep.subr.mxu0 0.0
    %1538 = vmatpush1.msra.mxu0 0.0
    %1539 = vmatprep.subr.mxu0 0.0
    %1540 = vmatpush1.msra.mxu0 0.0
    %1541 = vmatprep.subr.mxu0 0.0
    %1542 = vmatpush1.msra.mxu0 0.0
    %1543 = vmatprep.subr.mxu0 0.0
    %1544 = vmatpush1.msra.mxu0 0.0
    %1545 = vmatprep.subr.mxu0 0.0
    %1546 = vmatpush1.msra.mxu0 0.0
    %1547 = vmatprep.mubr.f32.mxu0 0.0
    %v1548 = vand.u32 %v74, 4294901760
    %v1549 = vsub.f32 %v74, %v1548
    %1550 = vmatmul.mubr.f32.gmra.mrb[0].mxu0 %v1549
    %v1551 = vpop.f32.mrb[0].mxu0
    %v1552 = vadd.f32 %v1415, %v1551
    %v1553 = vpop.f32.mrb[0].mxu0
    %v1554 = vadd.f32 %v1417, %v1553
    %1555 = vdwg.mxu0
    %v1556 = vand.u32 %v78, 4294901760
    %1557 = vmatprep.subr.mxu0 %v1556
    %v1558 = vand.u32 %v77, 4294901760
    %1559 = vmatpush1.msra.mxu0 %v1558
    %v1560 = vand.u32 %v85, 4294901760
    %1561 = vmatprep.subr.mxu0 %v1560
    %v1562 = vand.u32 %v84, 4294901760
    %1563 = vmatpush1.msra.mxu0 %v1562
    %v1564 = vand.u32 %v92, 4294901760
    %1565 = vmatprep.subr.mxu0 %v1564
    %v1566 = vand.u32 %v91, 4294901760
    %1567 = vmatpush1.msra.mxu0 %v1566
    %v1568 = vand.u32 %v99, 4294901760
    %1569 = vmatprep.subr.mxu0 %v1568
    %v1570 = vand.u32 %v98, 4294901760
    %1571 = vmatpush1.msra.mxu0 %v1570
    %v1572 = vand.u32 %v106, 4294901760
    %1573 = vmatprep.subr.mxu0 %v1572
    %v1574 = vand.u32 %v105, 4294901760
    %1575 = vmatpush1.msra.mxu0 %v1574
    %v1576 = vand.u32 %v113, 4294901760
    %1577 = vmatprep.subr.mxu0 %v1576
    %v1578 = vand.u32 %v112, 4294901760
    %1579 = vmatpush1.msra.mxu0 %v1578
    %v1580 = vand.u32 %v120, 4294901760
    %1581 = vmatprep.subr.mxu0 %v1580
    %v1582 = vand.u32 %v119, 4294901760
    %1583 = vmatpush1.msra.mxu0 %v1582
    %v1584 = vand.u32 %v127, 4294901760
    %1585 = vmatprep.subr.mxu0 %v1584
    %v1586 = vand.u32 %v126, 4294901760
    %1587 = vmatpush1.msra.mxu0 %v1586
    %v1588 = vand.u32 %v134, 4294901760
    %1589 = vmatprep.subr.mxu0 %v1588
    %v1590 = vand.u32 %v133, 4294901760
    %1591 = vmatpush1.msra.mxu0 %v1590
    %v1592 = vand.u32 %v141, 4294901760
    %1593 = vmatprep.subr.mxu0 %v1592
    %v1594 = vand.u32 %v140, 4294901760
    %1595 = vmatpush1.msra.mxu0 %v1594
    %v1596 = vand.u32 %v148, 4294901760
    %1597 = vmatprep.subr.mxu0 %v1596
    %v1598 = vand.u32 %v147, 4294901760
    %1599 = vmatpush1.msra.mxu0 %v1598
    %v1600 = vand.u32 %v155, 4294901760
    %1601 = vmatprep.subr.mxu0 %v1600
    %v1602 = vand.u32 %v154, 4294901760
    %1603 = vmatpush1.msra.mxu0 %v1602
    %v1604 = vand.u32 %v162, 4294901760
    %1605 = vmatprep.subr.mxu0 %v1604
    %v1606 = vand.u32 %v161, 4294901760
    %1607 = vmatpush1.msra.mxu0 %v1606
    %v1608 = vand.u32 %v169, 4294901760
    %1609 = vmatprep.subr.mxu0 %v1608
    %v1610 = vand.u32 %v168, 4294901760
    %1611 = vmatpush1.msra.mxu0 %v1610
    %v1612 = vand.u32 %v176, 4294901760
    %1613 = vmatprep.subr.mxu0 %v1612
    %v1614 = vand.u32 %v175, 4294901760
    %1615 = vmatpush1.msra.mxu0 %v1614
    %v1616 = vand.u32 %v183, 4294901760
    %1617 = vmatprep.subr.mxu0 %v1616
    %v1618 = vand.u32 %v182, 4294901760
    %1619 = vmatpush1.msra.mxu0 %v1618
    %1620 = vmatprep.subr.mxu0 0.0
    %1621 = vmatpush1.msra.mxu0 0.0
    %1622 = vmatprep.subr.mxu0 0.0
    %1623 = vmatpush1.msra.mxu0 0.0
    %1624 = vmatprep.subr.mxu0 0.0
    %1625 = vmatpush1.msra.mxu0 0.0
    %1626 = vmatprep.subr.mxu0 0.0
    %1627 = vmatpush1.msra.mxu0 0.0
    %1628 = vmatprep.subr.mxu0 0.0
    %1629 = vmatpush1.msra.mxu0 0.0
    %1630 = vmatprep.subr.mxu0 0.0
    %1631 = vmatpush1.msra.mxu0 0.0
    %1632 = vmatprep.subr.mxu0 0.0
    %1633 = vmatpush1.msra.mxu0 0.0
    %1634 = vmatprep.subr.mxu0 0.0
    %1635 = vmatpush1.msra.mxu0 0.0
    %1636 = vmatprep.subr.mxu0 0.0
    %1637 = vmatpush1.msra.mxu0 0.0
    %1638 = vmatprep.subr.mxu0 0.0
    %1639 = vmatpush1.msra.mxu0 0.0
    %1640 = vmatprep.subr.mxu0 0.0
    %1641 = vmatpush1.msra.mxu0 0.0
    %1642 = vmatprep.subr.mxu0 0.0
    %1643 = vmatpush1.msra.mxu0 0.0
    %1644 = vmatprep.subr.mxu0 0.0
    %1645 = vmatpush1.msra.mxu0 0.0
    %1646 = vmatprep.subr.mxu0 0.0
    %1647 = vmatpush1.msra.mxu0 0.0
    %1648 = vmatprep.subr.mxu0 0.0
    %1649 = vmatpush1.msra.mxu0 0.0
    %1650 = vmatprep.subr.mxu0 0.0
    %1651 = vmatpush1.msra.mxu0 0.0
    %1652 = vmatprep.mubr.f32.mxu0 0.0
    %v1653 = vand.u32 %v74, 4294901760
    %v1654 = vsub.f32 %v74, %v1653
    %v1655 = vand.u32 %v1654, 4294901760
    %1656 = vmatmul.mubr.f32.gmra.mrb[0].mxu0 %v1655
    %v1657 = vpop.f32.mrb[0].mxu0
    %v1658 = vadd.f32 %v1552, %v1657
    %v1659 = vpop.f32.mrb[0].mxu0
    %v1660 = vadd.f32 %v1554, %v1659
    %1661 = vdwg.mxu0
    %v1662 = vand.u32 %v78, 4294901760
    %v1663 = vsub.f32 %v78, %v1662
    %v1664 = vand.u32 %v1663, 4294901760
    %1665 = vmatprep.subr.mxu0 %v1664
    %v1666 = vand.u32 %v77, 4294901760
    %v1667 = vsub.f32 %v77, %v1666
    %v1668 = vand.u32 %v1667, 4294901760
    %1669 = vmatpush1.msra.mxu0 %v1668
    %v1670 = vand.u32 %v85, 4294901760
    %v1671 = vsub.f32 %v85, %v1670
    %v1672 = vand.u32 %v1671, 4294901760
    %1673 = vmatprep.subr.mxu0 %v1672
    %v1674 = vand.u32 %v84, 4294901760
    %v1675 = vsub.f32 %v84, %v1674
    %v1676 = vand.u32 %v1675, 4294901760
    %1677 = vmatpush1.msra.mxu0 %v1676
    %v1678 = vand.u32 %v92, 4294901760
    %v1679 = vsub.f32 %v92, %v1678
    %v1680 = vand.u32 %v1679, 4294901760
    %1681 = vmatprep.subr.mxu0 %v1680
    %v1682 = vand.u32 %v91, 4294901760
    %v1683 = vsub.f32 %v91, %v1682
    %v1684 = vand.u32 %v1683, 4294901760
    %1685 = vmatpush1.msra.mxu0 %v1684
    %v1686 = vand.u32 %v99, 4294901760
    %v1687 = vsub.f32 %v99, %v1686
    %v1688 = vand.u32 %v1687, 4294901760
    %1689 = vmatprep.subr.mxu0 %v1688
    %v1690 = vand.u32 %v98, 4294901760
    %v1691 = vsub.f32 %v98, %v1690
    %v1692 = vand.u32 %v1691, 4294901760
    %1693 = vmatpush1.msra.mxu0 %v1692
    %v1694 = vand.u32 %v106, 4294901760
    %v1695 = vsub.f32 %v106, %v1694
    %v1696 = vand.u32 %v1695, 4294901760
    %1697 = vmatprep.subr.mxu0 %v1696
    %v1698 = vand.u32 %v105, 4294901760
    %v1699 = vsub.f32 %v105, %v1698
    %v1700 = vand.u32 %v1699, 4294901760
    %1701 = vmatpush1.msra.mxu0 %v1700
    %v1702 = vand.u32 %v113, 4294901760
    %v1703 = vsub.f32 %v113, %v1702
    %v1704 = vand.u32 %v1703, 4294901760
    %1705 = vmatprep.subr.mxu0 %v1704
    %v1706 = vand.u32 %v112, 4294901760
    %v1707 = vsub.f32 %v112, %v1706
    %v1708 = vand.u32 %v1707, 4294901760
    %1709 = vmatpush1.msra.mxu0 %v1708
    %v1710 = vand.u32 %v120, 4294901760
    %v1711 = vsub.f32 %v120, %v1710
    %v1712 = vand.u32 %v1711, 4294901760
    %1713 = vmatprep.subr.mxu0 %v1712
    %v1714 = vand.u32 %v119, 4294901760
    %v1715 = vsub.f32 %v119, %v1714
    %v1716 = vand.u32 %v1715, 4294901760
    %1717 = vmatpush1.msra.mxu0 %v1716
    %v1718 = vand.u32 %v127, 4294901760
    %v1719 = vsub.f32 %v127, %v1718
    %v1720 = vand.u32 %v1719, 4294901760
    %1721 = vmatprep.subr.mxu0 %v1720
    %v1722 = vand.u32 %v126, 4294901760
    %v1723 = vsub.f32 %v126, %v1722
    %v1724 = vand.u32 %v1723, 4294901760
    %1725 = vmatpush1.msra.mxu0 %v1724
    %v1726 = vand.u32 %v134, 4294901760
    %v1727 = vsub.f32 %v134, %v1726
    %v1728 = vand.u32 %v1727, 4294901760
    %1729 = vmatprep.subr.mxu0 %v1728
    %v1730 = vand.u32 %v133, 4294901760
    %v1731 = vsub.f32 %v133, %v1730
    %v1732 = vand.u32 %v1731, 4294901760
    %1733 = vmatpush1.msra.mxu0 %v1732
    %v1734 = vand.u32 %v141, 4294901760
    %v1735 = vsub.f32 %v141, %v1734
    %v1736 = vand.u32 %v1735, 4294901760
    %1737 = vmatprep.subr.mxu0 %v1736
    %v1738 = vand.u32 %v140, 4294901760
    %v1739 = vsub.f32 %v140, %v1738
    %v1740 = vand.u32 %v1739, 4294901760
    %1741 = vmatpush1.msra.mxu0 %v1740
    %v1742 = vand.u32 %v148, 4294901760
    %v1743 = vsub.f32 %v148, %v1742
    %v1744 = vand.u32 %v1743, 4294901760
    %1745 = vmatprep.subr.mxu0 %v1744
    %v1746 = vand.u32 %v147, 4294901760
    %v1747 = vsub.f32 %v147, %v1746
    %v1748 = vand.u32 %v1747, 4294901760
    %1749 = vmatpush1.msra.mxu0 %v1748
    %v1750 = vand.u32 %v155, 4294901760
    %v1751 = vsub.f32 %v155, %v1750
    %v1752 = vand.u32 %v1751, 4294901760
    %1753 = vmatprep.subr.mxu0 %v1752
    %v1754 = vand.u32 %v154, 4294901760
    %v1755 = vsub.f32 %v154, %v1754
    %v1756 = vand.u32 %v1755, 4294901760
    %1757 = vmatpush1.msra.mxu0 %v1756
    %v1758 = vand.u32 %v162, 4294901760
    %v1759 = vsub.f32 %v162, %v1758
    %v1760 = vand.u32 %v1759, 4294901760
    %1761 = vmatprep.subr.mxu0 %v1760
    %v1762 = vand.u32 %v161, 4294901760
    %v1763 = vsub.f32 %v161, %v1762
    %v1764 = vand.u32 %v1763, 4294901760
    %1765 = vmatpush1.msra.mxu0 %v1764
    %v1766 = vand.u32 %v169, 4294901760
    %v1767 = vsub.f32 %v169, %v1766
    %v1768 = vand.u32 %v1767, 4294901760
    %1769 = vmatprep.subr.mxu0 %v1768
    %v1770 = vand.u32 %v168, 4294901760
    %v1771 = vsub.f32 %v168, %v1770
    %v1772 = vand.u32 %v1771, 4294901760
    %1773 = vmatpush1.msra.mxu0 %v1772
    %v1774 = vand.u32 %v176, 4294901760
    %v1775 = vsub.f32 %v176, %v1774
    %v1776 = vand.u32 %v1775, 4294901760
    %1777 = vmatprep.subr.mxu0 %v1776
    %v1778 = vand.u32 %v175, 4294901760
    %v1779 = vsub.f32 %v175, %v1778
    %v1780 = vand.u32 %v1779, 4294901760
    %1781 = vmatpush1.msra.mxu0 %v1780
    %v1782 = vand.u32 %v183, 4294901760
    %v1783 = vsub.f32 %v183, %v1782
    %v1784 = vand.u32 %v1783, 4294901760
    %1785 = vmatprep.subr.mxu0 %v1784
    %v1786 = vand.u32 %v182, 4294901760
    %v1787 = vsub.f32 %v182, %v1786
    %v1788 = vand.u32 %v1787, 4294901760
    %1789 = vmatpush1.msra.mxu0 %v1788
    %1790 = vmatprep.subr.mxu0 0.0
    %1791 = vmatpush1.msra.mxu0 0.0
    %1792 = vmatprep.subr.mxu0 0.0
    %1793 = vmatpush1.msra.mxu0 0.0
    %1794 = vmatprep.subr.mxu0 0.0
    %1795 = vmatpush1.msra.mxu0 0.0
    %1796 = vmatprep.subr.mxu0 0.0
    %1797 = vmatpush1.msra.mxu0 0.0
    %1798 = vmatprep.subr.mxu0 0.0
    %1799 = vmatpush1.msra.mxu0 0.0
    %1800 = vmatprep.subr.mxu0 0.0
    %1801 = vmatpush1.msra.mxu0 0.0
    %1802 = vmatprep.subr.mxu0 0.0
    %1803 = vmatpush1.msra.mxu0 0.0
    %1804 = vmatprep.subr.mxu0 0.0
    %1805 = vmatpush1.msra.mxu0 0.0
    %1806 = vmatprep.subr.mxu0 0.0
    %1807 = vmatpush1.msra.mxu0 0.0
    %1808 = vmatprep.subr.mxu0 0.0
    %1809 = vmatpush1.msra.mxu0 0.0
    %1810 = vmatprep.subr.mxu0 0.0
    %1811 = vmatpush1.msra.mxu0 0.0
    %1812 = vmatprep.subr.mxu0 0.0
    %1813 = vmatpush1.msra.mxu0 0.0
    %1814 = vmatprep.subr.mxu0 0.0
    %1815 = vmatpush1.msra.mxu0 0.0
    %1816 = vmatprep.subr.mxu0 0.0
    %1817 = vmatpush1.msra.mxu0 0.0
    %1818 = vmatprep.subr.mxu0 0.0
    %1819 = vmatpush1.msra.mxu0 0.0
    %1820 = vmatprep.subr.mxu0 0.0
    %1821 = vmatpush1.msra.mxu0 0.0
    %1822 = vmatprep.mubr.f32.mxu0 0.0
    %v1823 = vand.u32 %v74, 4294901760
    %1824 = vmatmul.mubr.f32.gmra.mrb[0].mxu0 %v1823
    %v1825 = vpop.f32.mrb[0].mxu0
    %v1826 = vadd.f32 %v1658, %v1825
    %v1827 = vpop.f32.mrb[0].mxu0
    %v1828 = vadd.f32 %v1660, %v1827
    %1829 = vdwg.mxu0
    %v1830 = vand.u32 %v78, 4294901760
    %1831 = vmatprep.subr.mxu0 %v1830
    %v1832 = vand.u32 %v77, 4294901760
    %1833 = vmatpush1.msra.mxu0 %v1832
    %v1834 = vand.u32 %v85, 4294901760
    %1835 = vmatprep.subr.mxu0 %v1834
    %v1836 = vand.u32 %v84, 4294901760
    %1837 = vmatpush1.msra.mxu0 %v1836
    %v1838 = vand.u32 %v92, 4294901760
    %1839 = vmatprep.subr.mxu0 %v1838
    %v1840 = vand.u32 %v91, 4294901760
    %1841 = vmatpush1.msra.mxu0 %v1840
    %v1842 = vand.u32 %v99, 4294901760
    %1843 = vmatprep.subr.mxu0 %v1842
    %v1844 = vand.u32 %v98, 4294901760
    %1845 = vmatpush1.msra.mxu0 %v1844
    %v1846 = vand.u32 %v106, 4294901760
    %1847 = vmatprep.subr.mxu0 %v1846
    %v1848 = vand.u32 %v105, 4294901760
    %1849 = vmatpush1.msra.mxu0 %v1848
    %v1850 = vand.u32 %v113, 4294901760
    %1851 = vmatprep.subr.mxu0 %v1850
    %v1852 = vand.u32 %v112, 4294901760
    %1853 = vmatpush1.msra.mxu0 %v1852
    %v1854 = vand.u32 %v120, 4294901760
    %1855 = vmatprep.subr.mxu0 %v1854
    %v1856 = vand.u32 %v119, 4294901760
    %1857 = vmatpush1.msra.mxu0 %v1856
    %v1858 = vand.u32 %v127, 4294901760
    %1859 = vmatprep.subr.mxu0 %v1858
    %v1860 = vand.u32 %v126, 4294901760
    %1861 = vmatpush1.msra.mxu0 %v1860
    %v1862 = vand.u32 %v134, 4294901760
    %1863 = vmatprep.subr.mxu0 %v1862
    %v1864 = vand.u32 %v133, 4294901760
    %1865 = vmatpush1.msra.mxu0 %v1864
    %v1866 = vand.u32 %v141, 4294901760
    %1867 = vmatprep.subr.mxu0 %v1866
    %v1868 = vand.u32 %v140, 4294901760
    %1869 = vmatpush1.msra.mxu0 %v1868
    %v1870 = vand.u32 %v148, 4294901760
    %1871 = vmatprep.subr.mxu0 %v1870
    %v1872 = vand.u32 %v147, 4294901760
    %1873 = vmatpush1.msra.mxu0 %v1872
    %v1874 = vand.u32 %v155, 4294901760
    %1875 = vmatprep.subr.mxu0 %v1874
    %v1876 = vand.u32 %v154, 4294901760
    %1877 = vmatpush1.msra.mxu0 %v1876
    %v1878 = vand.u32 %v162, 4294901760
    %1879 = vmatprep.subr.mxu0 %v1878
    %v1880 = vand.u32 %v161, 4294901760
    %1881 = vmatpush1.msra.mxu0 %v1880
    %v1882 = vand.u32 %v169, 4294901760
    %1883 = vmatprep.subr.mxu0 %v1882
    %v1884 = vand.u32 %v168, 4294901760
    %1885 = vmatpush1.msra.mxu0 %v1884
    %v1886 = vand.u32 %v176, 4294901760
    %1887 = vmatprep.subr.mxu0 %v1886
    %v1888 = vand.u32 %v175, 4294901760
    %1889 = vmatpush1.msra.mxu0 %v1888
    %v1890 = vand.u32 %v183, 4294901760
    %1891 = vmatprep.subr.mxu0 %v1890
    %v1892 = vand.u32 %v182, 4294901760
    %1893 = vmatpush1.msra.mxu0 %v1892
    %1894 = vmatprep.subr.mxu0 0.0
    %1895 = vmatpush1.msra.mxu0 0.0
    %1896 = vmatprep.subr.mxu0 0.0
    %1897 = vmatpush1.msra.mxu0 0.0
    %1898 = vmatprep.subr.mxu0 0.0
    %1899 = vmatpush1.msra.mxu0 0.0
    %1900 = vmatprep.subr.mxu0 0.0
    %1901 = vmatpush1.msra.mxu0 0.0
    %1902 = vmatprep.subr.mxu0 0.0
    %1903 = vmatpush1.msra.mxu0 0.0
    %1904 = vmatprep.subr.mxu0 0.0
    %1905 = vmatpush1.msra.mxu0 0.0
    %1906 = vmatprep.subr.mxu0 0.0
    %1907 = vmatpush1.msra.mxu0 0.0
    %1908 = vmatprep.subr.mxu0 0.0
    %1909 = vmatpush1.msra.mxu0 0.0
    %1910 = vmatprep.subr.mxu0 0.0
    %1911 = vmatpush1.msra.mxu0 0.0
    %1912 = vmatprep.subr.mxu0 0.0
    %1913 = vmatpush1.msra.mxu0 0.0
    %1914 = vmatprep.subr.mxu0 0.0
    %1915 = vmatpush1.msra.mxu0 0.0
    %1916 = vmatprep.subr.mxu0 0.0
    %1917 = vmatpush1.msra.mxu0 0.0
    %1918 = vmatprep.subr.mxu0 0.0
    %1919 = vmatpush1.msra.mxu0 0.0
    %1920 = vmatprep.subr.mxu0 0.0
    %1921 = vmatpush1.msra.mxu0 0.0
    %1922 = vmatprep.subr.mxu0 0.0
    %1923 = vmatpush1.msra.mxu0 0.0
    %1924 = vmatprep.subr.mxu0 0.0
    %1925 = vmatpush1.msra.mxu0 0.0
    %1926 = vmatprep.mubr.f32.mxu0 0.0
    %v1927 = vand.u32 %v74, 4294901760
    %1928 = vmatmul.mubr.f32.gmra.mrb[0].mxu0 %v1927
    %v1929 = vpop.f32.mrb[0].mxu0
    %v1930 = vadd.f32 %v1826, %v1929
    %v1931 = vpop.f32.mrb[0].mxu0
    %v1932 = vadd.f32 %v1828, %v1931
    %1933 = vdwg.mxu0
    %v1934 = vand.u32 %v80, 4294901760
    %1935 = vmatprep.subr.mxu0 %v1934
    %v1936 = vand.u32 %v79, 4294901760
    %1937 = vmatpush1.msra.mxu0 %v1936
    %v1938 = vand.u32 %v87, 4294901760
    %1939 = vmatprep.subr.mxu0 %v1938
    %v1940 = vand.u32 %v86, 4294901760
    %1941 = vmatpush1.msra.mxu0 %v1940
    %v1942 = vand.u32 %v94, 4294901760
    %1943 = vmatprep.subr.mxu0 %v1942
    %v1944 = vand.u32 %v93, 4294901760
    %1945 = vmatpush1.msra.mxu0 %v1944
    %v1946 = vand.u32 %v101, 4294901760
    %1947 = vmatprep.subr.mxu0 %v1946
    %v1948 = vand.u32 %v100, 4294901760
    %1949 = vmatpush1.msra.mxu0 %v1948
    %v1950 = vand.u32 %v108, 4294901760
    %1951 = vmatprep.subr.mxu0 %v1950
    %v1952 = vand.u32 %v107, 4294901760
    %1953 = vmatpush1.msra.mxu0 %v1952
    %v1954 = vand.u32 %v115, 4294901760
    %1955 = vmatprep.subr.mxu0 %v1954
    %v1956 = vand.u32 %v114, 4294901760
    %1957 = vmatpush1.msra.mxu0 %v1956
    %v1958 = vand.u32 %v122, 4294901760
    %1959 = vmatprep.subr.mxu0 %v1958
    %v1960 = vand.u32 %v121, 4294901760
    %1961 = vmatpush1.msra.mxu0 %v1960
    %v1962 = vand.u32 %v129, 4294901760
    %1963 = vmatprep.subr.mxu0 %v1962
    %v1964 = vand.u32 %v128, 4294901760
    %1965 = vmatpush1.msra.mxu0 %v1964
    %v1966 = vand.u32 %v136, 4294901760
    %1967 = vmatprep.subr.mxu0 %v1966
    %v1968 = vand.u32 %v135, 4294901760
    %1969 = vmatpush1.msra.mxu0 %v1968
    %v1970 = vand.u32 %v143, 4294901760
    %1971 = vmatprep.subr.mxu0 %v1970
    %v1972 = vand.u32 %v142, 4294901760
    %1973 = vmatpush1.msra.mxu0 %v1972
    %v1974 = vand.u32 %v150, 4294901760
    %1975 = vmatprep.subr.mxu0 %v1974
    %v1976 = vand.u32 %v149, 4294901760
    %1977 = vmatpush1.msra.mxu0 %v1976
    %v1978 = vand.u32 %v157, 4294901760
    %1979 = vmatprep.subr.mxu0 %v1978
    %v1980 = vand.u32 %v156, 4294901760
    %1981 = vmatpush1.msra.mxu0 %v1980
    %v1982 = vand.u32 %v164, 4294901760
    %1983 = vmatprep.subr.mxu0 %v1982
    %v1984 = vand.u32 %v163, 4294901760
    %1985 = vmatpush1.msra.mxu0 %v1984
    %v1986 = vand.u32 %v171, 4294901760
    %1987 = vmatprep.subr.mxu0 %v1986
    %v1988 = vand.u32 %v170, 4294901760
    %1989 = vmatpush1.msra.mxu0 %v1988
    %v1990 = vand.u32 %v178, 4294901760
    %1991 = vmatprep.subr.mxu0 %v1990
    %v1992 = vand.u32 %v177, 4294901760
    %1993 = vmatpush1.msra.mxu0 %v1992
    %v1994 = vand.u32 %v185, 4294901760
    %1995 = vmatprep.subr.mxu0 %v1994
    %v1996 = vand.u32 %v184, 4294901760
    %1997 = vmatpush1.msra.mxu0 %v1996
    %1998 = vmatprep.subr.mxu0 0.0
    %1999 = vmatpush1.msra.mxu0 0.0
    %2000 = vmatprep.subr.mxu0 0.0
    %2001 = vmatpush1.msra.mxu0 0.0
    %2002 = vmatprep.subr.mxu0 0.0
    %2003 = vmatpush1.msra.mxu0 0.0
    %2004 = vmatprep.subr.mxu0 0.0
    %2005 = vmatpush1.msra.mxu0 0.0
    %2006 = vmatprep.subr.mxu0 0.0
    %2007 = vmatpush1.msra.mxu0 0.0
    %2008 = vmatprep.subr.mxu0 0.0
    %2009 = vmatpush1.msra.mxu0 0.0
    %2010 = vmatprep.subr.mxu0 0.0
    %2011 = vmatpush1.msra.mxu0 0.0
    %2012 = vmatprep.subr.mxu0 0.0
    %2013 = vmatpush1.msra.mxu0 0.0
    %2014 = vmatprep.subr.mxu0 0.0
    %2015 = vmatpush1.msra.mxu0 0.0
    %2016 = vmatprep.subr.mxu0 0.0
    %2017 = vmatpush1.msra.mxu0 0.0
    %2018 = vmatprep.subr.mxu0 0.0
    %2019 = vmatpush1.msra.mxu0 0.0
    %2020 = vmatprep.subr.mxu0 0.0
    %2021 = vmatpush1.msra.mxu0 0.0
    %2022 = vmatprep.subr.mxu0 0.0
    %2023 = vmatpush1.msra.mxu0 0.0
    %2024 = vmatprep.subr.mxu0 0.0
    %2025 = vmatpush1.msra.mxu0 0.0
    %2026 = vmatprep.subr.mxu0 0.0
    %2027 = vmatpush1.msra.mxu0 0.0
    %2028 = vmatprep.subr.mxu0 0.0
    %2029 = vmatpush1.msra.mxu0 0.0
    %2030 = vmatprep.mubr.f32.mxu0 0.0
    %v2031 = vand.u32 %v74, 4294901760
    %v2032 = vsub.f32 %v74, %v2031
    %v2033 = vand.u32 %v2032, 4294901760
    %v2034 = vsub.f32 %v2032, %v2033
    %v2035 = vand.u32 %v2034, 4294901760
    %2036 = vmatmul.mubr.f32.gmra.mrb[0].mxu0 %v2035
    %v2037 = vpop.f32.mrb[0].mxu0
    %v2038 = vadd.f32 %v208, %v2037
    %v2039 = vpop.f32.mrb[0].mxu0
    %v2040 = vadd.f32 %v212, %v2039
    %2041 = vdwg.mxu0
    %v2042 = vand.u32 %v80, 4294901760
    %v2043 = vsub.f32 %v80, %v2042
    %v2044 = vand.u32 %v2043, 4294901760
    %v2045 = vsub.f32 %v2043, %v2044
    %v2046 = vand.u32 %v2045, 4294901760
    %2047 = vmatprep.subr.mxu0 %v2046
    %v2048 = vand.u32 %v79, 4294901760
    %v2049 = vsub.f32 %v79, %v2048
    %v2050 = vand.u32 %v2049, 4294901760
    %v2051 = vsub.f32 %v2049, %v2050
    %v2052 = vand.u32 %v2051, 4294901760
    %2053 = vmatpush1.msra.mxu0 %v2052
    %v2054 = vand.u32 %v87, 4294901760
    %v2055 = vsub.f32 %v87, %v2054
    %v2056 = vand.u32 %v2055, 4294901760
    %v2057 = vsub.f32 %v2055, %v2056
    %v2058 = vand.u32 %v2057, 4294901760
    %2059 = vmatprep.subr.mxu0 %v2058
    %v2060 = vand.u32 %v86, 4294901760
    %v2061 = vsub.f32 %v86, %v2060
    %v2062 = vand.u32 %v2061, 4294901760
    %v2063 = vsub.f32 %v2061, %v2062
    %v2064 = vand.u32 %v2063, 4294901760
    %2065 = vmatpush1.msra.mxu0 %v2064
    %v2066 = vand.u32 %v94, 4294901760
    %v2067 = vsub.f32 %v94, %v2066
    %v2068 = vand.u32 %v2067, 4294901760
    %v2069 = vsub.f32 %v2067, %v2068
    %v2070 = vand.u32 %v2069, 4294901760
    %2071 = vmatprep.subr.mxu0 %v2070
    %v2072 = vand.u32 %v93, 4294901760
    %v2073 = vsub.f32 %v93, %v2072
    %v2074 = vand.u32 %v2073, 4294901760
    %v2075 = vsub.f32 %v2073, %v2074
    %v2076 = vand.u32 %v2075, 4294901760
    %2077 = vmatpush1.msra.mxu0 %v2076
    %v2078 = vand.u32 %v101, 4294901760
    %v2079 = vsub.f32 %v101, %v2078
    %v2080 = vand.u32 %v2079, 4294901760
    %v2081 = vsub.f32 %v2079, %v2080
    %v2082 = vand.u32 %v2081, 4294901760
    %2083 = vmatprep.subr.mxu0 %v2082
    %v2084 = vand.u32 %v100, 4294901760
    %v2085 = vsub.f32 %v100, %v2084
    %v2086 = vand.u32 %v2085, 4294901760
    %v2087 = vsub.f32 %v2085, %v2086
    %v2088 = vand.u32 %v2087, 4294901760
    %2089 = vmatpush1.msra.mxu0 %v2088
    %v2090 = vand.u32 %v108, 4294901760
    %v2091 = vsub.f32 %v108, %v2090
    %v2092 = vand.u32 %v2091, 4294901760
    %v2093 = vsub.f32 %v2091, %v2092
    %v2094 = vand.u32 %v2093, 4294901760
    %2095 = vmatprep.subr.mxu0 %v2094
    %v2096 = vand.u32 %v107, 4294901760
    %v2097 = vsub.f32 %v107, %v2096
    %v2098 = vand.u32 %v2097, 4294901760
    %v2099 = vsub.f32 %v2097, %v2098
    %v2100 = vand.u32 %v2099, 4294901760
    %2101 = vmatpush1.msra.mxu0 %v2100
    %v2102 = vand.u32 %v115, 4294901760
    %v2103 = vsub.f32 %v115, %v2102
    %v2104 = vand.u32 %v2103, 4294901760
    %v2105 = vsub.f32 %v2103, %v2104
    %v2106 = vand.u32 %v2105, 4294901760
    %2107 = vmatprep.subr.mxu0 %v2106
    %v2108 = vand.u32 %v114, 4294901760
    %v2109 = vsub.f32 %v114, %v2108
    %v2110 = vand.u32 %v2109, 4294901760
    %v2111 = vsub.f32 %v2109, %v2110
    %v2112 = vand.u32 %v2111, 4294901760
    %2113 = vmatpush1.msra.mxu0 %v2112
    %v2114 = vand.u32 %v122, 4294901760
    %v2115 = vsub.f32 %v122, %v2114
    %v2116 = vand.u32 %v2115, 4294901760
    %v2117 = vsub.f32 %v2115, %v2116
    %v2118 = vand.u32 %v2117, 4294901760
    %2119 = vmatprep.subr.mxu0 %v2118
    %v2120 = vand.u32 %v121, 4294901760
    %v2121 = vsub.f32 %v121, %v2120
    %v2122 = vand.u32 %v2121, 4294901760
    %v2123 = vsub.f32 %v2121, %v2122
    %v2124 = vand.u32 %v2123, 4294901760
    %2125 = vmatpush1.msra.mxu0 %v2124
    %v2126 = vand.u32 %v129, 4294901760
    %v2127 = vsub.f32 %v129, %v2126
    %v2128 = vand.u32 %v2127, 4294901760
    %v2129 = vsub.f32 %v2127, %v2128
    %v2130 = vand.u32 %v2129, 4294901760
    %2131 = vmatprep.subr.mxu0 %v2130
    %v2132 = vand.u32 %v128, 4294901760
    %v2133 = vsub.f32 %v128, %v2132
    %v2134 = vand.u32 %v2133, 4294901760
    %v2135 = vsub.f32 %v2133, %v2134
    %v2136 = vand.u32 %v2135, 4294901760
    %2137 = vmatpush1.msra.mxu0 %v2136
    %v2138 = vand.u32 %v136, 4294901760
    %v2139 = vsub.f32 %v136, %v2138
    %v2140 = vand.u32 %v2139, 4294901760
    %v2141 = vsub.f32 %v2139, %v2140
    %v2142 = vand.u32 %v2141, 4294901760
    %2143 = vmatprep.subr.mxu0 %v2142
    %v2144 = vand.u32 %v135, 4294901760
    %v2145 = vsub.f32 %v135, %v2144
    %v2146 = vand.u32 %v2145, 4294901760
    %v2147 = vsub.f32 %v2145, %v2146
    %v2148 = vand.u32 %v2147, 4294901760
    %2149 = vmatpush1.msra.mxu0 %v2148
    %v2150 = vand.u32 %v143, 4294901760
    %v2151 = vsub.f32 %v143, %v2150
    %v2152 = vand.u32 %v2151, 4294901760
    %v2153 = vsub.f32 %v2151, %v2152
    %v2154 = vand.u32 %v2153, 4294901760
    %2155 = vmatprep.subr.mxu0 %v2154
    %v2156 = vand.u32 %v142, 4294901760
    %v2157 = vsub.f32 %v142, %v2156
    %v2158 = vand.u32 %v2157, 4294901760
    %v2159 = vsub.f32 %v2157, %v2158
    %v2160 = vand.u32 %v2159, 4294901760
    %2161 = vmatpush1.msra.mxu0 %v2160
    %v2162 = vand.u32 %v150, 4294901760
    %v2163 = vsub.f32 %v150, %v2162
    %v2164 = vand.u32 %v2163, 4294901760
    %v2165 = vsub.f32 %v2163, %v2164
    %v2166 = vand.u32 %v2165, 4294901760
    %2167 = vmatprep.subr.mxu0 %v2166
    %v2168 = vand.u32 %v149, 4294901760
    %v2169 = vsub.f32 %v149, %v2168
    %v2170 = vand.u32 %v2169, 4294901760
    %v2171 = vsub.f32 %v2169, %v2170
    %v2172 = vand.u32 %v2171, 4294901760
    %2173 = vmatpush1.msra.mxu0 %v2172
    %v2174 = vand.u32 %v157, 4294901760
    %v2175 = vsub.f32 %v157, %v2174
    %v2176 = vand.u32 %v2175, 4294901760
    %v2177 = vsub.f32 %v2175, %v2176
    %v2178 = vand.u32 %v2177, 4294901760
    %2179 = vmatprep.subr.mxu0 %v2178
    %v2180 = vand.u32 %v156, 4294901760
    %v2181 = vsub.f32 %v156, %v2180
    %v2182 = vand.u32 %v2181, 4294901760
    %v2183 = vsub.f32 %v2181, %v2182
    %v2184 = vand.u32 %v2183, 4294901760
    %2185 = vmatpush1.msra.mxu0 %v2184
    %v2186 = vand.u32 %v164, 4294901760
    %v2187 = vsub.f32 %v164, %v2186
    %v2188 = vand.u32 %v2187, 4294901760
    %v2189 = vsub.f32 %v2187, %v2188
    %v2190 = vand.u32 %v2189, 4294901760
    %2191 = vmatprep.subr.mxu0 %v2190
    %v2192 = vand.u32 %v163, 4294901760
    %v2193 = vsub.f32 %v163, %v2192
    %v2194 = vand.u32 %v2193, 4294901760
    %v2195 = vsub.f32 %v2193, %v2194
    %v2196 = vand.u32 %v2195, 4294901760
    %2197 = vmatpush1.msra.mxu0 %v2196
    %v2198 = vand.u32 %v171, 4294901760
    %v2199 = vsub.f32 %v171, %v2198
    %v2200 = vand.u32 %v2199, 4294901760
    %v2201 = vsub.f32 %v2199, %v2200
    %v2202 = vand.u32 %v2201, 4294901760
    %2203 = vmatprep.subr.mxu0 %v2202
    %v2204 = vand.u32 %v170, 4294901760
    %v2205 = vsub.f32 %v170, %v2204
    %v2206 = vand.u32 %v2205, 4294901760
    %v2207 = vsub.f32 %v2205, %v2206
    %v2208 = vand.u32 %v2207, 4294901760
    %2209 = vmatpush1.msra.mxu0 %v2208
    %v2210 = vand.u32 %v178, 4294901760
    %v2211 = vsub.f32 %v178, %v2210
    %v2212 = vand.u32 %v2211, 4294901760
    %v2213 = vsub.f32 %v2211, %v2212
    %v2214 = vand.u32 %v2213, 4294901760
    %2215 = vmatprep.subr.mxu0 %v2214
    %v2216 = vand.u32 %v177, 4294901760
    %v2217 = vsub.f32 %v177, %v2216
    %v2218 = vand.u32 %v2217, 4294901760
    %v2219 = vsub.f32 %v2217, %v2218
    %v2220 = vand.u32 %v2219, 4294901760
    %2221 = vmatpush1.msra.mxu0 %v2220
    %v2222 = vand.u32 %v185, 4294901760
    %v2223 = vsub.f32 %v185, %v2222
    %v2224 = vand.u32 %v2223, 4294901760
    %v2225 = vsub.f32 %v2223, %v2224
    %v2226 = vand.u32 %v2225, 4294901760
    %2227 = vmatprep.subr.mxu0 %v2226
    %v2228 = vand.u32 %v184, 4294901760
    %v2229 = vsub.f32 %v184, %v2228
    %v2230 = vand.u32 %v2229, 4294901760
    %v2231 = vsub.f32 %v2229, %v2230
    %v2232 = vand.u32 %v2231, 4294901760
    %2233 = vmatpush1.msra.mxu0 %v2232
    %2234 = vmatprep.subr.mxu0 0.0
    %2235 = vmatpush1.msra.mxu0 0.0
    %2236 = vmatprep.subr.mxu0 0.0
    %2237 = vmatpush1.msra.mxu0 0.0
    %2238 = vmatprep.subr.mxu0 0.0
    %2239 = vmatpush1.msra.mxu0 0.0
    %2240 = vmatprep.subr.mxu0 0.0
    %2241 = vmatpush1.msra.mxu0 0.0
    %2242 = vmatprep.subr.mxu0 0.0
    %2243 = vmatpush1.msra.mxu0 0.0
    %2244 = vmatprep.subr.mxu0 0.0
    %2245 = vmatpush1.msra.mxu0 0.0
    %2246 = vmatprep.subr.mxu0 0.0
    %2247 = vmatpush1.msra.mxu0 0.0
    %2248 = vmatprep.subr.mxu0 0.0
    %2249 = vmatpush1.msra.mxu0 0.0
    %2250 = vmatprep.subr.mxu0 0.0
    %2251 = vmatpush1.msra.mxu0 0.0
    %2252 = vmatprep.subr.mxu0 0.0
    %2253 = vmatpush1.msra.mxu0 0.0
    %2254 = vmatprep.subr.mxu0 0.0
    %2255 = vmatpush1.msra.mxu0 0.0
    %2256 = vmatprep.subr.mxu0 0.0
    %2257 = vmatpush1.msra.mxu0 0.0
    %2258 = vmatprep.subr.mxu0 0.0
    %2259 = vmatpush1.msra.mxu0 0.0
    %2260 = vmatprep.subr.mxu0 0.0
    %2261 = vmatpush1.msra.mxu0 0.0
    %2262 = vmatprep.subr.mxu0 0.0
    %2263 = vmatpush1.msra.mxu0 0.0
    %2264 = vmatprep.subr.mxu0 0.0
    %2265 = vmatpush1.msra.mxu0 0.0
    %2266 = vmatprep.mubr.f32.mxu0 0.0
    %v2267 = vand.u32 %v74, 4294901760
    %2268 = vmatmul.mubr.f32.gmra.mrb[0].mxu0 %v2267
    %v2269 = vpop.f32.mrb[0].mxu0
    %v2270 = vadd.f32 %v2038, %v2269
    %v2271 = vpop.f32.mrb[0].mxu0
    %v2272 = vadd.f32 %v2040, %v2271
    %2273 = vdwg.mxu0
    %v2274 = vand.u32 %v80, 4294901760
    %v2275 = vsub.f32 %v80, %v2274
    %2276 = vmatprep.subr.mxu0 %v2275
    %v2277 = vand.u32 %v79, 4294901760
    %v2278 = vsub.f32 %v79, %v2277
    %2279 = vmatpush1.msra.mxu0 %v2278
    %v2280 = vand.u32 %v87, 4294901760
    %v2281 = vsub.f32 %v87, %v2280
    %2282 = vmatprep.subr.mxu0 %v2281
    %v2283 = vand.u32 %v86, 4294901760
    %v2284 = vsub.f32 %v86, %v2283
    %2285 = vmatpush1.msra.mxu0 %v2284
    %v2286 = vand.u32 %v94, 4294901760
    %v2287 = vsub.f32 %v94, %v2286
    %2288 = vmatprep.subr.mxu0 %v2287
    %v2289 = vand.u32 %v93, 4294901760
    %v2290 = vsub.f32 %v93, %v2289
    %2291 = vmatpush1.msra.mxu0 %v2290
    %v2292 = vand.u32 %v101, 4294901760
    %v2293 = vsub.f32 %v101, %v2292
    %2294 = vmatprep.subr.mxu0 %v2293
    %v2295 = vand.u32 %v100, 4294901760
    %v2296 = vsub.f32 %v100, %v2295
    %2297 = vmatpush1.msra.mxu0 %v2296
    %v2298 = vand.u32 %v108, 4294901760
    %v2299 = vsub.f32 %v108, %v2298
    %2300 = vmatprep.subr.mxu0 %v2299
    %v2301 = vand.u32 %v107, 4294901760
    %v2302 = vsub.f32 %v107, %v2301
    %2303 = vmatpush1.msra.mxu0 %v2302
    %v2304 = vand.u32 %v115, 4294901760
    %v2305 = vsub.f32 %v115, %v2304
    %2306 = vmatprep.subr.mxu0 %v2305
    %v2307 = vand.u32 %v114, 4294901760
    %v2308 = vsub.f32 %v114, %v2307
    %2309 = vmatpush1.msra.mxu0 %v2308
    %v2310 = vand.u32 %v122, 4294901760
    %v2311 = vsub.f32 %v122, %v2310
    %2312 = vmatprep.subr.mxu0 %v2311
    %v2313 = vand.u32 %v121, 4294901760
    %v2314 = vsub.f32 %v121, %v2313
    %2315 = vmatpush1.msra.mxu0 %v2314
    %v2316 = vand.u32 %v129, 4294901760
    %v2317 = vsub.f32 %v129, %v2316
    %2318 = vmatprep.subr.mxu0 %v2317
    %v2319 = vand.u32 %v128, 4294901760
    %v2320 = vsub.f32 %v128, %v2319
    %2321 = vmatpush1.msra.mxu0 %v2320
    %v2322 = vand.u32 %v136, 4294901760
    %v2323 = vsub.f32 %v136, %v2322
    %2324 = vmatprep.subr.mxu0 %v2323
    %v2325 = vand.u32 %v135, 4294901760
    %v2326 = vsub.f32 %v135, %v2325
    %2327 = vmatpush1.msra.mxu0 %v2326
    %v2328 = vand.u32 %v143, 4294901760
    %v2329 = vsub.f32 %v143, %v2328
    %2330 = vmatprep.subr.mxu0 %v2329
    %v2331 = vand.u32 %v142, 4294901760
    %v2332 = vsub.f32 %v142, %v2331
    %2333 = vmatpush1.msra.mxu0 %v2332
    %v2334 = vand.u32 %v150, 4294901760
    %v2335 = vsub.f32 %v150, %v2334
    %2336 = vmatprep.subr.mxu0 %v2335
    %v2337 = vand.u32 %v149, 4294901760
    %v2338 = vsub.f32 %v149, %v2337
    %2339 = vmatpush1.msra.mxu0 %v2338
    %v2340 = vand.u32 %v157, 4294901760
    %v2341 = vsub.f32 %v157, %v2340
    %2342 = vmatprep.subr.mxu0 %v2341
    %v2343 = vand.u32 %v156, 4294901760
    %v2344 = vsub.f32 %v156, %v2343
    %2345 = vmatpush1.msra.mxu0 %v2344
    %v2346 = vand.u32 %v164, 4294901760
    %v2347 = vsub.f32 %v164, %v2346
    %2348 = vmatprep.subr.mxu0 %v2347
    %v2349 = vand.u32 %v163, 4294901760
    %v2350 = vsub.f32 %v163, %v2349
    %2351 = vmatpush1.msra.mxu0 %v2350
    %v2352 = vand.u32 %v171, 4294901760
    %v2353 = vsub.f32 %v171, %v2352
    %2354 = vmatprep.subr.mxu0 %v2353
    %v2355 = vand.u32 %v170, 4294901760
    %v2356 = vsub.f32 %v170, %v2355
    %2357 = vmatpush1.msra.mxu0 %v2356
    %v2358 = vand.u32 %v178, 4294901760
    %v2359 = vsub.f32 %v178, %v2358
    %2360 = vmatprep.subr.mxu0 %v2359
    %v2361 = vand.u32 %v177, 4294901760
    %v2362 = vsub.f32 %v177, %v2361
    %2363 = vmatpush1.msra.mxu0 %v2362
    %v2364 = vand.u32 %v185, 4294901760
    %v2365 = vsub.f32 %v185, %v2364
    %2366 = vmatprep.subr.mxu0 %v2365
    %v2367 = vand.u32 %v184, 4294901760
    %v2368 = vsub.f32 %v184, %v2367
    %2369 = vmatpush1.msra.mxu0 %v2368
    %2370 = vmatprep.subr.mxu0 0.0
    %2371 = vmatpush1.msra.mxu0 0.0
    %2372 = vmatprep.subr.mxu0 0.0
    %2373 = vmatpush1.msra.mxu0 0.0
    %2374 = vmatprep.subr.mxu0 0.0
    %2375 = vmatpush1.msra.mxu0 0.0
    %2376 = vmatprep.subr.mxu0 0.0
    %2377 = vmatpush1.msra.mxu0 0.0
    %2378 = vmatprep.subr.mxu0 0.0
    %2379 = vmatpush1.msra.mxu0 0.0
    %2380 = vmatprep.subr.mxu0 0.0
    %2381 = vmatpush1.msra.mxu0 0.0
    %2382 = vmatprep.subr.mxu0 0.0
    %2383 = vmatpush1.msra.mxu0 0.0
    %2384 = vmatprep.subr.mxu0 0.0
    %2385 = vmatpush1.msra.mxu0 0.0
    %2386 = vmatprep.subr.mxu0 0.0
    %2387 = vmatpush1.msra.mxu0 0.0
    %2388 = vmatprep.subr.mxu0 0.0
    %2389 = vmatpush1.msra.mxu0 0.0
    %2390 = vmatprep.subr.mxu0 0.0
    %2391 = vmatpush1.msra.mxu0 0.0
    %2392 = vmatprep.subr.mxu0 0.0
    %2393 = vmatpush1.msra.mxu0 0.0
    %2394 = vmatprep.subr.mxu0 0.0
    %2395 = vmatpush1.msra.mxu0 0.0
    %2396 = vmatprep.subr.mxu0 0.0
    %2397 = vmatpush1.msra.mxu0 0.0
    %2398 = vmatprep.subr.mxu0 0.0
    %2399 = vmatpush1.msra.mxu0 0.0
    %2400 = vmatprep.subr.mxu0 0.0
    %2401 = vmatpush1.msra.mxu0 0.0
    %2402 = vmatprep.mubr.f32.mxu0 0.0
    %v2403 = vand.u32 %v74, 4294901760
    %v2404 = vsub.f32 %v74, %v2403
    %2405 = vmatmul.mubr.f32.gmra.mrb[0].mxu0 %v2404
    %v2406 = vpop.f32.mrb[0].mxu0
    %v2407 = vadd.f32 %v2270, %v2406
    %v2408 = vpop.f32.mrb[0].mxu0
    %v2409 = vadd.f32 %v2272, %v2408
    %2410 = vdwg.mxu0
    %v2411 = vand.u32 %v80, 4294901760
    %2412 = vmatprep.subr.mxu0 %v2411
    %v2413 = vand.u32 %v79, 4294901760
    %2414 = vmatpush1.msra.mxu0 %v2413
    %v2415 = vand.u32 %v87, 4294901760
    %2416 = vmatprep.subr.mxu0 %v2415
    %v2417 = vand.u32 %v86, 4294901760
    %2418 = vmatpush1.msra.mxu0 %v2417
    %v2419 = vand.u32 %v94, 4294901760
    %2420 = vmatprep.subr.mxu0 %v2419
    %v2421 = vand.u32 %v93, 4294901760
    %2422 = vmatpush1.msra.mxu0 %v2421
    %v2423 = vand.u32 %v101, 4294901760
    %2424 = vmatprep.subr.mxu0 %v2423
    %v2425 = vand.u32 %v100, 4294901760
    %2426 = vmatpush1.msra.mxu0 %v2425
    %v2427 = vand.u32 %v108, 4294901760
    %2428 = vmatprep.subr.mxu0 %v2427
    %v2429 = vand.u32 %v107, 4294901760
    %2430 = vmatpush1.msra.mxu0 %v2429
    %v2431 = vand.u32 %v115, 4294901760
    %2432 = vmatprep.subr.mxu0 %v2431
    %v2433 = vand.u32 %v114, 4294901760
    %2434 = vmatpush1.msra.mxu0 %v2433
    %v2435 = vand.u32 %v122, 4294901760
    %2436 = vmatprep.subr.mxu0 %v2435
    %v2437 = vand.u32 %v121, 4294901760
    %2438 = vmatpush1.msra.mxu0 %v2437
    %v2439 = vand.u32 %v129, 4294901760
    %2440 = vmatprep.subr.mxu0 %v2439
    %v2441 = vand.u32 %v128, 4294901760
    %2442 = vmatpush1.msra.mxu0 %v2441
    %v2443 = vand.u32 %v136, 4294901760
    %2444 = vmatprep.subr.mxu0 %v2443
    %v2445 = vand.u32 %v135, 4294901760
    %2446 = vmatpush1.msra.mxu0 %v2445
    %v2447 = vand.u32 %v143, 4294901760
    %2448 = vmatprep.subr.mxu0 %v2447
    %v2449 = vand.u32 %v142, 4294901760
    %2450 = vmatpush1.msra.mxu0 %v2449
    %v2451 = vand.u32 %v150, 4294901760
    %2452 = vmatprep.subr.mxu0 %v2451
    %v2453 = vand.u32 %v149, 4294901760
    %2454 = vmatpush1.msra.mxu0 %v2453
    %v2455 = vand.u32 %v157, 4294901760
    %2456 = vmatprep.subr.mxu0 %v2455
    %v2457 = vand.u32 %v156, 4294901760
    %2458 = vmatpush1.msra.mxu0 %v2457
    %v2459 = vand.u32 %v164, 4294901760
    %2460 = vmatprep.subr.mxu0 %v2459
    %v2461 = vand.u32 %v163, 4294901760
    %2462 = vmatpush1.msra.mxu0 %v2461
    %v2463 = vand.u32 %v171, 4294901760
    %2464 = vmatprep.subr.mxu0 %v2463
    %v2465 = vand.u32 %v170, 4294901760
    %2466 = vmatpush1.msra.mxu0 %v2465
    %v2467 = vand.u32 %v178, 4294901760
    %2468 = vmatprep.subr.mxu0 %v2467
    %v2469 = vand.u32 %v177, 4294901760
    %2470 = vmatpush1.msra.mxu0 %v2469
    %v2471 = vand.u32 %v185, 4294901760
    %2472 = vmatprep.subr.mxu0 %v2471
    %v2473 = vand.u32 %v184, 4294901760
    %2474 = vmatpush1.msra.mxu0 %v2473
    %2475 = vmatprep.subr.mxu0 0.0
    %2476 = vmatpush1.msra.mxu0 0.0
    %2477 = vmatprep.subr.mxu0 0.0
    %2478 = vmatpush1.msra.mxu0 0.0
    %2479 = vmatprep.subr.mxu0 0.0
    %2480 = vmatpush1.msra.mxu0 0.0
    %2481 = vmatprep.subr.mxu0 0.0
    %2482 = vmatpush1.msra.mxu0 0.0
    %2483 = vmatprep.subr.mxu0 0.0
    %2484 = vmatpush1.msra.mxu0 0.0
    %2485 = vmatprep.subr.mxu0 0.0
    %2486 = vmatpush1.msra.mxu0 0.0
    %2487 = vmatprep.subr.mxu0 0.0
    %2488 = vmatpush1.msra.mxu0 0.0
    %2489 = vmatprep.subr.mxu0 0.0
    %2490 = vmatpush1.msra.mxu0 0.0
    %2491 = vmatprep.subr.mxu0 0.0
    %2492 = vmatpush1.msra.mxu0 0.0
    %2493 = vmatprep.subr.mxu0 0.0
    %2494 = vmatpush1.msra.mxu0 0.0
    %2495 = vmatprep.subr.mxu0 0.0
    %2496 = vmatpush1.msra.mxu0 0.0
    %2497 = vmatprep.subr.mxu0 0.0
    %2498 = vmatpush1.msra.mxu0 0.0
    %2499 = vmatprep.subr.mxu0 0.0
    %2500 = vmatpush1.msra.mxu0 0.0
    %2501 = vmatprep.subr.mxu0 0.0
    %2502 = vmatpush1.msra.mxu0 0.0
    %2503 = vmatprep.subr.mxu0 0.0
    %2504 = vmatpush1.msra.mxu0 0.0
    %2505 = vmatprep.subr.mxu0 0.0
    %2506 = vmatpush1.msra.mxu0 0.0
    %2507 = vmatprep.mubr.f32.mxu0 0.0
    %v2508 = vand.u32 %v74, 4294901760
    %v2509 = vsub.f32 %v74, %v2508
    %v2510 = vand.u32 %v2509, 4294901760
    %2511 = vmatmul.mubr.f32.gmra.mrb[0].mxu0 %v2510
    %v2512 = vpop.f32.mrb[0].mxu0
    %v2513 = vadd.f32 %v2407, %v2512
    %v2514 = vpop.f32.mrb[0].mxu0
    %v2515 = vadd.f32 %v2409, %v2514
    %2516 = vdwg.mxu0
    %v2517 = vand.u32 %v80, 4294901760
    %v2518 = vsub.f32 %v80, %v2517
    %v2519 = vand.u32 %v2518, 4294901760
    %2520 = vmatprep.subr.mxu0 %v2519
    %v2521 = vand.u32 %v79, 4294901760
    %v2522 = vsub.f32 %v79, %v2521
    %v2523 = vand.u32 %v2522, 4294901760
    %2524 = vmatpush1.msra.mxu0 %v2523
    %v2525 = vand.u32 %v87, 4294901760
    %v2526 = vsub.f32 %v87, %v2525
    %v2527 = vand.u32 %v2526, 4294901760
    %2528 = vmatprep.subr.mxu0 %v2527
    %v2529 = vand.u32 %v86, 4294901760
    %v2530 = vsub.f32 %v86, %v2529
    %v2531 = vand.u32 %v2530, 4294901760
    %2532 = vmatpush1.msra.mxu0 %v2531
    %v2533 = vand.u32 %v94, 4294901760
    %v2534 = vsub.f32 %v94, %v2533
    %v2535 = vand.u32 %v2534, 4294901760
    %2536 = vmatprep.subr.mxu0 %v2535
    %v2537 = vand.u32 %v93, 4294901760
    %v2538 = vsub.f32 %v93, %v2537
    %v2539 = vand.u32 %v2538, 4294901760
    %2540 = vmatpush1.msra.mxu0 %v2539
    %v2541 = vand.u32 %v101, 4294901760
    %v2542 = vsub.f32 %v101, %v2541
    %v2543 = vand.u32 %v2542, 4294901760
    %2544 = vmatprep.subr.mxu0 %v2543
    %v2545 = vand.u32 %v100, 4294901760
    %v2546 = vsub.f32 %v100, %v2545
    %v2547 = vand.u32 %v2546, 4294901760
    %2548 = vmatpush1.msra.mxu0 %v2547
    %v2549 = vand.u32 %v108, 4294901760
    %v2550 = vsub.f32 %v108, %v2549
    %v2551 = vand.u32 %v2550, 4294901760
    %2552 = vmatprep.subr.mxu0 %v2551
    %v2553 = vand.u32 %v107, 4294901760
    %v2554 = vsub.f32 %v107, %v2553
    %v2555 = vand.u32 %v2554, 4294901760
    %2556 = vmatpush1.msra.mxu0 %v2555
    %v2557 = vand.u32 %v115, 4294901760
    %v2558 = vsub.f32 %v115, %v2557
    %v2559 = vand.u32 %v2558, 4294901760
    %2560 = vmatprep.subr.mxu0 %v2559
    %v2561 = vand.u32 %v114, 4294901760
    %v2562 = vsub.f32 %v114, %v2561
    %v2563 = vand.u32 %v2562, 4294901760
    %2564 = vmatpush1.msra.mxu0 %v2563
    %v2565 = vand.u32 %v122, 4294901760
    %v2566 = vsub.f32 %v122, %v2565
    %v2567 = vand.u32 %v2566, 4294901760
    %2568 = vmatprep.subr.mxu0 %v2567
    %v2569 = vand.u32 %v121, 4294901760
    %v2570 = vsub.f32 %v121, %v2569
    %v2571 = vand.u32 %v2570, 4294901760
    %2572 = vmatpush1.msra.mxu0 %v2571
    %v2573 = vand.u32 %v129, 4294901760
    %v2574 = vsub.f32 %v129, %v2573
    %v2575 = vand.u32 %v2574, 4294901760
    %2576 = vmatprep.subr.mxu0 %v2575
    %v2577 = vand.u32 %v128, 4294901760
    %v2578 = vsub.f32 %v128, %v2577
    %v2579 = vand.u32 %v2578, 4294901760
    %2580 = vmatpush1.msra.mxu0 %v2579
    %v2581 = vand.u32 %v136, 4294901760
    %v2582 = vsub.f32 %v136, %v2581
    %v2583 = vand.u32 %v2582, 4294901760
    %2584 = vmatprep.subr.mxu0 %v2583
    %v2585 = vand.u32 %v135, 4294901760
    %v2586 = vsub.f32 %v135, %v2585
    %v2587 = vand.u32 %v2586, 4294901760
    %2588 = vmatpush1.msra.mxu0 %v2587
    %v2589 = vand.u32 %v143, 4294901760
    %v2590 = vsub.f32 %v143, %v2589
    %v2591 = vand.u32 %v2590, 4294901760
    %2592 = vmatprep.subr.mxu0 %v2591
    %v2593 = vand.u32 %v142, 4294901760
    %v2594 = vsub.f32 %v142, %v2593
    %v2595 = vand.u32 %v2594, 4294901760
    %2596 = vmatpush1.msra.mxu0 %v2595
    %v2597 = vand.u32 %v150, 4294901760
    %v2598 = vsub.f32 %v150, %v2597
    %v2599 = vand.u32 %v2598, 4294901760
    %2600 = vmatprep.subr.mxu0 %v2599
    %v2601 = vand.u32 %v149, 4294901760
    %v2602 = vsub.f32 %v149, %v2601
    %v2603 = vand.u32 %v2602, 4294901760
    %2604 = vmatpush1.msra.mxu0 %v2603
    %v2605 = vand.u32 %v157, 4294901760
    %v2606 = vsub.f32 %v157, %v2605
    %v2607 = vand.u32 %v2606, 4294901760
    %2608 = vmatprep.subr.mxu0 %v2607
    %v2609 = vand.u32 %v156, 4294901760
    %v2610 = vsub.f32 %v156, %v2609
    %v2611 = vand.u32 %v2610, 4294901760
    %2612 = vmatpush1.msra.mxu0 %v2611
    %v2613 = vand.u32 %v164, 4294901760
    %v2614 = vsub.f32 %v164, %v2613
    %v2615 = vand.u32 %v2614, 4294901760
    %2616 = vmatprep.subr.mxu0 %v2615
    %v2617 = vand.u32 %v163, 4294901760
    %v2618 = vsub.f32 %v163, %v2617
    %v2619 = vand.u32 %v2618, 4294901760
    %2620 = vmatpush1.msra.mxu0 %v2619
    %v2621 = vand.u32 %v171, 4294901760
    %v2622 = vsub.f32 %v171, %v2621
    %v2623 = vand.u32 %v2622, 4294901760
    %2624 = vmatprep.subr.mxu0 %v2623
    %v2625 = vand.u32 %v170, 4294901760
    %v2626 = vsub.f32 %v170, %v2625
    %v2627 = vand.u32 %v2626, 4294901760
    %2628 = vmatpush1.msra.mxu0 %v2627
    %v2629 = vand.u32 %v178, 4294901760
    %v2630 = vsub.f32 %v178, %v2629
    %v2631 = vand.u32 %v2630, 4294901760
    %2632 = vmatprep.subr.mxu0 %v2631
    %v2633 = vand.u32 %v177, 4294901760
    %v2634 = vsub.f32 %v177, %v2633
    %v2635 = vand.u32 %v2634, 4294901760
    %2636 = vmatpush1.msra.mxu0 %v2635
    %v2637 = vand.u32 %v185, 4294901760
    %v2638 = vsub.f32 %v185, %v2637
    %v2639 = vand.u32 %v2638, 4294901760
    %2640 = vmatprep.subr.mxu0 %v2639
    %v2641 = vand.u32 %v184, 4294901760
    %v2642 = vsub.f32 %v184, %v2641
    %v2643 = vand.u32 %v2642, 4294901760
    %2644 = vmatpush1.msra.mxu0 %v2643
    %2645 = vmatprep.subr.mxu0 0.0
    %2646 = vmatpush1.msra.mxu0 0.0
    %2647 = vmatprep.subr.mxu0 0.0
    %2648 = vmatpush1.msra.mxu0 0.0
    %2649 = vmatprep.subr.mxu0 0.0
    %2650 = vmatpush1.msra.mxu0 0.0
    %2651 = vmatprep.subr.mxu0 0.0
    %2652 = vmatpush1.msra.mxu0 0.0
    %2653 = vmatprep.subr.mxu0 0.0
    %2654 = vmatpush1.msra.mxu0 0.0
    %2655 = vmatprep.subr.mxu0 0.0
    %2656 = vmatpush1.msra.mxu0 0.0
    %2657 = vmatprep.subr.mxu0 0.0
    %2658 = vmatpush1.msra.mxu0 0.0
    %2659 = vmatprep.subr.mxu0 0.0
    %2660 = vmatpush1.msra.mxu0 0.0
    %2661 = vmatprep.subr.mxu0 0.0
    %2662 = vmatpush1.msra.mxu0 0.0
    %2663 = vmatprep.subr.mxu0 0.0
    %2664 = vmatpush1.msra.mxu0 0.0
    %2665 = vmatprep.subr.mxu0 0.0
    %2666 = vmatpush1.msra.mxu0 0.0
    %2667 = vmatprep.subr.mxu0 0.0
    %2668 = vmatpush1.msra.mxu0 0.0
    %2669 = vmatprep.subr.mxu0 0.0
    %2670 = vmatpush1.msra.mxu0 0.0
    %2671 = vmatprep.subr.mxu0 0.0
    %2672 = vmatpush1.msra.mxu0 0.0
    %2673 = vmatprep.subr.mxu0 0.0
    %2674 = vmatpush1.msra.mxu0 0.0
    %2675 = vmatprep.subr.mxu0 0.0
    %2676 = vmatpush1.msra.mxu0 0.0
    %2677 = vmatprep.mubr.f32.mxu0 0.0
    %v2678 = vand.u32 %v74, 4294901760
    %2679 = vmatmul.mubr.f32.gmra.mrb[0].mxu0 %v2678
    %v2680 = vpop.f32.mrb[0].mxu0
    %v2681 = vadd.f32 %v2513, %v2680
    %v2682 = vpop.f32.mrb[0].mxu0
    %v2683 = vadd.f32 %v2515, %v2682
    %2684 = vdwg.mxu0
    %v2685 = vand.u32 %v80, 4294901760
    %2686 = vmatprep.subr.mxu0 %v2685
    %v2687 = vand.u32 %v79, 4294901760
    %2688 = vmatpush1.msra.mxu0 %v2687
    %v2689 = vand.u32 %v87, 4294901760
    %2690 = vmatprep.subr.mxu0 %v2689
    %v2691 = vand.u32 %v86, 4294901760
    %2692 = vmatpush1.msra.mxu0 %v2691
    %v2693 = vand.u32 %v94, 4294901760
    %2694 = vmatprep.subr.mxu0 %v2693
    %v2695 = vand.u32 %v93, 4294901760
    %2696 = vmatpush1.msra.mxu0 %v2695
    %v2697 = vand.u32 %v101, 4294901760
    %2698 = vmatprep.subr.mxu0 %v2697
    %v2699 = vand.u32 %v100, 4294901760
    %2700 = vmatpush1.msra.mxu0 %v2699
    %v2701 = vand.u32 %v108, 4294901760
    %2702 = vmatprep.subr.mxu0 %v2701
    %v2703 = vand.u32 %v107, 4294901760
    %2704 = vmatpush1.msra.mxu0 %v2703
    %v2705 = vand.u32 %v115, 4294901760
    %2706 = vmatprep.subr.mxu0 %v2705
    %v2707 = vand.u32 %v114, 4294901760
    %2708 = vmatpush1.msra.mxu0 %v2707
    %v2709 = vand.u32 %v122, 4294901760
    %2710 = vmatprep.subr.mxu0 %v2709
    %v2711 = vand.u32 %v121, 4294901760
    %2712 = vmatpush1.msra.mxu0 %v2711
    %v2713 = vand.u32 %v129, 4294901760
    %2714 = vmatprep.subr.mxu0 %v2713
    %v2715 = vand.u32 %v128, 4294901760
    %2716 = vmatpush1.msra.mxu0 %v2715
    %v2717 = vand.u32 %v136, 4294901760
    %2718 = vmatprep.subr.mxu0 %v2717
    %v2719 = vand.u32 %v135, 4294901760
    %2720 = vmatpush1.msra.mxu0 %v2719
    %v2721 = vand.u32 %v143, 4294901760
    %2722 = vmatprep.subr.mxu0 %v2721
    %v2723 = vand.u32 %v142, 4294901760
    %2724 = vmatpush1.msra.mxu0 %v2723
    %v2725 = vand.u32 %v150, 4294901760
    %2726 = vmatprep.subr.mxu0 %v2725
    %v2727 = vand.u32 %v149, 4294901760
    %2728 = vmatpush1.msra.mxu0 %v2727
    %v2729 = vand.u32 %v157, 4294901760
    %2730 = vmatprep.subr.mxu0 %v2729
    %v2731 = vand.u32 %v156, 4294901760
    %2732 = vmatpush1.msra.mxu0 %v2731
    %v2733 = vand.u32 %v164, 4294901760
    %2734 = vmatprep.subr.mxu0 %v2733
    %v2735 = vand.u32 %v163, 4294901760
    %2736 = vmatpush1.msra.mxu0 %v2735
    %v2737 = vand.u32 %v171, 4294901760
    %2738 = vmatprep.subr.mxu0 %v2737
    %v2739 = vand.u32 %v170, 4294901760
    %2740 = vmatpush1.msra.mxu0 %v2739
    %v2741 = vand.u32 %v178, 4294901760
    %2742 = vmatprep.subr.mxu0 %v2741
    %v2743 = vand.u32 %v177, 4294901760
    %2744 = vmatpush1.msra.mxu0 %v2743
    %v2745 = vand.u32 %v185, 4294901760
    %2746 = vmatprep.subr.mxu0 %v2745
    %v2747 = vand.u32 %v184, 4294901760
    %2748 = vmatpush1.msra.mxu0 %v2747
    %2749 = vmatprep.subr.mxu0 0.0
    %2750 = vmatpush1.msra.mxu0 0.0
    %2751 = vmatprep.subr.mxu0 0.0
    %2752 = vmatpush1.msra.mxu0 0.0
    %2753 = vmatprep.subr.mxu0 0.0
    %2754 = vmatpush1.msra.mxu0 0.0
    %2755 = vmatprep.subr.mxu0 0.0
    %2756 = vmatpush1.msra.mxu0 0.0
    %2757 = vmatprep.subr.mxu0 0.0
    %2758 = vmatpush1.msra.mxu0 0.0
    %2759 = vmatprep.subr.mxu0 0.0
    %2760 = vmatpush1.msra.mxu0 0.0
    %2761 = vmatprep.subr.mxu0 0.0
    %2762 = vmatpush1.msra.mxu0 0.0
    %2763 = vmatprep.subr.mxu0 0.0
    %2764 = vmatpush1.msra.mxu0 0.0
    %2765 = vmatprep.subr.mxu0 0.0
    %2766 = vmatpush1.msra.mxu0 0.0
    %2767 = vmatprep.subr.mxu0 0.0
    %2768 = vmatpush1.msra.mxu0 0.0
    %2769 = vmatprep.subr.mxu0 0.0
    %2770 = vmatpush1.msra.mxu0 0.0
    %2771 = vmatprep.subr.mxu0 0.0
    %2772 = vmatpush1.msra.mxu0 0.0
    %2773 = vmatprep.subr.mxu0 0.0
    %2774 = vmatpush1.msra.mxu0 0.0
    %2775 = vmatprep.subr.mxu0 0.0
    %2776 = vmatpush1.msra.mxu0 0.0
    %2777 = vmatprep.subr.mxu0 0.0
    %2778 = vmatpush1.msra.mxu0 0.0
    %2779 = vmatprep.subr.mxu0 0.0
    %2780 = vmatpush1.msra.mxu0 0.0
    %2781 = vmatprep.mubr.f32.mxu0 0.0
    %v2782 = vand.u32 %v74, 4294901760
    %2783 = vmatmul.mubr.f32.gmra.mrb[0].mxu0 %v2782
    %v2784 = vpop.f32.mrb[0].mxu0
    %v2785 = vadd.f32 %v2681, %v2784
    %v2786 = vpop.f32.mrb[0].mxu0
    %v2787 = vadd.f32 %v2683, %v2786
    %2788 = vdwg.mxu0
    %2789 = vmatprep.subr.mxu0 0.0
    %v2790 = vand.u32 %v81, 4294901760
    %2791 = vmatpush1.msra.mxu0 %v2790
    %2792 = vmatprep.subr.mxu0 0.0
    %v2793 = vand.u32 %v88, 4294901760
    %2794 = vmatpush1.msra.mxu0 %v2793
    %2795 = vmatprep.subr.mxu0 0.0
    %v2796 = vand.u32 %v95, 4294901760
    %2797 = vmatpush1.msra.mxu0 %v2796
    %2798 = vmatprep.subr.mxu0 0.0
    %v2799 = vand.u32 %v102, 4294901760
    %2800 = vmatpush1.msra.mxu0 %v2799
    %2801 = vmatprep.subr.mxu0 0.0
    %v2802 = vand.u32 %v109, 4294901760
    %2803 = vmatpush1.msra.mxu0 %v2802
    %2804 = vmatprep.subr.mxu0 0.0
    %v2805 = vand.u32 %v116, 4294901760
    %2806 = vmatpush1.msra.mxu0 %v2805
    %2807 = vmatprep.subr.mxu0 0.0
    %v2808 = vand.u32 %v123, 4294901760
    %2809 = vmatpush1.msra.mxu0 %v2808
    %2810 = vmatprep.subr.mxu0 0.0
    %v2811 = vand.u32 %v130, 4294901760
    %2812 = vmatpush1.msra.mxu0 %v2811
    %2813 = vmatprep.subr.mxu0 0.0
    %v2814 = vand.u32 %v137, 4294901760
    %2815 = vmatpush1.msra.mxu0 %v2814
    %2816 = vmatprep.subr.mxu0 0.0
    %v2817 = vand.u32 %v144, 4294901760
    %2818 = vmatpush1.msra.mxu0 %v2817
    %2819 = vmatprep.subr.mxu0 0.0
    %v2820 = vand.u32 %v151, 4294901760
    %2821 = vmatpush1.msra.mxu0 %v2820
    %2822 = vmatprep.subr.mxu0 0.0
    %v2823 = vand.u32 %v158, 4294901760
    %2824 = vmatpush1.msra.mxu0 %v2823
    %2825 = vmatprep.subr.mxu0 0.0
    %v2826 = vand.u32 %v165, 4294901760
    %2827 = vmatpush1.msra.mxu0 %v2826
    %2828 = vmatprep.subr.mxu0 0.0
    %v2829 = vand.u32 %v172, 4294901760
    %2830 = vmatpush1.msra.mxu0 %v2829
    %2831 = vmatprep.subr.mxu0 0.0
    %v2832 = vand.u32 %v179, 4294901760
    %2833 = vmatpush1.msra.mxu0 %v2832
    %2834 = vmatprep.subr.mxu0 0.0
    %v2835 = vand.u32 %v186, 4294901760
    %2836 = vmatpush1.msra.mxu0 %v2835
    %2837 = vmatprep.subr.mxu0 0.0
    %2838 = vmatpush1.msra.mxu0 0.0
    %2839 = vmatprep.subr.mxu0 0.0
    %2840 = vmatpush1.msra.mxu0 0.0
    %2841 = vmatprep.subr.mxu0 0.0
    %2842 = vmatpush1.msra.mxu0 0.0
    %2843 = vmatprep.subr.mxu0 0.0
    %2844 = vmatpush1.msra.mxu0 0.0
    %2845 = vmatprep.subr.mxu0 0.0
    %2846 = vmatpush1.msra.mxu0 0.0
    %2847 = vmatprep.subr.mxu0 0.0
    %2848 = vmatpush1.msra.mxu0 0.0
    %2849 = vmatprep.subr.mxu0 0.0
    %2850 = vmatpush1.msra.mxu0 0.0
    %2851 = vmatprep.subr.mxu0 0.0
    %2852 = vmatpush1.msra.mxu0 0.0
    %2853 = vmatprep.subr.mxu0 0.0
    %2854 = vmatpush1.msra.mxu0 0.0
    %2855 = vmatprep.subr.mxu0 0.0
    %2856 = vmatpush1.msra.mxu0 0.0
    %2857 = vmatprep.subr.mxu0 0.0
    %2858 = vmatpush1.msra.mxu0 0.0
    %2859 = vmatprep.subr.mxu0 0.0
    %2860 = vmatpush1.msra.mxu0 0.0
    %2861 = vmatprep.subr.mxu0 0.0
    %2862 = vmatpush1.msra.mxu0 0.0
    %2863 = vmatprep.subr.mxu0 0.0
    %2864 = vmatpush1.msra.mxu0 0.0
    %2865 = vmatprep.subr.mxu0 0.0
    %2866 = vmatpush1.msra.mxu0 0.0
    %2867 = vmatprep.subr.mxu0 0.0
    %2868 = vmatpush1.msra.mxu0 0.0
    %2869 = vmatprep.mubr.f32.mxu0 0.0
    %v2870 = vand.u32 %v74, 4294901760
    %v2871 = vsub.f32 %v74, %v2870
    %v2872 = vand.u32 %v2871, 4294901760
    %v2873 = vsub.f32 %v2871, %v2872
    %v2874 = vand.u32 %v2873, 4294901760
    %2875 = vmatmul.mubr.f32.gmra.mrb[0].mxu0 %v2874
    %v2876 = vpop.f32.mrb[0].mxu0
    %v2877 = vadd.f32 %v216, %v2876
    %v2878 = vpop.f32.mrb[0].mxu0
    %2879 = vdwg.mxu0
    %2880 = vmatprep.subr.mxu0 0.0
    %v2881 = vand.u32 %v81, 4294901760
    %v2882 = vsub.f32 %v81, %v2881
    %v2883 = vand.u32 %v2882, 4294901760
    %v2884 = vsub.f32 %v2882, %v2883
    %v2885 = vand.u32 %v2884, 4294901760
    %2886 = vmatpush1.msra.mxu0 %v2885
    %2887 = vmatprep.subr.mxu0 0.0
    %v2888 = vand.u32 %v88, 4294901760
    %v2889 = vsub.f32 %v88, %v2888
    %v2890 = vand.u32 %v2889, 4294901760
    %v2891 = vsub.f32 %v2889, %v2890
    %v2892 = vand.u32 %v2891, 4294901760
    %2893 = vmatpush1.msra.mxu0 %v2892
    %2894 = vmatprep.subr.mxu0 0.0
    %v2895 = vand.u32 %v95, 4294901760
    %v2896 = vsub.f32 %v95, %v2895
    %v2897 = vand.u32 %v2896, 4294901760
    %v2898 = vsub.f32 %v2896, %v2897
    %v2899 = vand.u32 %v2898, 4294901760
    %2900 = vmatpush1.msra.mxu0 %v2899
    %2901 = vmatprep.subr.mxu0 0.0
    %v2902 = vand.u32 %v102, 4294901760
    %v2903 = vsub.f32 %v102, %v2902
    %v2904 = vand.u32 %v2903, 4294901760
    %v2905 = vsub.f32 %v2903, %v2904
    %v2906 = vand.u32 %v2905, 4294901760
    %2907 = vmatpush1.msra.mxu0 %v2906
    %2908 = vmatprep.subr.mxu0 0.0
    %v2909 = vand.u32 %v109, 4294901760
    %v2910 = vsub.f32 %v109, %v2909
    %v2911 = vand.u32 %v2910, 4294901760
    %v2912 = vsub.f32 %v2910, %v2911
    %v2913 = vand.u32 %v2912, 4294901760
    %2914 = vmatpush1.msra.mxu0 %v2913
    %2915 = vmatprep.subr.mxu0 0.0
    %v2916 = vand.u32 %v116, 4294901760
    %v2917 = vsub.f32 %v116, %v2916
    %v2918 = vand.u32 %v2917, 4294901760
    %v2919 = vsub.f32 %v2917, %v2918
    %v2920 = vand.u32 %v2919, 4294901760
    %2921 = vmatpush1.msra.mxu0 %v2920
    %2922 = vmatprep.subr.mxu0 0.0
    %v2923 = vand.u32 %v123, 4294901760
    %v2924 = vsub.f32 %v123, %v2923
    %v2925 = vand.u32 %v2924, 4294901760
    %v2926 = vsub.f32 %v2924, %v2925
    %v2927 = vand.u32 %v2926, 4294901760
    %2928 = vmatpush1.msra.mxu0 %v2927
    %2929 = vmatprep.subr.mxu0 0.0
    %v2930 = vand.u32 %v130, 4294901760
    %v2931 = vsub.f32 %v130, %v2930
    %v2932 = vand.u32 %v2931, 4294901760
    %v2933 = vsub.f32 %v2931, %v2932
    %v2934 = vand.u32 %v2933, 4294901760
    %2935 = vmatpush1.msra.mxu0 %v2934
    %2936 = vmatprep.subr.mxu0 0.0
    %v2937 = vand.u32 %v137, 4294901760
    %v2938 = vsub.f32 %v137, %v2937
    %v2939 = vand.u32 %v2938, 4294901760
    %v2940 = vsub.f32 %v2938, %v2939
    %v2941 = vand.u32 %v2940, 4294901760
    %2942 = vmatpush1.msra.mxu0 %v2941
    %2943 = vmatprep.subr.mxu0 0.0
    %v2944 = vand.u32 %v144, 4294901760
    %v2945 = vsub.f32 %v144, %v2944
    %v2946 = vand.u32 %v2945, 4294901760
    %v2947 = vsub.f32 %v2945, %v2946
    %v2948 = vand.u32 %v2947, 4294901760
    %2949 = vmatpush1.msra.mxu0 %v2948
    %2950 = vmatprep.subr.mxu0 0.0
    %v2951 = vand.u32 %v151, 4294901760
    %v2952 = vsub.f32 %v151, %v2951
    %v2953 = vand.u32 %v2952, 4294901760
    %v2954 = vsub.f32 %v2952, %v2953
    %v2955 = vand.u32 %v2954, 4294901760
    %2956 = vmatpush1.msra.mxu0 %v2955
    %2957 = vmatprep.subr.mxu0 0.0
    %v2958 = vand.u32 %v158, 4294901760
    %v2959 = vsub.f32 %v158, %v2958
    %v2960 = vand.u32 %v2959, 4294901760
    %v2961 = vsub.f32 %v2959, %v2960
    %v2962 = vand.u32 %v2961, 4294901760
    %2963 = vmatpush1.msra.mxu0 %v2962
    %2964 = vmatprep.subr.mxu0 0.0
    %v2965 = vand.u32 %v165, 4294901760
    %v2966 = vsub.f32 %v165, %v2965
    %v2967 = vand.u32 %v2966, 4294901760
    %v2968 = vsub.f32 %v2966, %v2967
    %v2969 = vand.u32 %v2968, 4294901760
    %2970 = vmatpush1.msra.mxu0 %v2969
    %2971 = vmatprep.subr.mxu0 0.0
    %v2972 = vand.u32 %v172, 4294901760
    %v2973 = vsub.f32 %v172, %v2972
    %v2974 = vand.u32 %v2973, 4294901760
    %v2975 = vsub.f32 %v2973, %v2974
    %v2976 = vand.u32 %v2975, 4294901760
    %2977 = vmatpush1.msra.mxu0 %v2976
    %2978 = vmatprep.subr.mxu0 0.0
    %v2979 = vand.u32 %v179, 4294901760
    %v2980 = vsub.f32 %v179, %v2979
    %v2981 = vand.u32 %v2980, 4294901760
    %v2982 = vsub.f32 %v2980, %v2981
    %v2983 = vand.u32 %v2982, 4294901760
    %2984 = vmatpush1.msra.mxu0 %v2983
    %2985 = vmatprep.subr.mxu0 0.0
    %v2986 = vand.u32 %v186, 4294901760
    %v2987 = vsub.f32 %v186, %v2986
    %v2988 = vand.u32 %v2987, 4294901760
    %v2989 = vsub.f32 %v2987, %v2988
    %v2990 = vand.u32 %v2989, 4294901760
    %2991 = vmatpush1.msra.mxu0 %v2990
    %2992 = vmatprep.subr.mxu0 0.0
    %2993 = vmatpush1.msra.mxu0 0.0
    %2994 = vmatprep.subr.mxu0 0.0
    %2995 = vmatpush1.msra.mxu0 0.0
    %2996 = vmatprep.subr.mxu0 0.0
    %2997 = vmatpush1.msra.mxu0 0.0
    %2998 = vmatprep.subr.mxu0 0.0
    %2999 = vmatpush1.msra.mxu0 0.0
    %3000 = vmatprep.subr.mxu0 0.0
    %3001 = vmatpush1.msra.mxu0 0.0
    %3002 = vmatprep.subr.mxu0 0.0
    %3003 = vmatpush1.msra.mxu0 0.0
    %3004 = vmatprep.subr.mxu0 0.0
    %3005 = vmatpush1.msra.mxu0 0.0
    %3006 = vmatprep.subr.mxu0 0.0
    %3007 = vmatpush1.msra.mxu0 0.0
    %3008 = vmatprep.subr.mxu0 0.0
    %3009 = vmatpush1.msra.mxu0 0.0
    %3010 = vmatprep.subr.mxu0 0.0
    %3011 = vmatpush1.msra.mxu0 0.0
    %3012 = vmatprep.subr.mxu0 0.0
    %3013 = vmatpush1.msra.mxu0 0.0
    %3014 = vmatprep.subr.mxu0 0.0
    %3015 = vmatpush1.msra.mxu0 0.0
    %3016 = vmatprep.subr.mxu0 0.0
    %3017 = vmatpush1.msra.mxu0 0.0
    %3018 = vmatprep.subr.mxu0 0.0
    %3019 = vmatpush1.msra.mxu0 0.0
    %3020 = vmatprep.subr.mxu0 0.0
    %3021 = vmatpush1.msra.mxu0 0.0
    %3022 = vmatprep.subr.mxu0 0.0
    %3023 = vmatpush1.msra.mxu0 0.0
    %3024 = vmatprep.mubr.f32.mxu0 0.0
    %v3025 = vand.u32 %v74, 4294901760
    %3026 = vmatmul.mubr.f32.gmra.mrb[0].mxu0 %v3025
    %v3027 = vpop.f32.mrb[0].mxu0
    %v3028 = vadd.f32 %v2877, %v3027
    %v3029 = vpop.f32.mrb[0].mxu0
    %3030 = vdwg.mxu0
    %3031 = vmatprep.subr.mxu0 0.0
    %v3032 = vand.u32 %v81, 4294901760
    %v3033 = vsub.f32 %v81, %v3032
    %3034 = vmatpush1.msra.mxu0 %v3033
    %3035 = vmatprep.subr.mxu0 0.0
    %v3036 = vand.u32 %v88, 4294901760
    %v3037 = vsub.f32 %v88, %v3036
    %3038 = vmatpush1.msra.mxu0 %v3037
    %3039 = vmatprep.subr.mxu0 0.0
    %v3040 = vand.u32 %v95, 4294901760
    %v3041 = vsub.f32 %v95, %v3040
    %3042 = vmatpush1.msra.mxu0 %v3041
    %3043 = vmatprep.subr.mxu0 0.0
    %v3044 = vand.u32 %v102, 4294901760
    %v3045 = vsub.f32 %v102, %v3044
    %3046 = vmatpush1.msra.mxu0 %v3045
    %3047 = vmatprep.subr.mxu0 0.0
    %v3048 = vand.u32 %v109, 4294901760
    %v3049 = vsub.f32 %v109, %v3048
    %3050 = vmatpush1.msra.mxu0 %v3049
    %3051 = vmatprep.subr.mxu0 0.0
    %v3052 = vand.u32 %v116, 4294901760
    %v3053 = vsub.f32 %v116, %v3052
    %3054 = vmatpush1.msra.mxu0 %v3053
    %3055 = vmatprep.subr.mxu0 0.0
    %v3056 = vand.u32 %v123, 4294901760
    %v3057 = vsub.f32 %v123, %v3056
    %3058 = vmatpush1.msra.mxu0 %v3057
    %3059 = vmatprep.subr.mxu0 0.0
    %v3060 = vand.u32 %v130, 4294901760
    %v3061 = vsub.f32 %v130, %v3060
    %3062 = vmatpush1.msra.mxu0 %v3061
    %3063 = vmatprep.subr.mxu0 0.0
    %v3064 = vand.u32 %v137, 4294901760
    %v3065 = vsub.f32 %v137, %v3064
    %3066 = vmatpush1.msra.mxu0 %v3065
    %3067 = vmatprep.subr.mxu0 0.0
    %v3068 = vand.u32 %v144, 4294901760
    %v3069 = vsub.f32 %v144, %v3068
    %3070 = vmatpush1.msra.mxu0 %v3069
    %3071 = vmatprep.subr.mxu0 0.0
    %v3072 = vand.u32 %v151, 4294901760
    %v3073 = vsub.f32 %v151, %v3072
    %3074 = vmatpush1.msra.mxu0 %v3073
    %3075 = vmatprep.subr.mxu0 0.0
    %v3076 = vand.u32 %v158, 4294901760
    %v3077 = vsub.f32 %v158, %v3076
    %3078 = vmatpush1.msra.mxu0 %v3077
    %3079 = vmatprep.subr.mxu0 0.0
    %v3080 = vand.u32 %v165, 4294901760
    %v3081 = vsub.f32 %v165, %v3080
    %3082 = vmatpush1.msra.mxu0 %v3081
    %3083 = vmatprep.subr.mxu0 0.0
    %v3084 = vand.u32 %v172, 4294901760
    %v3085 = vsub.f32 %v172, %v3084
    %3086 = vmatpush1.msra.mxu0 %v3085
    %3087 = vmatprep.subr.mxu0 0.0
    %v3088 = vand.u32 %v179, 4294901760
    %v3089 = vsub.f32 %v179, %v3088
    %3090 = vmatpush1.msra.mxu0 %v3089
    %3091 = vmatprep.subr.mxu0 0.0
    %v3092 = vand.u32 %v186, 4294901760
    %v3093 = vsub.f32 %v186, %v3092
    %3094 = vmatpush1.msra.mxu0 %v3093
    %3095 = vmatprep.subr.mxu0 0.0
    %3096 = vmatpush1.msra.mxu0 0.0
    %3097 = vmatprep.subr.mxu0 0.0
    %3098 = vmatpush1.msra.mxu0 0.0
    %3099 = vmatprep.subr.mxu0 0.0
    %3100 = vmatpush1.msra.mxu0 0.0
    %3101 = vmatprep.subr.mxu0 0.0
    %3102 = vmatpush1.msra.mxu0 0.0
    %3103 = vmatprep.subr.mxu0 0.0
    %3104 = vmatpush1.msra.mxu0 0.0
    %3105 = vmatprep.subr.mxu0 0.0
    %3106 = vmatpush1.msra.mxu0 0.0
    %3107 = vmatprep.subr.mxu0 0.0
    %3108 = vmatpush1.msra.mxu0 0.0
    %3109 = vmatprep.subr.mxu0 0.0
    %3110 = vmatpush1.msra.mxu0 0.0
    %3111 = vmatprep.subr.mxu0 0.0
    %3112 = vmatpush1.msra.mxu0 0.0
    %3113 = vmatprep.subr.mxu0 0.0
    %3114 = vmatpush1.msra.mxu0 0.0
    %3115 = vmatprep.subr.mxu0 0.0
    %3116 = vmatpush1.msra.mxu0 0.0
    %3117 = vmatprep.subr.mxu0 0.0
    %3118 = vmatpush1.msra.mxu0 0.0
    %3119 = vmatprep.subr.mxu0 0.0
    %3120 = vmatpush1.msra.mxu0 0.0
    %3121 = vmatprep.subr.mxu0 0.0
    %3122 = vmatpush1.msra.mxu0 0.0
    %3123 = vmatprep.subr.mxu0 0.0
    %3124 = vmatpush1.msra.mxu0 0.0
    %3125 = vmatprep.subr.mxu0 0.0
    %3126 = vmatpush1.msra.mxu0 0.0
    %3127 = vmatprep.mubr.f32.mxu0 0.0
    %v3128 = vand.u32 %v74, 4294901760
    %v3129 = vsub.f32 %v74, %v3128
    %3130 = vmatmul.mubr.f32.gmra.mrb[0].mxu0 %v3129
    %v3131 = vpop.f32.mrb[0].mxu0
    %v3132 = vadd.f32 %v3028, %v3131
    %v3133 = vpop.f32.mrb[0].mxu0
    %3134 = vdwg.mxu0
    %3135 = vmatprep.subr.mxu0 0.0
    %v3136 = vand.u32 %v81, 4294901760
    %3137 = vmatpush1.msra.mxu0 %v3136
    %3138 = vmatprep.subr.mxu0 0.0
    %v3139 = vand.u32 %v88, 4294901760
    %3140 = vmatpush1.msra.mxu0 %v3139
    %3141 = vmatprep.subr.mxu0 0.0
    %v3142 = vand.u32 %v95, 4294901760
    %3143 = vmatpush1.msra.mxu0 %v3142
    %3144 = vmatprep.subr.mxu0 0.0
    %v3145 = vand.u32 %v102, 4294901760
    %3146 = vmatpush1.msra.mxu0 %v3145
    %3147 = vmatprep.subr.mxu0 0.0
    %v3148 = vand.u32 %v109, 4294901760
    %3149 = vmatpush1.msra.mxu0 %v3148
    %3150 = vmatprep.subr.mxu0 0.0
    %v3151 = vand.u32 %v116, 4294901760
    %3152 = vmatpush1.msra.mxu0 %v3151
    %3153 = vmatprep.subr.mxu0 0.0
    %v3154 = vand.u32 %v123, 4294901760
    %3155 = vmatpush1.msra.mxu0 %v3154
    %3156 = vmatprep.subr.mxu0 0.0
    %v3157 = vand.u32 %v130, 4294901760
    %3158 = vmatpush1.msra.mxu0 %v3157
    %3159 = vmatprep.subr.mxu0 0.0
    %v3160 = vand.u32 %v137, 4294901760
    %3161 = vmatpush1.msra.mxu0 %v3160
    %3162 = vmatprep.subr.mxu0 0.0
    %v3163 = vand.u32 %v144, 4294901760
    %3164 = vmatpush1.msra.mxu0 %v3163
    %3165 = vmatprep.subr.mxu0 0.0
    %v3166 = vand.u32 %v151, 4294901760
    %3167 = vmatpush1.msra.mxu0 %v3166
    %3168 = vmatprep.subr.mxu0 0.0
    %v3169 = vand.u32 %v158, 4294901760
    %3170 = vmatpush1.msra.mxu0 %v3169
    %3171 = vmatprep.subr.mxu0 0.0
    %v3172 = vand.u32 %v165, 4294901760
    %3173 = vmatpush1.msra.mxu0 %v3172
    %3174 = vmatprep.subr.mxu0 0.0
    %v3175 = vand.u32 %v172, 4294901760
    %3176 = vmatpush1.msra.mxu0 %v3175
    %3177 = vmatprep.subr.mxu0 0.0
    %v3178 = vand.u32 %v179, 4294901760
    %3179 = vmatpush1.msra.mxu0 %v3178
    %3180 = vmatprep.subr.mxu0 0.0
    %v3181 = vand.u32 %v186, 4294901760
    %3182 = vmatpush1.msra.mxu0 %v3181
    %3183 = vmatprep.subr.mxu0 0.0
    %3184 = vmatpush1.msra.mxu0 0.0
    %3185 = vmatprep.subr.mxu0 0.0
    %3186 = vmatpush1.msra.mxu0 0.0
    %3187 = vmatprep.subr.mxu0 0.0
    %3188 = vmatpush1.msra.mxu0 0.0
    %3189 = vmatprep.subr.mxu0 0.0
    %3190 = vmatpush1.msra.mxu0 0.0
    %3191 = vmatprep.subr.mxu0 0.0
    %3192 = vmatpush1.msra.mxu0 0.0
    %3193 = vmatprep.subr.mxu0 0.0
    %3194 = vmatpush1.msra.mxu0 0.0
    %3195 = vmatprep.subr.mxu0 0.0
    %3196 = vmatpush1.msra.mxu0 0.0
    %3197 = vmatprep.subr.mxu0 0.0
    %3198 = vmatpush1.msra.mxu0 0.0
    %3199 = vmatprep.subr.mxu0 0.0
    %3200 = vmatpush1.msra.mxu0 0.0
    %3201 = vmatprep.subr.mxu0 0.0
    %3202 = vmatpush1.msra.mxu0 0.0
    %3203 = vmatprep.subr.mxu0 0.0
    %3204 = vmatpush1.msra.mxu0 0.0
    %3205 = vmatprep.subr.mxu0 0.0
    %3206 = vmatpush1.msra.mxu0 0.0
    %3207 = vmatprep.subr.mxu0 0.0
    %3208 = vmatpush1.msra.mxu0 0.0
    %3209 = vmatprep.subr.mxu0 0.0
    %3210 = vmatpush1.msra.mxu0 0.0
    %3211 = vmatprep.subr.mxu0 0.0
    %3212 = vmatpush1.msra.mxu0 0.0
    %3213 = vmatprep.subr.mxu0 0.0
    %3214 = vmatpush1.msra.mxu0 0.0
    %3215 = vmatprep.mubr.f32.mxu0 0.0
    %v3216 = vand.u32 %v74, 4294901760
    %v3217 = vsub.f32 %v74, %v3216
    %v3218 = vand.u32 %v3217, 4294901760
    %3219 = vmatmul.mubr.f32.gmra.mrb[0].mxu0 %v3218
    %v3220 = vpop.f32.mrb[0].mxu0
    %v3221 = vadd.f32 %v3132, %v3220
    %v3222 = vpop.f32.mrb[0].mxu0
    %3223 = vdwg.mxu0
    %3224 = vmatprep.subr.mxu0 0.0
    %v3225 = vand.u32 %v81, 4294901760
    %v3226 = vsub.f32 %v81, %v3225
    %v3227 = vand.u32 %v3226, 4294901760
    %3228 = vmatpush1.msra.mxu0 %v3227
    %3229 = vmatprep.subr.mxu0 0.0
    %v3230 = vand.u32 %v88, 4294901760
    %v3231 = vsub.f32 %v88, %v3230
    %v3232 = vand.u32 %v3231, 4294901760
    %3233 = vmatpush1.msra.mxu0 %v3232
    %3234 = vmatprep.subr.mxu0 0.0
    %v3235 = vand.u32 %v95, 4294901760
    %v3236 = vsub.f32 %v95, %v3235
    %v3237 = vand.u32 %v3236, 4294901760
    %3238 = vmatpush1.msra.mxu0 %v3237
    %3239 = vmatprep.subr.mxu0 0.0
    %v3240 = vand.u32 %v102, 4294901760
    %v3241 = vsub.f32 %v102, %v3240
    %v3242 = vand.u32 %v3241, 4294901760
    %3243 = vmatpush1.msra.mxu0 %v3242
    %3244 = vmatprep.subr.mxu0 0.0
    %v3245 = vand.u32 %v109, 4294901760
    %v3246 = vsub.f32 %v109, %v3245
    %v3247 = vand.u32 %v3246, 4294901760
    %3248 = vmatpush1.msra.mxu0 %v3247
    %3249 = vmatprep.subr.mxu0 0.0
    %v3250 = vand.u32 %v116, 4294901760
    %v3251 = vsub.f32 %v116, %v3250
    %v3252 = vand.u32 %v3251, 4294901760
    %3253 = vmatpush1.msra.mxu0 %v3252
    %3254 = vmatprep.subr.mxu0 0.0
    %v3255 = vand.u32 %v123, 4294901760
    %v3256 = vsub.f32 %v123, %v3255
    %v3257 = vand.u32 %v3256, 4294901760
    %3258 = vmatpush1.msra.mxu0 %v3257
    %3259 = vmatprep.subr.mxu0 0.0
    %v3260 = vand.u32 %v130, 4294901760
    %v3261 = vsub.f32 %v130, %v3260
    %v3262 = vand.u32 %v3261, 4294901760
    %3263 = vmatpush1.msra.mxu0 %v3262
    %3264 = vmatprep.subr.mxu0 0.0
    %v3265 = vand.u32 %v137, 4294901760
    %v3266 = vsub.f32 %v137, %v3265
    %v3267 = vand.u32 %v3266, 4294901760
    %3268 = vmatpush1.msra.mxu0 %v3267
    %3269 = vmatprep.subr.mxu0 0.0
    %v3270 = vand.u32 %v144, 4294901760
    %v3271 = vsub.f32 %v144, %v3270
    %v3272 = vand.u32 %v3271, 4294901760
    %3273 = vmatpush1.msra.mxu0 %v3272
    %3274 = vmatprep.subr.mxu0 0.0
    %v3275 = vand.u32 %v151, 4294901760
    %v3276 = vsub.f32 %v151, %v3275
    %v3277 = vand.u32 %v3276, 4294901760
    %3278 = vmatpush1.msra.mxu0 %v3277
    %3279 = vmatprep.subr.mxu0 0.0
    %v3280 = vand.u32 %v158, 4294901760
    %v3281 = vsub.f32 %v158, %v3280
    %v3282 = vand.u32 %v3281, 4294901760
    %3283 = vmatpush1.msra.mxu0 %v3282
    %3284 = vmatprep.subr.mxu0 0.0
    %v3285 = vand.u32 %v165, 4294901760
    %v3286 = vsub.f32 %v165, %v3285
    %v3287 = vand.u32 %v3286, 4294901760
    %3288 = vmatpush1.msra.mxu0 %v3287
    %3289 = vmatprep.subr.mxu0 0.0
    %v3290 = vand.u32 %v172, 4294901760
    %v3291 = vsub.f32 %v172, %v3290
    %v3292 = vand.u32 %v3291, 4294901760
    %3293 = vmatpush1.msra.mxu0 %v3292
    %3294 = vmatprep.subr.mxu0 0.0
    %v3295 = vand.u32 %v179, 4294901760
    %v3296 = vsub.f32 %v179, %v3295
    %v3297 = vand.u32 %v3296, 4294901760
    %3298 = vmatpush1.msra.mxu0 %v3297
    %3299 = vmatprep.subr.mxu0 0.0
    %v3300 = vand.u32 %v186, 4294901760
    %v3301 = vsub.f32 %v186, %v3300
    %v3302 = vand.u32 %v3301, 4294901760
    %3303 = vmatpush1.msra.mxu0 %v3302
    %3304 = vmatprep.subr.mxu0 0.0
    %3305 = vmatpush1.msra.mxu0 0.0
    %3306 = vmatprep.subr.mxu0 0.0
    %3307 = vmatpush1.msra.mxu0 0.0
    %3308 = vmatprep.subr.mxu0 0.0
    %3309 = vmatpush1.msra.mxu0 0.0
    %3310 = vmatprep.subr.mxu0 0.0
    %3311 = vmatpush1.msra.mxu0 0.0
    %3312 = vmatprep.subr.mxu0 0.0
    %3313 = vmatpush1.msra.mxu0 0.0
    %3314 = vmatprep.subr.mxu0 0.0
    %3315 = vmatpush1.msra.mxu0 0.0
    %3316 = vmatprep.subr.mxu0 0.0
    %3317 = vmatpush1.msra.mxu0 0.0
    %3318 = vmatprep.subr.mxu0 0.0
    %3319 = vmatpush1.msra.mxu0 0.0
    %3320 = vmatprep.subr.mxu0 0.0
    %3321 = vmatpush1.msra.mxu0 0.0
    %3322 = vmatprep.subr.mxu0 0.0
    %3323 = vmatpush1.msra.mxu0 0.0
    %3324 = vmatprep.subr.mxu0 0.0
    %3325 = vmatpush1.msra.mxu0 0.0
    %3326 = vmatprep.subr.mxu0 0.0
    %3327 = vmatpush1.msra.mxu0 0.0
    %3328 = vmatprep.subr.mxu0 0.0
    %3329 = vmatpush1.msra.mxu0 0.0
    %3330 = vmatprep.subr.mxu0 0.0
    %3331 = vmatpush1.msra.mxu0 0.0
    %3332 = vmatprep.subr.mxu0 0.0
    %3333 = vmatpush1.msra.mxu0 0.0
    %3334 = vmatprep.subr.mxu0 0.0
    %3335 = vmatpush1.msra.mxu0 0.0
    %3336 = vmatprep.mubr.f32.mxu0 0.0
    %v3337 = vand.u32 %v74, 4294901760
    %3338 = vmatmul.mubr.f32.gmra.mrb[0].mxu0 %v3337
    %v3339 = vpop.f32.mrb[0].mxu0
    %v3340 = vadd.f32 %v3221, %v3339
    %v3341 = vpop.f32.mrb[0].mxu0
    %3342 = vdwg.mxu0
    %3343 = vmatprep.subr.mxu0 0.0
    %v3344 = vand.u32 %v81, 4294901760
    %3345 = vmatpush1.msra.mxu0 %v3344
    %3346 = vmatprep.subr.mxu0 0.0
    %v3347 = vand.u32 %v88, 4294901760
    %3348 = vmatpush1.msra.mxu0 %v3347
    %3349 = vmatprep.subr.mxu0 0.0
    %v3350 = vand.u32 %v95, 4294901760
    %3351 = vmatpush1.msra.mxu0 %v3350
    %3352 = vmatprep.subr.mxu0 0.0
    %v3353 = vand.u32 %v102, 4294901760
    %3354 = vmatpush1.msra.mxu0 %v3353
    %3355 = vmatprep.subr.mxu0 0.0
    %v3356 = vand.u32 %v109, 4294901760
    %3357 = vmatpush1.msra.mxu0 %v3356
    %3358 = vmatprep.subr.mxu0 0.0
    %v3359 = vand.u32 %v116, 4294901760
    %3360 = vmatpush1.msra.mxu0 %v3359
    %3361 = vmatprep.subr.mxu0 0.0
    %v3362 = vand.u32 %v123, 4294901760
    %3363 = vmatpush1.msra.mxu0 %v3362
    %3364 = vmatprep.subr.mxu0 0.0
    %v3365 = vand.u32 %v130, 4294901760
    %3366 = vmatpush1.msra.mxu0 %v3365
    %3367 = vmatprep.subr.mxu0 0.0
    %v3368 = vand.u32 %v137, 4294901760
    %3369 = vmatpush1.msra.mxu0 %v3368
    %3370 = vmatprep.subr.mxu0 0.0
    %v3371 = vand.u32 %v144, 4294901760
    %3372 = vmatpush1.msra.mxu0 %v3371
    %3373 = vmatprep.subr.mxu0 0.0
    %v3374 = vand.u32 %v151, 4294901760
    %3375 = vmatpush1.msra.mxu0 %v3374
    %3376 = vmatprep.subr.mxu0 0.0
    %v3377 = vand.u32 %v158, 4294901760
    %3378 = vmatpush1.msra.mxu0 %v3377
    %3379 = vmatprep.subr.mxu0 0.0
    %v3380 = vand.u32 %v165, 4294901760
    %3381 = vmatpush1.msra.mxu0 %v3380
    %3382 = vmatprep.subr.mxu0 0.0
    %v3383 = vand.u32 %v172, 4294901760
    %3384 = vmatpush1.msra.mxu0 %v3383
    %3385 = vmatprep.subr.mxu0 0.0
    %v3386 = vand.u32 %v179, 4294901760
    %3387 = vmatpush1.msra.mxu0 %v3386
    %3388 = vmatprep.subr.mxu0 0.0
    %v3389 = vand.u32 %v186, 4294901760
    %3390 = vmatpush1.msra.mxu0 %v3389
    %3391 = vmatprep.subr.mxu0 0.0
    %3392 = vmatpush1.msra.mxu0 0.0
    %3393 = vmatprep.subr.mxu0 0.0
    %3394 = vmatpush1.msra.mxu0 0.0
    %3395 = vmatprep.subr.mxu0 0.0
    %3396 = vmatpush1.msra.mxu0 0.0
    %3397 = vmatprep.subr.mxu0 0.0
    %3398 = vmatpush1.msra.mxu0 0.0
    %3399 = vmatprep.subr.mxu0 0.0
    %3400 = vmatpush1.msra.mxu0 0.0
    %3401 = vmatprep.subr.mxu0 0.0
    %3402 = vmatpush1.msra.mxu0 0.0
    %3403 = vmatprep.subr.mxu0 0.0
    %3404 = vmatpush1.msra.mxu0 0.0
    %3405 = vmatprep.subr.mxu0 0.0
    %3406 = vmatpush1.msra.mxu0 0.0
    %3407 = vmatprep.subr.mxu0 0.0
    %3408 = vmatpush1.msra.mxu0 0.0
    %3409 = vmatprep.subr.mxu0 0.0
    %3410 = vmatpush1.msra.mxu0 0.0
    %3411 = vmatprep.subr.mxu0 0.0
    %3412 = vmatpush1.msra.mxu0 0.0
    %3413 = vmatprep.subr.mxu0 0.0
    %3414 = vmatpush1.msra.mxu0 0.0
    %3415 = vmatprep.subr.mxu0 0.0
    %3416 = vmatpush1.msra.mxu0 0.0
    %3417 = vmatprep.subr.mxu0 0.0
    %3418 = vmatpush1.msra.mxu0 0.0
    %3419 = vmatprep.subr.mxu0 0.0
    %3420 = vmatpush1.msra.mxu0 0.0
    %3421 = vmatprep.subr.mxu0 0.0
    %3422 = vmatpush1.msra.mxu0 0.0
    %3423 = vmatprep.mubr.f32.mxu0 0.0
    %v3424 = vand.u32 %v74, 4294901760
    %3425 = vmatmul.mubr.f32.gmra.mrb[0].mxu0 %v3424
    %v3426 = vpop.f32.mrb[0].mxu0
    %v3427 = vadd.f32 %v3340, %v3426
    %v3428 = vpop.f32.mrb[0].mxu0
    %3429 = vdwg.mxu0
    %v3430 = vmax.f32 %v1075, 0.0
    %v3431 = vmax.f32 %v1077, 0.0
    %v3432 = vmax.f32 %v1930, 0.0
    %v3433 = vmax.f32 %v1932, 0.0
    %v3434 = vmax.f32 %v2785, 0.0
    %v3435 = vmax.f32 %v2787, 0.0
    %v3436 = vmax.f32 %v3427, 0.0
    %3437 = vst [vmem:[#allocation10] sm:$0xff] %v3430
    %3438 = vst [vmem:[#allocation10 + $0x8] sm:$0xff] %v3431
    %3439 = vst [vmem:[#allocation10 + $0x10] sm:$0xff] %v3432
    %3440 = vst [vmem:[#allocation10 + $0x18] sm:$0xff] %v3433
    %3441 = vst [vmem:[#allocation10 + $0x20] sm:$0xff] %v3434
    %3442 = vst [vmem:[#allocation10 + $0x28] sm:$0xff] %v3435
    %3443 = vst [vmem:[#allocation10 + $0x30] sm:$0xff] %v3436
    %v3444 = vrot.slane %v3430, 4
    %v3445 = vadd.f32 %v3430, %v3444
    %v3446 = vrot.slane %v3445, 2
    %v3447 = vadd.f32 %v3445, %v3446
    %v3448 = vrot.slane %v3447, 1
    %v3449 = vadd.f32 %v3447, %v3448
    %v3450 = vrot.slane %v3431, 4
    %v3451 = vadd.f32 %v3431, %v3450
    %v3452 = vrot.slane %v3451, 2
    %v3453 = vadd.f32 %v3451, %v3452
    %v3454 = vrot.slane %v3453, 1
    %v3455 = vadd.f32 %v3453, %v3454
    %v3456 = vrot.slane %v3432, 4
    %v3457 = vadd.f32 %v3432, %v3456
    %v3458 = vrot.slane %v3457, 2
    %v3459 = vadd.f32 %v3457, %v3458
    %v3460 = vrot.slane %v3459, 1
    %v3461 = vadd.f32 %v3459, %v3460
    %v3462 = vrot.slane %v3433, 4
    %v3463 = vadd.f32 %v3433, %v3462
    %v3464 = vrot.slane %v3463, 2
    %v3465 = vadd.f32 %v3463, %v3464
    %v3466 = vrot.slane %v3465, 1
    %v3467 = vadd.f32 %v3465, %v3466
    %v3468 = vrot.slane %v3434, 4
    %v3469 = vadd.f32 %v3434, %v3468
    %v3470 = vrot.slane %v3469, 2
    %v3471 = vadd.f32 %v3469, %v3470
    %v3472 = vrot.slane %v3471, 1
    %v3473 = vadd.f32 %v3471, %v3472
    %v3474 = vrot.slane %v3435, 4
    %v3475 = vadd.f32 %v3435, %v3474
    %v3476 = vrot.slane %v3475, 2
    %v3477 = vadd.f32 %v3475, %v3476
    %v3478 = vrot.slane %v3477, 1
    %v3479 = vadd.f32 %v3477, %v3478
    %v3480 = vrot.slane %v3436, 4
    %v3481 = vadd.f32 %v3436, %v3480
    %v3482 = vrot.slane %v3481, 2
    %v3483 = vadd.f32 %v3481, %v3482
    %v3484 = vrot.slane %v3483, 1
    %v3485 = vadd.f32 %v3483, %v3484
    %v3493 = vcombine.low %v3449, %v3455
    %v3494 = vcombine.low %v3461, %v3467
    %v3495 = vcombine.low %v3473, %v3479
    %v3497 = vunpack.c.l.s4 1966171168
    %v3498 = vunpack.c.0.s8 %v3497
    %v3499 = vlaneseq
    %v3500 = vshrl.u32 %v3499, 7
    %v3501 = vsub.s32 %v3498, %v3500
    %v3502 = vrot.slane %v3493, %v3501
    %v3504 = vunpack.c.l.s4 1966171168
    %v3505 = vunpack.c.0.s8 %v3504
    %v3506 = vlaneseq
    %v3507 = vshrl.u32 %v3506, 7
    %v3508 = vsub.s32 %v3505, %v3507
    %v3509 = vrot.slane %v3494, %v3508
    %v3511 = vunpack.c.l.s4 1966171168
    %v3512 = vunpack.c.0.s8 %v3511
    %v3513 = vlaneseq
    %v3514 = vshrl.u32 %v3513, 7
    %v3515 = vsub.s32 %v3512, %v3514
    %v3516 = vrot.slane %v3495, %v3515
    %v3518 = vunpack.c.l.s4 1966171168
    %v3519 = vunpack.c.0.s8 %v3518
    %v3520 = vlaneseq
    %v3521 = vshrl.u32 %v3520, 7
    %v3522 = vsub.s32 %v3519, %v3521
    %v3523 = vrot.slane %v3485, %v3522
    %v3524 = vcombine.low %v3502, %v3509
    %v3525 = vcombine.low %v3516, %v3523
    %v3527 = vunpack.c.l.s4 1966171168
    %v3528 = vunpack.c.0.s8 %v3527
    %v3529 = vlaneseq
    %v3530 = vshrl.u32 %v3529, 7
    %v3531 = vsub.s32 %v3528, %v3530
    %v3532 = vrot.slane %v3524, %v3531
    %v3534 = vunpack.c.l.s4 1966171168
    %v3535 = vunpack.c.0.s8 %v3534
    %v3536 = vlaneseq
    %v3537 = vshrl.u32 %v3536, 7
    %v3538 = vsub.s32 %v3535, %v3537
    %v3539 = vrot.slane %v3525, %v3538
    %v3540 = vcombine.low %v3532, %v3539
    %v3542 = vlaneseq
    %vm3543 = vcmp.ge.s32.totalorder %v3542, 0
    %vm3544 = vcmp.lt.s32.totalorder %v3542, 896
    %vm3545 = vmand %vm3543, %vm3544
    %3546 = vst.msk [vmem:[#allocation13] sm:$0x7f] %vm3545, %v3540
    %v3547 = vld [vmem:[#allocation8] sm:$0xff]
    %v3548 = vld [vmem:[#allocation8 + $0x8] sm:$0xff]
    %v3549 = vld [vmem:[#allocation8 + $0x10] sm:$0xff]
    %v3550 = vld [vmem:[#allocation8 + $0x18] sm:$0xff]
    %v3551 = vld [vmem:[#allocation8 + $0x20] sm:$0xff]
    %v3552 = vld [vmem:[#allocation8 + $0x28] sm:$0xff]
    %v3553 = vld [vmem:[#allocation8 + $0x30] sm:$0xff]
    %v3554 = vld [vmem:[#allocation8 + $0x38] sm:$0xff]
    %v3555 = vld [vmem:[#allocation8 + $0x40] sm:$0xff]
    %v3556 = vld [vmem:[#allocation8 + $0x48] sm:$0xff]
    %v3557 = vld [vmem:[#allocation8 + $0x50] sm:$0xff]
    %v3558 = vld [vmem:[#allocation8 + $0x58] sm:$0xff]
    %v3559 = vld [vmem:[#allocation8 + $0x60] sm:$0xff]
    %v3560 = vld [vmem:[#allocation8 + $0x68] sm:$0xff]
    %v3561 = vld [vmem:[#allocation8 + $0x70] sm:$0xff]
    %v3562 = vld [vmem:[#allocation8 + $0x78] sm:$0xff]
    %v3563 = vld [vmem:[#allocation8 + $0x80] sm:$0xff]
    %v3564 = vld [vmem:[#allocation8 + $0x88] sm:$0xff]
    %v3565 = vld [vmem:[#allocation8 + $0x90] sm:$0xff]
    %v3566 = vld [vmem:[#allocation8 + $0x98] sm:$0xff]
    %v3567 = vld [vmem:[#allocation8 + $0xa0] sm:$0xff]
    %v3568 = vld [vmem:[#allocation8 + $0xa8] sm:$0xff]
    %v3569 = vld [vmem:[#allocation8 + $0xb0] sm:$0xff]
    %v3570 = vld [vmem:[#allocation8 + $0xb8] sm:$0xff]
    %v3571 = vld [vmem:[#allocation8 + $0xc0] sm:$0xff]
    %v3572 = vld [vmem:[#allocation8 + $0xc8] sm:$0xff]
    %v3573 = vld [vmem:[#allocation8 + $0xd0] sm:$0xff]
    %v3574 = vld [vmem:[#allocation8 + $0xd8] sm:$0xff]
    %v3575 = vld [vmem:[#allocation8 + $0xe0] sm:$0xff]
    %v3576 = vld [vmem:[#allocation8 + $0xe8] sm:$0xff]
    %v3577 = vld [vmem:[#allocation8 + $0xf0] sm:$0xff]
    %v3578 = vld [vmem:[#allocation8 + $0xf8] sm:$0xff]
    %v3579 = vld [vmem:[#allocation8 + $0x100] sm:$0xff]
    %v3580 = vld [vmem:[#allocation8 + $0x108] sm:$0xff]
    %v3581 = vld [vmem:[#allocation8 + $0x110] sm:$0xff]
    %v3582 = vld [vmem:[#allocation8 + $0x118] sm:$0xff]
    %v3583 = vld [vmem:[#allocation8 + $0x120] sm:$0xff]
    %v3584 = vld [vmem:[#allocation8 + $0x128] sm:$0xff]
    %v3585 = vld [vmem:[#allocation8 + $0x130] sm:$0xff]
    %v3586 = vld [vmem:[#allocation8 + $0x138] sm:$0xff]
    %v3587 = vld [vmem:[#allocation8 + $0x140] sm:$0xff]
    %v3588 = vld [vmem:[#allocation8 + $0x148] sm:$0xff]
    %v3589 = vld [vmem:[#allocation8 + $0x150] sm:$0xff]
    %v3590 = vld [vmem:[#allocation8 + $0x158] sm:$0xff]
    %v3591 = vld [vmem:[#allocation8 + $0x160] sm:$0xff]
    %v3592 = vld [vmem:[#allocation8 + $0x168] sm:$0xff]
    %v3593 = vld [vmem:[#allocation8 + $0x170] sm:$0xff]
    %v3594 = vld [vmem:[#allocation8 + $0x178] sm:$0xff]
    %v3595 = vld [vmem:[#allocation8 + $0x180] sm:$0xff]
    %v3596 = vld [vmem:[#allocation8 + $0x188] sm:$0xff]
    %v3597 = vld [vmem:[#allocation8 + $0x190] sm:$0xff]
    %v3598 = vld [vmem:[#allocation8 + $0x198] sm:$0xff]
    %v3599 = vld [vmem:[#allocation8 + $0x1a0] sm:$0xff]
    %v3600 = vld [vmem:[#allocation8 + $0x1a8] sm:$0xff]
    %v3601 = vld [vmem:[#allocation8 + $0x1b0] sm:$0xff]
    %v3602 = vld [vmem:[#allocation8 + $0x1b8] sm:$0xff]
    %v3603 = vld [vmem:[#allocation8 + $0x1c0] sm:$0xff]
    %v3604 = vld [vmem:[#allocation8 + $0x1c8] sm:$0xff]
    %v3605 = vld [vmem:[#allocation8 + $0x1d0] sm:$0xff]
    %v3606 = vld [vmem:[#allocation8 + $0x1d8] sm:$0xff]
    %v3607 = vld [vmem:[#allocation8 + $0x1e0] sm:$0xff]
    %v3608 = vld [vmem:[#allocation8 + $0x1e8] sm:$0xff]
    %v3609 = vld [vmem:[#allocation8 + $0x1f0] sm:$0xff]
    %v3610 = vld [vmem:[#allocation8 + $0x1f8] sm:$0xff]
    %v3611 = vld [vmem:[#allocation8 + $0x200] sm:$0xff]
    %v3612 = vld [vmem:[#allocation8 + $0x208] sm:$0xff]
    %v3613 = vld [vmem:[#allocation8 + $0x210] sm:$0xff]
    %v3614 = vld [vmem:[#allocation8 + $0x218] sm:$0xff]
    %v3615 = vld [vmem:[#allocation8 + $0x220] sm:$0xff]
    %v3616 = vld [vmem:[#allocation8 + $0x228] sm:$0xff]
    %v3617 = vld [vmem:[#allocation8 + $0x230] sm:$0xff]
    %v3618 = vld [vmem:[#allocation8 + $0x238] sm:$0xff]
    %v3619 = vld [vmem:[#allocation8 + $0x240] sm:$0xff]
    %v3620 = vld [vmem:[#allocation8 + $0x248] sm:$0xff]
    %v3621 = vld [vmem:[#allocation8 + $0x250] sm:$0xff]
    %v3622 = vld [vmem:[#allocation8 + $0x258] sm:$0xff]
    %v3623 = vld [vmem:[#allocation8 + $0x260] sm:$0xff]
    %v3624 = vld [vmem:[#allocation8 + $0x268] sm:$0xff]
    %v3625 = vld [vmem:[#allocation8 + $0x270] sm:$0xff]
    %v3626 = vld [vmem:[#allocation8 + $0x278] sm:$0xff]
    %v3627 = vld [vmem:[#allocation8 + $0x280] sm:$0xff]
    %v3628 = vld [vmem:[#allocation8 + $0x288] sm:$0xff]
    %v3629 = vld [vmem:[#allocation8 + $0x290] sm:$0xff]
    %v3630 = vld [vmem:[#allocation8 + $0x298] sm:$0xff]
    %v3631 = vld [vmem:[#allocation8 + $0x2a0] sm:$0xff]
    %v3632 = vld [vmem:[#allocation8 + $0x2a8] sm:$0xff]
    %v3633 = vld [vmem:[#allocation8 + $0x2b0] sm:$0xff]
    %v3634 = vld [vmem:[#allocation8 + $0x2b8] sm:$0xff]
    %v3635 = vld [vmem:[#allocation8 + $0x2c0] sm:$0xff]
    %v3636 = vld [vmem:[#allocation8 + $0x2c8] sm:$0xff]
    %v3637 = vld [vmem:[#allocation8 + $0x2d0] sm:$0xff]
    %v3638 = vld [vmem:[#allocation8 + $0x2d8] sm:$0xff]
    %v3639 = vld [vmem:[#allocation8 + $0x2e0] sm:$0xff]
    %v3640 = vld [vmem:[#allocation8 + $0x2e8] sm:$0xff]
    %v3641 = vld [vmem:[#allocation8 + $0x2f0] sm:$0xff]
    %v3642 = vld [vmem:[#allocation8 + $0x2f8] sm:$0xff]
    %v3643 = vld [vmem:[#allocation8 + $0x300] sm:$0xff]
    %v3644 = vld [vmem:[#allocation8 + $0x308] sm:$0xff]
    %v3645 = vld [vmem:[#allocation8 + $0x310] sm:$0xff]
    %v3646 = vld [vmem:[#allocation8 + $0x318] sm:$0xff]
    %v3647 = vld [vmem:[#allocation8 + $0x320] sm:$0xff]
    %v3648 = vld [vmem:[#allocation8 + $0x328] sm:$0xff]
    %v3649 = vld [vmem:[#allocation8 + $0x330] sm:$0xff]
    %v3650 = vld [vmem:[#allocation8 + $0x338] sm:$0xff]
    %v3651 = vld [vmem:[#allocation8 + $0x340] sm:$0xff]
    %v3652 = vld [vmem:[#allocation8 + $0x348] sm:$0xff]
    %v3653 = vld [vmem:[#allocation8 + $0x350] sm:$0xff]
    %v3654 = vld [vmem:[#allocation8 + $0x358] sm:$0xff]
    %v3655 = vld [vmem:[#allocation8 + $0x360] sm:$0xff]
    %v3656 = vld [vmem:[#allocation8 + $0x368] sm:$0xff]
    %v3657 = vld [vmem:[#allocation8 + $0x370] sm:$0xff]
    %v3658 = vld [vmem:[#allocation8 + $0x378] sm:$0xff]
    %3659 = vmatprep.subr.mxu0 0.0
    %v3660 = vand.u32 %v3547, 4294901760
    %3661 = vmatpush1.msra.mxu0 %v3660
    %3662 = vmatprep.subr.mxu0 0.0
    %v3663 = vand.u32 %v3548, 4294901760
    %3664 = vmatpush1.msra.mxu0 %v3663
    %3665 = vmatprep.subr.mxu0 0.0
    %v3666 = vand.u32 %v3549, 4294901760
    %3667 = vmatpush1.msra.mxu0 %v3666
    %3668 = vmatprep.subr.mxu0 0.0
    %v3669 = vand.u32 %v3550, 4294901760
    %3670 = vmatpush1.msra.mxu0 %v3669
    %3671 = vmatprep.subr.mxu0 0.0
    %v3672 = vand.u32 %v3551, 4294901760
    %3673 = vmatpush1.msra.mxu0 %v3672
    %3674 = vmatprep.subr.mxu0 0.0
    %v3675 = vand.u32 %v3552, 4294901760
    %3676 = vmatpush1.msra.mxu0 %v3675
    %3677 = vmatprep.subr.mxu0 0.0
    %v3678 = vand.u32 %v3553, 4294901760
    %3679 = vmatpush1.msra.mxu0 %v3678
    %3680 = vmatprep.subr.mxu0 0.0
    %v3681 = vand.u32 %v3554, 4294901760
    %3682 = vmatpush1.msra.mxu0 %v3681
    %3683 = vmatprep.subr.mxu0 0.0
    %v3684 = vand.u32 %v3555, 4294901760
    %3685 = vmatpush1.msra.mxu0 %v3684
    %3686 = vmatprep.subr.mxu0 0.0
    %v3687 = vand.u32 %v3556, 4294901760
    %3688 = vmatpush1.msra.mxu0 %v3687
    %3689 = vmatprep.subr.mxu0 0.0
    %v3690 = vand.u32 %v3557, 4294901760
    %3691 = vmatpush1.msra.mxu0 %v3690
    %3692 = vmatprep.subr.mxu0 0.0
    %v3693 = vand.u32 %v3558, 4294901760
    %3694 = vmatpush1.msra.mxu0 %v3693
    %3695 = vmatprep.subr.mxu0 0.0
    %v3696 = vand.u32 %v3559, 4294901760
    %3697 = vmatpush1.msra.mxu0 %v3696
    %3698 = vmatprep.subr.mxu0 0.0
    %v3699 = vand.u32 %v3560, 4294901760
    %3700 = vmatpush1.msra.mxu0 %v3699
    %3701 = vmatprep.subr.mxu0 0.0
    %v3702 = vand.u32 %v3561, 4294901760
    %3703 = vmatpush1.msra.mxu0 %v3702
    %3704 = vmatprep.subr.mxu0 0.0
    %v3705 = vand.u32 %v3562, 4294901760
    %3706 = vmatpush1.msra.mxu0 %v3705
    %3707 = vmatprep.subr.mxu0 0.0
    %v3708 = vand.u32 %v3563, 4294901760
    %3709 = vmatpush1.msra.mxu0 %v3708
    %3710 = vmatprep.subr.mxu0 0.0
    %v3711 = vand.u32 %v3564, 4294901760
    %3712 = vmatpush1.msra.mxu0 %v3711
    %3713 = vmatprep.subr.mxu0 0.0
    %v3714 = vand.u32 %v3565, 4294901760
    %3715 = vmatpush1.msra.mxu0 %v3714
    %3716 = vmatprep.subr.mxu0 0.0
    %v3717 = vand.u32 %v3566, 4294901760
    %3718 = vmatpush1.msra.mxu0 %v3717
    %3719 = vmatprep.subr.mxu0 0.0
    %v3720 = vand.u32 %v3567, 4294901760
    %3721 = vmatpush1.msra.mxu0 %v3720
    %3722 = vmatprep.subr.mxu0 0.0
    %v3723 = vand.u32 %v3568, 4294901760
    %3724 = vmatpush1.msra.mxu0 %v3723
    %3725 = vmatprep.subr.mxu0 0.0
    %v3726 = vand.u32 %v3569, 4294901760
    %3727 = vmatpush1.msra.mxu0 %v3726
    %3728 = vmatprep.subr.mxu0 0.0
    %v3729 = vand.u32 %v3570, 4294901760
    %3730 = vmatpush1.msra.mxu0 %v3729
    %3731 = vmatprep.subr.mxu0 0.0
    %v3732 = vand.u32 %v3571, 4294901760
    %3733 = vmatpush1.msra.mxu0 %v3732
    %3734 = vmatprep.subr.mxu0 0.0
    %v3735 = vand.u32 %v3572, 4294901760
    %3736 = vmatpush1.msra.mxu0 %v3735
    %3737 = vmatprep.subr.mxu0 0.0
    %v3738 = vand.u32 %v3573, 4294901760
    %3739 = vmatpush1.msra.mxu0 %v3738
    %3740 = vmatprep.subr.mxu0 0.0
    %v3741 = vand.u32 %v3574, 4294901760
    %3742 = vmatpush1.msra.mxu0 %v3741
    %3743 = vmatprep.subr.mxu0 0.0
    %v3744 = vand.u32 %v3575, 4294901760
    %3745 = vmatpush1.msra.mxu0 %v3744
    %3746 = vmatprep.subr.mxu0 0.0
    %v3747 = vand.u32 %v3576, 4294901760
    %3748 = vmatpush1.msra.mxu0 %v3747
    %3749 = vmatprep.subr.mxu0 0.0
    %v3750 = vand.u32 %v3577, 4294901760
    %3751 = vmatpush1.msra.mxu0 %v3750
    %3752 = vmatprep.subr.mxu0 0.0
    %v3753 = vand.u32 %v3578, 4294901760
    %3754 = vmatpush1.msra.mxu0 %v3753
    %v3755 = vand.u32 %v3431, 4294901760
    %v3756 = vsub.f32 %v3431, %v3755
    %v3757 = vand.u32 %v3756, 4294901760
    %v3758 = vsub.f32 %v3756, %v3757
    %v3759 = vand.u32 %v3758, 4294901760
    %3760 = vmatprep.mubr.f32.mxu0 %v3759
    %v3761 = vand.u32 %v3430, 4294901760
    %v3762 = vsub.f32 %v3430, %v3761
    %v3763 = vand.u32 %v3762, 4294901760
    %v3764 = vsub.f32 %v3762, %v3763
    %v3765 = vand.u32 %v3764, 4294901760
    %3766 = vmatmul.mubr.f32.gmra.mrb[0].mxu0 %v3765
    %v3767 = vpop.f32.mrb[0].mxu0
    %v3768 = vadd.f32 0.0, %v3767
    %v3769 = vpop.f32.mrb[0].mxu0
    %3770 = vdwg.mxu0
    %3771 = vmatprep.subr.mxu0 0.0
    %v3772 = vand.u32 %v3547, 4294901760
    %v3773 = vsub.f32 %v3547, %v3772
    %v3774 = vand.u32 %v3773, 4294901760
    %v3775 = vsub.f32 %v3773, %v3774
    %v3776 = vand.u32 %v3775, 4294901760
    %3777 = vmatpush1.msra.mxu0 %v3776
    %3778 = vmatprep.subr.mxu0 0.0
    %v3779 = vand.u32 %v3548, 4294901760
    %v3780 = vsub.f32 %v3548, %v3779
    %v3781 = vand.u32 %v3780, 4294901760
    %v3782 = vsub.f32 %v3780, %v3781
    %v3783 = vand.u32 %v3782, 4294901760
    %3784 = vmatpush1.msra.mxu0 %v3783
    %3785 = vmatprep.subr.mxu0 0.0
    %v3786 = vand.u32 %v3549, 4294901760
    %v3787 = vsub.f32 %v3549, %v3786
    %v3788 = vand.u32 %v3787, 4294901760
    %v3789 = vsub.f32 %v3787, %v3788
    %v3790 = vand.u32 %v3789, 4294901760
    %3791 = vmatpush1.msra.mxu0 %v3790
    %3792 = vmatprep.subr.mxu0 0.0
    %v3793 = vand.u32 %v3550, 4294901760
    %v3794 = vsub.f32 %v3550, %v3793
    %v3795 = vand.u32 %v3794, 4294901760
    %v3796 = vsub.f32 %v3794, %v3795
    %v3797 = vand.u32 %v3796, 4294901760
    %3798 = vmatpush1.msra.mxu0 %v3797
    %3799 = vmatprep.subr.mxu0 0.0
    %v3800 = vand.u32 %v3551, 4294901760
    %v3801 = vsub.f32 %v3551, %v3800
    %v3802 = vand.u32 %v3801, 4294901760
    %v3803 = vsub.f32 %v3801, %v3802
    %v3804 = vand.u32 %v3803, 4294901760
    %3805 = vmatpush1.msra.mxu0 %v3804
    %3806 = vmatprep.subr.mxu0 0.0
    %v3807 = vand.u32 %v3552, 4294901760
    %v3808 = vsub.f32 %v3552, %v3807
    %v3809 = vand.u32 %v3808, 4294901760
    %v3810 = vsub.f32 %v3808, %v3809
    %v3811 = vand.u32 %v3810, 4294901760
    %3812 = vmatpush1.msra.mxu0 %v3811
    %3813 = vmatprep.subr.mxu0 0.0
    %v3814 = vand.u32 %v3553, 4294901760
    %v3815 = vsub.f32 %v3553, %v3814
    %v3816 = vand.u32 %v3815, 4294901760
    %v3817 = vsub.f32 %v3815, %v3816
    %v3818 = vand.u32 %v3817, 4294901760
    %3819 = vmatpush1.msra.mxu0 %v3818
    %3820 = vmatprep.subr.mxu0 0.0
    %v3821 = vand.u32 %v3554, 4294901760
    %v3822 = vsub.f32 %v3554, %v3821
    %v3823 = vand.u32 %v3822, 4294901760
    %v3824 = vsub.f32 %v3822, %v3823
    %v3825 = vand.u32 %v3824, 4294901760
    %3826 = vmatpush1.msra.mxu0 %v3825
    %3827 = vmatprep.subr.mxu0 0.0
    %v3828 = vand.u32 %v3555, 4294901760
    %v3829 = vsub.f32 %v3555, %v3828
    %v3830 = vand.u32 %v3829, 4294901760
    %v3831 = vsub.f32 %v3829, %v3830
    %v3832 = vand.u32 %v3831, 4294901760
    %3833 = vmatpush1.msra.mxu0 %v3832
    %3834 = vmatprep.subr.mxu0 0.0
    %v3835 = vand.u32 %v3556, 4294901760
    %v3836 = vsub.f32 %v3556, %v3835
    %v3837 = vand.u32 %v3836, 4294901760
    %v3838 = vsub.f32 %v3836, %v3837
    %v3839 = vand.u32 %v3838, 4294901760
    %3840 = vmatpush1.msra.mxu0 %v3839
    %3841 = vmatprep.subr.mxu0 0.0
    %v3842 = vand.u32 %v3557, 4294901760
    %v3843 = vsub.f32 %v3557, %v3842
    %v3844 = vand.u32 %v3843, 4294901760
    %v3845 = vsub.f32 %v3843, %v3844
    %v3846 = vand.u32 %v3845, 4294901760
    %3847 = vmatpush1.msra.mxu0 %v3846
    %3848 = vmatprep.subr.mxu0 0.0
    %v3849 = vand.u32 %v3558, 4294901760
    %v3850 = vsub.f32 %v3558, %v3849
    %v3851 = vand.u32 %v3850, 4294901760
    %v3852 = vsub.f32 %v3850, %v3851
    %v3853 = vand.u32 %v3852, 4294901760
    %3854 = vmatpush1.msra.mxu0 %v3853
    %3855 = vmatprep.subr.mxu0 0.0
    %v3856 = vand.u32 %v3559, 4294901760
    %v3857 = vsub.f32 %v3559, %v3856
    %v3858 = vand.u32 %v3857, 4294901760
    %v3859 = vsub.f32 %v3857, %v3858
    %v3860 = vand.u32 %v3859, 4294901760
    %3861 = vmatpush1.msra.mxu0 %v3860
    %3862 = vmatprep.subr.mxu0 0.0
    %v3863 = vand.u32 %v3560, 4294901760
    %v3864 = vsub.f32 %v3560, %v3863
    %v3865 = vand.u32 %v3864, 4294901760
    %v3866 = vsub.f32 %v3864, %v3865
    %v3867 = vand.u32 %v3866, 4294901760
    %3868 = vmatpush1.msra.mxu0 %v3867
    %3869 = vmatprep.subr.mxu0 0.0
    %v3870 = vand.u32 %v3561, 4294901760
    %v3871 = vsub.f32 %v3561, %v3870
    %v3872 = vand.u32 %v3871, 4294901760
    %v3873 = vsub.f32 %v3871, %v3872
    %v3874 = vand.u32 %v3873, 4294901760
    %3875 = vmatpush1.msra.mxu0 %v3874
    %3876 = vmatprep.subr.mxu0 0.0
    %v3877 = vand.u32 %v3562, 4294901760
    %v3878 = vsub.f32 %v3562, %v3877
    %v3879 = vand.u32 %v3878, 4294901760
    %v3880 = vsub.f32 %v3878, %v3879
    %v3881 = vand.u32 %v3880, 4294901760
    %3882 = vmatpush1.msra.mxu0 %v3881
    %3883 = vmatprep.subr.mxu0 0.0
    %v3884 = vand.u32 %v3563, 4294901760
    %v3885 = vsub.f32 %v3563, %v3884
    %v3886 = vand.u32 %v3885, 4294901760
    %v3887 = vsub.f32 %v3885, %v3886
    %v3888 = vand.u32 %v3887, 4294901760
    %3889 = vmatpush1.msra.mxu0 %v3888
    %3890 = vmatprep.subr.mxu0 0.0
    %v3891 = vand.u32 %v3564, 4294901760
    %v3892 = vsub.f32 %v3564, %v3891
    %v3893 = vand.u32 %v3892, 4294901760
    %v3894 = vsub.f32 %v3892, %v3893
    %v3895 = vand.u32 %v3894, 4294901760
    %3896 = vmatpush1.msra.mxu0 %v3895
    %3897 = vmatprep.subr.mxu0 0.0
    %v3898 = vand.u32 %v3565, 4294901760
    %v3899 = vsub.f32 %v3565, %v3898
    %v3900 = vand.u32 %v3899, 4294901760
    %v3901 = vsub.f32 %v3899, %v3900
    %v3902 = vand.u32 %v3901, 4294901760
    %3903 = vmatpush1.msra.mxu0 %v3902
    %3904 = vmatprep.subr.mxu0 0.0
    %v3905 = vand.u32 %v3566, 4294901760
    %v3906 = vsub.f32 %v3566, %v3905
    %v3907 = vand.u32 %v3906, 4294901760
    %v3908 = vsub.f32 %v3906, %v3907
    %v3909 = vand.u32 %v3908, 4294901760
    %3910 = vmatpush1.msra.mxu0 %v3909
    %3911 = vmatprep.subr.mxu0 0.0
    %v3912 = vand.u32 %v3567, 4294901760
    %v3913 = vsub.f32 %v3567, %v3912
    %v3914 = vand.u32 %v3913, 4294901760
    %v3915 = vsub.f32 %v3913, %v3914
    %v3916 = vand.u32 %v3915, 4294901760
    %3917 = vmatpush1.msra.mxu0 %v3916
    %3918 = vmatprep.subr.mxu0 0.0
    %v3919 = vand.u32 %v3568, 4294901760
    %v3920 = vsub.f32 %v3568, %v3919
    %v3921 = vand.u32 %v3920, 4294901760
    %v3922 = vsub.f32 %v3920, %v3921
    %v3923 = vand.u32 %v3922, 4294901760
    %3924 = vmatpush1.msra.mxu0 %v3923
    %3925 = vmatprep.subr.mxu0 0.0
    %v3926 = vand.u32 %v3569, 4294901760
    %v3927 = vsub.f32 %v3569, %v3926
    %v3928 = vand.u32 %v3927, 4294901760
    %v3929 = vsub.f32 %v3927, %v3928
    %v3930 = vand.u32 %v3929, 4294901760
    %3931 = vmatpush1.msra.mxu0 %v3930
    %3932 = vmatprep.subr.mxu0 0.0
    %v3933 = vand.u32 %v3570, 4294901760
    %v3934 = vsub.f32 %v3570, %v3933
    %v3935 = vand.u32 %v3934, 4294901760
    %v3936 = vsub.f32 %v3934, %v3935
    %v3937 = vand.u32 %v3936, 4294901760
    %3938 = vmatpush1.msra.mxu0 %v3937
    %3939 = vmatprep.subr.mxu0 0.0
    %v3940 = vand.u32 %v3571, 4294901760
    %v3941 = vsub.f32 %v3571, %v3940
    %v3942 = vand.u32 %v3941, 4294901760
    %v3943 = vsub.f32 %v3941, %v3942
    %v3944 = vand.u32 %v3943, 4294901760
    %3945 = vmatpush1.msra.mxu0 %v3944
    %3946 = vmatprep.subr.mxu0 0.0
    %v3947 = vand.u32 %v3572, 4294901760
    %v3948 = vsub.f32 %v3572, %v3947
    %v3949 = vand.u32 %v3948, 4294901760
    %v3950 = vsub.f32 %v3948, %v3949
    %v3951 = vand.u32 %v3950, 4294901760
    %3952 = vmatpush1.msra.mxu0 %v3951
    %3953 = vmatprep.subr.mxu0 0.0
    %v3954 = vand.u32 %v3573, 4294901760
    %v3955 = vsub.f32 %v3573, %v3954
    %v3956 = vand.u32 %v3955, 4294901760
    %v3957 = vsub.f32 %v3955, %v3956
    %v3958 = vand.u32 %v3957, 4294901760
    %3959 = vmatpush1.msra.mxu0 %v3958
    %3960 = vmatprep.subr.mxu0 0.0
    %v3961 = vand.u32 %v3574, 4294901760
    %v3962 = vsub.f32 %v3574, %v3961
    %v3963 = vand.u32 %v3962, 4294901760
    %v3964 = vsub.f32 %v3962, %v3963
    %v3965 = vand.u32 %v3964, 4294901760
    %3966 = vmatpush1.msra.mxu0 %v3965
    %3967 = vmatprep.subr.mxu0 0.0
    %v3968 = vand.u32 %v3575, 4294901760
    %v3969 = vsub.f32 %v3575, %v3968
    %v3970 = vand.u32 %v3969, 4294901760
    %v3971 = vsub.f32 %v3969, %v3970
    %v3972 = vand.u32 %v3971, 4294901760
    %3973 = vmatpush1.msra.mxu0 %v3972
    %3974 = vmatprep.subr.mxu0 0.0
    %v3975 = vand.u32 %v3576, 4294901760
    %v3976 = vsub.f32 %v3576, %v3975
    %v3977 = vand.u32 %v3976, 4294901760
    %v3978 = vsub.f32 %v3976, %v3977
    %v3979 = vand.u32 %v3978, 4294901760
    %3980 = vmatpush1.msra.mxu0 %v3979
    %3981 = vmatprep.subr.mxu0 0.0
    %v3982 = vand.u32 %v3577, 4294901760
    %v3983 = vsub.f32 %v3577, %v3982
    %v3984 = vand.u32 %v3983, 4294901760
    %v3985 = vsub.f32 %v3983, %v3984
    %v3986 = vand.u32 %v3985, 4294901760
    %3987 = vmatpush1.msra.mxu0 %v3986
    %3988 = vmatprep.subr.mxu0 0.0
    %v3989 = vand.u32 %v3578, 4294901760
    %v3990 = vsub.f32 %v3578, %v3989
    %v3991 = vand.u32 %v3990, 4294901760
    %v3992 = vsub.f32 %v3990, %v3991
    %v3993 = vand.u32 %v3992, 4294901760
    %3994 = vmatpush1.msra.mxu0 %v3993
    %v3995 = vand.u32 %v3431, 4294901760
    %3996 = vmatprep.mubr.f32.mxu0 %v3995
    %v3997 = vand.u32 %v3430, 4294901760
    %3998 = vmatmul.mubr.f32.gmra.mrb[0].mxu0 %v3997
    %v3999 = vpop.f32.mrb[0].mxu0
    %v4000 = vadd.f32 %v3768, %v3999
    %v4001 = vpop.f32.mrb[0].mxu0
    %4002 = vdwg.mxu0
    %4003 = vmatprep.subr.mxu0 0.0
    %v4004 = vand.u32 %v3547, 4294901760
    %v4005 = vsub.f32 %v3547, %v4004
    %4006 = vmatpush1.msra.mxu0 %v4005
    %4007 = vmatprep.subr.mxu0 0.0
    %v4008 = vand.u32 %v3548, 4294901760
    %v4009 = vsub.f32 %v3548, %v4008
    %4010 = vmatpush1.msra.mxu0 %v4009
    %4011 = vmatprep.subr.mxu0 0.0
    %v4012 = vand.u32 %v3549, 4294901760
    %v4013 = vsub.f32 %v3549, %v4012
    %4014 = vmatpush1.msra.mxu0 %v4013
    %4015 = vmatprep.subr.mxu0 0.0
    %v4016 = vand.u32 %v3550, 4294901760
    %v4017 = vsub.f32 %v3550, %v4016
    %4018 = vmatpush1.msra.mxu0 %v4017
    %4019 = vmatprep.subr.mxu0 0.0
    %v4020 = vand.u32 %v3551, 4294901760
    %v4021 = vsub.f32 %v3551, %v4020
    %4022 = vmatpush1.msra.mxu0 %v4021
    %4023 = vmatprep.subr.mxu0 0.0
    %v4024 = vand.u32 %v3552, 4294901760
    %v4025 = vsub.f32 %v3552, %v4024
    %4026 = vmatpush1.msra.mxu0 %v4025
    %4027 = vmatprep.subr.mxu0 0.0
    %v4028 = vand.u32 %v3553, 4294901760
    %v4029 = vsub.f32 %v3553, %v4028
    %4030 = vmatpush1.msra.mxu0 %v4029
    %4031 = vmatprep.subr.mxu0 0.0
    %v4032 = vand.u32 %v3554, 4294901760
    %v4033 = vsub.f32 %v3554, %v4032
    %4034 = vmatpush1.msra.mxu0 %v4033
    %4035 = vmatprep.subr.mxu0 0.0
    %v4036 = vand.u32 %v3555, 4294901760
    %v4037 = vsub.f32 %v3555, %v4036
    %4038 = vmatpush1.msra.mxu0 %v4037
    %4039 = vmatprep.subr.mxu0 0.0
    %v4040 = vand.u32 %v3556, 4294901760
    %v4041 = vsub.f32 %v3556, %v4040
    %4042 = vmatpush1.msra.mxu0 %v4041
    %4043 = vmatprep.subr.mxu0 0.0
    %v4044 = vand.u32 %v3557, 4294901760
    %v4045 = vsub.f32 %v3557, %v4044
    %4046 = vmatpush1.msra.mxu0 %v4045
    %4047 = vmatprep.subr.mxu0 0.0
    %v4048 = vand.u32 %v3558, 4294901760
    %v4049 = vsub.f32 %v3558, %v4048
    %4050 = vmatpush1.msra.mxu0 %v4049
    %4051 = vmatprep.subr.mxu0 0.0
    %v4052 = vand.u32 %v3559, 4294901760
    %v4053 = vsub.f32 %v3559, %v4052
    %4054 = vmatpush1.msra.mxu0 %v4053
    %4055 = vmatprep.subr.mxu0 0.0
    %v4056 = vand.u32 %v3560, 4294901760
    %v4057 = vsub.f32 %v3560, %v4056
    %4058 = vmatpush1.msra.mxu0 %v4057
    %4059 = vmatprep.subr.mxu0 0.0
    %v4060 = vand.u32 %v3561, 4294901760
    %v4061 = vsub.f32 %v3561, %v4060
    %4062 = vmatpush1.msra.mxu0 %v4061
    %4063 = vmatprep.subr.mxu0 0.0
    %v4064 = vand.u32 %v3562, 4294901760
    %v4065 = vsub.f32 %v3562, %v4064
    %4066 = vmatpush1.msra.mxu0 %v4065
    %4067 = vmatprep.subr.mxu0 0.0
    %v4068 = vand.u32 %v3563, 4294901760
    %v4069 = vsub.f32 %v3563, %v4068
    %4070 = vmatpush1.msra.mxu0 %v4069
    %4071 = vmatprep.subr.mxu0 0.0
    %v4072 = vand.u32 %v3564, 4294901760
    %v4073 = vsub.f32 %v3564, %v4072
    %4074 = vmatpush1.msra.mxu0 %v4073
    %4075 = vmatprep.subr.mxu0 0.0
    %v4076 = vand.u32 %v3565, 4294901760
    %v4077 = vsub.f32 %v3565, %v4076
    %4078 = vmatpush1.msra.mxu0 %v4077
    %4079 = vmatprep.subr.mxu0 0.0
    %v4080 = vand.u32 %v3566, 4294901760
    %v4081 = vsub.f32 %v3566, %v4080
    %4082 = vmatpush1.msra.mxu0 %v4081
    %4083 = vmatprep.subr.mxu0 0.0
    %v4084 = vand.u32 %v3567, 4294901760
    %v4085 = vsub.f32 %v3567, %v4084
    %4086 = vmatpush1.msra.mxu0 %v4085
    %4087 = vmatprep.subr.mxu0 0.0
    %v4088 = vand.u32 %v3568, 4294901760
    %v4089 = vsub.f32 %v3568, %v4088
    %4090 = vmatpush1.msra.mxu0 %v4089
    %4091 = vmatprep.subr.mxu0 0.0
    %v4092 = vand.u32 %v3569, 4294901760
    %v4093 = vsub.f32 %v3569, %v4092
    %4094 = vmatpush1.msra.mxu0 %v4093
    %4095 = vmatprep.subr.mxu0 0.0
    %v4096 = vand.u32 %v3570, 4294901760
    %v4097 = vsub.f32 %v3570, %v4096
    %4098 = vmatpush1.msra.mxu0 %v4097
    %4099 = vmatprep.subr.mxu0 0.0
    %v4100 = vand.u32 %v3571, 4294901760
    %v4101 = vsub.f32 %v3571, %v4100
    %4102 = vmatpush1.msra.mxu0 %v4101
    %4103 = vmatprep.subr.mxu0 0.0
    %v4104 = vand.u32 %v3572, 4294901760
    %v4105 = vsub.f32 %v3572, %v4104
    %4106 = vmatpush1.msra.mxu0 %v4105
    %4107 = vmatprep.subr.mxu0 0.0
    %v4108 = vand.u32 %v3573, 4294901760
    %v4109 = vsub.f32 %v3573, %v4108
    %4110 = vmatpush1.msra.mxu0 %v4109
    %4111 = vmatprep.subr.mxu0 0.0
    %v4112 = vand.u32 %v3574, 4294901760
    %v4113 = vsub.f32 %v3574, %v4112
    %4114 = vmatpush1.msra.mxu0 %v4113
    %4115 = vmatprep.subr.mxu0 0.0
    %v4116 = vand.u32 %v3575, 4294901760
    %v4117 = vsub.f32 %v3575, %v4116
    %4118 = vmatpush1.msra.mxu0 %v4117
    %4119 = vmatprep.subr.mxu0 0.0
    %v4120 = vand.u32 %v3576, 4294901760
    %v4121 = vsub.f32 %v3576, %v4120
    %4122 = vmatpush1.msra.mxu0 %v4121
    %4123 = vmatprep.subr.mxu0 0.0
    %v4124 = vand.u32 %v3577, 4294901760
    %v4125 = vsub.f32 %v3577, %v4124
    %4126 = vmatpush1.msra.mxu0 %v4125
    %4127 = vmatprep.subr.mxu0 0.0
    %v4128 = vand.u32 %v3578, 4294901760
    %v4129 = vsub.f32 %v3578, %v4128
    %4130 = vmatpush1.msra.mxu0 %v4129
    %v4131 = vand.u32 %v3431, 4294901760
    %v4132 = vsub.f32 %v3431, %v4131
    %4133 = vmatprep.mubr.f32.mxu0 %v4132
    %v4134 = vand.u32 %v3430, 4294901760
    %v4135 = vsub.f32 %v3430, %v4134
    %4136 = vmatmul.mubr.f32.gmra.mrb[0].mxu0 %v4135
    %v4137 = vpop.f32.mrb[0].mxu0
    %v4138 = vadd.f32 %v4000, %v4137
    %v4139 = vpop.f32.mrb[0].mxu0
    %4140 = vdwg.mxu0
    %4141 = vmatprep.subr.mxu0 0.0
    %v4142 = vand.u32 %v3547, 4294901760
    %4143 = vmatpush1.msra.mxu0 %v4142
    %4144 = vmatprep.subr.mxu0 0.0
    %v4145 = vand.u32 %v3548, 4294901760
    %4146 = vmatpush1.msra.mxu0 %v4145
    %4147 = vmatprep.subr.mxu0 0.0
    %v4148 = vand.u32 %v3549, 4294901760
    %4149 = vmatpush1.msra.mxu0 %v4148
    %4150 = vmatprep.subr.mxu0 0.0
    %v4151 = vand.u32 %v3550, 4294901760
    %4152 = vmatpush1.msra.mxu0 %v4151
    %4153 = vmatprep.subr.mxu0 0.0
    %v4154 = vand.u32 %v3551, 4294901760
    %4155 = vmatpush1.msra.mxu0 %v4154
    %4156 = vmatprep.subr.mxu0 0.0
    %v4157 = vand.u32 %v3552, 4294901760
    %4158 = vmatpush1.msra.mxu0 %v4157
    %4159 = vmatprep.subr.mxu0 0.0
    %v4160 = vand.u32 %v3553, 4294901760
    %4161 = vmatpush1.msra.mxu0 %v4160
    %4162 = vmatprep.subr.mxu0 0.0
    %v4163 = vand.u32 %v3554, 4294901760
    %4164 = vmatpush1.msra.mxu0 %v4163
    %4165 = vmatprep.subr.mxu0 0.0
    %v4166 = vand.u32 %v3555, 4294901760
    %4167 = vmatpush1.msra.mxu0 %v4166
    %4168 = vmatprep.subr.mxu0 0.0
    %v4169 = vand.u32 %v3556, 4294901760
    %4170 = vmatpush1.msra.mxu0 %v4169
    %4171 = vmatprep.subr.mxu0 0.0
    %v4172 = vand.u32 %v3557, 4294901760
    %4173 = vmatpush1.msra.mxu0 %v4172
    %4174 = vmatprep.subr.mxu0 0.0
    %v4175 = vand.u32 %v3558, 4294901760
    %4176 = vmatpush1.msra.mxu0 %v4175
    %4177 = vmatprep.subr.mxu0 0.0
    %v4178 = vand.u32 %v3559, 4294901760
    %4179 = vmatpush1.msra.mxu0 %v4178
    %4180 = vmatprep.subr.mxu0 0.0
    %v4181 = vand.u32 %v3560, 4294901760
    %4182 = vmatpush1.msra.mxu0 %v4181
    %4183 = vmatprep.subr.mxu0 0.0
    %v4184 = vand.u32 %v3561, 4294901760
    %4185 = vmatpush1.msra.mxu0 %v4184
    %4186 = vmatprep.subr.mxu0 0.0
    %v4187 = vand.u32 %v3562, 4294901760
    %4188 = vmatpush1.msra.mxu0 %v4187
    %4189 = vmatprep.subr.mxu0 0.0
    %v4190 = vand.u32 %v3563, 4294901760
    %4191 = vmatpush1.msra.mxu0 %v4190
    %4192 = vmatprep.subr.mxu0 0.0
    %v4193 = vand.u32 %v3564, 4294901760
    %4194 = vmatpush1.msra.mxu0 %v4193
    %4195 = vmatprep.subr.mxu0 0.0
    %v4196 = vand.u32 %v3565, 4294901760
    %4197 = vmatpush1.msra.mxu0 %v4196
    %4198 = vmatprep.subr.mxu0 0.0
    %v4199 = vand.u32 %v3566, 4294901760
    %4200 = vmatpush1.msra.mxu0 %v4199
    %4201 = vmatprep.subr.mxu0 0.0
    %v4202 = vand.u32 %v3567, 4294901760
    %4203 = vmatpush1.msra.mxu0 %v4202
    %4204 = vmatprep.subr.mxu0 0.0
    %v4205 = vand.u32 %v3568, 4294901760
    %4206 = vmatpush1.msra.mxu0 %v4205
    %4207 = vmatprep.subr.mxu0 0.0
    %v4208 = vand.u32 %v3569, 4294901760
    %4209 = vmatpush1.msra.mxu0 %v4208
    %4210 = vmatprep.subr.mxu0 0.0
    %v4211 = vand.u32 %v3570, 4294901760
    %4212 = vmatpush1.msra.mxu0 %v4211
    %4213 = vmatprep.subr.mxu0 0.0
    %v4214 = vand.u32 %v3571, 4294901760
    %4215 = vmatpush1.msra.mxu0 %v4214
    %4216 = vmatprep.subr.mxu0 0.0
    %v4217 = vand.u32 %v3572, 4294901760
    %4218 = vmatpush1.msra.mxu0 %v4217
    %4219 = vmatprep.subr.mxu0 0.0
    %v4220 = vand.u32 %v3573, 4294901760
    %4221 = vmatpush1.msra.mxu0 %v4220
    %4222 = vmatprep.subr.mxu0 0.0
    %v4223 = vand.u32 %v3574, 4294901760
    %4224 = vmatpush1.msra.mxu0 %v4223
    %4225 = vmatprep.subr.mxu0 0.0
    %v4226 = vand.u32 %v3575, 4294901760
    %4227 = vmatpush1.msra.mxu0 %v4226
    %4228 = vmatprep.subr.mxu0 0.0
    %v4229 = vand.u32 %v3576, 4294901760
    %4230 = vmatpush1.msra.mxu0 %v4229
    %4231 = vmatprep.subr.mxu0 0.0
    %v4232 = vand.u32 %v3577, 4294901760
    %4233 = vmatpush1.msra.mxu0 %v4232
    %4234 = vmatprep.subr.mxu0 0.0
    %v4235 = vand.u32 %v3578, 4294901760
    %4236 = vmatpush1.msra.mxu0 %v4235
    %v4237 = vand.u32 %v3431, 4294901760
    %v4238 = vsub.f32 %v3431, %v4237
    %v4239 = vand.u32 %v4238, 4294901760
    %4240 = vmatprep.mubr.f32.mxu0 %v4239
    %v4241 = vand.u32 %v3430, 4294901760
    %v4242 = vsub.f32 %v3430, %v4241
    %v4243 = vand.u32 %v4242, 4294901760
    %4244 = vmatmul.mubr.f32.gmra.mrb[0].mxu0 %v4243
    %v4245 = vpop.f32.mrb[0].mxu0
    %v4246 = vadd.f32 %v4138, %v4245
    %v4247 = vpop.f32.mrb[0].mxu0
    %4248 = vdwg.mxu0
    %4249 = vmatprep.subr.mxu0 0.0
    %v4250 = vand.u32 %v3547, 4294901760
    %v4251 = vsub.f32 %v3547, %v4250
    %v4252 = vand.u32 %v4251, 4294901760
    %4253 = vmatpush1.msra.mxu0 %v4252
    %4254 = vmatprep.subr.mxu0 0.0
    %v4255 = vand.u32 %v3548, 4294901760
    %v4256 = vsub.f32 %v3548, %v4255
    %v4257 = vand.u32 %v4256, 4294901760
    %4258 = vmatpush1.msra.mxu0 %v4257
    %4259 = vmatprep.subr.mxu0 0.0
    %v4260 = vand.u32 %v3549, 4294901760
    %v4261 = vsub.f32 %v3549, %v4260
    %v4262 = vand.u32 %v4261, 4294901760
    %4263 = vmatpush1.msra.mxu0 %v4262
    %4264 = vmatprep.subr.mxu0 0.0
    %v4265 = vand.u32 %v3550, 4294901760
    %v4266 = vsub.f32 %v3550, %v4265
    %v4267 = vand.u32 %v4266, 4294901760
    %4268 = vmatpush1.msra.mxu0 %v4267
    %4269 = vmatprep.subr.mxu0 0.0
    %v4270 = vand.u32 %v3551, 4294901760
    %v4271 = vsub.f32 %v3551, %v4270
    %v4272 = vand.u32 %v4271, 4294901760
    %4273 = vmatpush1.msra.mxu0 %v4272
    %4274 = vmatprep.subr.mxu0 0.0
    %v4275 = vand.u32 %v3552, 4294901760
    %v4276 = vsub.f32 %v3552, %v4275
    %v4277 = vand.u32 %v4276, 4294901760
    %4278 = vmatpush1.msra.mxu0 %v4277
    %4279 = vmatprep.subr.mxu0 0.0
    %v4280 = vand.u32 %v3553, 4294901760
    %v4281 = vsub.f32 %v3553, %v4280
    %v4282 = vand.u32 %v4281, 4294901760
    %4283 = vmatpush1.msra.mxu0 %v4282
    %4284 = vmatprep.subr.mxu0 0.0
    %v4285 = vand.u32 %v3554, 4294901760
    %v4286 = vsub.f32 %v3554, %v4285
    %v4287 = vand.u32 %v4286, 4294901760
    %4288 = vmatpush1.msra.mxu0 %v4287
    %4289 = vmatprep.subr.mxu0 0.0
    %v4290 = vand.u32 %v3555, 4294901760
    %v4291 = vsub.f32 %v3555, %v4290
    %v4292 = vand.u32 %v4291, 4294901760
    %4293 = vmatpush1.msra.mxu0 %v4292
    %4294 = vmatprep.subr.mxu0 0.0
    %v4295 = vand.u32 %v3556, 4294901760
    %v4296 = vsub.f32 %v3556, %v4295
    %v4297 = vand.u32 %v4296, 4294901760
    %4298 = vmatpush1.msra.mxu0 %v4297
    %4299 = vmatprep.subr.mxu0 0.0
    %v4300 = vand.u32 %v3557, 4294901760
    %v4301 = vsub.f32 %v3557, %v4300
    %v4302 = vand.u32 %v4301, 4294901760
    %4303 = vmatpush1.msra.mxu0 %v4302
    %4304 = vmatprep.subr.mxu0 0.0
    %v4305 = vand.u32 %v3558, 4294901760
    %v4306 = vsub.f32 %v3558, %v4305
    %v4307 = vand.u32 %v4306, 4294901760
    %4308 = vmatpush1.msra.mxu0 %v4307
    %4309 = vmatprep.subr.mxu0 0.0
    %v4310 = vand.u32 %v3559, 4294901760
    %v4311 = vsub.f32 %v3559, %v4310
    %v4312 = vand.u32 %v4311, 4294901760
    %4313 = vmatpush1.msra.mxu0 %v4312
    %4314 = vmatprep.subr.mxu0 0.0
    %v4315 = vand.u32 %v3560, 4294901760
    %v4316 = vsub.f32 %v3560, %v4315
    %v4317 = vand.u32 %v4316, 4294901760
    %4318 = vmatpush1.msra.mxu0 %v4317
    %4319 = vmatprep.subr.mxu0 0.0
    %v4320 = vand.u32 %v3561, 4294901760
    %v4321 = vsub.f32 %v3561, %v4320
    %v4322 = vand.u32 %v4321, 4294901760
    %4323 = vmatpush1.msra.mxu0 %v4322
    %4324 = vmatprep.subr.mxu0 0.0
    %v4325 = vand.u32 %v3562, 4294901760
    %v4326 = vsub.f32 %v3562, %v4325
    %v4327 = vand.u32 %v4326, 4294901760
    %4328 = vmatpush1.msra.mxu0 %v4327
    %4329 = vmatprep.subr.mxu0 0.0
    %v4330 = vand.u32 %v3563, 4294901760
    %v4331 = vsub.f32 %v3563, %v4330
    %v4332 = vand.u32 %v4331, 4294901760
    %4333 = vmatpush1.msra.mxu0 %v4332
    %4334 = vmatprep.subr.mxu0 0.0
    %v4335 = vand.u32 %v3564, 4294901760
    %v4336 = vsub.f32 %v3564, %v4335
    %v4337 = vand.u32 %v4336, 4294901760
    %4338 = vmatpush1.msra.mxu0 %v4337
    %4339 = vmatprep.subr.mxu0 0.0
    %v4340 = vand.u32 %v3565, 4294901760
    %v4341 = vsub.f32 %v3565, %v4340
    %v4342 = vand.u32 %v4341, 4294901760
    %4343 = vmatpush1.msra.mxu0 %v4342
    %4344 = vmatprep.subr.mxu0 0.0
    %v4345 = vand.u32 %v3566, 4294901760
    %v4346 = vsub.f32 %v3566, %v4345
    %v4347 = vand.u32 %v4346, 4294901760
    %4348 = vmatpush1.msra.mxu0 %v4347
    %4349 = vmatprep.subr.mxu0 0.0
    %v4350 = vand.u32 %v3567, 4294901760
    %v4351 = vsub.f32 %v3567, %v4350
    %v4352 = vand.u32 %v4351, 4294901760
    %4353 = vmatpush1.msra.mxu0 %v4352
    %4354 = vmatprep.subr.mxu0 0.0
    %v4355 = vand.u32 %v3568, 4294901760
    %v4356 = vsub.f32 %v3568, %v4355
    %v4357 = vand.u32 %v4356, 4294901760
    %4358 = vmatpush1.msra.mxu0 %v4357
    %4359 = vmatprep.subr.mxu0 0.0
    %v4360 = vand.u32 %v3569, 4294901760
    %v4361 = vsub.f32 %v3569, %v4360
    %v4362 = vand.u32 %v4361, 4294901760
    %4363 = vmatpush1.msra.mxu0 %v4362
    %4364 = vmatprep.subr.mxu0 0.0
    %v4365 = vand.u32 %v3570, 4294901760
    %v4366 = vsub.f32 %v3570, %v4365
    %v4367 = vand.u32 %v4366, 4294901760
    %4368 = vmatpush1.msra.mxu0 %v4367
    %4369 = vmatprep.subr.mxu0 0.0
    %v4370 = vand.u32 %v3571, 4294901760
    %v4371 = vsub.f32 %v3571, %v4370
    %v4372 = vand.u32 %v4371, 4294901760
    %4373 = vmatpush1.msra.mxu0 %v4372
    %4374 = vmatprep.subr.mxu0 0.0
    %v4375 = vand.u32 %v3572, 4294901760
    %v4376 = vsub.f32 %v3572, %v4375
    %v4377 = vand.u32 %v4376, 4294901760
    %4378 = vmatpush1.msra.mxu0 %v4377
    %4379 = vmatprep.subr.mxu0 0.0
    %v4380 = vand.u32 %v3573, 4294901760
    %v4381 = vsub.f32 %v3573, %v4380
    %v4382 = vand.u32 %v4381, 4294901760
    %4383 = vmatpush1.msra.mxu0 %v4382
    %4384 = vmatprep.subr.mxu0 0.0
    %v4385 = vand.u32 %v3574, 4294901760
    %v4386 = vsub.f32 %v3574, %v4385
    %v4387 = vand.u32 %v4386, 4294901760
    %4388 = vmatpush1.msra.mxu0 %v4387
    %4389 = vmatprep.subr.mxu0 0.0
    %v4390 = vand.u32 %v3575, 4294901760
    %v4391 = vsub.f32 %v3575, %v4390
    %v4392 = vand.u32 %v4391, 4294901760
    %4393 = vmatpush1.msra.mxu0 %v4392
    %4394 = vmatprep.subr.mxu0 0.0
    %v4395 = vand.u32 %v3576, 4294901760
    %v4396 = vsub.f32 %v3576, %v4395
    %v4397 = vand.u32 %v4396, 4294901760
    %4398 = vmatpush1.msra.mxu0 %v4397
    %4399 = vmatprep.subr.mxu0 0.0
    %v4400 = vand.u32 %v3577, 4294901760
    %v4401 = vsub.f32 %v3577, %v4400
    %v4402 = vand.u32 %v4401, 4294901760
    %4403 = vmatpush1.msra.mxu0 %v4402
    %4404 = vmatprep.subr.mxu0 0.0
    %v4405 = vand.u32 %v3578, 4294901760
    %v4406 = vsub.f32 %v3578, %v4405
    %v4407 = vand.u32 %v4406, 4294901760
    %4408 = vmatpush1.msra.mxu0 %v4407
    %v4409 = vand.u32 %v3431, 4294901760
    %4410 = vmatprep.mubr.f32.mxu0 %v4409
    %v4411 = vand.u32 %v3430, 4294901760
    %4412 = vmatmul.mubr.f32.gmra.mrb[0].mxu0 %v4411
    %v4413 = vpop.f32.mrb[0].mxu0
    %v4414 = vadd.f32 %v4246, %v4413
    %v4415 = vpop.f32.mrb[0].mxu0
    %4416 = vdwg.mxu0
    %4417 = vmatprep.subr.mxu0 0.0
    %v4418 = vand.u32 %v3547, 4294901760
    %4419 = vmatpush1.msra.mxu0 %v4418
    %4420 = vmatprep.subr.mxu0 0.0
    %v4421 = vand.u32 %v3548, 4294901760
    %4422 = vmatpush1.msra.mxu0 %v4421
    %4423 = vmatprep.subr.mxu0 0.0
    %v4424 = vand.u32 %v3549, 4294901760
    %4425 = vmatpush1.msra.mxu0 %v4424
    %4426 = vmatprep.subr.mxu0 0.0
    %v4427 = vand.u32 %v3550, 4294901760
    %4428 = vmatpush1.msra.mxu0 %v4427
    %4429 = vmatprep.subr.mxu0 0.0
    %v4430 = vand.u32 %v3551, 4294901760
    %4431 = vmatpush1.msra.mxu0 %v4430
    %4432 = vmatprep.subr.mxu0 0.0
    %v4433 = vand.u32 %v3552, 4294901760
    %4434 = vmatpush1.msra.mxu0 %v4433
    %4435 = vmatprep.subr.mxu0 0.0
    %v4436 = vand.u32 %v3553, 4294901760
    %4437 = vmatpush1.msra.mxu0 %v4436
    %4438 = vmatprep.subr.mxu0 0.0
    %v4439 = vand.u32 %v3554, 4294901760
    %4440 = vmatpush1.msra.mxu0 %v4439
    %4441 = vmatprep.subr.mxu0 0.0
    %v4442 = vand.u32 %v3555, 4294901760
    %4443 = vmatpush1.msra.mxu0 %v4442
    %4444 = vmatprep.subr.mxu0 0.0
    %v4445 = vand.u32 %v3556, 4294901760
    %4446 = vmatpush1.msra.mxu0 %v4445
    %4447 = vmatprep.subr.mxu0 0.0
    %v4448 = vand.u32 %v3557, 4294901760
    %4449 = vmatpush1.msra.mxu0 %v4448
    %4450 = vmatprep.subr.mxu0 0.0
    %v4451 = vand.u32 %v3558, 4294901760
    %4452 = vmatpush1.msra.mxu0 %v4451
    %4453 = vmatprep.subr.mxu0 0.0
    %v4454 = vand.u32 %v3559, 4294901760
    %4455 = vmatpush1.msra.mxu0 %v4454
    %4456 = vmatprep.subr.mxu0 0.0
    %v4457 = vand.u32 %v3560, 4294901760
    %4458 = vmatpush1.msra.mxu0 %v4457
    %4459 = vmatprep.subr.mxu0 0.0
    %v4460 = vand.u32 %v3561, 4294901760
    %4461 = vmatpush1.msra.mxu0 %v4460
    %4462 = vmatprep.subr.mxu0 0.0
    %v4463 = vand.u32 %v3562, 4294901760
    %4464 = vmatpush1.msra.mxu0 %v4463
    %4465 = vmatprep.subr.mxu0 0.0
    %v4466 = vand.u32 %v3563, 4294901760
    %4467 = vmatpush1.msra.mxu0 %v4466
    %4468 = vmatprep.subr.mxu0 0.0
    %v4469 = vand.u32 %v3564, 4294901760
    %4470 = vmatpush1.msra.mxu0 %v4469
    %4471 = vmatprep.subr.mxu0 0.0
    %v4472 = vand.u32 %v3565, 4294901760
    %4473 = vmatpush1.msra.mxu0 %v4472
    %4474 = vmatprep.subr.mxu0 0.0
    %v4475 = vand.u32 %v3566, 4294901760
    %4476 = vmatpush1.msra.mxu0 %v4475
    %4477 = vmatprep.subr.mxu0 0.0
    %v4478 = vand.u32 %v3567, 4294901760
    %4479 = vmatpush1.msra.mxu0 %v4478
    %4480 = vmatprep.subr.mxu0 0.0
    %v4481 = vand.u32 %v3568, 4294901760
    %4482 = vmatpush1.msra.mxu0 %v4481
    %4483 = vmatprep.subr.mxu0 0.0
    %v4484 = vand.u32 %v3569, 4294901760
    %4485 = vmatpush1.msra.mxu0 %v4484
    %4486 = vmatprep.subr.mxu0 0.0
    %v4487 = vand.u32 %v3570, 4294901760
    %4488 = vmatpush1.msra.mxu0 %v4487
    %4489 = vmatprep.subr.mxu0 0.0
    %v4490 = vand.u32 %v3571, 4294901760
    %4491 = vmatpush1.msra.mxu0 %v4490
    %4492 = vmatprep.subr.mxu0 0.0
    %v4493 = vand.u32 %v3572, 4294901760
    %4494 = vmatpush1.msra.mxu0 %v4493
    %4495 = vmatprep.subr.mxu0 0.0
    %v4496 = vand.u32 %v3573, 4294901760
    %4497 = vmatpush1.msra.mxu0 %v4496
    %4498 = vmatprep.subr.mxu0 0.0
    %v4499 = vand.u32 %v3574, 4294901760
    %4500 = vmatpush1.msra.mxu0 %v4499
    %4501 = vmatprep.subr.mxu0 0.0
    %v4502 = vand.u32 %v3575, 4294901760
    %4503 = vmatpush1.msra.mxu0 %v4502
    %4504 = vmatprep.subr.mxu0 0.0
    %v4505 = vand.u32 %v3576, 4294901760
    %4506 = vmatpush1.msra.mxu0 %v4505
    %4507 = vmatprep.subr.mxu0 0.0
    %v4508 = vand.u32 %v3577, 4294901760
    %4509 = vmatpush1.msra.mxu0 %v4508
    %4510 = vmatprep.subr.mxu0 0.0
    %v4511 = vand.u32 %v3578, 4294901760
    %4512 = vmatpush1.msra.mxu0 %v4511
    %v4513 = vand.u32 %v3431, 4294901760
    %4514 = vmatprep.mubr.f32.mxu0 %v4513
    %v4515 = vand.u32 %v3430, 4294901760
    %4516 = vmatmul.mubr.f32.gmra.mrb[0].mxu0 %v4515
    %v4517 = vpop.f32.mrb[0].mxu0
    %v4518 = vadd.f32 %v4414, %v4517
    %v4519 = vpop.f32.mrb[0].mxu0
    %4520 = vdwg.mxu0
    %4521 = vmatprep.subr.mxu0 0.0
    %v4522 = vand.u32 %v3579, 4294901760
    %4523 = vmatpush1.msra.mxu0 %v4522
    %4524 = vmatprep.subr.mxu0 0.0
    %v4525 = vand.u32 %v3580, 4294901760
    %4526 = vmatpush1.msra.mxu0 %v4525
    %4527 = vmatprep.subr.mxu0 0.0
    %v4528 = vand.u32 %v3581, 4294901760
    %4529 = vmatpush1.msra.mxu0 %v4528
    %4530 = vmatprep.subr.mxu0 0.0
    %v4531 = vand.u32 %v3582, 4294901760
    %4532 = vmatpush1.msra.mxu0 %v4531
    %4533 = vmatprep.subr.mxu0 0.0
    %v4534 = vand.u32 %v3583, 4294901760
    %4535 = vmatpush1.msra.mxu0 %v4534
    %4536 = vmatprep.subr.mxu0 0.0
    %v4537 = vand.u32 %v3584, 4294901760
    %4538 = vmatpush1.msra.mxu0 %v4537
    %4539 = vmatprep.subr.mxu0 0.0
    %v4540 = vand.u32 %v3585, 4294901760
    %4541 = vmatpush1.msra.mxu0 %v4540
    %4542 = vmatprep.subr.mxu0 0.0
    %v4543 = vand.u32 %v3586, 4294901760
    %4544 = vmatpush1.msra.mxu0 %v4543
    %4545 = vmatprep.subr.mxu0 0.0
    %v4546 = vand.u32 %v3587, 4294901760
    %4547 = vmatpush1.msra.mxu0 %v4546
    %4548 = vmatprep.subr.mxu0 0.0
    %v4549 = vand.u32 %v3588, 4294901760
    %4550 = vmatpush1.msra.mxu0 %v4549
    %4551 = vmatprep.subr.mxu0 0.0
    %v4552 = vand.u32 %v3589, 4294901760
    %4553 = vmatpush1.msra.mxu0 %v4552
    %4554 = vmatprep.subr.mxu0 0.0
    %v4555 = vand.u32 %v3590, 4294901760
    %4556 = vmatpush1.msra.mxu0 %v4555
    %4557 = vmatprep.subr.mxu0 0.0
    %v4558 = vand.u32 %v3591, 4294901760
    %4559 = vmatpush1.msra.mxu0 %v4558
    %4560 = vmatprep.subr.mxu0 0.0
    %v4561 = vand.u32 %v3592, 4294901760
    %4562 = vmatpush1.msra.mxu0 %v4561
    %4563 = vmatprep.subr.mxu0 0.0
    %v4564 = vand.u32 %v3593, 4294901760
    %4565 = vmatpush1.msra.mxu0 %v4564
    %4566 = vmatprep.subr.mxu0 0.0
    %v4567 = vand.u32 %v3594, 4294901760
    %4568 = vmatpush1.msra.mxu0 %v4567
    %4569 = vmatprep.subr.mxu0 0.0
    %v4570 = vand.u32 %v3595, 4294901760
    %4571 = vmatpush1.msra.mxu0 %v4570
    %4572 = vmatprep.subr.mxu0 0.0
    %v4573 = vand.u32 %v3596, 4294901760
    %4574 = vmatpush1.msra.mxu0 %v4573
    %4575 = vmatprep.subr.mxu0 0.0
    %v4576 = vand.u32 %v3597, 4294901760
    %4577 = vmatpush1.msra.mxu0 %v4576
    %4578 = vmatprep.subr.mxu0 0.0
    %v4579 = vand.u32 %v3598, 4294901760
    %4580 = vmatpush1.msra.mxu0 %v4579
    %4581 = vmatprep.subr.mxu0 0.0
    %v4582 = vand.u32 %v3599, 4294901760
    %4583 = vmatpush1.msra.mxu0 %v4582
    %4584 = vmatprep.subr.mxu0 0.0
    %v4585 = vand.u32 %v3600, 4294901760
    %4586 = vmatpush1.msra.mxu0 %v4585
    %4587 = vmatprep.subr.mxu0 0.0
    %v4588 = vand.u32 %v3601, 4294901760
    %4589 = vmatpush1.msra.mxu0 %v4588
    %4590 = vmatprep.subr.mxu0 0.0
    %v4591 = vand.u32 %v3602, 4294901760
    %4592 = vmatpush1.msra.mxu0 %v4591
    %4593 = vmatprep.subr.mxu0 0.0
    %v4594 = vand.u32 %v3603, 4294901760
    %4595 = vmatpush1.msra.mxu0 %v4594
    %4596 = vmatprep.subr.mxu0 0.0
    %v4597 = vand.u32 %v3604, 4294901760
    %4598 = vmatpush1.msra.mxu0 %v4597
    %4599 = vmatprep.subr.mxu0 0.0
    %v4600 = vand.u32 %v3605, 4294901760
    %4601 = vmatpush1.msra.mxu0 %v4600
    %4602 = vmatprep.subr.mxu0 0.0
    %v4603 = vand.u32 %v3606, 4294901760
    %4604 = vmatpush1.msra.mxu0 %v4603
    %4605 = vmatprep.subr.mxu0 0.0
    %v4606 = vand.u32 %v3607, 4294901760
    %4607 = vmatpush1.msra.mxu0 %v4606
    %4608 = vmatprep.subr.mxu0 0.0
    %v4609 = vand.u32 %v3608, 4294901760
    %4610 = vmatpush1.msra.mxu0 %v4609
    %4611 = vmatprep.subr.mxu0 0.0
    %v4612 = vand.u32 %v3609, 4294901760
    %4613 = vmatpush1.msra.mxu0 %v4612
    %4614 = vmatprep.subr.mxu0 0.0
    %v4615 = vand.u32 %v3610, 4294901760
    %4616 = vmatpush1.msra.mxu0 %v4615
    %v4617 = vand.u32 %v3433, 4294901760
    %v4618 = vsub.f32 %v3433, %v4617
    %v4619 = vand.u32 %v4618, 4294901760
    %v4620 = vsub.f32 %v4618, %v4619
    %v4621 = vand.u32 %v4620, 4294901760
    %4622 = vmatprep.mubr.f32.mxu0 %v4621
    %v4623 = vand.u32 %v3432, 4294901760
    %v4624 = vsub.f32 %v3432, %v4623
    %v4625 = vand.u32 %v4624, 4294901760
    %v4626 = vsub.f32 %v4624, %v4625
    %v4627 = vand.u32 %v4626, 4294901760
    %4628 = vmatmul.mubr.f32.gmra.mrb[0].mxu0 %v4627
    %v4629 = vpop.f32.mrb[0].mxu0
    %v4630 = vadd.f32 %v4518, %v4629
    %v4631 = vpop.f32.mrb[0].mxu0
    %4632 = vdwg.mxu0
    %4633 = vmatprep.subr.mxu0 0.0
    %v4634 = vand.u32 %v3579, 4294901760
    %v4635 = vsub.f32 %v3579, %v4634
    %v4636 = vand.u32 %v4635, 4294901760
    %v4637 = vsub.f32 %v4635, %v4636
    %v4638 = vand.u32 %v4637, 4294901760
    %4639 = vmatpush1.msra.mxu0 %v4638
    %4640 = vmatprep.subr.mxu0 0.0
    %v4641 = vand.u32 %v3580, 4294901760
    %v4642 = vsub.f32 %v3580, %v4641
    %v4643 = vand.u32 %v4642, 4294901760
    %v4644 = vsub.f32 %v4642, %v4643
    %v4645 = vand.u32 %v4644, 4294901760
    %4646 = vmatpush1.msra.mxu0 %v4645
    %4647 = vmatprep.subr.mxu0 0.0
    %v4648 = vand.u32 %v3581, 4294901760
    %v4649 = vsub.f32 %v3581, %v4648
    %v4650 = vand.u32 %v4649, 4294901760
    %v4651 = vsub.f32 %v4649, %v4650
    %v4652 = vand.u32 %v4651, 4294901760
    %4653 = vmatpush1.msra.mxu0 %v4652
    %4654 = vmatprep.subr.mxu0 0.0
    %v4655 = vand.u32 %v3582, 4294901760
    %v4656 = vsub.f32 %v3582, %v4655
    %v4657 = vand.u32 %v4656, 4294901760
    %v4658 = vsub.f32 %v4656, %v4657
    %v4659 = vand.u32 %v4658, 4294901760
    %4660 = vmatpush1.msra.mxu0 %v4659
    %4661 = vmatprep.subr.mxu0 0.0
    %v4662 = vand.u32 %v3583, 4294901760
    %v4663 = vsub.f32 %v3583, %v4662
    %v4664 = vand.u32 %v4663, 4294901760
    %v4665 = vsub.f32 %v4663, %v4664
    %v4666 = vand.u32 %v4665, 4294901760
    %4667 = vmatpush1.msra.mxu0 %v4666
    %4668 = vmatprep.subr.mxu0 0.0
    %v4669 = vand.u32 %v3584, 4294901760
    %v4670 = vsub.f32 %v3584, %v4669
    %v4671 = vand.u32 %v4670, 4294901760
    %v4672 = vsub.f32 %v4670, %v4671
    %v4673 = vand.u32 %v4672, 4294901760
    %4674 = vmatpush1.msra.mxu0 %v4673
    %4675 = vmatprep.subr.mxu0 0.0
    %v4676 = vand.u32 %v3585, 4294901760
    %v4677 = vsub.f32 %v3585, %v4676
    %v4678 = vand.u32 %v4677, 4294901760
    %v4679 = vsub.f32 %v4677, %v4678
    %v4680 = vand.u32 %v4679, 4294901760
    %4681 = vmatpush1.msra.mxu0 %v4680
    %4682 = vmatprep.subr.mxu0 0.0
    %v4683 = vand.u32 %v3586, 4294901760
    %v4684 = vsub.f32 %v3586, %v4683
    %v4685 = vand.u32 %v4684, 4294901760
    %v4686 = vsub.f32 %v4684, %v4685
    %v4687 = vand.u32 %v4686, 4294901760
    %4688 = vmatpush1.msra.mxu0 %v4687
    %4689 = vmatprep.subr.mxu0 0.0
    %v4690 = vand.u32 %v3587, 4294901760
    %v4691 = vsub.f32 %v3587, %v4690
    %v4692 = vand.u32 %v4691, 4294901760
    %v4693 = vsub.f32 %v4691, %v4692
    %v4694 = vand.u32 %v4693, 4294901760
    %4695 = vmatpush1.msra.mxu0 %v4694
    %4696 = vmatprep.subr.mxu0 0.0
    %v4697 = vand.u32 %v3588, 4294901760
    %v4698 = vsub.f32 %v3588, %v4697
    %v4699 = vand.u32 %v4698, 4294901760
    %v4700 = vsub.f32 %v4698, %v4699
    %v4701 = vand.u32 %v4700, 4294901760
    %4702 = vmatpush1.msra.mxu0 %v4701
    %4703 = vmatprep.subr.mxu0 0.0
    %v4704 = vand.u32 %v3589, 4294901760
    %v4705 = vsub.f32 %v3589, %v4704
    %v4706 = vand.u32 %v4705, 4294901760
    %v4707 = vsub.f32 %v4705, %v4706
    %v4708 = vand.u32 %v4707, 4294901760
    %4709 = vmatpush1.msra.mxu0 %v4708
    %4710 = vmatprep.subr.mxu0 0.0
    %v4711 = vand.u32 %v3590, 4294901760
    %v4712 = vsub.f32 %v3590, %v4711
    %v4713 = vand.u32 %v4712, 4294901760
    %v4714 = vsub.f32 %v4712, %v4713
    %v4715 = vand.u32 %v4714, 4294901760
    %4716 = vmatpush1.msra.mxu0 %v4715
    %4717 = vmatprep.subr.mxu0 0.0
    %v4718 = vand.u32 %v3591, 4294901760
    %v4719 = vsub.f32 %v3591, %v4718
    %v4720 = vand.u32 %v4719, 4294901760
    %v4721 = vsub.f32 %v4719, %v4720
    %v4722 = vand.u32 %v4721, 4294901760
    %4723 = vmatpush1.msra.mxu0 %v4722
    %4724 = vmatprep.subr.mxu0 0.0
    %v4725 = vand.u32 %v3592, 4294901760
    %v4726 = vsub.f32 %v3592, %v4725
    %v4727 = vand.u32 %v4726, 4294901760
    %v4728 = vsub.f32 %v4726, %v4727
    %v4729 = vand.u32 %v4728, 4294901760
    %4730 = vmatpush1.msra.mxu0 %v4729
    %4731 = vmatprep.subr.mxu0 0.0
    %v4732 = vand.u32 %v3593, 4294901760
    %v4733 = vsub.f32 %v3593, %v4732
    %v4734 = vand.u32 %v4733, 4294901760
    %v4735 = vsub.f32 %v4733, %v4734
    %v4736 = vand.u32 %v4735, 4294901760
    %4737 = vmatpush1.msra.mxu0 %v4736
    %4738 = vmatprep.subr.mxu0 0.0
    %v4739 = vand.u32 %v3594, 4294901760
    %v4740 = vsub.f32 %v3594, %v4739
    %v4741 = vand.u32 %v4740, 4294901760
    %v4742 = vsub.f32 %v4740, %v4741
    %v4743 = vand.u32 %v4742, 4294901760
    %4744 = vmatpush1.msra.mxu0 %v4743
    %4745 = vmatprep.subr.mxu0 0.0
    %v4746 = vand.u32 %v3595, 4294901760
    %v4747 = vsub.f32 %v3595, %v4746
    %v4748 = vand.u32 %v4747, 4294901760
    %v4749 = vsub.f32 %v4747, %v4748
    %v4750 = vand.u32 %v4749, 4294901760
    %4751 = vmatpush1.msra.mxu0 %v4750
    %4752 = vmatprep.subr.mxu0 0.0
    %v4753 = vand.u32 %v3596, 4294901760
    %v4754 = vsub.f32 %v3596, %v4753
    %v4755 = vand.u32 %v4754, 4294901760
    %v4756 = vsub.f32 %v4754, %v4755
    %v4757 = vand.u32 %v4756, 4294901760
    %4758 = vmatpush1.msra.mxu0 %v4757
    %4759 = vmatprep.subr.mxu0 0.0
    %v4760 = vand.u32 %v3597, 4294901760
    %v4761 = vsub.f32 %v3597, %v4760
    %v4762 = vand.u32 %v4761, 4294901760
    %v4763 = vsub.f32 %v4761, %v4762
    %v4764 = vand.u32 %v4763, 4294901760
    %4765 = vmatpush1.msra.mxu0 %v4764
    %4766 = vmatprep.subr.mxu0 0.0
    %v4767 = vand.u32 %v3598, 4294901760
    %v4768 = vsub.f32 %v3598, %v4767
    %v4769 = vand.u32 %v4768, 4294901760
    %v4770 = vsub.f32 %v4768, %v4769
    %v4771 = vand.u32 %v4770, 4294901760
    %4772 = vmatpush1.msra.mxu0 %v4771
    %4773 = vmatprep.subr.mxu0 0.0
    %v4774 = vand.u32 %v3599, 4294901760
    %v4775 = vsub.f32 %v3599, %v4774
    %v4776 = vand.u32 %v4775, 4294901760
    %v4777 = vsub.f32 %v4775, %v4776
    %v4778 = vand.u32 %v4777, 4294901760
    %4779 = vmatpush1.msra.mxu0 %v4778
    %4780 = vmatprep.subr.mxu0 0.0
    %v4781 = vand.u32 %v3600, 4294901760
    %v4782 = vsub.f32 %v3600, %v4781
    %v4783 = vand.u32 %v4782, 4294901760
    %v4784 = vsub.f32 %v4782, %v4783
    %v4785 = vand.u32 %v4784, 4294901760
    %4786 = vmatpush1.msra.mxu0 %v4785
    %4787 = vmatprep.subr.mxu0 0.0
    %v4788 = vand.u32 %v3601, 4294901760
    %v4789 = vsub.f32 %v3601, %v4788
    %v4790 = vand.u32 %v4789, 4294901760
    %v4791 = vsub.f32 %v4789, %v4790
    %v4792 = vand.u32 %v4791, 4294901760
    %4793 = vmatpush1.msra.mxu0 %v4792
    %4794 = vmatprep.subr.mxu0 0.0
    %v4795 = vand.u32 %v3602, 4294901760
    %v4796 = vsub.f32 %v3602, %v4795
    %v4797 = vand.u32 %v4796, 4294901760
    %v4798 = vsub.f32 %v4796, %v4797
    %v4799 = vand.u32 %v4798, 4294901760
    %4800 = vmatpush1.msra.mxu0 %v4799
    %4801 = vmatprep.subr.mxu0 0.0
    %v4802 = vand.u32 %v3603, 4294901760
    %v4803 = vsub.f32 %v3603, %v4802
    %v4804 = vand.u32 %v4803, 4294901760
    %v4805 = vsub.f32 %v4803, %v4804
    %v4806 = vand.u32 %v4805, 4294901760
    %4807 = vmatpush1.msra.mxu0 %v4806
    %4808 = vmatprep.subr.mxu0 0.0
    %v4809 = vand.u32 %v3604, 4294901760
    %v4810 = vsub.f32 %v3604, %v4809
    %v4811 = vand.u32 %v4810, 4294901760
    %v4812 = vsub.f32 %v4810, %v4811
    %v4813 = vand.u32 %v4812, 4294901760
    %4814 = vmatpush1.msra.mxu0 %v4813
    %4815 = vmatprep.subr.mxu0 0.0
    %v4816 = vand.u32 %v3605, 4294901760
    %v4817 = vsub.f32 %v3605, %v4816
    %v4818 = vand.u32 %v4817, 4294901760
    %v4819 = vsub.f32 %v4817, %v4818
    %v4820 = vand.u32 %v4819, 4294901760
    %4821 = vmatpush1.msra.mxu0 %v4820
    %4822 = vmatprep.subr.mxu0 0.0
    %v4823 = vand.u32 %v3606, 4294901760
    %v4824 = vsub.f32 %v3606, %v4823
    %v4825 = vand.u32 %v4824, 4294901760
    %v4826 = vsub.f32 %v4824, %v4825
    %v4827 = vand.u32 %v4826, 4294901760
    %4828 = vmatpush1.msra.mxu0 %v4827
    %4829 = vmatprep.subr.mxu0 0.0
    %v4830 = vand.u32 %v3607, 4294901760
    %v4831 = vsub.f32 %v3607, %v4830
    %v4832 = vand.u32 %v4831, 4294901760
    %v4833 = vsub.f32 %v4831, %v4832
    %v4834 = vand.u32 %v4833, 4294901760
    %4835 = vmatpush1.msra.mxu0 %v4834
    %4836 = vmatprep.subr.mxu0 0.0
    %v4837 = vand.u32 %v3608, 4294901760
    %v4838 = vsub.f32 %v3608, %v4837
    %v4839 = vand.u32 %v4838, 4294901760
    %v4840 = vsub.f32 %v4838, %v4839
    %v4841 = vand.u32 %v4840, 4294901760
    %4842 = vmatpush1.msra.mxu0 %v4841
    %4843 = vmatprep.subr.mxu0 0.0
    %v4844 = vand.u32 %v3609, 4294901760
    %v4845 = vsub.f32 %v3609, %v4844
    %v4846 = vand.u32 %v4845, 4294901760
    %v4847 = vsub.f32 %v4845, %v4846
    %v4848 = vand.u32 %v4847, 4294901760
    %4849 = vmatpush1.msra.mxu0 %v4848
    %4850 = vmatprep.subr.mxu0 0.0
    %v4851 = vand.u32 %v3610, 4294901760
    %v4852 = vsub.f32 %v3610, %v4851
    %v4853 = vand.u32 %v4852, 4294901760
    %v4854 = vsub.f32 %v4852, %v4853
    %v4855 = vand.u32 %v4854, 4294901760
    %4856 = vmatpush1.msra.mxu0 %v4855
    %v4857 = vand.u32 %v3433, 4294901760
    %4858 = vmatprep.mubr.f32.mxu0 %v4857
    %v4859 = vand.u32 %v3432, 4294901760
    %4860 = vmatmul.mubr.f32.gmra.mrb[0].mxu0 %v4859
    %v4861 = vpop.f32.mrb[0].mxu0
    %v4862 = vadd.f32 %v4630, %v4861
    %v4863 = vpop.f32.mrb[0].mxu0
    %4864 = vdwg.mxu0
    %4865 = vmatprep.subr.mxu0 0.0
    %v4866 = vand.u32 %v3579, 4294901760
    %v4867 = vsub.f32 %v3579, %v4866
    %4868 = vmatpush1.msra.mxu0 %v4867
    %4869 = vmatprep.subr.mxu0 0.0
    %v4870 = vand.u32 %v3580, 4294901760
    %v4871 = vsub.f32 %v3580, %v4870
    %4872 = vmatpush1.msra.mxu0 %v4871
    %4873 = vmatprep.subr.mxu0 0.0
    %v4874 = vand.u32 %v3581, 4294901760
    %v4875 = vsub.f32 %v3581, %v4874
    %4876 = vmatpush1.msra.mxu0 %v4875
    %4877 = vmatprep.subr.mxu0 0.0
    %v4878 = vand.u32 %v3582, 4294901760
    %v4879 = vsub.f32 %v3582, %v4878
    %4880 = vmatpush1.msra.mxu0 %v4879
    %4881 = vmatprep.subr.mxu0 0.0
    %v4882 = vand.u32 %v3583, 4294901760
    %v4883 = vsub.f32 %v3583, %v4882
    %4884 = vmatpush1.msra.mxu0 %v4883
    %4885 = vmatprep.subr.mxu0 0.0
    %v4886 = vand.u32 %v3584, 4294901760
    %v4887 = vsub.f32 %v3584, %v4886
    %4888 = vmatpush1.msra.mxu0 %v4887
    %4889 = vmatprep.subr.mxu0 0.0
    %v4890 = vand.u32 %v3585, 4294901760
    %v4891 = vsub.f32 %v3585, %v4890
    %4892 = vmatpush1.msra.mxu0 %v4891
    %4893 = vmatprep.subr.mxu0 0.0
    %v4894 = vand.u32 %v3586, 4294901760
    %v4895 = vsub.f32 %v3586, %v4894
    %4896 = vmatpush1.msra.mxu0 %v4895
    %4897 = vmatprep.subr.mxu0 0.0
    %v4898 = vand.u32 %v3587, 4294901760
    %v4899 = vsub.f32 %v3587, %v4898
    %4900 = vmatpush1.msra.mxu0 %v4899
    %4901 = vmatprep.subr.mxu0 0.0
    %v4902 = vand.u32 %v3588, 4294901760
    %v4903 = vsub.f32 %v3588, %v4902
    %4904 = vmatpush1.msra.mxu0 %v4903
    %4905 = vmatprep.subr.mxu0 0.0
    %v4906 = vand.u32 %v3589, 4294901760
    %v4907 = vsub.f32 %v3589, %v4906
    %4908 = vmatpush1.msra.mxu0 %v4907
    %4909 = vmatprep.subr.mxu0 0.0
    %v4910 = vand.u32 %v3590, 4294901760
    %v4911 = vsub.f32 %v3590, %v4910
    %4912 = vmatpush1.msra.mxu0 %v4911
    %4913 = vmatprep.subr.mxu0 0.0
    %v4914 = vand.u32 %v3591, 4294901760
    %v4915 = vsub.f32 %v3591, %v4914
    %4916 = vmatpush1.msra.mxu0 %v4915
    %4917 = vmatprep.subr.mxu0 0.0
    %v4918 = vand.u32 %v3592, 4294901760
    %v4919 = vsub.f32 %v3592, %v4918
    %4920 = vmatpush1.msra.mxu0 %v4919
    %4921 = vmatprep.subr.mxu0 0.0
    %v4922 = vand.u32 %v3593, 4294901760
    %v4923 = vsub.f32 %v3593, %v4922
    %4924 = vmatpush1.msra.mxu0 %v4923
    %4925 = vmatprep.subr.mxu0 0.0
    %v4926 = vand.u32 %v3594, 4294901760
    %v4927 = vsub.f32 %v3594, %v4926
    %4928 = vmatpush1.msra.mxu0 %v4927
    %4929 = vmatprep.subr.mxu0 0.0
    %v4930 = vand.u32 %v3595, 4294901760
    %v4931 = vsub.f32 %v3595, %v4930
    %4932 = vmatpush1.msra.mxu0 %v4931
    %4933 = vmatprep.subr.mxu0 0.0
    %v4934 = vand.u32 %v3596, 4294901760
    %v4935 = vsub.f32 %v3596, %v4934
    %4936 = vmatpush1.msra.mxu0 %v4935
    %4937 = vmatprep.subr.mxu0 0.0
    %v4938 = vand.u32 %v3597, 4294901760
    %v4939 = vsub.f32 %v3597, %v4938
    %4940 = vmatpush1.msra.mxu0 %v4939
    %4941 = vmatprep.subr.mxu0 0.0
    %v4942 = vand.u32 %v3598, 4294901760
    %v4943 = vsub.f32 %v3598, %v4942
    %4944 = vmatpush1.msra.mxu0 %v4943
    %4945 = vmatprep.subr.mxu0 0.0
    %v4946 = vand.u32 %v3599, 4294901760
    %v4947 = vsub.f32 %v3599, %v4946
    %4948 = vmatpush1.msra.mxu0 %v4947
    %4949 = vmatprep.subr.mxu0 0.0
    %v4950 = vand.u32 %v3600, 4294901760
    %v4951 = vsub.f32 %v3600, %v4950
    %4952 = vmatpush1.msra.mxu0 %v4951
    %4953 = vmatprep.subr.mxu0 0.0
    %v4954 = vand.u32 %v3601, 4294901760
    %v4955 = vsub.f32 %v3601, %v4954
    %4956 = vmatpush1.msra.mxu0 %v4955
    %4957 = vmatprep.subr.mxu0 0.0
    %v4958 = vand.u32 %v3602, 4294901760
    %v4959 = vsub.f32 %v3602, %v4958
    %4960 = vmatpush1.msra.mxu0 %v4959
    %4961 = vmatprep.subr.mxu0 0.0
    %v4962 = vand.u32 %v3603, 4294901760
    %v4963 = vsub.f32 %v3603, %v4962
    %4964 = vmatpush1.msra.mxu0 %v4963
    %4965 = vmatprep.subr.mxu0 0.0
    %v4966 = vand.u32 %v3604, 4294901760
    %v4967 = vsub.f32 %v3604, %v4966
    %4968 = vmatpush1.msra.mxu0 %v4967
    %4969 = vmatprep.subr.mxu0 0.0
    %v4970 = vand.u32 %v3605, 4294901760
    %v4971 = vsub.f32 %v3605, %v4970
    %4972 = vmatpush1.msra.mxu0 %v4971
    %4973 = vmatprep.subr.mxu0 0.0
    %v4974 = vand.u32 %v3606, 4294901760
    %v4975 = vsub.f32 %v3606, %v4974
    %4976 = vmatpush1.msra.mxu0 %v4975
    %4977 = vmatprep.subr.mxu0 0.0
    %v4978 = vand.u32 %v3607, 4294901760
    %v4979 = vsub.f32 %v3607, %v4978
    %4980 = vmatpush1.msra.mxu0 %v4979
    %4981 = vmatprep.subr.mxu0 0.0
    %v4982 = vand.u32 %v3608, 4294901760
    %v4983 = vsub.f32 %v3608, %v4982
    %4984 = vmatpush1.msra.mxu0 %v4983
    %4985 = vmatprep.subr.mxu0 0.0
    %v4986 = vand.u32 %v3609, 4294901760
    %v4987 = vsub.f32 %v3609, %v4986
    %4988 = vmatpush1.msra.mxu0 %v4987
    %4989 = vmatprep.subr.mxu0 0.0
    %v4990 = vand.u32 %v3610, 4294901760
    %v4991 = vsub.f32 %v3610, %v4990
    %4992 = vmatpush1.msra.mxu0 %v4991
    %v4993 = vand.u32 %v3433, 4294901760
    %v4994 = vsub.f32 %v3433, %v4993
    %4995 = vmatprep.mubr.f32.mxu0 %v4994
    %v4996 = vand.u32 %v3432, 4294901760
    %v4997 = vsub.f32 %v3432, %v4996
    %4998 = vmatmul.mubr.f32.gmra.mrb[0].mxu0 %v4997
    %v4999 = vpop.f32.mrb[0].mxu0
    %v5000 = vadd.f32 %v4862, %v4999
    %v5001 = vpop.f32.mrb[0].mxu0
    %5002 = vdwg.mxu0
    %5003 = vmatprep.subr.mxu0 0.0
    %v5004 = vand.u32 %v3579, 4294901760
    %5005 = vmatpush1.msra.mxu0 %v5004
    %5006 = vmatprep.subr.mxu0 0.0
    %v5007 = vand.u32 %v3580, 4294901760
    %5008 = vmatpush1.msra.mxu0 %v5007
    %5009 = vmatprep.subr.mxu0 0.0
    %v5010 = vand.u32 %v3581, 4294901760
    %5011 = vmatpush1.msra.mxu0 %v5010
    %5012 = vmatprep.subr.mxu0 0.0
    %v5013 = vand.u32 %v3582, 4294901760
    %5014 = vmatpush1.msra.mxu0 %v5013
    %5015 = vmatprep.subr.mxu0 0.0
    %v5016 = vand.u32 %v3583, 4294901760
    %5017 = vmatpush1.msra.mxu0 %v5016
    %5018 = vmatprep.subr.mxu0 0.0
    %v5019 = vand.u32 %v3584, 4294901760
    %5020 = vmatpush1.msra.mxu0 %v5019
    %5021 = vmatprep.subr.mxu0 0.0
    %v5022 = vand.u32 %v3585, 4294901760
    %5023 = vmatpush1.msra.mxu0 %v5022
    %5024 = vmatprep.subr.mxu0 0.0
    %v5025 = vand.u32 %v3586, 4294901760
    %5026 = vmatpush1.msra.mxu0 %v5025
    %5027 = vmatprep.subr.mxu0 0.0
    %v5028 = vand.u32 %v3587, 4294901760
    %5029 = vmatpush1.msra.mxu0 %v5028
    %5030 = vmatprep.subr.mxu0 0.0
    %v5031 = vand.u32 %v3588, 4294901760
    %5032 = vmatpush1.msra.mxu0 %v5031
    %5033 = vmatprep.subr.mxu0 0.0
    %v5034 = vand.u32 %v3589, 4294901760
    %5035 = vmatpush1.msra.mxu0 %v5034
    %5036 = vmatprep.subr.mxu0 0.0
    %v5037 = vand.u32 %v3590, 4294901760
    %5038 = vmatpush1.msra.mxu0 %v5037
    %5039 = vmatprep.subr.mxu0 0.0
    %v5040 = vand.u32 %v3591, 4294901760
    %5041 = vmatpush1.msra.mxu0 %v5040
    %5042 = vmatprep.subr.mxu0 0.0
    %v5043 = vand.u32 %v3592, 4294901760
    %5044 = vmatpush1.msra.mxu0 %v5043
    %5045 = vmatprep.subr.mxu0 0.0
    %v5046 = vand.u32 %v3593, 4294901760
    %5047 = vmatpush1.msra.mxu0 %v5046
    %5048 = vmatprep.subr.mxu0 0.0
    %v5049 = vand.u32 %v3594, 4294901760
    %5050 = vmatpush1.msra.mxu0 %v5049
    %5051 = vmatprep.subr.mxu0 0.0
    %v5052 = vand.u32 %v3595, 4294901760
    %5053 = vmatpush1.msra.mxu0 %v5052
    %5054 = vmatprep.subr.mxu0 0.0
    %v5055 = vand.u32 %v3596, 4294901760
    %5056 = vmatpush1.msra.mxu0 %v5055
    %5057 = vmatprep.subr.mxu0 0.0
    %v5058 = vand.u32 %v3597, 4294901760
    %5059 = vmatpush1.msra.mxu0 %v5058
    %5060 = vmatprep.subr.mxu0 0.0
    %v5061 = vand.u32 %v3598, 4294901760
    %5062 = vmatpush1.msra.mxu0 %v5061
    %5063 = vmatprep.subr.mxu0 0.0
    %v5064 = vand.u32 %v3599, 4294901760
    %5065 = vmatpush1.msra.mxu0 %v5064
    %5066 = vmatprep.subr.mxu0 0.0
    %v5067 = vand.u32 %v3600, 4294901760
    %5068 = vmatpush1.msra.mxu0 %v5067
    %5069 = vmatprep.subr.mxu0 0.0
    %v5070 = vand.u32 %v3601, 4294901760
    %5071 = vmatpush1.msra.mxu0 %v5070
    %5072 = vmatprep.subr.mxu0 0.0
    %v5073 = vand.u32 %v3602, 4294901760
    %5074 = vmatpush1.msra.mxu0 %v5073
    %5075 = vmatprep.subr.mxu0 0.0
    %v5076 = vand.u32 %v3603, 4294901760
    %5077 = vmatpush1.msra.mxu0 %v5076
    %5078 = vmatprep.subr.mxu0 0.0
    %v5079 = vand.u32 %v3604, 4294901760
    %5080 = vmatpush1.msra.mxu0 %v5079
    %5081 = vmatprep.subr.mxu0 0.0
    %v5082 = vand.u32 %v3605, 4294901760
    %5083 = vmatpush1.msra.mxu0 %v5082
    %5084 = vmatprep.subr.mxu0 0.0
    %v5085 = vand.u32 %v3606, 4294901760
    %5086 = vmatpush1.msra.mxu0 %v5085
    %5087 = vmatprep.subr.mxu0 0.0
    %v5088 = vand.u32 %v3607, 4294901760
    %5089 = vmatpush1.msra.mxu0 %v5088
    %5090 = vmatprep.subr.mxu0 0.0
    %v5091 = vand.u32 %v3608, 4294901760
    %5092 = vmatpush1.msra.mxu0 %v5091
    %5093 = vmatprep.subr.mxu0 0.0
    %v5094 = vand.u32 %v3609, 4294901760
    %5095 = vmatpush1.msra.mxu0 %v5094
    %5096 = vmatprep.subr.mxu0 0.0
    %v5097 = vand.u32 %v3610, 4294901760
    %5098 = vmatpush1.msra.mxu0 %v5097
    %v5099 = vand.u32 %v3433, 4294901760
    %v5100 = vsub.f32 %v3433, %v5099
    %v5101 = vand.u32 %v5100, 4294901760
    %5102 = vmatprep.mubr.f32.mxu0 %v5101
    %v5103 = vand.u32 %v3432, 4294901760
    %v5104 = vsub.f32 %v3432, %v5103
    %v5105 = vand.u32 %v5104, 4294901760
    %5106 = vmatmul.mubr.f32.gmra.mrb[0].mxu0 %v5105
    %v5107 = vpop.f32.mrb[0].mxu0
    %v5108 = vadd.f32 %v5000, %v5107
    %v5109 = vpop.f32.mrb[0].mxu0
    %5110 = vdwg.mxu0
    %5111 = vmatprep.subr.mxu0 0.0
    %v5112 = vand.u32 %v3579, 4294901760
    %v5113 = vsub.f32 %v3579, %v5112
    %v5114 = vand.u32 %v5113, 4294901760
    %5115 = vmatpush1.msra.mxu0 %v5114
    %5116 = vmatprep.subr.mxu0 0.0
    %v5117 = vand.u32 %v3580, 4294901760
    %v5118 = vsub.f32 %v3580, %v5117
    %v5119 = vand.u32 %v5118, 4294901760
    %5120 = vmatpush1.msra.mxu0 %v5119
    %5121 = vmatprep.subr.mxu0 0.0
    %v5122 = vand.u32 %v3581, 4294901760
    %v5123 = vsub.f32 %v3581, %v5122
    %v5124 = vand.u32 %v5123, 4294901760
    %5125 = vmatpush1.msra.mxu0 %v5124
    %5126 = vmatprep.subr.mxu0 0.0
    %v5127 = vand.u32 %v3582, 4294901760
    %v5128 = vsub.f32 %v3582, %v5127
    %v5129 = vand.u32 %v5128, 4294901760
    %5130 = vmatpush1.msra.mxu0 %v5129
    %5131 = vmatprep.subr.mxu0 0.0
    %v5132 = vand.u32 %v3583, 4294901760
    %v5133 = vsub.f32 %v3583, %v5132
    %v5134 = vand.u32 %v5133, 4294901760
    %5135 = vmatpush1.msra.mxu0 %v5134
    %5136 = vmatprep.subr.mxu0 0.0
    %v5137 = vand.u32 %v3584, 4294901760
    %v5138 = vsub.f32 %v3584, %v5137
    %v5139 = vand.u32 %v5138, 4294901760
    %5140 = vmatpush1.msra.mxu0 %v5139
    %5141 = vmatprep.subr.mxu0 0.0
    %v5142 = vand.u32 %v3585, 4294901760
    %v5143 = vsub.f32 %v3585, %v5142
    %v5144 = vand.u32 %v5143, 4294901760
    %5145 = vmatpush1.msra.mxu0 %v5144
    %5146 = vmatprep.subr.mxu0 0.0
    %v5147 = vand.u32 %v3586, 4294901760
    %v5148 = vsub.f32 %v3586, %v5147
    %v5149 = vand.u32 %v5148, 4294901760
    %5150 = vmatpush1.msra.mxu0 %v5149
    %5151 = vmatprep.subr.mxu0 0.0
    %v5152 = vand.u32 %v3587, 4294901760
    %v5153 = vsub.f32 %v3587, %v5152
    %v5154 = vand.u32 %v5153, 4294901760
    %5155 = vmatpush1.msra.mxu0 %v5154
    %5156 = vmatprep.subr.mxu0 0.0
    %v5157 = vand.u32 %v3588, 4294901760
    %v5158 = vsub.f32 %v3588, %v5157
    %v5159 = vand.u32 %v5158, 4294901760
    %5160 = vmatpush1.msra.mxu0 %v5159
    %5161 = vmatprep.subr.mxu0 0.0
    %v5162 = vand.u32 %v3589, 4294901760
    %v5163 = vsub.f32 %v3589, %v5162
    %v5164 = vand.u32 %v5163, 4294901760
    %5165 = vmatpush1.msra.mxu0 %v5164
    %5166 = vmatprep.subr.mxu0 0.0
    %v5167 = vand.u32 %v3590, 4294901760
    %v5168 = vsub.f32 %v3590, %v5167
    %v5169 = vand.u32 %v5168, 4294901760
    %5170 = vmatpush1.msra.mxu0 %v5169
    %5171 = vmatprep.subr.mxu0 0.0
    %v5172 = vand.u32 %v3591, 4294901760
    %v5173 = vsub.f32 %v3591, %v5172
    %v5174 = vand.u32 %v5173, 4294901760
    %5175 = vmatpush1.msra.mxu0 %v5174
    %5176 = vmatprep.subr.mxu0 0.0
    %v5177 = vand.u32 %v3592, 4294901760
    %v5178 = vsub.f32 %v3592, %v5177
    %v5179 = vand.u32 %v5178, 4294901760
    %5180 = vmatpush1.msra.mxu0 %v5179
    %5181 = vmatprep.subr.mxu0 0.0
    %v5182 = vand.u32 %v3593, 4294901760
    %v5183 = vsub.f32 %v3593, %v5182
    %v5184 = vand.u32 %v5183, 4294901760
    %5185 = vmatpush1.msra.mxu0 %v5184
    %5186 = vmatprep.subr.mxu0 0.0
    %v5187 = vand.u32 %v3594, 4294901760
    %v5188 = vsub.f32 %v3594, %v5187
    %v5189 = vand.u32 %v5188, 4294901760
    %5190 = vmatpush1.msra.mxu0 %v5189
    %5191 = vmatprep.subr.mxu0 0.0
    %v5192 = vand.u32 %v3595, 4294901760
    %v5193 = vsub.f32 %v3595, %v5192
    %v5194 = vand.u32 %v5193, 4294901760
    %5195 = vmatpush1.msra.mxu0 %v5194
    %5196 = vmatprep.subr.mxu0 0.0
    %v5197 = vand.u32 %v3596, 4294901760
    %v5198 = vsub.f32 %v3596, %v5197
    %v5199 = vand.u32 %v5198, 4294901760
    %5200 = vmatpush1.msra.mxu0 %v5199
    %5201 = vmatprep.subr.mxu0 0.0
    %v5202 = vand.u32 %v3597, 4294901760
    %v5203 = vsub.f32 %v3597, %v5202
    %v5204 = vand.u32 %v5203, 4294901760
    %5205 = vmatpush1.msra.mxu0 %v5204
    %5206 = vmatprep.subr.mxu0 0.0
    %v5207 = vand.u32 %v3598, 4294901760
    %v5208 = vsub.f32 %v3598, %v5207
    %v5209 = vand.u32 %v5208, 4294901760
    %5210 = vmatpush1.msra.mxu0 %v5209
    %5211 = vmatprep.subr.mxu0 0.0
    %v5212 = vand.u32 %v3599, 4294901760
    %v5213 = vsub.f32 %v3599, %v5212
    %v5214 = vand.u32 %v5213, 4294901760
    %5215 = vmatpush1.msra.mxu0 %v5214
    %5216 = vmatprep.subr.mxu0 0.0
    %v5217 = vand.u32 %v3600, 4294901760
    %v5218 = vsub.f32 %v3600, %v5217
    %v5219 = vand.u32 %v5218, 4294901760
    %5220 = vmatpush1.msra.mxu0 %v5219
    %5221 = vmatprep.subr.mxu0 0.0
    %v5222 = vand.u32 %v3601, 4294901760
    %v5223 = vsub.f32 %v3601, %v5222
    %v5224 = vand.u32 %v5223, 4294901760
    %5225 = vmatpush1.msra.mxu0 %v5224
    %5226 = vmatprep.subr.mxu0 0.0
    %v5227 = vand.u32 %v3602, 4294901760
    %v5228 = vsub.f32 %v3602, %v5227
    %v5229 = vand.u32 %v5228, 4294901760
    %5230 = vmatpush1.msra.mxu0 %v5229
    %5231 = vmatprep.subr.mxu0 0.0
    %v5232 = vand.u32 %v3603, 4294901760
    %v5233 = vsub.f32 %v3603, %v5232
    %v5234 = vand.u32 %v5233, 4294901760
    %5235 = vmatpush1.msra.mxu0 %v5234
    %5236 = vmatprep.subr.mxu0 0.0
    %v5237 = vand.u32 %v3604, 4294901760
    %v5238 = vsub.f32 %v3604, %v5237
    %v5239 = vand.u32 %v5238, 4294901760
    %5240 = vmatpush1.msra.mxu0 %v5239
    %5241 = vmatprep.subr.mxu0 0.0
    %v5242 = vand.u32 %v3605, 4294901760
    %v5243 = vsub.f32 %v3605, %v5242
    %v5244 = vand.u32 %v5243, 4294901760
    %5245 = vmatpush1.msra.mxu0 %v5244
    %5246 = vmatprep.subr.mxu0 0.0
    %v5247 = vand.u32 %v3606, 4294901760
    %v5248 = vsub.f32 %v3606, %v5247
    %v5249 = vand.u32 %v5248, 4294901760
    %5250 = vmatpush1.msra.mxu0 %v5249
    %5251 = vmatprep.subr.mxu0 0.0
    %v5252 = vand.u32 %v3607, 4294901760
    %v5253 = vsub.f32 %v3607, %v5252
    %v5254 = vand.u32 %v5253, 4294901760
    %5255 = vmatpush1.msra.mxu0 %v5254
    %5256 = vmatprep.subr.mxu0 0.0
    %v5257 = vand.u32 %v3608, 4294901760
    %v5258 = vsub.f32 %v3608, %v5257
    %v5259 = vand.u32 %v5258, 4294901760
    %5260 = vmatpush1.msra.mxu0 %v5259
    %5261 = vmatprep.subr.mxu0 0.0
    %v5262 = vand.u32 %v3609, 4294901760
    %v5263 = vsub.f32 %v3609, %v5262
    %v5264 = vand.u32 %v5263, 4294901760
    %5265 = vmatpush1.msra.mxu0 %v5264
    %5266 = vmatprep.subr.mxu0 0.0
    %v5267 = vand.u32 %v3610, 4294901760
    %v5268 = vsub.f32 %v3610, %v5267
    %v5269 = vand.u32 %v5268, 4294901760
    %5270 = vmatpush1.msra.mxu0 %v5269
    %v5271 = vand.u32 %v3433, 4294901760
    %5272 = vmatprep.mubr.f32.mxu0 %v5271
    %v5273 = vand.u32 %v3432, 4294901760
    %5274 = vmatmul.mubr.f32.gmra.mrb[0].mxu0 %v5273
    %v5275 = vpop.f32.mrb[0].mxu0
    %v5276 = vadd.f32 %v5108, %v5275
    %v5277 = vpop.f32.mrb[0].mxu0
    %5278 = vdwg.mxu0
    %5279 = vmatprep.subr.mxu0 0.0
    %v5280 = vand.u32 %v3579, 4294901760
    %5281 = vmatpush1.msra.mxu0 %v5280
    %5282 = vmatprep.subr.mxu0 0.0
    %v5283 = vand.u32 %v3580, 4294901760
    %5284 = vmatpush1.msra.mxu0 %v5283
    %5285 = vmatprep.subr.mxu0 0.0
    %v5286 = vand.u32 %v3581, 4294901760
    %5287 = vmatpush1.msra.mxu0 %v5286
    %5288 = vmatprep.subr.mxu0 0.0
    %v5289 = vand.u32 %v3582, 4294901760
    %5290 = vmatpush1.msra.mxu0 %v5289
    %5291 = vmatprep.subr.mxu0 0.0
    %v5292 = vand.u32 %v3583, 4294901760
    %5293 = vmatpush1.msra.mxu0 %v5292
    %5294 = vmatprep.subr.mxu0 0.0
    %v5295 = vand.u32 %v3584, 4294901760
    %5296 = vmatpush1.msra.mxu0 %v5295
    %5297 = vmatprep.subr.mxu0 0.0
    %v5298 = vand.u32 %v3585, 4294901760
    %5299 = vmatpush1.msra.mxu0 %v5298
    %5300 = vmatprep.subr.mxu0 0.0
    %v5301 = vand.u32 %v3586, 4294901760
    %5302 = vmatpush1.msra.mxu0 %v5301
    %5303 = vmatprep.subr.mxu0 0.0
    %v5304 = vand.u32 %v3587, 4294901760
    %5305 = vmatpush1.msra.mxu0 %v5304
    %5306 = vmatprep.subr.mxu0 0.0
    %v5307 = vand.u32 %v3588, 4294901760
    %5308 = vmatpush1.msra.mxu0 %v5307
    %5309 = vmatprep.subr.mxu0 0.0
    %v5310 = vand.u32 %v3589, 4294901760
    %5311 = vmatpush1.msra.mxu0 %v5310
    %5312 = vmatprep.subr.mxu0 0.0
    %v5313 = vand.u32 %v3590, 4294901760
    %5314 = vmatpush1.msra.mxu0 %v5313
    %5315 = vmatprep.subr.mxu0 0.0
    %v5316 = vand.u32 %v3591, 4294901760
    %5317 = vmatpush1.msra.mxu0 %v5316
    %5318 = vmatprep.subr.mxu0 0.0
    %v5319 = vand.u32 %v3592, 4294901760
    %5320 = vmatpush1.msra.mxu0 %v5319
    %5321 = vmatprep.subr.mxu0 0.0
    %v5322 = vand.u32 %v3593, 4294901760
    %5323 = vmatpush1.msra.mxu0 %v5322
    %5324 = vmatprep.subr.mxu0 0.0
    %v5325 = vand.u32 %v3594, 4294901760
    %5326 = vmatpush1.msra.mxu0 %v5325
    %5327 = vmatprep.subr.mxu0 0.0
    %v5328 = vand.u32 %v3595, 4294901760
    %5329 = vmatpush1.msra.mxu0 %v5328
    %5330 = vmatprep.subr.mxu0 0.0
    %v5331 = vand.u32 %v3596, 4294901760
    %5332 = vmatpush1.msra.mxu0 %v5331
    %5333 = vmatprep.subr.mxu0 0.0
    %v5334 = vand.u32 %v3597, 4294901760
    %5335 = vmatpush1.msra.mxu0 %v5334
    %5336 = vmatprep.subr.mxu0 0.0
    %v5337 = vand.u32 %v3598, 4294901760
    %5338 = vmatpush1.msra.mxu0 %v5337
    %5339 = vmatprep.subr.mxu0 0.0
    %v5340 = vand.u32 %v3599, 4294901760
    %5341 = vmatpush1.msra.mxu0 %v5340
    %5342 = vmatprep.subr.mxu0 0.0
    %v5343 = vand.u32 %v3600, 4294901760
    %5344 = vmatpush1.msra.mxu0 %v5343
    %5345 = vmatprep.subr.mxu0 0.0
    %v5346 = vand.u32 %v3601, 4294901760
    %5347 = vmatpush1.msra.mxu0 %v5346
    %5348 = vmatprep.subr.mxu0 0.0
    %v5349 = vand.u32 %v3602, 4294901760
    %5350 = vmatpush1.msra.mxu0 %v5349
    %5351 = vmatprep.subr.mxu0 0.0
    %v5352 = vand.u32 %v3603, 4294901760
    %5353 = vmatpush1.msra.mxu0 %v5352
    %5354 = vmatprep.subr.mxu0 0.0
    %v5355 = vand.u32 %v3604, 4294901760
    %5356 = vmatpush1.msra.mxu0 %v5355
    %5357 = vmatprep.subr.mxu0 0.0
    %v5358 = vand.u32 %v3605, 4294901760
    %5359 = vmatpush1.msra.mxu0 %v5358
    %5360 = vmatprep.subr.mxu0 0.0
    %v5361 = vand.u32 %v3606, 4294901760
    %5362 = vmatpush1.msra.mxu0 %v5361
    %5363 = vmatprep.subr.mxu0 0.0
    %v5364 = vand.u32 %v3607, 4294901760
    %5365 = vmatpush1.msra.mxu0 %v5364
    %5366 = vmatprep.subr.mxu0 0.0
    %v5367 = vand.u32 %v3608, 4294901760
    %5368 = vmatpush1.msra.mxu0 %v5367
    %5369 = vmatprep.subr.mxu0 0.0
    %v5370 = vand.u32 %v3609, 4294901760
    %5371 = vmatpush1.msra.mxu0 %v5370
    %5372 = vmatprep.subr.mxu0 0.0
    %v5373 = vand.u32 %v3610, 4294901760
    %5374 = vmatpush1.msra.mxu0 %v5373
    %v5375 = vand.u32 %v3433, 4294901760
    %5376 = vmatprep.mubr.f32.mxu0 %v5375
    %v5377 = vand.u32 %v3432, 4294901760
    %5378 = vmatmul.mubr.f32.gmra.mrb[0].mxu0 %v5377
    %v5379 = vpop.f32.mrb[0].mxu0
    %v5380 = vadd.f32 %v5276, %v5379
    %v5381 = vpop.f32.mrb[0].mxu0
    %5382 = vdwg.mxu0
    %5383 = vmatprep.subr.mxu0 0.0
    %v5384 = vand.u32 %v3611, 4294901760
    %5385 = vmatpush1.msra.mxu0 %v5384
    %5386 = vmatprep.subr.mxu0 0.0
    %v5387 = vand.u32 %v3612, 4294901760
    %5388 = vmatpush1.msra.mxu0 %v5387
    %5389 = vmatprep.subr.mxu0 0.0
    %v5390 = vand.u32 %v3613, 4294901760
    %5391 = vmatpush1.msra.mxu0 %v5390
    %5392 = vmatprep.subr.mxu0 0.0
    %v5393 = vand.u32 %v3614, 4294901760
    %5394 = vmatpush1.msra.mxu0 %v5393
    %5395 = vmatprep.subr.mxu0 0.0
    %v5396 = vand.u32 %v3615, 4294901760
    %5397 = vmatpush1.msra.mxu0 %v5396
    %5398 = vmatprep.subr.mxu0 0.0
    %v5399 = vand.u32 %v3616, 4294901760
    %5400 = vmatpush1.msra.mxu0 %v5399
    %5401 = vmatprep.subr.mxu0 0.0
    %v5402 = vand.u32 %v3617, 4294901760
    %5403 = vmatpush1.msra.mxu0 %v5402
    %5404 = vmatprep.subr.mxu0 0.0
    %v5405 = vand.u32 %v3618, 4294901760
    %5406 = vmatpush1.msra.mxu0 %v5405
    %5407 = vmatprep.subr.mxu0 0.0
    %v5408 = vand.u32 %v3619, 4294901760
    %5409 = vmatpush1.msra.mxu0 %v5408
    %5410 = vmatprep.subr.mxu0 0.0
    %v5411 = vand.u32 %v3620, 4294901760
    %5412 = vmatpush1.msra.mxu0 %v5411
    %5413 = vmatprep.subr.mxu0 0.0
    %v5414 = vand.u32 %v3621, 4294901760
    %5415 = vmatpush1.msra.mxu0 %v5414
    %5416 = vmatprep.subr.mxu0 0.0
    %v5417 = vand.u32 %v3622, 4294901760
    %5418 = vmatpush1.msra.mxu0 %v5417
    %5419 = vmatprep.subr.mxu0 0.0
    %v5420 = vand.u32 %v3623, 4294901760
    %5421 = vmatpush1.msra.mxu0 %v5420
    %5422 = vmatprep.subr.mxu0 0.0
    %v5423 = vand.u32 %v3624, 4294901760
    %5424 = vmatpush1.msra.mxu0 %v5423
    %5425 = vmatprep.subr.mxu0 0.0
    %v5426 = vand.u32 %v3625, 4294901760
    %5427 = vmatpush1.msra.mxu0 %v5426
    %5428 = vmatprep.subr.mxu0 0.0
    %v5429 = vand.u32 %v3626, 4294901760
    %5430 = vmatpush1.msra.mxu0 %v5429
    %5431 = vmatprep.subr.mxu0 0.0
    %v5432 = vand.u32 %v3627, 4294901760
    %5433 = vmatpush1.msra.mxu0 %v5432
    %5434 = vmatprep.subr.mxu0 0.0
    %v5435 = vand.u32 %v3628, 4294901760
    %5436 = vmatpush1.msra.mxu0 %v5435
    %5437 = vmatprep.subr.mxu0 0.0
    %v5438 = vand.u32 %v3629, 4294901760
    %5439 = vmatpush1.msra.mxu0 %v5438
    %5440 = vmatprep.subr.mxu0 0.0
    %v5441 = vand.u32 %v3630, 4294901760
    %5442 = vmatpush1.msra.mxu0 %v5441
    %5443 = vmatprep.subr.mxu0 0.0
    %v5444 = vand.u32 %v3631, 4294901760
    %5445 = vmatpush1.msra.mxu0 %v5444
    %5446 = vmatprep.subr.mxu0 0.0
    %v5447 = vand.u32 %v3632, 4294901760
    %5448 = vmatpush1.msra.mxu0 %v5447
    %5449 = vmatprep.subr.mxu0 0.0
    %v5450 = vand.u32 %v3633, 4294901760
    %5451 = vmatpush1.msra.mxu0 %v5450
    %5452 = vmatprep.subr.mxu0 0.0
    %v5453 = vand.u32 %v3634, 4294901760
    %5454 = vmatpush1.msra.mxu0 %v5453
    %5455 = vmatprep.subr.mxu0 0.0
    %v5456 = vand.u32 %v3635, 4294901760
    %5457 = vmatpush1.msra.mxu0 %v5456
    %5458 = vmatprep.subr.mxu0 0.0
    %v5459 = vand.u32 %v3636, 4294901760
    %5460 = vmatpush1.msra.mxu0 %v5459
    %5461 = vmatprep.subr.mxu0 0.0
    %v5462 = vand.u32 %v3637, 4294901760
    %5463 = vmatpush1.msra.mxu0 %v5462
    %5464 = vmatprep.subr.mxu0 0.0
    %v5465 = vand.u32 %v3638, 4294901760
    %5466 = vmatpush1.msra.mxu0 %v5465
    %5467 = vmatprep.subr.mxu0 0.0
    %v5468 = vand.u32 %v3639, 4294901760
    %5469 = vmatpush1.msra.mxu0 %v5468
    %5470 = vmatprep.subr.mxu0 0.0
    %v5471 = vand.u32 %v3640, 4294901760
    %5472 = vmatpush1.msra.mxu0 %v5471
    %5473 = vmatprep.subr.mxu0 0.0
    %v5474 = vand.u32 %v3641, 4294901760
    %5475 = vmatpush1.msra.mxu0 %v5474
    %5476 = vmatprep.subr.mxu0 0.0
    %v5477 = vand.u32 %v3642, 4294901760
    %5478 = vmatpush1.msra.mxu0 %v5477
    %v5479 = vand.u32 %v3435, 4294901760
    %v5480 = vsub.f32 %v3435, %v5479
    %v5481 = vand.u32 %v5480, 4294901760
    %v5482 = vsub.f32 %v5480, %v5481
    %v5483 = vand.u32 %v5482, 4294901760
    %5484 = vmatprep.mubr.f32.mxu0 %v5483
    %v5485 = vand.u32 %v3434, 4294901760
    %v5486 = vsub.f32 %v3434, %v5485
    %v5487 = vand.u32 %v5486, 4294901760
    %v5488 = vsub.f32 %v5486, %v5487
    %v5489 = vand.u32 %v5488, 4294901760
    %5490 = vmatmul.mubr.f32.gmra.mrb[0].mxu0 %v5489
    %v5491 = vpop.f32.mrb[0].mxu0
    %v5492 = vadd.f32 %v5380, %v5491
    %v5493 = vpop.f32.mrb[0].mxu0
    %5494 = vdwg.mxu0
    %5495 = vmatprep.subr.mxu0 0.0
    %v5496 = vand.u32 %v3611, 4294901760
    %v5497 = vsub.f32 %v3611, %v5496
    %v5498 = vand.u32 %v5497, 4294901760
    %v5499 = vsub.f32 %v5497, %v5498
    %v5500 = vand.u32 %v5499, 4294901760
    %5501 = vmatpush1.msra.mxu0 %v5500
    %5502 = vmatprep.subr.mxu0 0.0
    %v5503 = vand.u32 %v3612, 4294901760
    %v5504 = vsub.f32 %v3612, %v5503
    %v5505 = vand.u32 %v5504, 4294901760
    %v5506 = vsub.f32 %v5504, %v5505
    %v5507 = vand.u32 %v5506, 4294901760
    %5508 = vmatpush1.msra.mxu0 %v5507
    %5509 = vmatprep.subr.mxu0 0.0
    %v5510 = vand.u32 %v3613, 4294901760
    %v5511 = vsub.f32 %v3613, %v5510
    %v5512 = vand.u32 %v5511, 4294901760
    %v5513 = vsub.f32 %v5511, %v5512
    %v5514 = vand.u32 %v5513, 4294901760
    %5515 = vmatpush1.msra.mxu0 %v5514
    %5516 = vmatprep.subr.mxu0 0.0
    %v5517 = vand.u32 %v3614, 4294901760
    %v5518 = vsub.f32 %v3614, %v5517
    %v5519 = vand.u32 %v5518, 4294901760
    %v5520 = vsub.f32 %v5518, %v5519
    %v5521 = vand.u32 %v5520, 4294901760
    %5522 = vmatpush1.msra.mxu0 %v5521
    %5523 = vmatprep.subr.mxu0 0.0
    %v5524 = vand.u32 %v3615, 4294901760
    %v5525 = vsub.f32 %v3615, %v5524
    %v5526 = vand.u32 %v5525, 4294901760
    %v5527 = vsub.f32 %v5525, %v5526
    %v5528 = vand.u32 %v5527, 4294901760
    %5529 = vmatpush1.msra.mxu0 %v5528
    %5530 = vmatprep.subr.mxu0 0.0
    %v5531 = vand.u32 %v3616, 4294901760
    %v5532 = vsub.f32 %v3616, %v5531
    %v5533 = vand.u32 %v5532, 4294901760
    %v5534 = vsub.f32 %v5532, %v5533
    %v5535 = vand.u32 %v5534, 4294901760
    %5536 = vmatpush1.msra.mxu0 %v5535
    %5537 = vmatprep.subr.mxu0 0.0
    %v5538 = vand.u32 %v3617, 4294901760
    %v5539 = vsub.f32 %v3617, %v5538
    %v5540 = vand.u32 %v5539, 4294901760
    %v5541 = vsub.f32 %v5539, %v5540
    %v5542 = vand.u32 %v5541, 4294901760
    %5543 = vmatpush1.msra.mxu0 %v5542
    %5544 = vmatprep.subr.mxu0 0.0
    %v5545 = vand.u32 %v3618, 4294901760
    %v5546 = vsub.f32 %v3618, %v5545
    %v5547 = vand.u32 %v5546, 4294901760
    %v5548 = vsub.f32 %v5546, %v5547
    %v5549 = vand.u32 %v5548, 4294901760
    %5550 = vmatpush1.msra.mxu0 %v5549
    %5551 = vmatprep.subr.mxu0 0.0
    %v5552 = vand.u32 %v3619, 4294901760
    %v5553 = vsub.f32 %v3619, %v5552
    %v5554 = vand.u32 %v5553, 4294901760
    %v5555 = vsub.f32 %v5553, %v5554
    %v5556 = vand.u32 %v5555, 4294901760
    %5557 = vmatpush1.msra.mxu0 %v5556
    %5558 = vmatprep.subr.mxu0 0.0
    %v5559 = vand.u32 %v3620, 4294901760
    %v5560 = vsub.f32 %v3620, %v5559
    %v5561 = vand.u32 %v5560, 4294901760
    %v5562 = vsub.f32 %v5560, %v5561
    %v5563 = vand.u32 %v5562, 4294901760
    %5564 = vmatpush1.msra.mxu0 %v5563
    %5565 = vmatprep.subr.mxu0 0.0
    %v5566 = vand.u32 %v3621, 4294901760
    %v5567 = vsub.f32 %v3621, %v5566
    %v5568 = vand.u32 %v5567, 4294901760
    %v5569 = vsub.f32 %v5567, %v5568
    %v5570 = vand.u32 %v5569, 4294901760
    %5571 = vmatpush1.msra.mxu0 %v5570
    %5572 = vmatprep.subr.mxu0 0.0
    %v5573 = vand.u32 %v3622, 4294901760
    %v5574 = vsub.f32 %v3622, %v5573
    %v5575 = vand.u32 %v5574, 4294901760
    %v5576 = vsub.f32 %v5574, %v5575
    %v5577 = vand.u32 %v5576, 4294901760
    %5578 = vmatpush1.msra.mxu0 %v5577
    %5579 = vmatprep.subr.mxu0 0.0
    %v5580 = vand.u32 %v3623, 4294901760
    %v5581 = vsub.f32 %v3623, %v5580
    %v5582 = vand.u32 %v5581, 4294901760
    %v5583 = vsub.f32 %v5581, %v5582
    %v5584 = vand.u32 %v5583, 4294901760
    %5585 = vmatpush1.msra.mxu0 %v5584
    %5586 = vmatprep.subr.mxu0 0.0
    %v5587 = vand.u32 %v3624, 4294901760
    %v5588 = vsub.f32 %v3624, %v5587
    %v5589 = vand.u32 %v5588, 4294901760
    %v5590 = vsub.f32 %v5588, %v5589
    %v5591 = vand.u32 %v5590, 4294901760
    %5592 = vmatpush1.msra.mxu0 %v5591
    %5593 = vmatprep.subr.mxu0 0.0
    %v5594 = vand.u32 %v3625, 4294901760
    %v5595 = vsub.f32 %v3625, %v5594
    %v5596 = vand.u32 %v5595, 4294901760
    %v5597 = vsub.f32 %v5595, %v5596
    %v5598 = vand.u32 %v5597, 4294901760
    %5599 = vmatpush1.msra.mxu0 %v5598
    %5600 = vmatprep.subr.mxu0 0.0
    %v5601 = vand.u32 %v3626, 4294901760
    %v5602 = vsub.f32 %v3626, %v5601
    %v5603 = vand.u32 %v5602, 4294901760
    %v5604 = vsub.f32 %v5602, %v5603
    %v5605 = vand.u32 %v5604, 4294901760
    %5606 = vmatpush1.msra.mxu0 %v5605
    %5607 = vmatprep.subr.mxu0 0.0
    %v5608 = vand.u32 %v3627, 4294901760
    %v5609 = vsub.f32 %v3627, %v5608
    %v5610 = vand.u32 %v5609, 4294901760
    %v5611 = vsub.f32 %v5609, %v5610
    %v5612 = vand.u32 %v5611, 4294901760
    %5613 = vmatpush1.msra.mxu0 %v5612
    %5614 = vmatprep.subr.mxu0 0.0
    %v5615 = vand.u32 %v3628, 4294901760
    %v5616 = vsub.f32 %v3628, %v5615
    %v5617 = vand.u32 %v5616, 4294901760
    %v5618 = vsub.f32 %v5616, %v5617
    %v5619 = vand.u32 %v5618, 4294901760
    %5620 = vmatpush1.msra.mxu0 %v5619
    %5621 = vmatprep.subr.mxu0 0.0
    %v5622 = vand.u32 %v3629, 4294901760
    %v5623 = vsub.f32 %v3629, %v5622
    %v5624 = vand.u32 %v5623, 4294901760
    %v5625 = vsub.f32 %v5623, %v5624
    %v5626 = vand.u32 %v5625, 4294901760
    %5627 = vmatpush1.msra.mxu0 %v5626
    %5628 = vmatprep.subr.mxu0 0.0
    %v5629 = vand.u32 %v3630, 4294901760
    %v5630 = vsub.f32 %v3630, %v5629
    %v5631 = vand.u32 %v5630, 4294901760
    %v5632 = vsub.f32 %v5630, %v5631
    %v5633 = vand.u32 %v5632, 4294901760
    %5634 = vmatpush1.msra.mxu0 %v5633
    %5635 = vmatprep.subr.mxu0 0.0
    %v5636 = vand.u32 %v3631, 4294901760
    %v5637 = vsub.f32 %v3631, %v5636
    %v5638 = vand.u32 %v5637, 4294901760
    %v5639 = vsub.f32 %v5637, %v5638
    %v5640 = vand.u32 %v5639, 4294901760
    %5641 = vmatpush1.msra.mxu0 %v5640
    %5642 = vmatprep.subr.mxu0 0.0
    %v5643 = vand.u32 %v3632, 4294901760
    %v5644 = vsub.f32 %v3632, %v5643
    %v5645 = vand.u32 %v5644, 4294901760
    %v5646 = vsub.f32 %v5644, %v5645
    %v5647 = vand.u32 %v5646, 4294901760
    %5648 = vmatpush1.msra.mxu0 %v5647
    %5649 = vmatprep.subr.mxu0 0.0
    %v5650 = vand.u32 %v3633, 4294901760
    %v5651 = vsub.f32 %v3633, %v5650
    %v5652 = vand.u32 %v5651, 4294901760
    %v5653 = vsub.f32 %v5651, %v5652
    %v5654 = vand.u32 %v5653, 4294901760
    %5655 = vmatpush1.msra.mxu0 %v5654
    %5656 = vmatprep.subr.mxu0 0.0
    %v5657 = vand.u32 %v3634, 4294901760
    %v5658 = vsub.f32 %v3634, %v5657
    %v5659 = vand.u32 %v5658, 4294901760
    %v5660 = vsub.f32 %v5658, %v5659
    %v5661 = vand.u32 %v5660, 4294901760
    %5662 = vmatpush1.msra.mxu0 %v5661
    %5663 = vmatprep.subr.mxu0 0.0
    %v5664 = vand.u32 %v3635, 4294901760
    %v5665 = vsub.f32 %v3635, %v5664
    %v5666 = vand.u32 %v5665, 4294901760
    %v5667 = vsub.f32 %v5665, %v5666
    %v5668 = vand.u32 %v5667, 4294901760
    %5669 = vmatpush1.msra.mxu0 %v5668
    %5670 = vmatprep.subr.mxu0 0.0
    %v5671 = vand.u32 %v3636, 4294901760
    %v5672 = vsub.f32 %v3636, %v5671
    %v5673 = vand.u32 %v5672, 4294901760
    %v5674 = vsub.f32 %v5672, %v5673
    %v5675 = vand.u32 %v5674, 4294901760
    %5676 = vmatpush1.msra.mxu0 %v5675
    %5677 = vmatprep.subr.mxu0 0.0
    %v5678 = vand.u32 %v3637, 4294901760
    %v5679 = vsub.f32 %v3637, %v5678
    %v5680 = vand.u32 %v5679, 4294901760
    %v5681 = vsub.f32 %v5679, %v5680
    %v5682 = vand.u32 %v5681, 4294901760
    %5683 = vmatpush1.msra.mxu0 %v5682
    %5684 = vmatprep.subr.mxu0 0.0
    %v5685 = vand.u32 %v3638, 4294901760
    %v5686 = vsub.f32 %v3638, %v5685
    %v5687 = vand.u32 %v5686, 4294901760
    %v5688 = vsub.f32 %v5686, %v5687
    %v5689 = vand.u32 %v5688, 4294901760
    %5690 = vmatpush1.msra.mxu0 %v5689
    %5691 = vmatprep.subr.mxu0 0.0
    %v5692 = vand.u32 %v3639, 4294901760
    %v5693 = vsub.f32 %v3639, %v5692
    %v5694 = vand.u32 %v5693, 4294901760
    %v5695 = vsub.f32 %v5693, %v5694
    %v5696 = vand.u32 %v5695, 4294901760
    %5697 = vmatpush1.msra.mxu0 %v5696
    %5698 = vmatprep.subr.mxu0 0.0
    %v5699 = vand.u32 %v3640, 4294901760
    %v5700 = vsub.f32 %v3640, %v5699
    %v5701 = vand.u32 %v5700, 4294901760
    %v5702 = vsub.f32 %v5700, %v5701
    %v5703 = vand.u32 %v5702, 4294901760
    %5704 = vmatpush1.msra.mxu0 %v5703
    %5705 = vmatprep.subr.mxu0 0.0
    %v5706 = vand.u32 %v3641, 4294901760
    %v5707 = vsub.f32 %v3641, %v5706
    %v5708 = vand.u32 %v5707, 4294901760
    %v5709 = vsub.f32 %v5707, %v5708
    %v5710 = vand.u32 %v5709, 4294901760
    %5711 = vmatpush1.msra.mxu0 %v5710
    %5712 = vmatprep.subr.mxu0 0.0
    %v5713 = vand.u32 %v3642, 4294901760
    %v5714 = vsub.f32 %v3642, %v5713
    %v5715 = vand.u32 %v5714, 4294901760
    %v5716 = vsub.f32 %v5714, %v5715
    %v5717 = vand.u32 %v5716, 4294901760
    %5718 = vmatpush1.msra.mxu0 %v5717
    %v5719 = vand.u32 %v3435, 4294901760
    %5720 = vmatprep.mubr.f32.mxu0 %v5719
    %v5721 = vand.u32 %v3434, 4294901760
    %5722 = vmatmul.mubr.f32.gmra.mrb[0].mxu0 %v5721
    %v5723 = vpop.f32.mrb[0].mxu0
    %v5724 = vadd.f32 %v5492, %v5723
    %v5725 = vpop.f32.mrb[0].mxu0
    %5726 = vdwg.mxu0
    %5727 = vmatprep.subr.mxu0 0.0
    %v5728 = vand.u32 %v3611, 4294901760
    %v5729 = vsub.f32 %v3611, %v5728
    %5730 = vmatpush1.msra.mxu0 %v5729
    %5731 = vmatprep.subr.mxu0 0.0
    %v5732 = vand.u32 %v3612, 4294901760
    %v5733 = vsub.f32 %v3612, %v5732
    %5734 = vmatpush1.msra.mxu0 %v5733
    %5735 = vmatprep.subr.mxu0 0.0
    %v5736 = vand.u32 %v3613, 4294901760
    %v5737 = vsub.f32 %v3613, %v5736
    %5738 = vmatpush1.msra.mxu0 %v5737
    %5739 = vmatprep.subr.mxu0 0.0
    %v5740 = vand.u32 %v3614, 4294901760
    %v5741 = vsub.f32 %v3614, %v5740
    %5742 = vmatpush1.msra.mxu0 %v5741
    %5743 = vmatprep.subr.mxu0 0.0
    %v5744 = vand.u32 %v3615, 4294901760
    %v5745 = vsub.f32 %v3615, %v5744
    %5746 = vmatpush1.msra.mxu0 %v5745
    %5747 = vmatprep.subr.mxu0 0.0
    %v5748 = vand.u32 %v3616, 4294901760
    %v5749 = vsub.f32 %v3616, %v5748
    %5750 = vmatpush1.msra.mxu0 %v5749
    %5751 = vmatprep.subr.mxu0 0.0
    %v5752 = vand.u32 %v3617, 4294901760
    %v5753 = vsub.f32 %v3617, %v5752
    %5754 = vmatpush1.msra.mxu0 %v5753
    %5755 = vmatprep.subr.mxu0 0.0
    %v5756 = vand.u32 %v3618, 4294901760
    %v5757 = vsub.f32 %v3618, %v5756
    %5758 = vmatpush1.msra.mxu0 %v5757
    %5759 = vmatprep.subr.mxu0 0.0
    %v5760 = vand.u32 %v3619, 4294901760
    %v5761 = vsub.f32 %v3619, %v5760
    %5762 = vmatpush1.msra.mxu0 %v5761
    %5763 = vmatprep.subr.mxu0 0.0
    %v5764 = vand.u32 %v3620, 4294901760
    %v5765 = vsub.f32 %v3620, %v5764
    %5766 = vmatpush1.msra.mxu0 %v5765
    %5767 = vmatprep.subr.mxu0 0.0
    %v5768 = vand.u32 %v3621, 4294901760
    %v5769 = vsub.f32 %v3621, %v5768
    %5770 = vmatpush1.msra.mxu0 %v5769
    %5771 = vmatprep.subr.mxu0 0.0
    %v5772 = vand.u32 %v3622, 4294901760
    %v5773 = vsub.f32 %v3622, %v5772
    %5774 = vmatpush1.msra.mxu0 %v5773
    %5775 = vmatprep.subr.mxu0 0.0
    %v5776 = vand.u32 %v3623, 4294901760
    %v5777 = vsub.f32 %v3623, %v5776
    %5778 = vmatpush1.msra.mxu0 %v5777
    %5779 = vmatprep.subr.mxu0 0.0
    %v5780 = vand.u32 %v3624, 4294901760
    %v5781 = vsub.f32 %v3624, %v5780
    %5782 = vmatpush1.msra.mxu0 %v5781
    %5783 = vmatprep.subr.mxu0 0.0
    %v5784 = vand.u32 %v3625, 4294901760
    %v5785 = vsub.f32 %v3625, %v5784
    %5786 = vmatpush1.msra.mxu0 %v5785
    %5787 = vmatprep.subr.mxu0 0.0
    %v5788 = vand.u32 %v3626, 4294901760
    %v5789 = vsub.f32 %v3626, %v5788
    %5790 = vmatpush1.msra.mxu0 %v5789
    %5791 = vmatprep.subr.mxu0 0.0
    %v5792 = vand.u32 %v3627, 4294901760
    %v5793 = vsub.f32 %v3627, %v5792
    %5794 = vmatpush1.msra.mxu0 %v5793
    %5795 = vmatprep.subr.mxu0 0.0
    %v5796 = vand.u32 %v3628, 4294901760
    %v5797 = vsub.f32 %v3628, %v5796
    %5798 = vmatpush1.msra.mxu0 %v5797
    %5799 = vmatprep.subr.mxu0 0.0
    %v5800 = vand.u32 %v3629, 4294901760
    %v5801 = vsub.f32 %v3629, %v5800
    %5802 = vmatpush1.msra.mxu0 %v5801
    %5803 = vmatprep.subr.mxu0 0.0
    %v5804 = vand.u32 %v3630, 4294901760
    %v5805 = vsub.f32 %v3630, %v5804
    %5806 = vmatpush1.msra.mxu0 %v5805
    %5807 = vmatprep.subr.mxu0 0.0
    %v5808 = vand.u32 %v3631, 4294901760
    %v5809 = vsub.f32 %v3631, %v5808
    %5810 = vmatpush1.msra.mxu0 %v5809
    %5811 = vmatprep.subr.mxu0 0.0
    %v5812 = vand.u32 %v3632, 4294901760
    %v5813 = vsub.f32 %v3632, %v5812
    %5814 = vmatpush1.msra.mxu0 %v5813
    %5815 = vmatprep.subr.mxu0 0.0
    %v5816 = vand.u32 %v3633, 4294901760
    %v5817 = vsub.f32 %v3633, %v5816
    %5818 = vmatpush1.msra.mxu0 %v5817
    %5819 = vmatprep.subr.mxu0 0.0
    %v5820 = vand.u32 %v3634, 4294901760
    %v5821 = vsub.f32 %v3634, %v5820
    %5822 = vmatpush1.msra.mxu0 %v5821
    %5823 = vmatprep.subr.mxu0 0.0
    %v5824 = vand.u32 %v3635, 4294901760
    %v5825 = vsub.f32 %v3635, %v5824
    %5826 = vmatpush1.msra.mxu0 %v5825
    %5827 = vmatprep.subr.mxu0 0.0
    %v5828 = vand.u32 %v3636, 4294901760
    %v5829 = vsub.f32 %v3636, %v5828
    %5830 = vmatpush1.msra.mxu0 %v5829
    %5831 = vmatprep.subr.mxu0 0.0
    %v5832 = vand.u32 %v3637, 4294901760
    %v5833 = vsub.f32 %v3637, %v5832
    %5834 = vmatpush1.msra.mxu0 %v5833
    %5835 = vmatprep.subr.mxu0 0.0
    %v5836 = vand.u32 %v3638, 4294901760
    %v5837 = vsub.f32 %v3638, %v5836
    %5838 = vmatpush1.msra.mxu0 %v5837
    %5839 = vmatprep.subr.mxu0 0.0
    %v5840 = vand.u32 %v3639, 4294901760
    %v5841 = vsub.f32 %v3639, %v5840
    %5842 = vmatpush1.msra.mxu0 %v5841
    %5843 = vmatprep.subr.mxu0 0.0
    %v5844 = vand.u32 %v3640, 4294901760
    %v5845 = vsub.f32 %v3640, %v5844
    %5846 = vmatpush1.msra.mxu0 %v5845
    %5847 = vmatprep.subr.mxu0 0.0
    %v5848 = vand.u32 %v3641, 4294901760
    %v5849 = vsub.f32 %v3641, %v5848
    %5850 = vmatpush1.msra.mxu0 %v5849
    %5851 = vmatprep.subr.mxu0 0.0
    %v5852 = vand.u32 %v3642, 4294901760
    %v5853 = vsub.f32 %v3642, %v5852
    %5854 = vmatpush1.msra.mxu0 %v5853
    %v5855 = vand.u32 %v3435, 4294901760
    %v5856 = vsub.f32 %v3435, %v5855
    %5857 = vmatprep.mubr.f32.mxu0 %v5856
    %v5858 = vand.u32 %v3434, 4294901760
    %v5859 = vsub.f32 %v3434, %v5858
    %5860 = vmatmul.mubr.f32.gmra.mrb[0].mxu0 %v5859
    %v5861 = vpop.f32.mrb[0].mxu0
    %v5862 = vadd.f32 %v5724, %v5861
    %v5863 = vpop.f32.mrb[0].mxu0
    %5864 = vdwg.mxu0
    %5865 = vmatprep.subr.mxu0 0.0
    %v5866 = vand.u32 %v3611, 4294901760
    %5867 = vmatpush1.msra.mxu0 %v5866
    %5868 = vmatprep.subr.mxu0 0.0
    %v5869 = vand.u32 %v3612, 4294901760
    %5870 = vmatpush1.msra.mxu0 %v5869
    %5871 = vmatprep.subr.mxu0 0.0
    %v5872 = vand.u32 %v3613, 4294901760
    %5873 = vmatpush1.msra.mxu0 %v5872
    %5874 = vmatprep.subr.mxu0 0.0
    %v5875 = vand.u32 %v3614, 4294901760
    %5876 = vmatpush1.msra.mxu0 %v5875
    %5877 = vmatprep.subr.mxu0 0.0
    %v5878 = vand.u32 %v3615, 4294901760
    %5879 = vmatpush1.msra.mxu0 %v5878
    %5880 = vmatprep.subr.mxu0 0.0
    %v5881 = vand.u32 %v3616, 4294901760
    %5882 = vmatpush1.msra.mxu0 %v5881
    %5883 = vmatprep.subr.mxu0 0.0
    %v5884 = vand.u32 %v3617, 4294901760
    %5885 = vmatpush1.msra.mxu0 %v5884
    %5886 = vmatprep.subr.mxu0 0.0
    %v5887 = vand.u32 %v3618, 4294901760
    %5888 = vmatpush1.msra.mxu0 %v5887
    %5889 = vmatprep.subr.mxu0 0.0
    %v5890 = vand.u32 %v3619, 4294901760
    %5891 = vmatpush1.msra.mxu0 %v5890
    %5892 = vmatprep.subr.mxu0 0.0
    %v5893 = vand.u32 %v3620, 4294901760
    %5894 = vmatpush1.msra.mxu0 %v5893
    %5895 = vmatprep.subr.mxu0 0.0
    %v5896 = vand.u32 %v3621, 4294901760
    %5897 = vmatpush1.msra.mxu0 %v5896
    %5898 = vmatprep.subr.mxu0 0.0
    %v5899 = vand.u32 %v3622, 4294901760
    %5900 = vmatpush1.msra.mxu0 %v5899
    %5901 = vmatprep.subr.mxu0 0.0
    %v5902 = vand.u32 %v3623, 4294901760
    %5903 = vmatpush1.msra.mxu0 %v5902
    %5904 = vmatprep.subr.mxu0 0.0
    %v5905 = vand.u32 %v3624, 4294901760
    %5906 = vmatpush1.msra.mxu0 %v5905
    %5907 = vmatprep.subr.mxu0 0.0
    %v5908 = vand.u32 %v3625, 4294901760
    %5909 = vmatpush1.msra.mxu0 %v5908
    %5910 = vmatprep.subr.mxu0 0.0
    %v5911 = vand.u32 %v3626, 4294901760
    %5912 = vmatpush1.msra.mxu0 %v5911
    %5913 = vmatprep.subr.mxu0 0.0
    %v5914 = vand.u32 %v3627, 4294901760
    %5915 = vmatpush1.msra.mxu0 %v5914
    %5916 = vmatprep.subr.mxu0 0.0
    %v5917 = vand.u32 %v3628, 4294901760
    %5918 = vmatpush1.msra.mxu0 %v5917
    %5919 = vmatprep.subr.mxu0 0.0
    %v5920 = vand.u32 %v3629, 4294901760
    %5921 = vmatpush1.msra.mxu0 %v5920
    %5922 = vmatprep.subr.mxu0 0.0
    %v5923 = vand.u32 %v3630, 4294901760
    %5924 = vmatpush1.msra.mxu0 %v5923
    %5925 = vmatprep.subr.mxu0 0.0
    %v5926 = vand.u32 %v3631, 4294901760
    %5927 = vmatpush1.msra.mxu0 %v5926
    %5928 = vmatprep.subr.mxu0 0.0
    %v5929 = vand.u32 %v3632, 4294901760
    %5930 = vmatpush1.msra.mxu0 %v5929
    %5931 = vmatprep.subr.mxu0 0.0
    %v5932 = vand.u32 %v3633, 4294901760
    %5933 = vmatpush1.msra.mxu0 %v5932
    %5934 = vmatprep.subr.mxu0 0.0
    %v5935 = vand.u32 %v3634, 4294901760
    %5936 = vmatpush1.msra.mxu0 %v5935
    %5937 = vmatprep.subr.mxu0 0.0
    %v5938 = vand.u32 %v3635, 4294901760
    %5939 = vmatpush1.msra.mxu0 %v5938
    %5940 = vmatprep.subr.mxu0 0.0
    %v5941 = vand.u32 %v3636, 4294901760
    %5942 = vmatpush1.msra.mxu0 %v5941
    %5943 = vmatprep.subr.mxu0 0.0
    %v5944 = vand.u32 %v3637, 4294901760
    %5945 = vmatpush1.msra.mxu0 %v5944
    %5946 = vmatprep.subr.mxu0 0.0
    %v5947 = vand.u32 %v3638, 4294901760
    %5948 = vmatpush1.msra.mxu0 %v5947
    %5949 = vmatprep.subr.mxu0 0.0
    %v5950 = vand.u32 %v3639, 4294901760
    %5951 = vmatpush1.msra.mxu0 %v5950
    %5952 = vmatprep.subr.mxu0 0.0
    %v5953 = vand.u32 %v3640, 4294901760
    %5954 = vmatpush1.msra.mxu0 %v5953
    %5955 = vmatprep.subr.mxu0 0.0
    %v5956 = vand.u32 %v3641, 4294901760
    %5957 = vmatpush1.msra.mxu0 %v5956
    %5958 = vmatprep.subr.mxu0 0.0
    %v5959 = vand.u32 %v3642, 4294901760
    %5960 = vmatpush1.msra.mxu0 %v5959
    %v5961 = vand.u32 %v3435, 4294901760
    %v5962 = vsub.f32 %v3435, %v5961
    %v5963 = vand.u32 %v5962, 4294901760
    %5964 = vmatprep.mubr.f32.mxu0 %v5963
    %v5965 = vand.u32 %v3434, 4294901760
    %v5966 = vsub.f32 %v3434, %v5965
    %v5967 = vand.u32 %v5966, 4294901760
    %5968 = vmatmul.mubr.f32.gmra.mrb[0].mxu0 %v5967
    %v5969 = vpop.f32.mrb[0].mxu0
    %v5970 = vadd.f32 %v5862, %v5969
    %v5971 = vpop.f32.mrb[0].mxu0
    %5972 = vdwg.mxu0
    %5973 = vmatprep.subr.mxu0 0.0
    %v5974 = vand.u32 %v3611, 4294901760
    %v5975 = vsub.f32 %v3611, %v5974
    %v5976 = vand.u32 %v5975, 4294901760
    %5977 = vmatpush1.msra.mxu0 %v5976
    %5978 = vmatprep.subr.mxu0 0.0
    %v5979 = vand.u32 %v3612, 4294901760
    %v5980 = vsub.f32 %v3612, %v5979
    %v5981 = vand.u32 %v5980, 4294901760
    %5982 = vmatpush1.msra.mxu0 %v5981
    %5983 = vmatprep.subr.mxu0 0.0
    %v5984 = vand.u32 %v3613, 4294901760
    %v5985 = vsub.f32 %v3613, %v5984
    %v5986 = vand.u32 %v5985, 4294901760
    %5987 = vmatpush1.msra.mxu0 %v5986
    %5988 = vmatprep.subr.mxu0 0.0
    %v5989 = vand.u32 %v3614, 4294901760
    %v5990 = vsub.f32 %v3614, %v5989
    %v5991 = vand.u32 %v5990, 4294901760
    %5992 = vmatpush1.msra.mxu0 %v5991
    %5993 = vmatprep.subr.mxu0 0.0
    %v5994 = vand.u32 %v3615, 4294901760
    %v5995 = vsub.f32 %v3615, %v5994
    %v5996 = vand.u32 %v5995, 4294901760
    %5997 = vmatpush1.msra.mxu0 %v5996
    %5998 = vmatprep.subr.mxu0 0.0
    %v5999 = vand.u32 %v3616, 4294901760
    %v6000 = vsub.f32 %v3616, %v5999
    %v6001 = vand.u32 %v6000, 4294901760
    %6002 = vmatpush1.msra.mxu0 %v6001
    %6003 = vmatprep.subr.mxu0 0.0
    %v6004 = vand.u32 %v3617, 4294901760
    %v6005 = vsub.f32 %v3617, %v6004
    %v6006 = vand.u32 %v6005, 4294901760
    %6007 = vmatpush1.msra.mxu0 %v6006
    %6008 = vmatprep.subr.mxu0 0.0
    %v6009 = vand.u32 %v3618, 4294901760
    %v6010 = vsub.f32 %v3618, %v6009
    %v6011 = vand.u32 %v6010, 4294901760
    %6012 = vmatpush1.msra.mxu0 %v6011
    %6013 = vmatprep.subr.mxu0 0.0
    %v6014 = vand.u32 %v3619, 4294901760
    %v6015 = vsub.f32 %v3619, %v6014
    %v6016 = vand.u32 %v6015, 4294901760
    %6017 = vmatpush1.msra.mxu0 %v6016
    %6018 = vmatprep.subr.mxu0 0.0
    %v6019 = vand.u32 %v3620, 4294901760
    %v6020 = vsub.f32 %v3620, %v6019
    %v6021 = vand.u32 %v6020, 4294901760
    %6022 = vmatpush1.msra.mxu0 %v6021
    %6023 = vmatprep.subr.mxu0 0.0
    %v6024 = vand.u32 %v3621, 4294901760
    %v6025 = vsub.f32 %v3621, %v6024
    %v6026 = vand.u32 %v6025, 4294901760
    %6027 = vmatpush1.msra.mxu0 %v6026
    %6028 = vmatprep.subr.mxu0 0.0
    %v6029 = vand.u32 %v3622, 4294901760
    %v6030 = vsub.f32 %v3622, %v6029
    %v6031 = vand.u32 %v6030, 4294901760
    %6032 = vmatpush1.msra.mxu0 %v6031
    %6033 = vmatprep.subr.mxu0 0.0
    %v6034 = vand.u32 %v3623, 4294901760
    %v6035 = vsub.f32 %v3623, %v6034
    %v6036 = vand.u32 %v6035, 4294901760
    %6037 = vmatpush1.msra.mxu0 %v6036
    %6038 = vmatprep.subr.mxu0 0.0
    %v6039 = vand.u32 %v3624, 4294901760
    %v6040 = vsub.f32 %v3624, %v6039
    %v6041 = vand.u32 %v6040, 4294901760
    %6042 = vmatpush1.msra.mxu0 %v6041
    %6043 = vmatprep.subr.mxu0 0.0
    %v6044 = vand.u32 %v3625, 4294901760
    %v6045 = vsub.f32 %v3625, %v6044
    %v6046 = vand.u32 %v6045, 4294901760
    %6047 = vmatpush1.msra.mxu0 %v6046
    %6048 = vmatprep.subr.mxu0 0.0
    %v6049 = vand.u32 %v3626, 4294901760
    %v6050 = vsub.f32 %v3626, %v6049
    %v6051 = vand.u32 %v6050, 4294901760
    %6052 = vmatpush1.msra.mxu0 %v6051
    %6053 = vmatprep.subr.mxu0 0.0
    %v6054 = vand.u32 %v3627, 4294901760
    %v6055 = vsub.f32 %v3627, %v6054
    %v6056 = vand.u32 %v6055, 4294901760
    %6057 = vmatpush1.msra.mxu0 %v6056
    %6058 = vmatprep.subr.mxu0 0.0
    %v6059 = vand.u32 %v3628, 4294901760
    %v6060 = vsub.f32 %v3628, %v6059
    %v6061 = vand.u32 %v6060, 4294901760
    %6062 = vmatpush1.msra.mxu0 %v6061
    %6063 = vmatprep.subr.mxu0 0.0
    %v6064 = vand.u32 %v3629, 4294901760
    %v6065 = vsub.f32 %v3629, %v6064
    %v6066 = vand.u32 %v6065, 4294901760
    %6067 = vmatpush1.msra.mxu0 %v6066
    %6068 = vmatprep.subr.mxu0 0.0
    %v6069 = vand.u32 %v3630, 4294901760
    %v6070 = vsub.f32 %v3630, %v6069
    %v6071 = vand.u32 %v6070, 4294901760
    %6072 = vmatpush1.msra.mxu0 %v6071
    %6073 = vmatprep.subr.mxu0 0.0
    %v6074 = vand.u32 %v3631, 4294901760
    %v6075 = vsub.f32 %v3631, %v6074
    %v6076 = vand.u32 %v6075, 4294901760
    %6077 = vmatpush1.msra.mxu0 %v6076
    %6078 = vmatprep.subr.mxu0 0.0
    %v6079 = vand.u32 %v3632, 4294901760
    %v6080 = vsub.f32 %v3632, %v6079
    %v6081 = vand.u32 %v6080, 4294901760
    %6082 = vmatpush1.msra.mxu0 %v6081
    %6083 = vmatprep.subr.mxu0 0.0
    %v6084 = vand.u32 %v3633, 4294901760
    %v6085 = vsub.f32 %v3633, %v6084
    %v6086 = vand.u32 %v6085, 4294901760
    %6087 = vmatpush1.msra.mxu0 %v6086
    %6088 = vmatprep.subr.mxu0 0.0
    %v6089 = vand.u32 %v3634, 4294901760
    %v6090 = vsub.f32 %v3634, %v6089
    %v6091 = vand.u32 %v6090, 4294901760
    %6092 = vmatpush1.msra.mxu0 %v6091
    %6093 = vmatprep.subr.mxu0 0.0
    %v6094 = vand.u32 %v3635, 4294901760
    %v6095 = vsub.f32 %v3635, %v6094
    %v6096 = vand.u32 %v6095, 4294901760
    %6097 = vmatpush1.msra.mxu0 %v6096
    %6098 = vmatprep.subr.mxu0 0.0
    %v6099 = vand.u32 %v3636, 4294901760
    %v6100 = vsub.f32 %v3636, %v6099
    %v6101 = vand.u32 %v6100, 4294901760
    %6102 = vmatpush1.msra.mxu0 %v6101
    %6103 = vmatprep.subr.mxu0 0.0
    %v6104 = vand.u32 %v3637, 4294901760
    %v6105 = vsub.f32 %v3637, %v6104
    %v6106 = vand.u32 %v6105, 4294901760
    %6107 = vmatpush1.msra.mxu0 %v6106
    %6108 = vmatprep.subr.mxu0 0.0
    %v6109 = vand.u32 %v3638, 4294901760
    %v6110 = vsub.f32 %v3638, %v6109
    %v6111 = vand.u32 %v6110, 4294901760
    %6112 = vmatpush1.msra.mxu0 %v6111
    %6113 = vmatprep.subr.mxu0 0.0
    %v6114 = vand.u32 %v3639, 4294901760
    %v6115 = vsub.f32 %v3639, %v6114
    %v6116 = vand.u32 %v6115, 4294901760
    %6117 = vmatpush1.msra.mxu0 %v6116
    %6118 = vmatprep.subr.mxu0 0.0
    %v6119 = vand.u32 %v3640, 4294901760
    %v6120 = vsub.f32 %v3640, %v6119
    %v6121 = vand.u32 %v6120, 4294901760
    %6122 = vmatpush1.msra.mxu0 %v6121
    %6123 = vmatprep.subr.mxu0 0.0
    %v6124 = vand.u32 %v3641, 4294901760
    %v6125 = vsub.f32 %v3641, %v6124
    %v6126 = vand.u32 %v6125, 4294901760
    %6127 = vmatpush1.msra.mxu0 %v6126
    %6128 = vmatprep.subr.mxu0 0.0
    %v6129 = vand.u32 %v3642, 4294901760
    %v6130 = vsub.f32 %v3642, %v6129
    %v6131 = vand.u32 %v6130, 4294901760
    %6132 = vmatpush1.msra.mxu0 %v6131
    %v6133 = vand.u32 %v3435, 4294901760
    %6134 = vmatprep.mubr.f32.mxu0 %v6133
    %v6135 = vand.u32 %v3434, 4294901760
    %6136 = vmatmul.mubr.f32.gmra.mrb[0].mxu0 %v6135
    %v6137 = vpop.f32.mrb[0].mxu0
    %v6138 = vadd.f32 %v5970, %v6137
    %v6139 = vpop.f32.mrb[0].mxu0
    %6140 = vdwg.mxu0
    %6141 = vmatprep.subr.mxu0 0.0
    %v6142 = vand.u32 %v3611, 4294901760
    %6143 = vmatpush1.msra.mxu0 %v6142
    %6144 = vmatprep.subr.mxu0 0.0
    %v6145 = vand.u32 %v3612, 4294901760
    %6146 = vmatpush1.msra.mxu0 %v6145
    %6147 = vmatprep.subr.mxu0 0.0
    %v6148 = vand.u32 %v3613, 4294901760
    %6149 = vmatpush1.msra.mxu0 %v6148
    %6150 = vmatprep.subr.mxu0 0.0
    %v6151 = vand.u32 %v3614, 4294901760
    %6152 = vmatpush1.msra.mxu0 %v6151
    %6153 = vmatprep.subr.mxu0 0.0
    %v6154 = vand.u32 %v3615, 4294901760
    %6155 = vmatpush1.msra.mxu0 %v6154
    %6156 = vmatprep.subr.mxu0 0.0
    %v6157 = vand.u32 %v3616, 4294901760
    %6158 = vmatpush1.msra.mxu0 %v6157
    %6159 = vmatprep.subr.mxu0 0.0
    %v6160 = vand.u32 %v3617, 4294901760
    %6161 = vmatpush1.msra.mxu0 %v6160
    %6162 = vmatprep.subr.mxu0 0.0
    %v6163 = vand.u32 %v3618, 4294901760
    %6164 = vmatpush1.msra.mxu0 %v6163
    %6165 = vmatprep.subr.mxu0 0.0
    %v6166 = vand.u32 %v3619, 4294901760
    %6167 = vmatpush1.msra.mxu0 %v6166
    %6168 = vmatprep.subr.mxu0 0.0
    %v6169 = vand.u32 %v3620, 4294901760
    %6170 = vmatpush1.msra.mxu0 %v6169
    %6171 = vmatprep.subr.mxu0 0.0
    %v6172 = vand.u32 %v3621, 4294901760
    %6173 = vmatpush1.msra.mxu0 %v6172
    %6174 = vmatprep.subr.mxu0 0.0
    %v6175 = vand.u32 %v3622, 4294901760
    %6176 = vmatpush1.msra.mxu0 %v6175
    %6177 = vmatprep.subr.mxu0 0.0
    %v6178 = vand.u32 %v3623, 4294901760
    %6179 = vmatpush1.msra.mxu0 %v6178
    %6180 = vmatprep.subr.mxu0 0.0
    %v6181 = vand.u32 %v3624, 4294901760
    %6182 = vmatpush1.msra.mxu0 %v6181
    %6183 = vmatprep.subr.mxu0 0.0
    %v6184 = vand.u32 %v3625, 4294901760
    %6185 = vmatpush1.msra.mxu0 %v6184
    %6186 = vmatprep.subr.mxu0 0.0
    %v6187 = vand.u32 %v3626, 4294901760
    %6188 = vmatpush1.msra.mxu0 %v6187
    %6189 = vmatprep.subr.mxu0 0.0
    %v6190 = vand.u32 %v3627, 4294901760
    %6191 = vmatpush1.msra.mxu0 %v6190
    %6192 = vmatprep.subr.mxu0 0.0
    %v6193 = vand.u32 %v3628, 4294901760
    %6194 = vmatpush1.msra.mxu0 %v6193
    %6195 = vmatprep.subr.mxu0 0.0
    %v6196 = vand.u32 %v3629, 4294901760
    %6197 = vmatpush1.msra.mxu0 %v6196
    %6198 = vmatprep.subr.mxu0 0.0
    %v6199 = vand.u32 %v3630, 4294901760
    %6200 = vmatpush1.msra.mxu0 %v6199
    %6201 = vmatprep.subr.mxu0 0.0
    %v6202 = vand.u32 %v3631, 4294901760
    %6203 = vmatpush1.msra.mxu0 %v6202
    %6204 = vmatprep.subr.mxu0 0.0
    %v6205 = vand.u32 %v3632, 4294901760
    %6206 = vmatpush1.msra.mxu0 %v6205
    %6207 = vmatprep.subr.mxu0 0.0
    %v6208 = vand.u32 %v3633, 4294901760
    %6209 = vmatpush1.msra.mxu0 %v6208
    %6210 = vmatprep.subr.mxu0 0.0
    %v6211 = vand.u32 %v3634, 4294901760
    %6212 = vmatpush1.msra.mxu0 %v6211
    %6213 = vmatprep.subr.mxu0 0.0
    %v6214 = vand.u32 %v3635, 4294901760
    %6215 = vmatpush1.msra.mxu0 %v6214
    %6216 = vmatprep.subr.mxu0 0.0
    %v6217 = vand.u32 %v3636, 4294901760
    %6218 = vmatpush1.msra.mxu0 %v6217
    %6219 = vmatprep.subr.mxu0 0.0
    %v6220 = vand.u32 %v3637, 4294901760
    %6221 = vmatpush1.msra.mxu0 %v6220
    %6222 = vmatprep.subr.mxu0 0.0
    %v6223 = vand.u32 %v3638, 4294901760
    %6224 = vmatpush1.msra.mxu0 %v6223
    %6225 = vmatprep.subr.mxu0 0.0
    %v6226 = vand.u32 %v3639, 4294901760
    %6227 = vmatpush1.msra.mxu0 %v6226
    %6228 = vmatprep.subr.mxu0 0.0
    %v6229 = vand.u32 %v3640, 4294901760
    %6230 = vmatpush1.msra.mxu0 %v6229
    %6231 = vmatprep.subr.mxu0 0.0
    %v6232 = vand.u32 %v3641, 4294901760
    %6233 = vmatpush1.msra.mxu0 %v6232
    %6234 = vmatprep.subr.mxu0 0.0
    %v6235 = vand.u32 %v3642, 4294901760
    %6236 = vmatpush1.msra.mxu0 %v6235
    %v6237 = vand.u32 %v3435, 4294901760
    %6238 = vmatprep.mubr.f32.mxu0 %v6237
    %v6239 = vand.u32 %v3434, 4294901760
    %6240 = vmatmul.mubr.f32.gmra.mrb[0].mxu0 %v6239
    %v6241 = vpop.f32.mrb[0].mxu0
    %v6242 = vadd.f32 %v6138, %v6241
    %v6243 = vpop.f32.mrb[0].mxu0
    %6244 = vdwg.mxu0
    %6245 = vmatprep.subr.mxu0 0.0
    %v6246 = vand.u32 %v3643, 4294901760
    %6247 = vmatpush1.msra.mxu0 %v6246
    %6248 = vmatprep.subr.mxu0 0.0
    %v6249 = vand.u32 %v3644, 4294901760
    %6250 = vmatpush1.msra.mxu0 %v6249
    %6251 = vmatprep.subr.mxu0 0.0
    %v6252 = vand.u32 %v3645, 4294901760
    %6253 = vmatpush1.msra.mxu0 %v6252
    %6254 = vmatprep.subr.mxu0 0.0
    %v6255 = vand.u32 %v3646, 4294901760
    %6256 = vmatpush1.msra.mxu0 %v6255
    %6257 = vmatprep.subr.mxu0 0.0
    %v6258 = vand.u32 %v3647, 4294901760
    %6259 = vmatpush1.msra.mxu0 %v6258
    %6260 = vmatprep.subr.mxu0 0.0
    %v6261 = vand.u32 %v3648, 4294901760
    %6262 = vmatpush1.msra.mxu0 %v6261
    %6263 = vmatprep.subr.mxu0 0.0
    %v6264 = vand.u32 %v3649, 4294901760
    %6265 = vmatpush1.msra.mxu0 %v6264
    %6266 = vmatprep.subr.mxu0 0.0
    %v6267 = vand.u32 %v3650, 4294901760
    %6268 = vmatpush1.msra.mxu0 %v6267
    %6269 = vmatprep.subr.mxu0 0.0
    %v6270 = vand.u32 %v3651, 4294901760
    %6271 = vmatpush1.msra.mxu0 %v6270
    %6272 = vmatprep.subr.mxu0 0.0
    %v6273 = vand.u32 %v3652, 4294901760
    %6274 = vmatpush1.msra.mxu0 %v6273
    %6275 = vmatprep.subr.mxu0 0.0
    %v6276 = vand.u32 %v3653, 4294901760
    %6277 = vmatpush1.msra.mxu0 %v6276
    %6278 = vmatprep.subr.mxu0 0.0
    %v6279 = vand.u32 %v3654, 4294901760
    %6280 = vmatpush1.msra.mxu0 %v6279
    %6281 = vmatprep.subr.mxu0 0.0
    %v6282 = vand.u32 %v3655, 4294901760
    %6283 = vmatpush1.msra.mxu0 %v6282
    %6284 = vmatprep.subr.mxu0 0.0
    %v6285 = vand.u32 %v3656, 4294901760
    %6286 = vmatpush1.msra.mxu0 %v6285
    %6287 = vmatprep.subr.mxu0 0.0
    %v6288 = vand.u32 %v3657, 4294901760
    %6289 = vmatpush1.msra.mxu0 %v6288
    %6290 = vmatprep.subr.mxu0 0.0
    %v6291 = vand.u32 %v3658, 4294901760
    %6292 = vmatpush1.msra.mxu0 %v6291
    %6293 = vmatprep.subr.mxu0 0.0
    %6294 = vmatpush1.msra.mxu0 0.0
    %6295 = vmatprep.subr.mxu0 0.0
    %6296 = vmatpush1.msra.mxu0 0.0
    %6297 = vmatprep.subr.mxu0 0.0
    %6298 = vmatpush1.msra.mxu0 0.0
    %6299 = vmatprep.subr.mxu0 0.0
    %6300 = vmatpush1.msra.mxu0 0.0
    %6301 = vmatprep.subr.mxu0 0.0
    %6302 = vmatpush1.msra.mxu0 0.0
    %6303 = vmatprep.subr.mxu0 0.0
    %6304 = vmatpush1.msra.mxu0 0.0
    %6305 = vmatprep.subr.mxu0 0.0
    %6306 = vmatpush1.msra.mxu0 0.0
    %6307 = vmatprep.subr.mxu0 0.0
    %6308 = vmatpush1.msra.mxu0 0.0
    %6309 = vmatprep.subr.mxu0 0.0
    %6310 = vmatpush1.msra.mxu0 0.0
    %6311 = vmatprep.subr.mxu0 0.0
    %6312 = vmatpush1.msra.mxu0 0.0
    %6313 = vmatprep.subr.mxu0 0.0
    %6314 = vmatpush1.msra.mxu0 0.0
    %6315 = vmatprep.subr.mxu0 0.0
    %6316 = vmatpush1.msra.mxu0 0.0
    %6317 = vmatprep.subr.mxu0 0.0
    %6318 = vmatpush1.msra.mxu0 0.0
    %6319 = vmatprep.subr.mxu0 0.0
    %6320 = vmatpush1.msra.mxu0 0.0
    %6321 = vmatprep.subr.mxu0 0.0
    %6322 = vmatpush1.msra.mxu0 0.0
    %6323 = vmatprep.subr.mxu0 0.0
    %6324 = vmatpush1.msra.mxu0 0.0
    %6325 = vmatprep.mubr.f32.mxu0 0.0
    %v6326 = vand.u32 %v3436, 4294901760
    %v6327 = vsub.f32 %v3436, %v6326
    %v6328 = vand.u32 %v6327, 4294901760
    %v6329 = vsub.f32 %v6327, %v6328
    %v6330 = vand.u32 %v6329, 4294901760
    %6331 = vmatmul.mubr.f32.gmra.mrb[0].mxu0 %v6330
    %v6332 = vpop.f32.mrb[0].mxu0
    %v6333 = vadd.f32 %v6242, %v6332
    %v6334 = vpop.f32.mrb[0].mxu0
    %6335 = vdwg.mxu0
    %6336 = vmatprep.subr.mxu0 0.0
    %v6337 = vand.u32 %v3643, 4294901760
    %v6338 = vsub.f32 %v3643, %v6337
    %v6339 = vand.u32 %v6338, 4294901760
    %v6340 = vsub.f32 %v6338, %v6339
    %v6341 = vand.u32 %v6340, 4294901760
    %6342 = vmatpush1.msra.mxu0 %v6341
    %6343 = vmatprep.subr.mxu0 0.0
    %v6344 = vand.u32 %v3644, 4294901760
    %v6345 = vsub.f32 %v3644, %v6344
    %v6346 = vand.u32 %v6345, 4294901760
    %v6347 = vsub.f32 %v6345, %v6346
    %v6348 = vand.u32 %v6347, 4294901760
    %6349 = vmatpush1.msra.mxu0 %v6348
    %6350 = vmatprep.subr.mxu0 0.0
    %v6351 = vand.u32 %v3645, 4294901760
    %v6352 = vsub.f32 %v3645, %v6351
    %v6353 = vand.u32 %v6352, 4294901760
    %v6354 = vsub.f32 %v6352, %v6353
    %v6355 = vand.u32 %v6354, 4294901760
    %6356 = vmatpush1.msra.mxu0 %v6355
    %6357 = vmatprep.subr.mxu0 0.0
    %v6358 = vand.u32 %v3646, 4294901760
    %v6359 = vsub.f32 %v3646, %v6358
    %v6360 = vand.u32 %v6359, 4294901760
    %v6361 = vsub.f32 %v6359, %v6360
    %v6362 = vand.u32 %v6361, 4294901760
    %6363 = vmatpush1.msra.mxu0 %v6362
    %6364 = vmatprep.subr.mxu0 0.0
    %v6365 = vand.u32 %v3647, 4294901760
    %v6366 = vsub.f32 %v3647, %v6365
    %v6367 = vand.u32 %v6366, 4294901760
    %v6368 = vsub.f32 %v6366, %v6367
    %v6369 = vand.u32 %v6368, 4294901760
    %6370 = vmatpush1.msra.mxu0 %v6369
    %6371 = vmatprep.subr.mxu0 0.0
    %v6372 = vand.u32 %v3648, 4294901760
    %v6373 = vsub.f32 %v3648, %v6372
    %v6374 = vand.u32 %v6373, 4294901760
    %v6375 = vsub.f32 %v6373, %v6374
    %v6376 = vand.u32 %v6375, 4294901760
    %6377 = vmatpush1.msra.mxu0 %v6376
    %6378 = vmatprep.subr.mxu0 0.0
    %v6379 = vand.u32 %v3649, 4294901760
    %v6380 = vsub.f32 %v3649, %v6379
    %v6381 = vand.u32 %v6380, 4294901760
    %v6382 = vsub.f32 %v6380, %v6381
    %v6383 = vand.u32 %v6382, 4294901760
    %6384 = vmatpush1.msra.mxu0 %v6383
    %6385 = vmatprep.subr.mxu0 0.0
    %v6386 = vand.u32 %v3650, 4294901760
    %v6387 = vsub.f32 %v3650, %v6386
    %v6388 = vand.u32 %v6387, 4294901760
    %v6389 = vsub.f32 %v6387, %v6388
    %v6390 = vand.u32 %v6389, 4294901760
    %6391 = vmatpush1.msra.mxu0 %v6390
    %6392 = vmatprep.subr.mxu0 0.0
    %v6393 = vand.u32 %v3651, 4294901760
    %v6394 = vsub.f32 %v3651, %v6393
    %v6395 = vand.u32 %v6394, 4294901760
    %v6396 = vsub.f32 %v6394, %v6395
    %v6397 = vand.u32 %v6396, 4294901760
    %6398 = vmatpush1.msra.mxu0 %v6397
    %6399 = vmatprep.subr.mxu0 0.0
    %v6400 = vand.u32 %v3652, 4294901760
    %v6401 = vsub.f32 %v3652, %v6400
    %v6402 = vand.u32 %v6401, 4294901760
    %v6403 = vsub.f32 %v6401, %v6402
    %v6404 = vand.u32 %v6403, 4294901760
    %6405 = vmatpush1.msra.mxu0 %v6404
    %6406 = vmatprep.subr.mxu0 0.0
    %v6407 = vand.u32 %v3653, 4294901760
    %v6408 = vsub.f32 %v3653, %v6407
    %v6409 = vand.u32 %v6408, 4294901760
    %v6410 = vsub.f32 %v6408, %v6409
    %v6411 = vand.u32 %v6410, 4294901760
    %6412 = vmatpush1.msra.mxu0 %v6411
    %6413 = vmatprep.subr.mxu0 0.0
    %v6414 = vand.u32 %v3654, 4294901760
    %v6415 = vsub.f32 %v3654, %v6414
    %v6416 = vand.u32 %v6415, 4294901760
    %v6417 = vsub.f32 %v6415, %v6416
    %v6418 = vand.u32 %v6417, 4294901760
    %6419 = vmatpush1.msra.mxu0 %v6418
    %6420 = vmatprep.subr.mxu0 0.0
    %v6421 = vand.u32 %v3655, 4294901760
    %v6422 = vsub.f32 %v3655, %v6421
    %v6423 = vand.u32 %v6422, 4294901760
    %v6424 = vsub.f32 %v6422, %v6423
    %v6425 = vand.u32 %v6424, 4294901760
    %6426 = vmatpush1.msra.mxu0 %v6425
    %6427 = vmatprep.subr.mxu0 0.0
    %v6428 = vand.u32 %v3656, 4294901760
    %v6429 = vsub.f32 %v3656, %v6428
    %v6430 = vand.u32 %v6429, 4294901760
    %v6431 = vsub.f32 %v6429, %v6430
    %v6432 = vand.u32 %v6431, 4294901760
    %6433 = vmatpush1.msra.mxu0 %v6432
    %6434 = vmatprep.subr.mxu0 0.0
    %v6435 = vand.u32 %v3657, 4294901760
    %v6436 = vsub.f32 %v3657, %v6435
    %v6437 = vand.u32 %v6436, 4294901760
    %v6438 = vsub.f32 %v6436, %v6437
    %v6439 = vand.u32 %v6438, 4294901760
    %6440 = vmatpush1.msra.mxu0 %v6439
    %6441 = vmatprep.subr.mxu0 0.0
    %v6442 = vand.u32 %v3658, 4294901760
    %v6443 = vsub.f32 %v3658, %v6442
    %v6444 = vand.u32 %v6443, 4294901760
    %v6445 = vsub.f32 %v6443, %v6444
    %v6446 = vand.u32 %v6445, 4294901760
    %6447 = vmatpush1.msra.mxu0 %v6446
    %6448 = vmatprep.subr.mxu0 0.0
    %6449 = vmatpush1.msra.mxu0 0.0
    %6450 = vmatprep.subr.mxu0 0.0
    %6451 = vmatpush1.msra.mxu0 0.0
    %6452 = vmatprep.subr.mxu0 0.0
    %6453 = vmatpush1.msra.mxu0 0.0
    %6454 = vmatprep.subr.mxu0 0.0
    %6455 = vmatpush1.msra.mxu0 0.0
    %6456 = vmatprep.subr.mxu0 0.0
    %6457 = vmatpush1.msra.mxu0 0.0
    %6458 = vmatprep.subr.mxu0 0.0
    %6459 = vmatpush1.msra.mxu0 0.0
    %6460 = vmatprep.subr.mxu0 0.0
    %6461 = vmatpush1.msra.mxu0 0.0
    %6462 = vmatprep.subr.mxu0 0.0
    %6463 = vmatpush1.msra.mxu0 0.0
    %6464 = vmatprep.subr.mxu0 0.0
    %6465 = vmatpush1.msra.mxu0 0.0
    %6466 = vmatprep.subr.mxu0 0.0
    %6467 = vmatpush1.msra.mxu0 0.0
    %6468 = vmatprep.subr.mxu0 0.0
    %6469 = vmatpush1.msra.mxu0 0.0
    %6470 = vmatprep.subr.mxu0 0.0
    %6471 = vmatpush1.msra.mxu0 0.0
    %6472 = vmatprep.subr.mxu0 0.0
    %6473 = vmatpush1.msra.mxu0 0.0
    %6474 = vmatprep.subr.mxu0 0.0
    %6475 = vmatpush1.msra.mxu0 0.0
    %6476 = vmatprep.subr.mxu0 0.0
    %6477 = vmatpush1.msra.mxu0 0.0
    %6478 = vmatprep.subr.mxu0 0.0
    %6479 = vmatpush1.msra.mxu0 0.0
    %6480 = vmatprep.mubr.f32.mxu0 0.0
    %v6481 = vand.u32 %v3436, 4294901760
    %6482 = vmatmul.mubr.f32.gmra.mrb[0].mxu0 %v6481
    %v6483 = vpop.f32.mrb[0].mxu0
    %v6484 = vadd.f32 %v6333, %v6483
    %v6485 = vpop.f32.mrb[0].mxu0
    %6486 = vdwg.mxu0
    %6487 = vmatprep.subr.mxu0 0.0
    %v6488 = vand.u32 %v3643, 4294901760
    %v6489 = vsub.f32 %v3643, %v6488
    %6490 = vmatpush1.msra.mxu0 %v6489
    %6491 = vmatprep.subr.mxu0 0.0
    %v6492 = vand.u32 %v3644, 4294901760
    %v6493 = vsub.f32 %v3644, %v6492
    %6494 = vmatpush1.msra.mxu0 %v6493
    %6495 = vmatprep.subr.mxu0 0.0
    %v6496 = vand.u32 %v3645, 4294901760
    %v6497 = vsub.f32 %v3645, %v6496
    %6498 = vmatpush1.msra.mxu0 %v6497
    %6499 = vmatprep.subr.mxu0 0.0
    %v6500 = vand.u32 %v3646, 4294901760
    %v6501 = vsub.f32 %v3646, %v6500
    %6502 = vmatpush1.msra.mxu0 %v6501
    %6503 = vmatprep.subr.mxu0 0.0
    %v6504 = vand.u32 %v3647, 4294901760
    %v6505 = vsub.f32 %v3647, %v6504
    %6506 = vmatpush1.msra.mxu0 %v6505
    %6507 = vmatprep.subr.mxu0 0.0
    %v6508 = vand.u32 %v3648, 4294901760
    %v6509 = vsub.f32 %v3648, %v6508
    %6510 = vmatpush1.msra.mxu0 %v6509
    %6511 = vmatprep.subr.mxu0 0.0
    %v6512 = vand.u32 %v3649, 4294901760
    %v6513 = vsub.f32 %v3649, %v6512
    %6514 = vmatpush1.msra.mxu0 %v6513
    %6515 = vmatprep.subr.mxu0 0.0
    %v6516 = vand.u32 %v3650, 4294901760
    %v6517 = vsub.f32 %v3650, %v6516
    %6518 = vmatpush1.msra.mxu0 %v6517
    %6519 = vmatprep.subr.mxu0 0.0
    %v6520 = vand.u32 %v3651, 4294901760
    %v6521 = vsub.f32 %v3651, %v6520
    %6522 = vmatpush1.msra.mxu0 %v6521
    %6523 = vmatprep.subr.mxu0 0.0
    %v6524 = vand.u32 %v3652, 4294901760
    %v6525 = vsub.f32 %v3652, %v6524
    %6526 = vmatpush1.msra.mxu0 %v6525
    %6527 = vmatprep.subr.mxu0 0.0
    %v6528 = vand.u32 %v3653, 4294901760
    %v6529 = vsub.f32 %v3653, %v6528
    %6530 = vmatpush1.msra.mxu0 %v6529
    %6531 = vmatprep.subr.mxu0 0.0
    %v6532 = vand.u32 %v3654, 4294901760
    %v6533 = vsub.f32 %v3654, %v6532
    %6534 = vmatpush1.msra.mxu0 %v6533
    %6535 = vmatprep.subr.mxu0 0.0
    %v6536 = vand.u32 %v3655, 4294901760
    %v6537 = vsub.f32 %v3655, %v6536
    %6538 = vmatpush1.msra.mxu0 %v6537
    %6539 = vmatprep.subr.mxu0 0.0
    %v6540 = vand.u32 %v3656, 4294901760
    %v6541 = vsub.f32 %v3656, %v6540
    %6542 = vmatpush1.msra.mxu0 %v6541
    %6543 = vmatprep.subr.mxu0 0.0
    %v6544 = vand.u32 %v3657, 4294901760
    %v6545 = vsub.f32 %v3657, %v6544
    %6546 = vmatpush1.msra.mxu0 %v6545
    %6547 = vmatprep.subr.mxu0 0.0
    %v6548 = vand.u32 %v3658, 4294901760
    %v6549 = vsub.f32 %v3658, %v6548
    %6550 = vmatpush1.msra.mxu0 %v6549
    %6551 = vmatprep.subr.mxu0 0.0
    %6552 = vmatpush1.msra.mxu0 0.0
    %6553 = vmatprep.subr.mxu0 0.0
    %6554 = vmatpush1.msra.mxu0 0.0
    %6555 = vmatprep.subr.mxu0 0.0
    %6556 = vmatpush1.msra.mxu0 0.0
    %6557 = vmatprep.subr.mxu0 0.0
    %6558 = vmatpush1.msra.mxu0 0.0
    %6559 = vmatprep.subr.mxu0 0.0
    %6560 = vmatpush1.msra.mxu0 0.0
    %6561 = vmatprep.subr.mxu0 0.0
    %6562 = vmatpush1.msra.mxu0 0.0
    %6563 = vmatprep.subr.mxu0 0.0
    %6564 = vmatpush1.msra.mxu0 0.0
    %6565 = vmatprep.subr.mxu0 0.0
    %6566 = vmatpush1.msra.mxu0 0.0
    %6567 = vmatprep.subr.mxu0 0.0
    %6568 = vmatpush1.msra.mxu0 0.0
    %6569 = vmatprep.subr.mxu0 0.0
    %6570 = vmatpush1.msra.mxu0 0.0
    %6571 = vmatprep.subr.mxu0 0.0
    %6572 = vmatpush1.msra.mxu0 0.0
    %6573 = vmatprep.subr.mxu0 0.0
    %6574 = vmatpush1.msra.mxu0 0.0
    %6575 = vmatprep.subr.mxu0 0.0
    %6576 = vmatpush1.msra.mxu0 0.0
    %6577 = vmatprep.subr.mxu0 0.0
    %6578 = vmatpush1.msra.mxu0 0.0
    %6579 = vmatprep.subr.mxu0 0.0
    %6580 = vmatpush1.msra.mxu0 0.0
    %6581 = vmatprep.subr.mxu0 0.0
    %6582 = vmatpush1.msra.mxu0 0.0
    %6583 = vmatprep.mubr.f32.mxu0 0.0
    %v6584 = vand.u32 %v3436, 4294901760
    %v6585 = vsub.f32 %v3436, %v6584
    %6586 = vmatmul.mubr.f32.gmra.mrb[0].mxu0 %v6585
    %v6587 = vpop.f32.mrb[0].mxu0
    %v6588 = vadd.f32 %v6484, %v6587
    %v6589 = vpop.f32.mrb[0].mxu0
    %6590 = vdwg.mxu0
    %6591 = vmatprep.subr.mxu0 0.0
    %v6592 = vand.u32 %v3643, 4294901760
    %6593 = vmatpush1.msra.mxu0 %v6592
    %6594 = vmatprep.subr.mxu0 0.0
    %v6595 = vand.u32 %v3644, 4294901760
    %6596 = vmatpush1.msra.mxu0 %v6595
    %6597 = vmatprep.subr.mxu0 0.0
    %v6598 = vand.u32 %v3645, 4294901760
    %6599 = vmatpush1.msra.mxu0 %v6598
    %6600 = vmatprep.subr.mxu0 0.0
    %v6601 = vand.u32 %v3646, 4294901760
    %6602 = vmatpush1.msra.mxu0 %v6601
    %6603 = vmatprep.subr.mxu0 0.0
    %v6604 = vand.u32 %v3647, 4294901760
    %6605 = vmatpush1.msra.mxu0 %v6604
    %6606 = vmatprep.subr.mxu0 0.0
    %v6607 = vand.u32 %v3648, 4294901760
    %6608 = vmatpush1.msra.mxu0 %v6607
    %6609 = vmatprep.subr.mxu0 0.0
    %v6610 = vand.u32 %v3649, 4294901760
    %6611 = vmatpush1.msra.mxu0 %v6610
    %6612 = vmatprep.subr.mxu0 0.0
    %v6613 = vand.u32 %v3650, 4294901760
    %6614 = vmatpush1.msra.mxu0 %v6613
    %6615 = vmatprep.subr.mxu0 0.0
    %v6616 = vand.u32 %v3651, 4294901760
    %6617 = vmatpush1.msra.mxu0 %v6616
    %6618 = vmatprep.subr.mxu0 0.0
    %v6619 = vand.u32 %v3652, 4294901760
    %6620 = vmatpush1.msra.mxu0 %v6619
    %6621 = vmatprep.subr.mxu0 0.0
    %v6622 = vand.u32 %v3653, 4294901760
    %6623 = vmatpush1.msra.mxu0 %v6622
    %6624 = vmatprep.subr.mxu0 0.0
    %v6625 = vand.u32 %v3654, 4294901760
    %6626 = vmatpush1.msra.mxu0 %v6625
    %6627 = vmatprep.subr.mxu0 0.0
    %v6628 = vand.u32 %v3655, 4294901760
    %6629 = vmatpush1.msra.mxu0 %v6628
    %6630 = vmatprep.subr.mxu0 0.0
    %v6631 = vand.u32 %v3656, 4294901760
    %6632 = vmatpush1.msra.mxu0 %v6631
    %6633 = vmatprep.subr.mxu0 0.0
    %v6634 = vand.u32 %v3657, 4294901760
    %6635 = vmatpush1.msra.mxu0 %v6634
    %6636 = vmatprep.subr.mxu0 0.0
    %v6637 = vand.u32 %v3658, 4294901760
    %6638 = vmatpush1.msra.mxu0 %v6637
    %6639 = vmatprep.subr.mxu0 0.0
    %6640 = vmatpush1.msra.mxu0 0.0
    %6641 = vmatprep.subr.mxu0 0.0
    %6642 = vmatpush1.msra.mxu0 0.0
    %6643 = vmatprep.subr.mxu0 0.0
    %6644 = vmatpush1.msra.mxu0 0.0
    %6645 = vmatprep.subr.mxu0 0.0
    %6646 = vmatpush1.msra.mxu0 0.0
    %6647 = vmatprep.subr.mxu0 0.0
    %6648 = vmatpush1.msra.mxu0 0.0
    %6649 = vmatprep.subr.mxu0 0.0
    %6650 = vmatpush1.msra.mxu0 0.0
    %6651 = vmatprep.subr.mxu0 0.0
    %6652 = vmatpush1.msra.mxu0 0.0
    %6653 = vmatprep.subr.mxu0 0.0
    %6654 = vmatpush1.msra.mxu0 0.0
    %6655 = vmatprep.subr.mxu0 0.0
    %6656 = vmatpush1.msra.mxu0 0.0
    %6657 = vmatprep.subr.mxu0 0.0
    %6658 = vmatpush1.msra.mxu0 0.0
    %6659 = vmatprep.subr.mxu0 0.0
    %6660 = vmatpush1.msra.mxu0 0.0
    %6661 = vmatprep.subr.mxu0 0.0
    %6662 = vmatpush1.msra.mxu0 0.0
    %6663 = vmatprep.subr.mxu0 0.0
    %6664 = vmatpush1.msra.mxu0 0.0
    %6665 = vmatprep.subr.mxu0 0.0
    %6666 = vmatpush1.msra.mxu0 0.0
    %6667 = vmatprep.subr.mxu0 0.0
    %6668 = vmatpush1.msra.mxu0 0.0
    %6669 = vmatprep.subr.mxu0 0.0
    %6670 = vmatpush1.msra.mxu0 0.0
    %6671 = vmatprep.mubr.f32.mxu0 0.0
    %v6672 = vand.u32 %v3436, 4294901760
    %v6673 = vsub.f32 %v3436, %v6672
    %v6674 = vand.u32 %v6673, 4294901760
    %6675 = vmatmul.mubr.f32.gmra.mrb[0].mxu0 %v6674
    %v6676 = vpop.f32.mrb[0].mxu0
    %v6677 = vadd.f32 %v6588, %v6676
    %v6678 = vpop.f32.mrb[0].mxu0
    %6679 = vdwg.mxu0
    %6680 = vmatprep.subr.mxu0 0.0
    %v6681 = vand.u32 %v3643, 4294901760
    %v6682 = vsub.f32 %v3643, %v6681
    %v6683 = vand.u32 %v6682, 4294901760
    %6684 = vmatpush1.msra.mxu0 %v6683
    %6685 = vmatprep.subr.mxu0 0.0
    %v6686 = vand.u32 %v3644, 4294901760
    %v6687 = vsub.f32 %v3644, %v6686
    %v6688 = vand.u32 %v6687, 4294901760
    %6689 = vmatpush1.msra.mxu0 %v6688
    %6690 = vmatprep.subr.mxu0 0.0
    %v6691 = vand.u32 %v3645, 4294901760
    %v6692 = vsub.f32 %v3645, %v6691
    %v6693 = vand.u32 %v6692, 4294901760
    %6694 = vmatpush1.msra.mxu0 %v6693
    %6695 = vmatprep.subr.mxu0 0.0
    %v6696 = vand.u32 %v3646, 4294901760
    %v6697 = vsub.f32 %v3646, %v6696
    %v6698 = vand.u32 %v6697, 4294901760
    %6699 = vmatpush1.msra.mxu0 %v6698
    %6700 = vmatprep.subr.mxu0 0.0
    %v6701 = vand.u32 %v3647, 4294901760
    %v6702 = vsub.f32 %v3647, %v6701
    %v6703 = vand.u32 %v6702, 4294901760
    %6704 = vmatpush1.msra.mxu0 %v6703
    %6705 = vmatprep.subr.mxu0 0.0
    %v6706 = vand.u32 %v3648, 4294901760
    %v6707 = vsub.f32 %v3648, %v6706
    %v6708 = vand.u32 %v6707, 4294901760
    %6709 = vmatpush1.msra.mxu0 %v6708
    %6710 = vmatprep.subr.mxu0 0.0
    %v6711 = vand.u32 %v3649, 4294901760
    %v6712 = vsub.f32 %v3649, %v6711
    %v6713 = vand.u32 %v6712, 4294901760
    %6714 = vmatpush1.msra.mxu0 %v6713
    %6715 = vmatprep.subr.mxu0 0.0
    %v6716 = vand.u32 %v3650, 4294901760
    %v6717 = vsub.f32 %v3650, %v6716
    %v6718 = vand.u32 %v6717, 4294901760
    %6719 = vmatpush1.msra.mxu0 %v6718
    %6720 = vmatprep.subr.mxu0 0.0
    %v6721 = vand.u32 %v3651, 4294901760
    %v6722 = vsub.f32 %v3651, %v6721
    %v6723 = vand.u32 %v6722, 4294901760
    %6724 = vmatpush1.msra.mxu0 %v6723
    %6725 = vmatprep.subr.mxu0 0.0
    %v6726 = vand.u32 %v3652, 4294901760
    %v6727 = vsub.f32 %v3652, %v6726
    %v6728 = vand.u32 %v6727, 4294901760
    %6729 = vmatpush1.msra.mxu0 %v6728
    %6730 = vmatprep.subr.mxu0 0.0
    %v6731 = vand.u32 %v3653, 4294901760
    %v6732 = vsub.f32 %v3653, %v6731
    %v6733 = vand.u32 %v6732, 4294901760
    %6734 = vmatpush1.msra.mxu0 %v6733
    %6735 = vmatprep.subr.mxu0 0.0
    %v6736 = vand.u32 %v3654, 4294901760
    %v6737 = vsub.f32 %v3654, %v6736
    %v6738 = vand.u32 %v6737, 4294901760
    %6739 = vmatpush1.msra.mxu0 %v6738
    %6740 = vmatprep.subr.mxu0 0.0
    %v6741 = vand.u32 %v3655, 4294901760
    %v6742 = vsub.f32 %v3655, %v6741
    %v6743 = vand.u32 %v6742, 4294901760
    %6744 = vmatpush1.msra.mxu0 %v6743
    %6745 = vmatprep.subr.mxu0 0.0
    %v6746 = vand.u32 %v3656, 4294901760
    %v6747 = vsub.f32 %v3656, %v6746
    %v6748 = vand.u32 %v6747, 4294901760
    %6749 = vmatpush1.msra.mxu0 %v6748
    %6750 = vmatprep.subr.mxu0 0.0
    %v6751 = vand.u32 %v3657, 4294901760
    %v6752 = vsub.f32 %v3657, %v6751
    %v6753 = vand.u32 %v6752, 4294901760
    %6754 = vmatpush1.msra.mxu0 %v6753
    %6755 = vmatprep.subr.mxu0 0.0
    %v6756 = vand.u32 %v3658, 4294901760
    %v6757 = vsub.f32 %v3658, %v6756
    %v6758 = vand.u32 %v6757, 4294901760
    %6759 = vmatpush1.msra.mxu0 %v6758
    %6760 = vmatprep.subr.mxu0 0.0
    %6761 = vmatpush1.msra.mxu0 0.0
    %6762 = vmatprep.subr.mxu0 0.0
    %6763 = vmatpush1.msra.mxu0 0.0
    %6764 = vmatprep.subr.mxu0 0.0
    %6765 = vmatpush1.msra.mxu0 0.0
    %6766 = vmatprep.subr.mxu0 0.0
    %6767 = vmatpush1.msra.mxu0 0.0
    %6768 = vmatprep.subr.mxu0 0.0
    %6769 = vmatpush1.msra.mxu0 0.0
    %6770 = vmatprep.subr.mxu0 0.0
    %6771 = vmatpush1.msra.mxu0 0.0
    %6772 = vmatprep.subr.mxu0 0.0
    %6773 = vmatpush1.msra.mxu0 0.0
    %6774 = vmatprep.subr.mxu0 0.0
    %6775 = vmatpush1.msra.mxu0 0.0
    %6776 = vmatprep.subr.mxu0 0.0
    %6777 = vmatpush1.msra.mxu0 0.0
    %6778 = vmatprep.subr.mxu0 0.0
    %6779 = vmatpush1.msra.mxu0 0.0
    %6780 = vmatprep.subr.mxu0 0.0
    %6781 = vmatpush1.msra.mxu0 0.0
    %6782 = vmatprep.subr.mxu0 0.0
    %6783 = vmatpush1.msra.mxu0 0.0
    %6784 = vmatprep.subr.mxu0 0.0
    %6785 = vmatpush1.msra.mxu0 0.0
    %6786 = vmatprep.subr.mxu0 0.0
    %6787 = vmatpush1.msra.mxu0 0.0
    %6788 = vmatprep.subr.mxu0 0.0
    %6789 = vmatpush1.msra.mxu0 0.0
    %6790 = vmatprep.subr.mxu0 0.0
    %6791 = vmatpush1.msra.mxu0 0.0
    %6792 = vmatprep.mubr.f32.mxu0 0.0
    %v6793 = vand.u32 %v3436, 4294901760
    %6794 = vmatmul.mubr.f32.gmra.mrb[0].mxu0 %v6793
    %v6795 = vpop.f32.mrb[0].mxu0
    %v6796 = vadd.f32 %v6677, %v6795
    %v6797 = vpop.f32.mrb[0].mxu0
    %6798 = vdwg.mxu0
    %6799 = vmatprep.subr.mxu0 0.0
    %v6800 = vand.u32 %v3643, 4294901760
    %6801 = vmatpush1.msra.mxu0 %v6800
    %6802 = vmatprep.subr.mxu0 0.0
    %v6803 = vand.u32 %v3644, 4294901760
    %6804 = vmatpush1.msra.mxu0 %v6803
    %6805 = vmatprep.subr.mxu0 0.0
    %v6806 = vand.u32 %v3645, 4294901760
    %6807 = vmatpush1.msra.mxu0 %v6806
    %6808 = vmatprep.subr.mxu0 0.0
    %v6809 = vand.u32 %v3646, 4294901760
    %6810 = vmatpush1.msra.mxu0 %v6809
    %6811 = vmatprep.subr.mxu0 0.0
    %v6812 = vand.u32 %v3647, 4294901760
    %6813 = vmatpush1.msra.mxu0 %v6812
    %6814 = vmatprep.subr.mxu0 0.0
    %v6815 = vand.u32 %v3648, 4294901760
    %6816 = vmatpush1.msra.mxu0 %v6815
    %6817 = vmatprep.subr.mxu0 0.0
    %v6818 = vand.u32 %v3649, 4294901760
    %6819 = vmatpush1.msra.mxu0 %v6818
    %6820 = vmatprep.subr.mxu0 0.0
    %v6821 = vand.u32 %v3650, 4294901760
    %6822 = vmatpush1.msra.mxu0 %v6821
    %6823 = vmatprep.subr.mxu0 0.0
    %v6824 = vand.u32 %v3651, 4294901760
    %6825 = vmatpush1.msra.mxu0 %v6824
    %6826 = vmatprep.subr.mxu0 0.0
    %v6827 = vand.u32 %v3652, 4294901760
    %6828 = vmatpush1.msra.mxu0 %v6827
    %6829 = vmatprep.subr.mxu0 0.0
    %v6830 = vand.u32 %v3653, 4294901760
    %6831 = vmatpush1.msra.mxu0 %v6830
    %6832 = vmatprep.subr.mxu0 0.0
    %v6833 = vand.u32 %v3654, 4294901760
    %6834 = vmatpush1.msra.mxu0 %v6833
    %6835 = vmatprep.subr.mxu0 0.0
    %v6836 = vand.u32 %v3655, 4294901760
    %6837 = vmatpush1.msra.mxu0 %v6836
    %6838 = vmatprep.subr.mxu0 0.0
    %v6839 = vand.u32 %v3656, 4294901760
    %6840 = vmatpush1.msra.mxu0 %v6839
    %6841 = vmatprep.subr.mxu0 0.0
    %v6842 = vand.u32 %v3657, 4294901760
    %6843 = vmatpush1.msra.mxu0 %v6842
    %6844 = vmatprep.subr.mxu0 0.0
    %v6845 = vand.u32 %v3658, 4294901760
    %6846 = vmatpush1.msra.mxu0 %v6845
    %6847 = vmatprep.subr.mxu0 0.0
    %6848 = vmatpush1.msra.mxu0 0.0
    %6849 = vmatprep.subr.mxu0 0.0
    %6850 = vmatpush1.msra.mxu0 0.0
    %6851 = vmatprep.subr.mxu0 0.0
    %6852 = vmatpush1.msra.mxu0 0.0
    %6853 = vmatprep.subr.mxu0 0.0
    %6854 = vmatpush1.msra.mxu0 0.0
    %6855 = vmatprep.subr.mxu0 0.0
    %6856 = vmatpush1.msra.mxu0 0.0
    %6857 = vmatprep.subr.mxu0 0.0
    %6858 = vmatpush1.msra.mxu0 0.0
    %6859 = vmatprep.subr.mxu0 0.0
    %6860 = vmatpush1.msra.mxu0 0.0
    %6861 = vmatprep.subr.mxu0 0.0
    %6862 = vmatpush1.msra.mxu0 0.0
    %6863 = vmatprep.subr.mxu0 0.0
    %6864 = vmatpush1.msra.mxu0 0.0
    %6865 = vmatprep.subr.mxu0 0.0
    %6866 = vmatpush1.msra.mxu0 0.0
    %6867 = vmatprep.subr.mxu0 0.0
    %6868 = vmatpush1.msra.mxu0 0.0
    %6869 = vmatprep.subr.mxu0 0.0
    %6870 = vmatpush1.msra.mxu0 0.0
    %6871 = vmatprep.subr.mxu0 0.0
    %6872 = vmatpush1.msra.mxu0 0.0
    %6873 = vmatprep.subr.mxu0 0.0
    %6874 = vmatpush1.msra.mxu0 0.0
    %6875 = vmatprep.subr.mxu0 0.0
    %6876 = vmatpush1.msra.mxu0 0.0
    %6877 = vmatprep.subr.mxu0 0.0
    %6878 = vmatpush1.msra.mxu0 0.0
    %6879 = vmatprep.mubr.f32.mxu0 0.0
    %v6880 = vand.u32 %v3436, 4294901760
    %6881 = vmatmul.mubr.f32.gmra.mrb[0].mxu0 %v6880
    %v6882 = vpop.f32.mrb[0].mxu0
    %v6883 = vadd.f32 %v6796, %v6882
    %v6884 = vpop.f32.mrb[0].mxu0
    %6885 = vdwg.mxu0
    %p6886 = scmp.eq.s32.totalorder 0, 0
    // Predicated region
    $region34: #{tpu_custom_call.1} parent=1 // pred_check
      %p6887 = pneg %p6886
    $region35: #{tpu_custom_call.1} parent=1 // pred_check_branch
      %6889 = sbr.rel (%p6887) target = $region37
    $region36: #{tpu_custom_call.1} parent=1 // pred_region
      %6890 = vst [vmem:[#allocation2] sm:$0xff] %v72
    $region37: #{tpu_custom_call.1} parent=1 // pred_fallthru
      _
    %v6891 = vld [vmem:[#allocation2] sm:$0xff]
    %v6892 = vadd.f32 %v6891, %v6883
    %6893 = vst [vmem:[#allocation2] sm:$0xff] %v6892
    // Predicated region
    $region38: #{tpu_custom_call.1} parent=1 // pred_check
      %p6894 = pneg %p6886
    $region39: #{tpu_custom_call.1} parent=1 // pred_check_branch
      %6896 = sbr.rel (%p6894) target = $region41
    $region40: #{tpu_custom_call.1} parent=1 // pred_region
      %v6897 = vld [vmem:[#allocation2] sm:$0xff]
      %6898 = vst [vmem:[#allocation9] sm:$0xff] %v6897
      %v6899 = vsub.f32 %v6897, %v66
      %v6900 = vmul.f32 %v6899, %v6899
      %v6901 = vrot.slane %v6900, 4
      %v6902 = vadd.f32 %v6900, %v6901
      %v6903 = vrot.slane %v6902, 2
      %v6904 = vadd.f32 %v6902, %v6903
      %v6905 = vrot.slane %v6904, 1
      %v6906 = vadd.f32 %v6904, %v6905
      %6907 = vst [vmem:[#allocation12] sm:$0x1] %v6906
    $region41: #{tpu_custom_call.1} parent=1 // pred_fallthru
      _
    // Predicated region
    $region42: #{tpu_custom_call.1} parent=1 // pred_check
      _
    $region43: #{tpu_custom_call.1} parent=1 // pred_check_branch
      %6909 = sbr.rel (0) target = $region45
    $region44: #{tpu_custom_call.1} parent=1 // pred_region
      %s6911 = ssub.s32 128, 128
      %6912 = vsyncadd [#allocation5], %s6911
      %s6914 = sshll.u32 [#allocation9], 4
      %s6915 = int_to_ptr.vmem [resolvable:$true] %s6914
      %6917 = dma.vmem_to_hbm [thread:$0]  %s6915, 128, %s5, [#allocation5]
    $region45: #{tpu_custom_call.1} parent=1 // pred_fallthru
      _
    // Predicated region
    $region46: #{tpu_custom_call.1} parent=1 // pred_check
      _
    $region47: #{tpu_custom_call.1} parent=1 // pred_check_branch
      %6919 = sbr.rel (0) target = $region49
    $region48: #{tpu_custom_call.1} parent=1 // pred_region
      %s6921 = ssub.s32 896, 896
      %6922 = vsyncadd [#allocation11], %s6921
      %s6924 = sshll.u32 [#allocation10], 4
      %s6925 = int_to_ptr.vmem [resolvable:$true] %s6924
      %6927 = dma.vmem_to_hbm [thread:$0]  %s6925, 896, %s6, [#allocation11]
    $region49: #{tpu_custom_call.1} parent=1 // pred_fallthru
      _
    // Predicated region
    $region50: #{tpu_custom_call.1} parent=1 // pred_check
      _
    $region51: #{tpu_custom_call.1} parent=1 // pred_check_branch
      %6929 = sbr.rel (0) target = $region53
    $region52: #{tpu_custom_call.1} parent=1 // pred_region
      %s6931 = ssub.s32 16, 16
      %6932 = vsyncadd [#allocation11], %s6931
      %s6934 = sshll.u32 [#allocation12], 4
      %s6935 = int_to_ptr.vmem [resolvable:$true] %s6934
      %6937 = dma.vmem_to_hbm [thread:$0]  %s6935, 16, %s7, [#allocation11]
    $region53: #{tpu_custom_call.1} parent=1 // pred_fallthru
      _
    // Predicated region
    $region54: #{tpu_custom_call.1} parent=1 // pred_check
      _
    $region55: #{tpu_custom_call.1} parent=1 // pred_check_branch
      %6939 = sbr.rel (0) target = $region57
    $region56: #{tpu_custom_call.1} parent=1 // pred_region
      %s6941 = ssub.s32 112, 112
      %6942 = vsyncadd [#allocation14], %s6941
      %s6944 = sshll.u32 [#allocation13], 4
      %s6945 = int_to_ptr.vmem [resolvable:$true] %s6944
      %6947 = dma.vmem_to_hbm [thread:$0]  %s6945, 112, %s8, [#allocation14]
    $region57: #{tpu_custom_call.1} parent=1 // pred_fallthru
      _
    // Predicated region
    $region58: #{tpu_custom_call.1} parent=1 // pred_check
      _
    $region59: #{tpu_custom_call.1} parent=1 // pred_check_branch
      %6949 = sbr.rel (0) target = $region61
    $region60: #{tpu_custom_call.1} parent=1 // pred_region
      %6950 = dma.done [#allocation5], 128
    $region61: #{tpu_custom_call.1} parent=1 // pred_fallthru
      _
    // Predicated region
    $region62: #{tpu_custom_call.1} parent=1 // pred_check
      _
    $region63: #{tpu_custom_call.1} parent=1 // pred_check_branch
      %6952 = sbr.rel (0) target = $region65
    $region64: #{tpu_custom_call.1} parent=1 // pred_region
      %6953 = dma.done [#allocation11], 896
    $region65: #{tpu_custom_call.1} parent=1 // pred_fallthru
      _
    // Predicated region
    $region66: #{tpu_custom_call.1} parent=1 // pred_check
      _
    $region67: #{tpu_custom_call.1} parent=1 // pred_check_branch
      %6955 = sbr.rel (0) target = $region69
    $region68: #{tpu_custom_call.1} parent=1 // pred_region
      %6956 = dma.done [#allocation11], 16
    $region69: #{tpu_custom_call.1} parent=1 // pred_fallthru
      _
    // Predicated region
    $region70: #{tpu_custom_call.1} parent=1 // pred_check
      _
    $region71: #{tpu_custom_call.1} parent=1 // pred_check_branch
      %6958 = sbr.rel (0) target = $region73
    $region72: #{tpu_custom_call.1} parent=1 // pred_region
      %6959 = dma.done [#allocation14], 112
    $region73: #{tpu_custom_call.1} parent=1 // pred_fallthru
      _
    %6960 = vsyncpa [#allocation4], 1
    %6961 = vsyncpa [#allocation7], 1
    %6962 = vsyncpa [#allocation5], 1
    %6963 = vsyncpa [#allocation11], 1
    %6964 = vsyncpa [#allocation14], 1

</llo_original>
